<compile_context>
chip_gen: v6e
topology: v6e:2x2x1
jax: 0.10.0
libtpu: 0.0.40
codegen_flags: <defaults>
</compile_context>

<pallas_src>
import functools

import jax
import jax.numpy as jnp
from jax.experimental import pallas as pl
from jax.experimental.pallas import tpu as pltpu

N_EMBD = 384
N_HEAD = 6
DROPOUT = 0.2       # eval-mode forward: all dropout layers are identity
LN_EPS = 1e-5


def _layernorm(x, gamma, beta):
    mu = jnp.mean(x, axis=-1, keepdims=True)
    xc = x - mu
    var = jnp.mean(xc * xc, axis=-1, keepdims=True)
    return xc * jax.lax.rsqrt(var + LN_EPS) * gamma + beta


# ---------------------------------------------------------------------------
# Fused Block kernel: one grid step per batch element.
#   x1 = x  + Wp @ concat_h( softmax(q_h k_h^T / sqrt(hs) + causal) v_h ) + bp
#   y  = x1 + W2 @ ReLU(W1 @ LN2(x1) + b1) + b2          (q/k/v from LN1(x))
# ---------------------------------------------------------------------------
def _block_kernel(x_ref, mask_ref, g1_ref, b1_ref, wq_ref, wk_ref, wv_ref,
                  wp_ref, bp_ref, g2_ref, b2_ref, w1_ref, bh_ref, w2_ref,
                  bo_ref, o_ref, att_ref, *, n_head: int):
    x = x_ref[0]                                       # (T, C) f32
    T, C = x.shape
    hs = C // n_head
    scale = float(hs) ** -0.5

    # ---- LN1 + QKV projections (bf16 MXU operands, f32 accumulation) ----
    xn = _layernorm(x, g1_ref[...], b1_ref[...]).astype(jnp.bfloat16)
    # scale folded into q (O(T*hs) mul instead of O(T*T) on the scores)
    q = (jnp.dot(xn, wq_ref[...], preferred_element_type=jnp.float32)
         * scale).astype(jnp.bfloat16)
    k = jnp.dot(xn, wk_ref[...],
                preferred_element_type=jnp.float32).astype(jnp.bfloat16)
    v = jnp.dot(xn, wv_ref[...],
                preferred_element_type=jnp.float32).astype(jnp.bfloat16)

    mask = mask_ref[...]                               # (T, T) f32: 0 / -1e30

    for h in range(n_head):                            # static unroll (6 heads)
        sl = slice(h * hs, (h + 1) * hs)
        qh, kh, vh = q[:, sl], k[:, sl], v[:, sl]
        # contract last dims of q_h and k_h directly (no kh.T / XLU transpose)
        s = jax.lax.dot_general(qh, kh, (((1,), (1,)), ((), ())),
                                preferred_element_type=jnp.float32)
        s = s + mask
        s = s - jnp.max(s, axis=-1, keepdims=True)
        p = jnp.exp(s)
        inv = pl.reciprocal(jnp.sum(p, axis=-1, keepdims=True), approx=True)
        p = p * inv
        # TODO(synk): attention-weight dropout (train mode) omitted — eval().
        att_ref[:, sl] = jnp.dot(p.astype(jnp.bfloat16), vh,
                                 preferred_element_type=jnp.float32)

    proj = jnp.dot(att_ref[...].astype(jnp.bfloat16), wp_ref[...],
                   preferred_element_type=jnp.float32) + bp_ref[...]
    x1 = x + proj                                      # attention residual (f32)

    # ---- LN2 + MLP (Linear -> ReLU -> Linear) + residual ----
    xn2 = _layernorm(x1, g2_ref[...], b2_ref[...]).astype(jnp.bfloat16)
    hid = jnp.dot(xn2, w1_ref[...],
                  preferred_element_type=jnp.float32) + bh_ref[...]
    hid = jnp.maximum(hid, 0.0).astype(jnp.bfloat16)   # ReLU in f32 -> bf16
    y = jnp.dot(hid, w2_ref[...],
                preferred_element_type=jnp.float32) + bo_ref[...]
    # TODO(synk): train-mode dropout (p=0.2) omitted — eval() semantics.
    o_ref[0] = (x1 + y).astype(o_ref.dtype)


# ---------------------------------------------------------------------------
# Wrappers
# ---------------------------------------------------------------------------
def _causal_mask(T):
    tril = jnp.tril(jnp.ones((T, T), dtype=jnp.bool_))
    # large finite negative (not -inf) so fully-masked/padded rows stay NaN-free
    return jnp.where(tril, 0.0, -1e30).astype(jnp.float32)


def _vmem_limit_bytes(T, C, H):
    """Derive the scoped-VMEM limit from the actual working set (with
    double-buffering headroom); clamp to [24, 32] MiB so it stays safe on
    v7x's 64 MiB VMEM while exceeding v5e's 16 MiB scoped default."""
    wbytes = (4 * C * C + 2 * C * H) * 2 * 2           # bf16 weights, x2 buffers
    abytes = 2 * (T * C) * 4 * 2                       # x in/out blocks, x2 buffers
    sbytes = (T * T + 6 * C + 2 * H) * 4 * 2           # mask + LN params + biases
    scratch = T * C * 4                                # head-output scratch
    need = wbytes + abytes + sbytes + scratch
    return int(min(max(need * 2, 24 * 1024 * 1024), 32 * 1024 * 1024))


def prepare_params(p):
    """One-time conversion: bf16 weight copies + (1, n) biases/LN params.
    Done OUTSIDE the forward so the f32->bf16 casts don't run every call."""
    C, H = p["w1"].shape
    return {
        "ln1_g": p["ln1_g"].reshape(1, C), "ln1_b": p["ln1_b"].reshape(1, C),
        "wq": p["wq"].astype(jnp.bfloat16), "wk": p["wk"].astype(jnp.bfloat16),
        "wv": p["wv"].astype(jnp.bfloat16), "wp": p["wp"].astype(jnp.bfloat16),
        "bp": p["bp"].reshape(1, C),
        "ln2_g": p["ln2_g"].reshape(1, C), "ln2_b": p["ln2_b"].reshape(1, C),
        "w1": p["w1"].astype(jnp.bfloat16), "b1": p["b1"].reshape(1, H),
        "w2": p["w2"].astype(jnp.bfloat16), "b2": p["b2"].reshape(1, C),
    }


def block_forward(x, pp):
    """x: (B, T, C) f32; pp: output of prepare_params()."""
    B, T, C = x.shape
    H = pp["w1"].shape[1]
    mask = _causal_mask(T)
    kern = functools.partial(_block_kernel, n_head=N_HEAD)
    c2 = lambda b: (0, 0)
    return pl.pallas_call(
        kern,
        out_shape=jax.ShapeDtypeStruct((B, T, C), x.dtype),
        grid_spec=pltpu.PrefetchScalarGridSpec(
            num_scalar_prefetch=0,
            grid=(B,),                                   # one step per sequence
            in_specs=[
                pl.BlockSpec((1, T, C), lambda b: (b, 0, 0)),     # x (one sequence)
                pl.BlockSpec((T, T), c2),                         # additive causal mask
                pl.BlockSpec((1, C), c2), pl.BlockSpec((1, C), c2),  # ln1 gamma/beta
                pl.BlockSpec((C, C), c2), pl.BlockSpec((C, C), c2),  # Wq, Wk (bf16)
                pl.BlockSpec((C, C), c2), pl.BlockSpec((C, C), c2),  # Wv, Wproj (bf16)
                pl.BlockSpec((1, C), c2),                            # bproj
                pl.BlockSpec((1, C), c2), pl.BlockSpec((1, C), c2),  # ln2 gamma/beta
                pl.BlockSpec((C, H), c2), pl.BlockSpec((1, H), c2),  # W1 (bf16), b1
                pl.BlockSpec((H, C), c2), pl.BlockSpec((1, C), c2),  # W2 (bf16), b2
            ],
            out_specs=pl.BlockSpec((1, T, C), lambda b: (b, 0, 0)),
            scratch_shapes=[pltpu.VMEM((T, C), jnp.float32)],     # head outputs
        ),
        compiler_params=pltpu.CompilerParams(
            dimension_semantics=("parallel",),       # dual-TC sharding on v7x
            vmem_limit_bytes=_vmem_limit_bytes(T, C, H),
        ),
    )(x, mask,
      pp["ln1_g"], pp["ln1_b"],
      pp["wq"], pp["wk"], pp["wv"], pp["wp"], pp["bp"],
      pp["ln2_g"], pp["ln2_b"],
      pp["w1"], pp["b1"], pp["w2"], pp["b2"])


# ---------------------------------------------------------------------------
# Parameters (torch-style init, weights stored (in, out)) & f32 reference
# ---------------------------------------------------------------------------
def init_params(key, n_embd=N_EMBD, n_head=N_HEAD):
    H = 4 * n_embd
    ks = jax.random.split(key, 9)
    bC = 1.0 / (n_embd ** 0.5)       # U(-1/sqrt(fan_in), 1/sqrt(fan_in))
    bH = 1.0 / (H ** 0.5)
    u = lambda k, shape, b: jax.random.uniform(k, shape, jnp.float32, -b, b)
    return {
        "ln1_g": jnp.ones((n_embd,), jnp.float32),
        "ln1_b": jnp.zeros((n_embd,), jnp.float32),
        "wq": u(ks[0], (n_embd, n_embd), bC),   # 6 heads' Linear(C,64,no-bias) concat
        "wk": u(ks[1], (n_embd, n_embd), bC),
        "wv": u(ks[2], (n_embd, n_embd), bC),
        "wp": u(ks[3], (n_embd, n_embd), bC),
        "bp": u(ks[4], (n_embd,), bC),
        "ln2_g": jnp.ones((n_embd,), jnp.float32),
        "ln2_b": jnp.zeros((n_embd,), jnp.float32),
        "w1": u(ks[5], (n_embd, H), bC),
        "b1": u(ks[6], (H,), bC),
        "w2": u(ks[7], (H, n_embd), bH),
        "b2": u(ks[8], (n_embd,), bH),
    }


def block_ref(x, p, n_head=N_HEAD):
    """Pure-JAX f32 reference (torch eval-mode semantics)."""
    B, T, C = x.shape

    def ln(z, g, b):
        mu = z.mean(-1, keepdims=True)
        var = ((z - mu) ** 2).mean(-1, keepdims=True)
        return (z - mu) / jnp.sqrt(var + LN_EPS) * g + b

    xn = ln(x, p["ln1_g"], p["ln1_b"])
    q = xn @ p["wq"]; k = xn @ p["wk"]; v = xn @ p["wv"]
    hs = C // n_head
    causal = jnp.tril(jnp.ones((T, T), bool))
    heads = []
    for h in range(n_head):
        sl = slice(h * hs, (h + 1) * hs)
        s = (q[..., sl] @ jnp.swapaxes(k[..., sl], -1, -2)) * hs ** -0.5
        s = jnp.where(causal, s, -jnp.inf)
        w = jax.nn.softmax(s, axis=-1)
        heads.append(w @ v[..., sl])
    att = jnp.concatenate(heads, axis=-1)
    x = x + att @ p["wp"] + p["bp"]
    xn2 = ln(x, p["ln2_g"], p["ln2_b"])
    hdn = jnp.maximum(xn2 @ p["w1"] + p["b1"], 0.0)
    return x + hdn @ p["w2"] + p["b2"]


if __name__ == "__main__":
    key = jax.random.PRNGKey(0)
    kx, kp = jax.random.split(key)

    B, T, C = 2, 8, N_EMBD         # small shapes: batch=2, seq=8, n_embd=384
    x = jax.random.normal(kx, (B, T, C), jnp.float32)
    params = init_params(kp)
    pp = prepare_params(params)    # one-time bf16 weight casts (outside forward)
    jax.block_until_ready(pp)

    y = block_forward(x, pp)
    jax.block_until_ready(y)

    ref = block_ref(x, params)
    max_err = float(jnp.max(jnp.abs(y - ref)))
    # bf16 MXU operands (f32 accumulation) + approx reciprocal vs. pure-f32 ref
    assert jnp.allclose(y, ref, atol=5e-2, rtol=5e-2), \
        f"mismatch vs reference (max abs err {max_err})"

    print("KERNEL_OK")
</pallas_src>

<mosaic_0001>
module attributes {stable_mosaic.version = 11 : i64} {
  func.func @_block_kernel(%arg0: i32, %arg1: memref<1x8x384xf32, #tpu.memory_space<vmem>>, %arg2: memref<8x8xf32, #tpu.memory_space<vmem>>, %arg3: memref<1x384xf32, #tpu.memory_space<vmem>>, %arg4: memref<1x384xf32, #tpu.memory_space<vmem>>, %arg5: memref<384x384xbf16, #tpu.memory_space<vmem>>, %arg6: memref<384x384xbf16, #tpu.memory_space<vmem>>, %arg7: memref<384x384xbf16, #tpu.memory_space<vmem>>, %arg8: memref<384x384xbf16, #tpu.memory_space<vmem>>, %arg9: memref<1x384xf32, #tpu.memory_space<vmem>>, %arg10: memref<1x384xf32, #tpu.memory_space<vmem>>, %arg11: memref<1x384xf32, #tpu.memory_space<vmem>>, %arg12: memref<384x1536xbf16, #tpu.memory_space<vmem>>, %arg13: memref<1x1536xf32, #tpu.memory_space<vmem>>, %arg14: memref<1536x384xbf16, #tpu.memory_space<vmem>>, %arg15: memref<1x384xf32, #tpu.memory_space<vmem>>, %arg16: memref<1x8x384xf32, #tpu.memory_space<vmem>>, %arg17: memref<8x384xf32, #tpu.memory_space<vmem>>) attributes {dimension_semantics = [#tpu.dimension_semantics<parallel>], iteration_bounds = array<i64: 2>, scalar_prefetch = 0 : i64, scratch_operands = 1 : i64, tpu.core_type = #tpu.core_type<tc>, window_params = [{transform_indices = @transform_0, window_bounds = array<i64: 1, 8, 384>}, {pipeline_mode = #tpu.pipeline_mode<synchronous>, transform_indices = @transform_1, window_bounds = array<i64: 8, 8>}, {pipeline_mode = #tpu.pipeline_mode<synchronous>, transform_indices = @transform_2, window_bounds = array<i64: 1, 384>}, {pipeline_mode = #tpu.pipeline_mode<synchronous>, transform_indices = @transform_3, window_bounds = array<i64: 1, 384>}, {pipeline_mode = #tpu.pipeline_mode<synchronous>, transform_indices = @transform_4, window_bounds = array<i64: 384, 384>}, {pipeline_mode = #tpu.pipeline_mode<synchronous>, transform_indices = @transform_5, window_bounds = array<i64: 384, 384>}, {pipeline_mode = #tpu.pipeline_mode<synchronous>, transform_indices = @transform_6, window_bounds = array<i64: 384, 384>}, {pipeline_mode = #tpu.pipeline_mode<synchronous>, transform_indices = @transform_7, window_bounds = array<i64: 384, 384>}, {pipeline_mode = #tpu.pipeline_mode<synchronous>, transform_indices = @transform_8, window_bounds = array<i64: 1, 384>}, {pipeline_mode = #tpu.pipeline_mode<synchronous>, transform_indices = @transform_9, window_bounds = array<i64: 1, 384>}, {pipeline_mode = #tpu.pipeline_mode<synchronous>, transform_indices = @transform_10, window_bounds = array<i64: 1, 384>}, {pipeline_mode = #tpu.pipeline_mode<synchronous>, transform_indices = @transform_11, window_bounds = array<i64: 384, 1536>}, {pipeline_mode = #tpu.pipeline_mode<synchronous>, transform_indices = @transform_12, window_bounds = array<i64: 1, 1536>}, {pipeline_mode = #tpu.pipeline_mode<synchronous>, transform_indices = @transform_13, window_bounds = array<i64: 1536, 384>}, {pipeline_mode = #tpu.pipeline_mode<synchronous>, transform_indices = @transform_14, window_bounds = array<i64: 1, 384>}, {transform_indices = @transform_15, window_bounds = array<i64: 1, 8, 384>}]} {
    %c0 = arith.constant 0 : index
    %c0_0 = arith.constant 0 : index
    %c0_1 = arith.constant 0 : index
    %0 = vector.load %arg1[%c0, %c0_0, %c0_1] : memref<1x8x384xf32, #tpu.memory_space<vmem>>, vector<1x8x384xf32>
    %1 = vector.shape_cast %0 : vector<1x8x384xf32> to vector<8x384xf32>
    %c0_2 = arith.constant 0 : index
    %c0_3 = arith.constant 0 : index
    %2 = vector.load %arg3[%c0_2, %c0_3] : memref<1x384xf32, #tpu.memory_space<vmem>>, vector<1x384xf32>
    %c0_4 = arith.constant 0 : index
    %c0_5 = arith.constant 0 : index
    %3 = vector.load %arg4[%c0_4, %c0_5] : memref<1x384xf32, #tpu.memory_space<vmem>>, vector<1x384xf32>
    %cst = arith.constant dense<0.000000e+00> : vector<8xf32>
    %4 = vector.multi_reduction <add>, %1, %cst [1] : vector<8x384xf32> to vector<8xf32>
    %5 = vector.shape_cast %4 : vector<8xf32> to vector<8x1xf32>
    %cst_6 = arith.constant 3.840000e+02 : f32
    %6 = vector.broadcast %cst_6 : f32 to vector<8x1xf32>
    %7 = arith.divf %5, %6 : vector<8x1xf32>
    %8 = vector.broadcast %7 : vector<8x1xf32> to vector<8x384xf32>
    %9 = arith.subf %1, %8 : vector<8x384xf32>
    %10 = arith.mulf %9, %9 : vector<8x384xf32>
    %cst_7 = arith.constant dense<0.000000e+00> : vector<8xf32>
    %11 = vector.multi_reduction <add>, %10, %cst_7 [1] : vector<8x384xf32> to vector<8xf32>
    %12 = vector.shape_cast %11 : vector<8xf32> to vector<8x1xf32>
    %cst_8 = arith.constant 3.840000e+02 : f32
    %13 = vector.broadcast %cst_8 : f32 to vector<8x1xf32>
    %14 = arith.divf %12, %13 : vector<8x1xf32>
    %cst_9 = arith.constant 9.99999974E-6 : f32
    %15 = vector.broadcast %cst_9 : f32 to vector<8x1xf32>
    %16 = arith.addf %14, %15 : vector<8x1xf32>
    %17 = math.rsqrt %16 : vector<8x1xf32>
    %18 = vector.broadcast %17 : vector<8x1xf32> to vector<8x384xf32>
    %19 = arith.mulf %9, %18 : vector<8x384xf32>
    %20 = vector.broadcast %2 : vector<1x384xf32> to vector<8x384xf32>
    %21 = arith.mulf %19, %20 : vector<8x384xf32>
    %22 = vector.broadcast %3 : vector<1x384xf32> to vector<8x384xf32>
    %23 = arith.addf %21, %22 : vector<8x384xf32>
    %24 = arith.truncf %23 : vector<8x384xf32> to vector<8x384xbf16>
    %c0_10 = arith.constant 0 : index
    %c0_11 = arith.constant 0 : index
    %25 = vector.load %arg5[%c0_10, %c0_11] : memref<384x384xbf16, #tpu.memory_space<vmem>>, vector<384x384xbf16>
    %cst_12 = arith.constant dense<0.000000e+00> : vector<8x384xf32>
    %26 = tpu.matmul %24, %25, %cst_12 {dimension_numbers = #tpu.dot_dimension_numbers<[1], [0], [0], [1], [0, 0, 1, 1], [], []>} : vector<8x384xbf16>, vector<384x384xbf16>, vector<8x384xf32> -> vector<8x384xf32>
    %cst_13 = arith.constant 1.250000e-01 : f32
    %27 = vector.broadcast %cst_13 : f32 to vector<8x384xf32>
    %28 = arith.mulf %26, %27 : vector<8x384xf32>
    %29 = arith.truncf %28 : vector<8x384xf32> to vector<8x384xbf16>
    %c0_14 = arith.constant 0 : index
    %c0_15 = arith.constant 0 : index
    %30 = vector.load %arg6[%c0_14, %c0_15] : memref<384x384xbf16, #tpu.memory_space<vmem>>, vector<384x384xbf16>
    %cst_16 = arith.constant dense<0.000000e+00> : vector<8x384xf32>
    %31 = tpu.matmul %24, %30, %cst_16 {dimension_numbers = #tpu.dot_dimension_numbers<[1], [0], [0], [1], [0, 0, 1, 1], [], []>} : vector<8x384xbf16>, vector<384x384xbf16>, vector<8x384xf32> -> vector<8x384xf32>
    %32 = arith.truncf %31 : vector<8x384xf32> to vector<8x384xbf16>
    %c0_17 = arith.constant 0 : index
    %c0_18 = arith.constant 0 : index
    %33 = vector.load %arg7[%c0_17, %c0_18] : memref<384x384xbf16, #tpu.memory_space<vmem>>, vector<384x384xbf16>
    %cst_19 = arith.constant dense<0.000000e+00> : vector<8x384xf32>
    %34 = tpu.matmul %24, %33, %cst_19 {dimension_numbers = #tpu.dot_dimension_numbers<[1], [0], [0], [1], [0, 0, 1, 1], [], []>} : vector<8x384xbf16>, vector<384x384xbf16>, vector<8x384xf32> -> vector<8x384xf32>
    %35 = arith.truncf %34 : vector<8x384xf32> to vector<8x384xbf16>
    %c0_20 = arith.constant 0 : index
    %c0_21 = arith.constant 0 : index
    %36 = vector.load %arg2[%c0_20, %c0_21] : memref<8x8xf32, #tpu.memory_space<vmem>>, vector<8x8xf32>
    %37 = vector.extract_strided_slice %29 {offsets = [0, 0], sizes = [8, 64], strides = [1, 1]} : vector<8x384xbf16> to vector<8x64xbf16>
    %38 = vector.extract_strided_slice %32 {offsets = [0, 0], sizes = [8, 64], strides = [1, 1]} : vector<8x384xbf16> to vector<8x64xbf16>
    %39 = vector.extract_strided_slice %35 {offsets = [0, 0], sizes = [8, 64], strides = [1, 1]} : vector<8x384xbf16> to vector<8x64xbf16>
    %cst_22 = arith.constant dense<0.000000e+00> : vector<8x8xf32>
    %40 = tpu.matmul %37, %38, %cst_22 {dimension_numbers = #tpu.dot_dimension_numbers<[1], [1], [0], [0], [0, 0, 1, 0], [], []>} : vector<8x64xbf16>, vector<8x64xbf16>, vector<8x8xf32> -> vector<8x8xf32>
    %41 = arith.addf %40, %36 : vector<8x8xf32>
    %cst_23 = arith.constant dense<0xFF800000> : vector<8xf32>
    %42 = vector.multi_reduction <maximumf>, %41, %cst_23 [1] : vector<8x8xf32> to vector<8xf32>
    %43 = vector.shape_cast %42 : vector<8xf32> to vector<8x1xf32>
    %44 = vector.broadcast %43 : vector<8x1xf32> to vector<8x8xf32>
    %45 = arith.subf %41, %44 : vector<8x8xf32>
    %46 = math.exp %45 : vector<8x8xf32>
    %cst_24 = arith.constant dense<0.000000e+00> : vector<8xf32>
    %47 = vector.multi_reduction <add>, %46, %cst_24 [1] : vector<8x8xf32> to vector<8xf32>
    %48 = vector.shape_cast %47 : vector<8xf32> to vector<8x1xf32>
    %49 = tpu.reciprocal %48 {approx = true} : vector<8x1xf32> -> vector<8x1xf32>
    %50 = vector.broadcast %49 : vector<8x1xf32> to vector<8x8xf32>
    %51 = arith.mulf %46, %50 : vector<8x8xf32>
    %52 = arith.truncf %51 : vector<8x8xf32> to vector<8x8xbf16>
    %cst_25 = arith.constant dense<0.000000e+00> : vector<8x64xf32>
    %53 = tpu.matmul %52, %39, %cst_25 {dimension_numbers = #tpu.dot_dimension_numbers<[1], [0], [0], [1], [0, 0, 1, 1], [], []>} : vector<8x8xbf16>, vector<8x64xbf16>, vector<8x64xf32> -> vector<8x64xf32>
    %c0_26 = arith.constant 0 : index
    %c0_27 = arith.constant 0 : index
    %54 = vector.load %arg17[%c0_26, %c0_27] : memref<8x384xf32, #tpu.memory_space<vmem>>, vector<8x64xf32>
    tpu.vector_store %arg17[%c0_26, %c0_27], %53 {strides = array<i32>} : memref<8x384xf32, #tpu.memory_space<vmem>>, vector<8x64xf32>,
    %55 = vector.extract_strided_slice %29 {offsets = [0, 64], sizes = [8, 64], strides = [1, 1]} : vector<8x384xbf16> to vector<8x64xbf16>
    %56 = vector.extract_strided_slice %32 {offsets = [0, 64], sizes = [8, 64], strides = [1, 1]} : vector<8x384xbf16> to vector<8x64xbf16>
    %57 = vector.extract_strided_slice %35 {offsets = [0, 64], sizes = [8, 64], strides = [1, 1]} : vector<8x384xbf16> to vector<8x64xbf16>
    %cst_28 = arith.constant dense<0.000000e+00> : vector<8x8xf32>
    %58 = tpu.matmul %55, %56, %cst_28 {dimension_numbers = #tpu.dot_dimension_numbers<[1], [1], [0], [0], [0, 0, 1, 0], [], []>} : vector<8x64xbf16>, vector<8x64xbf16>, vector<8x8xf32> -> vector<8x8xf32>
    %59 = arith.addf %58, %36 : vector<8x8xf32>
    %cst_29 = arith.constant dense<0xFF800000> : vector<8xf32>
    %60 = vector.multi_reduction <maximumf>, %59, %cst_29 [1] : vector<8x8xf32> to vector<8xf32>
    %61 = vector.shape_cast %60 : vector<8xf32> to vector<8x1xf32>
    %62 = vector.broadcast %61 : vector<8x1xf32> to vector<8x8xf32>
    %63 = arith.subf %59, %62 : vector<8x8xf32>
    %64 = math.exp %63 : vector<8x8xf32>
    %cst_30 = arith.constant dense<0.000000e+00> : vector<8xf32>
    %65 = vector.multi_reduction <add>, %64, %cst_30 [1] : vector<8x8xf32> to vector<8xf32>
    %66 = vector.shape_cast %65 : vector<8xf32> to vector<8x1xf32>
    %67 = tpu.reciprocal %66 {approx = true} : vector<8x1xf32> -> vector<8x1xf32>
    %68 = vector.broadcast %67 : vector<8x1xf32> to vector<8x8xf32>
    %69 = arith.mulf %64, %68 : vector<8x8xf32>
    %70 = arith.truncf %69 : vector<8x8xf32> to vector<8x8xbf16>
    %cst_31 = arith.constant dense<0.000000e+00> : vector<8x64xf32>
    %71 = tpu.matmul %70, %57, %cst_31 {dimension_numbers = #tpu.dot_dimension_numbers<[1], [0], [0], [1], [0, 0, 1, 1], [], []>} : vector<8x8xbf16>, vector<8x64xbf16>, vector<8x64xf32> -> vector<8x64xf32>
    %c0_32 = arith.constant 0 : index
    %c64 = arith.constant 64 : index
    %72 = vector.load %arg17[%c0_32, %c64] : memref<8x384xf32, #tpu.memory_space<vmem>>, vector<8x64xf32>
    tpu.vector_store %arg17[%c0_32, %c64], %71 {strides = array<i32>} : memref<8x384xf32, #tpu.memory_space<vmem>>, vector<8x64xf32>,
    %73 = vector.extract_strided_slice %29 {offsets = [0, 128], sizes = [8, 64], strides = [1, 1]} : vector<8x384xbf16> to vector<8x64xbf16>
    %74 = vector.extract_strided_slice %32 {offsets = [0, 128], sizes = [8, 64], strides = [1, 1]} : vector<8x384xbf16> to vector<8x64xbf16>
    %75 = vector.extract_strided_slice %35 {offsets = [0, 128], sizes = [8, 64], strides = [1, 1]} : vector<8x384xbf16> to vector<8x64xbf16>
    %cst_33 = arith.constant dense<0.000000e+00> : vector<8x8xf32>
    %76 = tpu.matmul %73, %74, %cst_33 {dimension_numbers = #tpu.dot_dimension_numbers<[1], [1], [0], [0], [0, 0, 1, 0], [], []>} : vector<8x64xbf16>, vector<8x64xbf16>, vector<8x8xf32> -> vector<8x8xf32>
    %77 = arith.addf %76, %36 : vector<8x8xf32>
    %cst_34 = arith.constant dense<0xFF800000> : vector<8xf32>
    %78 = vector.multi_reduction <maximumf>, %77, %cst_34 [1] : vector<8x8xf32> to vector<8xf32>
    %79 = vector.shape_cast %78 : vector<8xf32> to vector<8x1xf32>
    %80 = vector.broadcast %79 : vector<8x1xf32> to vector<8x8xf32>
    %81 = arith.subf %77, %80 : vector<8x8xf32>
    %82 = math.exp %81 : vector<8x8xf32>
    %cst_35 = arith.constant dense<0.000000e+00> : vector<8xf32>
    %83 = vector.multi_reduction <add>, %82, %cst_35 [1] : vector<8x8xf32> to vector<8xf32>
    %84 = vector.shape_cast %83 : vector<8xf32> to vector<8x1xf32>
    %85 = tpu.reciprocal %84 {approx = true} : vector<8x1xf32> -> vector<8x1xf32>
    %86 = vector.broadcast %85 : vector<8x1xf32> to vector<8x8xf32>
    %87 = arith.mulf %82, %86 : vector<8x8xf32>
    %88 = arith.truncf %87 : vector<8x8xf32> to vector<8x8xbf16>
    %cst_36 = arith.constant dense<0.000000e+00> : vector<8x64xf32>
    %89 = tpu.matmul %88, %75, %cst_36 {dimension_numbers = #tpu.dot_dimension_numbers<[1], [0], [0], [1], [0, 0, 1, 1], [], []>} : vector<8x8xbf16>, vector<8x64xbf16>, vector<8x64xf32> -> vector<8x64xf32>
    %c0_37 = arith.constant 0 : index
    %c128 = arith.constant 128 : index
    %90 = vector.load %arg17[%c0_37, %c128] : memref<8x384xf32, #tpu.memory_space<vmem>>, vector<8x64xf32>
    tpu.vector_store %arg17[%c0_37, %c128], %89 {strides = array<i32>} : memref<8x384xf32, #tpu.memory_space<vmem>>, vector<8x64xf32>,
    %91 = vector.extract_strided_slice %29 {offsets = [0, 192], sizes = [8, 64], strides = [1, 1]} : vector<8x384xbf16> to vector<8x64xbf16>
    %92 = vector.extract_strided_slice %32 {offsets = [0, 192], sizes = [8, 64], strides = [1, 1]} : vector<8x384xbf16> to vector<8x64xbf16>
    %93 = vector.extract_strided_slice %35 {offsets = [0, 192], sizes = [8, 64], strides = [1, 1]} : vector<8x384xbf16> to vector<8x64xbf16>
    %cst_38 = arith.constant dense<0.000000e+00> : vector<8x8xf32>
    %94 = tpu.matmul %91, %92, %cst_38 {dimension_numbers = #tpu.dot_dimension_numbers<[1], [1], [0], [0], [0, 0, 1, 0], [], []>} : vector<8x64xbf16>, vector<8x64xbf16>, vector<8x8xf32> -> vector<8x8xf32>
    %95 = arith.addf %94, %36 : vector<8x8xf32>
    %cst_39 = arith.constant dense<0xFF800000> : vector<8xf32>
    %96 = vector.multi_reduction <maximumf>, %95, %cst_39 [1] : vector<8x8xf32> to vector<8xf32>
    %97 = vector.shape_cast %96 : vector<8xf32> to vector<8x1xf32>
    %98 = vector.broadcast %97 : vector<8x1xf32> to vector<8x8xf32>
    %99 = arith.subf %95, %98 : vector<8x8xf32>
    %100 = math.exp %99 : vector<8x8xf32>
    %cst_40 = arith.constant dense<0.000000e+00> : vector<8xf32>
    %101 = vector.multi_reduction <add>, %100, %cst_40 [1] : vector<8x8xf32> to vector<8xf32>
    %102 = vector.shape_cast %101 : vector<8xf32> to vector<8x1xf32>
    %103 = tpu.reciprocal %102 {approx = true} : vector<8x1xf32> -> vector<8x1xf32>
    %104 = vector.broadcast %103 : vector<8x1xf32> to vector<8x8xf32>
    %105 = arith.mulf %100, %104 : vector<8x8xf32>
    %106 = arith.truncf %105 : vector<8x8xf32> to vector<8x8xbf16>
    %cst_41 = arith.constant dense<0.000000e+00> : vector<8x64xf32>
    %107 = tpu.matmul %106, %93, %cst_41 {dimension_numbers = #tpu.dot_dimension_numbers<[1], [0], [0], [1], [0, 0, 1, 1], [], []>} : vector<8x8xbf16>, vector<8x64xbf16>, vector<8x64xf32> -> vector<8x64xf32>
    %c0_42 = arith.constant 0 : index
    %c192 = arith.constant 192 : index
    %108 = vector.load %arg17[%c0_42, %c192] : memref<8x384xf32, #tpu.memory_space<vmem>>, vector<8x64xf32>
    tpu.vector_store %arg17[%c0_42, %c192], %107 {strides = array<i32>} : memref<8x384xf32, #tpu.memory_space<vmem>>, vector<8x64xf32>,
    %109 = vector.extract_strided_slice %29 {offsets = [0, 256], sizes = [8, 64], strides = [1, 1]} : vector<8x384xbf16> to vector<8x64xbf16>
    %110 = vector.extract_strided_slice %32 {offsets = [0, 256], sizes = [8, 64], strides = [1, 1]} : vector<8x384xbf16> to vector<8x64xbf16>
    %111 = vector.extract_strided_slice %35 {offsets = [0, 256], sizes = [8, 64], strides = [1, 1]} : vector<8x384xbf16> to vector<8x64xbf16>
    %cst_43 = arith.constant dense<0.000000e+00> : vector<8x8xf32>
    %112 = tpu.matmul %109, %110, %cst_43 {dimension_numbers = #tpu.dot_dimension_numbers<[1], [1], [0], [0], [0, 0, 1, 0], [], []>} : vector<8x64xbf16>, vector<8x64xbf16>, vector<8x8xf32> -> vector<8x8xf32>
    %113 = arith.addf %112, %36 : vector<8x8xf32>
    %cst_44 = arith.constant dense<0xFF800000> : vector<8xf32>
    %114 = vector.multi_reduction <maximumf>, %113, %cst_44 [1] : vector<8x8xf32> to vector<8xf32>
    %115 = vector.shape_cast %114 : vector<8xf32> to vector<8x1xf32>
    %116 = vector.broadcast %115 : vector<8x1xf32> to vector<8x8xf32>
    %117 = arith.subf %113, %116 : vector<8x8xf32>
    %118 = math.exp %117 : vector<8x8xf32>
    %cst_45 = arith.constant dense<0.000000e+00> : vector<8xf32>
    %119 = vector.multi_reduction <add>, %118, %cst_45 [1] : vector<8x8xf32> to vector<8xf32>
    %120 = vector.shape_cast %119 : vector<8xf32> to vector<8x1xf32>
    %121 = tpu.reciprocal %120 {approx = true} : vector<8x1xf32> -> vector<8x1xf32>
    %122 = vector.broadcast %121 : vector<8x1xf32> to vector<8x8xf32>
    %123 = arith.mulf %118, %122 : vector<8x8xf32>
    %124 = arith.truncf %123 : vector<8x8xf32> to vector<8x8xbf16>
    %cst_46 = arith.constant dense<0.000000e+00> : vector<8x64xf32>
    %125 = tpu.matmul %124, %111, %cst_46 {dimension_numbers = #tpu.dot_dimension_numbers<[1], [0], [0], [1], [0, 0, 1, 1], [], []>} : vector<8x8xbf16>, vector<8x64xbf16>, vector<8x64xf32> -> vector<8x64xf32>
    %c0_47 = arith.constant 0 : index
    %c256 = arith.constant 256 : index
    %126 = vector.load %arg17[%c0_47, %c256] : memref<8x384xf32, #tpu.memory_space<vmem>>, vector<8x64xf32>
    tpu.vector_store %arg17[%c0_47, %c256], %125 {strides = array<i32>} : memref<8x384xf32, #tpu.memory_space<vmem>>, vector<8x64xf32>,
    %127 = vector.extract_strided_slice %29 {offsets = [0, 320], sizes = [8, 64], strides = [1, 1]} : vector<8x384xbf16> to vector<8x64xbf16>
    %128 = vector.extract_strided_slice %32 {offsets = [0, 320], sizes = [8, 64], strides = [1, 1]} : vector<8x384xbf16> to vector<8x64xbf16>
    %129 = vector.extract_strided_slice %35 {offsets = [0, 320], sizes = [8, 64], strides = [1, 1]} : vector<8x384xbf16> to vector<8x64xbf16>
    %cst_48 = arith.constant dense<0.000000e+00> : vector<8x8xf32>
    %130 = tpu.matmul %127, %128, %cst_48 {dimension_numbers = #tpu.dot_dimension_numbers<[1], [1], [0], [0], [0, 0, 1, 0], [], []>} : vector<8x64xbf16>, vector<8x64xbf16>, vector<8x8xf32> -> vector<8x8xf32>
    %131 = arith.addf %130, %36 : vector<8x8xf32>
    %cst_49 = arith.constant dense<0xFF800000> : vector<8xf32>
    %132 = vector.multi_reduction <maximumf>, %131, %cst_49 [1] : vector<8x8xf32> to vector<8xf32>
    %133 = vector.shape_cast %132 : vector<8xf32> to vector<8x1xf32>
    %134 = vector.broadcast %133 : vector<8x1xf32> to vector<8x8xf32>
    %135 = arith.subf %131, %134 : vector<8x8xf32>
    %136 = math.exp %135 : vector<8x8xf32>
    %cst_50 = arith.constant dense<0.000000e+00> : vector<8xf32>
    %137 = vector.multi_reduction <add>, %136, %cst_50 [1] : vector<8x8xf32> to vector<8xf32>
    %138 = vector.shape_cast %137 : vector<8xf32> to vector<8x1xf32>
    %139 = tpu.reciprocal %138 {approx = true} : vector<8x1xf32> -> vector<8x1xf32>
    %140 = vector.broadcast %139 : vector<8x1xf32> to vector<8x8xf32>
    %141 = arith.mulf %136, %140 : vector<8x8xf32>
    %142 = arith.truncf %141 : vector<8x8xf32> to vector<8x8xbf16>
    %cst_51 = arith.constant dense<0.000000e+00> : vector<8x64xf32>
    %143 = tpu.matmul %142, %129, %cst_51 {dimension_numbers = #tpu.dot_dimension_numbers<[1], [0], [0], [1], [0, 0, 1, 1], [], []>} : vector<8x8xbf16>, vector<8x64xbf16>, vector<8x64xf32> -> vector<8x64xf32>
    %c0_52 = arith.constant 0 : index
    %c320 = arith.constant 320 : index
    %144 = vector.load %arg17[%c0_52, %c320] : memref<8x384xf32, #tpu.memory_space<vmem>>, vector<8x64xf32>
    tpu.vector_store %arg17[%c0_52, %c320], %143 {strides = array<i32>} : memref<8x384xf32, #tpu.memory_space<vmem>>, vector<8x64xf32>,
    %c0_53 = arith.constant 0 : index
    %c0_54 = arith.constant 0 : index
    %145 = vector.load %arg17[%c0_53, %c0_54] : memref<8x384xf32, #tpu.memory_space<vmem>>, vector<8x384xf32>
    %146 = arith.truncf %145 : vector<8x384xf32> to vector<8x384xbf16>
    %c0_55 = arith.constant 0 : index
    %c0_56 = arith.constant 0 : index
    %147 = vector.load %arg8[%c0_55, %c0_56] : memref<384x384xbf16, #tpu.memory_space<vmem>>, vector<384x384xbf16>
    %cst_57 = arith.constant dense<0.000000e+00> : vector<8x384xf32>
    %148 = tpu.matmul %146, %147, %cst_57 {dimension_numbers = #tpu.dot_dimension_numbers<[1], [0], [0], [1], [0, 0, 1, 1], [], []>} : vector<8x384xbf16>, vector<384x384xbf16>, vector<8x384xf32> -> vector<8x384xf32>
    %c0_58 = arith.constant 0 : index
    %c0_59 = arith.constant 0 : index
    %149 = vector.load %arg9[%c0_58, %c0_59] : memref<1x384xf32, #tpu.memory_space<vmem>>, vector<1x384xf32>
    %150 = vector.broadcast %149 : vector<1x384xf32> to vector<8x384xf32>
    %151 = arith.addf %148, %150 : vector<8x384xf32>
    %152 = arith.addf %1, %151 : vector<8x384xf32>
    %c0_60 = arith.constant 0 : index
    %c0_61 = arith.constant 0 : index
    %153 = vector.load %arg10[%c0_60, %c0_61] : memref<1x384xf32, #tpu.memory_space<vmem>>, vector<1x384xf32>
    %c0_62 = arith.constant 0 : index
    %c0_63 = arith.constant 0 : index
    %154 = vector.load %arg11[%c0_62, %c0_63] : memref<1x384xf32, #tpu.memory_space<vmem>>, vector<1x384xf32>
    %cst_64 = arith.constant dense<0.000000e+00> : vector<8xf32>
    %155 = vector.multi_reduction <add>, %152, %cst_64 [1] : vector<8x384xf32> to vector<8xf32>
    %156 = vector.shape_cast %155 : vector<8xf32> to vector<8x1xf32>
    %cst_65 = arith.constant 3.840000e+02 : f32
    %157 = vector.broadcast %cst_65 : f32 to vector<8x1xf32>
    %158 = arith.divf %156, %157 : vector<8x1xf32>
    %159 = vector.broadcast %158 : vector<8x1xf32> to vector<8x384xf32>
    %160 = arith.subf %152, %159 : vector<8x384xf32>
    %161 = arith.mulf %160, %160 : vector<8x384xf32>
    %cst_66 = arith.constant dense<0.000000e+00> : vector<8xf32>
    %162 = vector.multi_reduction <add>, %161, %cst_66 [1] : vector<8x384xf32> to vector<8xf32>
    %163 = vector.shape_cast %162 : vector<8xf32> to vector<8x1xf32>
    %cst_67 = arith.constant 3.840000e+02 : f32
    %164 = vector.broadcast %cst_67 : f32 to vector<8x1xf32>
    %165 = arith.divf %163, %164 : vector<8x1xf32>
    %cst_68 = arith.constant 9.99999974E-6 : f32
    %166 = vector.broadcast %cst_68 : f32 to vector<8x1xf32>
    %167 = arith.addf %165, %166 : vector<8x1xf32>
    %168 = math.rsqrt %167 : vector<8x1xf32>
    %169 = vector.broadcast %168 : vector<8x1xf32> to vector<8x384xf32>
    %170 = arith.mulf %160, %169 : vector<8x384xf32>
    %171 = vector.broadcast %153 : vector<1x384xf32> to vector<8x384xf32>
    %172 = arith.mulf %170, %171 : vector<8x384xf32>
    %173 = vector.broadcast %154 : vector<1x384xf32> to vector<8x384xf32>
    %174 = arith.addf %172, %173 : vector<8x384xf32>
    %175 = arith.truncf %174 : vector<8x384xf32> to vector<8x384xbf16>
    %c0_69 = arith.constant 0 : index
    %c0_70 = arith.constant 0 : index
    %176 = vector.load %arg12[%c0_69, %c0_70] : memref<384x1536xbf16, #tpu.memory_space<vmem>>, vector<384x1536xbf16>
    %cst_71 = arith.constant dense<0.000000e+00> : vector<8x1536xf32>
    %177 = tpu.matmul %175, %176, %cst_71 {dimension_numbers = #tpu.dot_dimension_numbers<[1], [0], [0], [1], [0, 0, 1, 1], [], []>} : vector<8x384xbf16>, vector<384x1536xbf16>, vector<8x1536xf32> -> vector<8x1536xf32>
    %c0_72 = arith.constant 0 : index
    %c0_73 = arith.constant 0 : index
    %178 = vector.load %arg13[%c0_72, %c0_73] : memref<1x1536xf32, #tpu.memory_space<vmem>>, vector<1x1536xf32>
    %179 = vector.broadcast %178 : vector<1x1536xf32> to vector<8x1536xf32>
    %180 = arith.addf %177, %179 : vector<8x1536xf32>
    %cst_74 = arith.constant 0.000000e+00 : f32
    %181 = vector.broadcast %cst_74 : f32 to vector<8x1536xf32>
    %182 = arith.maximumf %180, %181 : vector<8x1536xf32>
    %183 = arith.truncf %182 : vector<8x1536xf32> to vector<8x1536xbf16>
    %c0_75 = arith.constant 0 : index
    %c0_76 = arith.constant 0 : index
    %184 = vector.load %arg14[%c0_75, %c0_76] : memref<1536x384xbf16, #tpu.memory_space<vmem>>, vector<1536x384xbf16>
    %cst_77 = arith.constant dense<0.000000e+00> : vector<8x384xf32>
    %185 = tpu.matmul %183, %184, %cst_77 {dimension_numbers = #tpu.dot_dimension_numbers<[1], [0], [0], [1], [0, 0, 1, 1], [], []>} : vector<8x1536xbf16>, vector<1536x384xbf16>, vector<8x384xf32> -> vector<8x384xf32>
    %c0_78 = arith.constant 0 : index
    %c0_79 = arith.constant 0 : index
    %186 = vector.load %arg15[%c0_78, %c0_79] : memref<1x384xf32, #tpu.memory_space<vmem>>, vector<1x384xf32>
    %187 = vector.broadcast %186 : vector<1x384xf32> to vector<8x384xf32>
    %188 = arith.addf %185, %187 : vector<8x384xf32>
    %189 = arith.addf %152, %188 : vector<8x384xf32>
    %c0_80 = arith.constant 0 : index
    %c0_81 = arith.constant 0 : index
    %c0_82 = arith.constant 0 : index
    %190 = vector.load %arg16[%c0_80, %c0_81, %c0_82] : memref<1x8x384xf32, #tpu.memory_space<vmem>>, vector<1x8x384xf32>
    %191 = vector.shape_cast %190 : vector<1x8x384xf32> to vector<8x384xf32>
    %192 = vector.shape_cast %189 : vector<8x384xf32> to vector<1x8x384xf32>
    tpu.vector_store %arg16[%c0_80, %c0_81, %c0_82], %192 {strides = array<i32>} : memref<1x8x384xf32, #tpu.memory_space<vmem>>, vector<1x8x384xf32>,
    return
  }
  func.func @transform_0(%arg0: i32) -> (i32, i32, i32) {
    %c0_i32 = arith.constant 0 : i32
    %c0_i32_0 = arith.constant 0 : i32
    %c0_i32_1 = arith.constant 0 : i32
    return %arg0, %c0_i32, %c0_i32_0 : i32, i32, i32
  }
  func.func @transform_1(%arg0: i32) -> (i32, i32) {
    %c0_i32 = arith.constant 0 : i32
    %c0_i32_0 = arith.constant 0 : i32
    %c0_i32_1 = arith.constant 0 : i32
    return %c0_i32, %c0_i32_0 : i32, i32
  }
  func.func @transform_2(%arg0: i32) -> (i32, i32) {
    %c0_i32 = arith.constant 0 : i32
    %c0_i32_0 = arith.constant 0 : i32
    %c0_i32_1 = arith.constant 0 : i32
    return %c0_i32, %c0_i32_0 : i32, i32
  }
  func.func @transform_3(%arg0: i32) -> (i32, i32) {
    %c0_i32 = arith.constant 0 : i32
    %c0_i32_0 = arith.constant 0 : i32
    %c0_i32_1 = arith.constant 0 : i32
    return %c0_i32, %c0_i32_0 : i32, i32
  }
  func.func @transform_4(%arg0: i32) -> (i32, i32) {
    %c0_i32 = arith.constant 0 : i32
    %c0_i32_0 = arith.constant 0 : i32
    %c0_i32_1 = arith.constant 0 : i32
    return %c0_i32, %c0_i32_0 : i32, i32
  }
  func.func @transform_5(%arg0: i32) -> (i32, i32) {
    %c0_i32 = arith.constant 0 : i32
    %c0_i32_0 = arith.constant 0 : i32
    %c0_i32_1 = arith.constant 0 : i32
    return %c0_i32, %c0_i32_0 : i32, i32
  }
  func.func @transform_6(%arg0: i32) -> (i32, i32) {
    %c0_i32 = arith.constant 0 : i32
    %c0_i32_0 = arith.constant 0 : i32
    %c0_i32_1 = arith.constant 0 : i32
    return %c0_i32, %c0_i32_0 : i32, i32
  }
  func.func @transform_7(%arg0: i32) -> (i32, i32) {
    %c0_i32 = arith.constant 0 : i32
    %c0_i32_0 = arith.constant 0 : i32
    %c0_i32_1 = arith.constant 0 : i32
    return %c0_i32, %c0_i32_0 : i32, i32
  }
  func.func @transform_8(%arg0: i32) -> (i32, i32) {
    %c0_i32 = arith.constant 0 : i32
    %c0_i32_0 = arith.constant 0 : i32
    %c0_i32_1 = arith.constant 0 : i32
    return %c0_i32, %c0_i32_0 : i32, i32
  }
  func.func @transform_9(%arg0: i32) -> (i32, i32) {
    %c0_i32 = arith.constant 0 : i32
    %c0_i32_0 = arith.constant 0 : i32
    %c0_i32_1 = arith.constant 0 : i32
    return %c0_i32, %c0_i32_0 : i32, i32
  }
  func.func @transform_10(%arg0: i32) -> (i32, i32) {
    %c0_i32 = arith.constant 0 : i32
    %c0_i32_0 = arith.constant 0 : i32
    %c0_i32_1 = arith.constant 0 : i32
    return %c0_i32, %c0_i32_0 : i32, i32
  }
  func.func @transform_11(%arg0: i32) -> (i32, i32) {
    %c0_i32 = arith.constant 0 : i32
    %c0_i32_0 = arith.constant 0 : i32
    %c0_i32_1 = arith.constant 0 : i32
    return %c0_i32, %c0_i32_0 : i32, i32
  }
  func.func @transform_12(%arg0: i32) -> (i32, i32) {
    %c0_i32 = arith.constant 0 : i32
    %c0_i32_0 = arith.constant 0 : i32
    %c0_i32_1 = arith.constant 0 : i32
    return %c0_i32, %c0_i32_0 : i32, i32
  }
  func.func @transform_13(%arg0: i32) -> (i32, i32) {
    %c0_i32 = arith.constant 0 : i32
    %c0_i32_0 = arith.constant 0 : i32
    %c0_i32_1 = arith.constant 0 : i32
    return %c0_i32, %c0_i32_0 : i32, i32
  }
  func.func @transform_14(%arg0: i32) -> (i32, i32) {
    %c0_i32 = arith.constant 0 : i32
    %c0_i32_0 = arith.constant 0 : i32
    %c0_i32_1 = arith.constant 0 : i32
    return %c0_i32, %c0_i32_0 : i32, i32
  }
  func.func @transform_15(%arg0: i32) -> (i32, i32, i32) {
    %c0_i32 = arith.constant 0 : i32
    %c0_i32_0 = arith.constant 0 : i32
    %c0_i32_1 = arith.constant 0 : i32
    return %arg0, %c0_i32, %c0_i32_0 : i32, i32, i32
  }
}

</mosaic_0001>

<llo_original>
// kernel: tpu_custom_call.1
$region0: #{tpu_custom_call.1}
  #allocation0 [shape = 'u32[]', space=smem, size = 0x4, offset = 0x4, fixed_abs, tag = 'smem constant byte address 0x4 - core index']
  #allocation1 [shape = 'u32[144,128]{1,0:T(1,128)}', space=vmem, size = 0x12000, scoped, tag = 'internal scratch']
  #allocation2 [shape = 'f32[8,384]{1,0:T(8,128)}', space=vmem, size = 0x3000, scoped, tag = 'scratch operand']
  %s0 = inlined_call_operand.hbm [shape: f32[2,8,384], index: 0, kind: input, shape index: {}]
  %s1 = inlined_call_operand.hbm [shape: f32[8,8], index: 1, kind: input, shape index: {}]
  %s2 = inlined_call_operand.hbm [shape: f32[1,384], index: 2, kind: input, shape index: {}]
  %s3 = inlined_call_operand.hbm [shape: f32[1,384], index: 3, kind: input, shape index: {}]
  %s4 = inlined_call_operand.hbm [shape: bf16[384,384], index: 4, kind: input, shape index: {}]
  %s5 = inlined_call_operand.hbm [shape: bf16[384,384], index: 5, kind: input, shape index: {}]
  %s6 = inlined_call_operand.hbm [shape: bf16[384,384], index: 6, kind: input, shape index: {}]
  %s7 = inlined_call_operand.hbm [shape: bf16[384,384], index: 7, kind: input, shape index: {}]
  %s8 = inlined_call_operand.hbm [shape: f32[1,384], index: 8, kind: input, shape index: {}]
  %s9 = inlined_call_operand.hbm [shape: f32[1,384], index: 9, kind: input, shape index: {}]
  %s10 = inlined_call_operand.hbm [shape: f32[1,384], index: 10, kind: input, shape index: {}]
  %s11 = inlined_call_operand.hbm [shape: bf16[384,1536], index: 11, kind: input, shape index: {}]
  %s12 = inlined_call_operand.hbm [shape: f32[1,1536], index: 12, kind: input, shape index: {}]
  %s13 = inlined_call_operand.hbm [shape: bf16[1536,384], index: 13, kind: input, shape index: {}]
  %s14 = inlined_call_operand.hbm [shape: f32[1,384], index: 14, kind: input, shape index: {}]
  %s15 = inlined_call_operand.hbm [shape: f32[2,8,384], index: 15, kind: output, shape index: {}]
  %s16 = sld [smem:[#allocation0]]
  $region153: #{tpu_custom_call.1} parent=0
    _
  %s18 = ssub.s32 1, %s16
  %s19 = scalar_select 0, %s18, %s16
  $region1: #{tpu_custom_call.1} parent=0
    #allocation3 [shape = 'u8[24576]{0}', space=vmem, size = 0x6000, scoped, tag = 'input window, operand 0']
    #allocation4 [shape = 's32[2]{0}', space=sflag, size = 0x8, scoped, tag = 'scoped memory for tpu_custom_call.1']
    #allocation5 [shape = 's32[2]{0}', space=sflag, size = 0x8, scoped, tag = 'scoped memory for tpu_custom_call.1']
    #allocation6 [shape = 'u8[4096]{0}', space=vmem, size = 0x1000, scoped, tag = 'input window, operand 1, single buffered']
    #allocation7 [shape = 's32[1]{0}', space=sflag, size = 0x4, scoped, tag = 'scoped memory for tpu_custom_call.1']
    #allocation8 [shape = 'u8[1536]{0}', space=vmem, size = 0x800, scoped, tag = 'input window, operand 2, single buffered']
    #allocation9 [shape = 'u8[1536]{0}', space=vmem, size = 0x800, scoped, tag = 'input window, operand 3, single buffered']
    #allocation10 [shape = 's32[1]{0}', space=sflag, size = 0x4, scoped, tag = 'scoped memory for tpu_custom_call.1']
    #allocation11 [shape = 'u8[294912]{0}', space=vmem, size = 0x48000, scoped, tag = 'input window, operand 4, single buffered']
    #allocation12 [shape = 'u8[294912]{0}', space=vmem, size = 0x48000, scoped, tag = 'input window, operand 5, single buffered']
    #allocation13 [shape = 's32[1]{0}', space=sflag, size = 0x4, scoped, tag = 'scoped memory for tpu_custom_call.1']
    #allocation14 [shape = 'u8[294912]{0}', space=vmem, size = 0x48000, scoped, tag = 'input window, operand 6, single buffered']
    #allocation15 [shape = 'u8[294912]{0}', space=vmem, size = 0x48000, scoped, tag = 'input window, operand 7, single buffered']
    #allocation16 [shape = 's32[1]{0}', space=sflag, size = 0x4, scoped, tag = 'scoped memory for tpu_custom_call.1']
    #allocation17 [shape = 'u8[1536]{0}', space=vmem, size = 0x800, scoped, tag = 'input window, operand 8, single buffered']
    #allocation18 [shape = 'u8[1536]{0}', space=vmem, size = 0x800, scoped, tag = 'input window, operand 9, single buffered']
    #allocation19 [shape = 's32[1]{0}', space=sflag, size = 0x4, scoped, tag = 'scoped memory for tpu_custom_call.1']
    #allocation20 [shape = 'u8[1536]{0}', space=vmem, size = 0x800, scoped, tag = 'input window, operand 10, single buffered']
    #allocation21 [shape = 'u8[1179648]{0}', space=vmem, size = 0x120000, scoped, tag = 'input window, operand 11, single buffered']
    #allocation22 [shape = 's32[1]{0}', space=sflag, size = 0x4, scoped, tag = 'scoped memory for tpu_custom_call.1']
    #allocation23 [shape = 'u8[6144]{0}', space=vmem, size = 0x1800, scoped, tag = 'input window, operand 12, single buffered']
    #allocation24 [shape = 'u8[1179648]{0}', space=vmem, size = 0x120000, scoped, tag = 'input window, operand 13, single buffered']
    #allocation25 [shape = 's32[1]{0}', space=sflag, size = 0x4, scoped, tag = 'scoped memory for tpu_custom_call.1']
    #allocation26 [shape = 'u8[1536]{0}', space=vmem, size = 0x800, scoped, tag = 'input window, operand 14, single buffered']
    #allocation27 [shape = 'u8[24576]{0}', space=vmem, size = 0x6000, scoped, tag = 'output window, operand 0']
    %20 = vsyncpa [#allocation4], 0
    %s21 = scalar_lea.sflag [#allocation4], 1
    %22 = vsyncpa %s21, 0
    %23 = vsyncpa [#allocation7], 0
    %24 = vsyncpa [#allocation10], 0
    %25 = vsyncpa [#allocation13], 0
    %26 = vsyncpa [#allocation16], 0
    %27 = vsyncpa [#allocation19], 0
    %28 = vsyncpa [#allocation22], 0
    %29 = vsyncpa [#allocation25], 0
    %30 = vsyncpa [#allocation5], 0
    %s31 = scalar_lea.sflag [#allocation5], 1
    %32 = vsyncpa %s31, 0
    loop: start=0, step=1, limit=4
    $region2: #{tpu_custom_call.1} parent=1 // loop_pre_header
      _
    $region3: #{tpu_custom_call.1} parent=1 // loop_header
      %s34 = sphi 0, %s38
      %p35 = scmp.ge.s32.totalorder %s34, 4
      %s44 = sphi 0, %s46
      %s47 = sphi 0, %s44
      %s48 = sphi 0, %s47
      %s64 = sphi 0, %s48
      %s68 = sphi 0, %s68
      %s70 = sphi 0, %s68
      %s71 = sphi 0, %s70
      %s85 = sphi 0, %s71
      %s89 = sphi 0, %s89
      %s91 = sphi 0, %s89
      %s92 = sphi 0, %s91
      %s106 = sphi 0, %s92
      %s110 = sphi 0, %s110
      %s112 = sphi 0, %s110
      %s113 = sphi 0, %s112
      %s127 = sphi 0, %s113
      %s131 = sphi 0, %s131
      %s133 = sphi 0, %s131
      %s134 = sphi 0, %s133
      %s148 = sphi 0, %s134
      %s152 = sphi 0, %s152
      %s154 = sphi 0, %s152
      %s155 = sphi 0, %s154
      %s169 = sphi 0, %s155
      %s173 = sphi 0, %s173
      %s175 = sphi 0, %s173
      %s176 = sphi 0, %s175
      %s190 = sphi 0, %s176
      %s194 = sphi 0, %s194
      %s196 = sphi 0, %s194
      %s197 = sphi 0, %s196
      %s211 = sphi 0, %s197
      %s215 = sphi 0, %s215
      %s217 = sphi 0, %s215
      %s218 = sphi 0, %s217
      %s232 = sphi 0, %s218
      %s236 = sphi 0, %s236
      %s238 = sphi 0, %s236
      %s239 = sphi 0, %s238
      %s253 = sphi 0, %s239
      %s257 = sphi 0, %s257
      %s259 = sphi 0, %s257
      %s260 = sphi 0, %s259
      %s274 = sphi 0, %s260
      %s278 = sphi 0, %s278
      %s280 = sphi 0, %s278
      %s281 = sphi 0, %s280
      %s295 = sphi 0, %s281
      %s299 = sphi 0, %s299
      %s301 = sphi 0, %s299
      %s302 = sphi 0, %s301
      %s316 = sphi 0, %s302
      %s320 = sphi 0, %s320
      %s322 = sphi 0, %s320
      %s323 = sphi 0, %s322
      %s337 = sphi 0, %s323
      %s341 = sphi 0, %s341
      %s343 = sphi 0, %s341
      %s344 = sphi 0, %s343
      %s358 = sphi 0, %s344
      %s364 = sphi 0, %s366
      %s367 = sphi 0, %s364
      %s368 = sphi 0, %s367
      %s384 = sphi 0, %s368
    $region4: #{tpu_custom_call.1} parent=1 // loop_header_branch
      %37 = sbr.rel (%p35) target = $region8
    $region5: #{tpu_custom_call.1} parent=1 // loop_body
      %s39 = ssub.s32 %s34, 1
      %s40 = ssub.s32 %s34, 2
      %s41 = sadd.s32 %s34, 1
      %s42 = ssub.s32 %s34, %s41
      %p43 = scmp.eq.s32.totalorder %s42, 0
      %s45 = sadd.s32 %s44, 1
      %s46 = scalar_select %p43, %s44, %s45
      %p49 = pneg %p43
      %p50 = scmp.eq.s32.totalorder %s34, 1
      %p51 = por %p49, %p50
      %p52 = scmp.ne.s32.totalorder %s44, %s47
      %p53 = scmp.eq.s32.totalorder %s34, 0
      %p54 = por %p52, %p53
      %p55 = scmp.ne.s32.totalorder %s44, %s47
      %p56 = scmp.eq.s32.totalorder %s39, 1
      %p57 = por %p55, %p56
      %p58 = scmp.ne.s32.totalorder %s47, %s48
      %p59 = scmp.eq.s32.totalorder %s39, 0
      %p60 = por %p58, %p59
      %p61 = scmp.ne.s32.totalorder %s47, %s48
      %p62 = scmp.eq.s32.totalorder %s40, 1
      %p63 = por %p61, %p62
      %p65 = scmp.ne.s32.totalorder %s48, %s64
      %p66 = scmp.eq.s32.totalorder %s40, 0
      %p67 = por %p65, %p66
      %s69 = sadd.s32 %s68, 1
      %p72 = scmp.eq.s32.totalorder %s34, 1
      %p73 = scmp.ne.s32.totalorder %s68, %s70
      %p74 = scmp.eq.s32.totalorder %s34, 0
      %p75 = por %p73, %p74
      %p76 = scmp.ne.s32.totalorder %s68, %s70
      %p77 = scmp.eq.s32.totalorder %s39, 1
      %p78 = por %p76, %p77
      %p79 = scmp.ne.s32.totalorder %s70, %s71
      %p80 = scmp.eq.s32.totalorder %s39, 0
      %p81 = por %p79, %p80
      %p82 = scmp.ne.s32.totalorder %s70, %s71
      %p83 = scmp.eq.s32.totalorder %s40, 1
      %p84 = por %p82, %p83
      %p86 = scmp.ne.s32.totalorder %s71, %s85
      %p87 = scmp.eq.s32.totalorder %s40, 0
      %p88 = por %p86, %p87
      %s90 = sadd.s32 %s89, 1
      %p93 = scmp.eq.s32.totalorder %s34, 1
      %p94 = scmp.ne.s32.totalorder %s89, %s91
      %p95 = scmp.eq.s32.totalorder %s34, 0
      %p96 = por %p94, %p95
      %p97 = scmp.ne.s32.totalorder %s89, %s91
      %p98 = scmp.eq.s32.totalorder %s39, 1
      %p99 = por %p97, %p98
      %p100 = scmp.ne.s32.totalorder %s91, %s92
      %p101 = scmp.eq.s32.totalorder %s39, 0
      %p102 = por %p100, %p101
      %p103 = scmp.ne.s32.totalorder %s91, %s92
      %p104 = scmp.eq.s32.totalorder %s40, 1
      %p105 = por %p103, %p104
      %p107 = scmp.ne.s32.totalorder %s92, %s106
      %p108 = scmp.eq.s32.totalorder %s40, 0
      %p109 = por %p107, %p108
      %s111 = sadd.s32 %s110, 1
      %p114 = scmp.eq.s32.totalorder %s34, 1
      %p115 = scmp.ne.s32.totalorder %s110, %s112
      %p116 = scmp.eq.s32.totalorder %s34, 0
      %p117 = por %p115, %p116
      %p118 = scmp.ne.s32.totalorder %s110, %s112
      %p119 = scmp.eq.s32.totalorder %s39, 1
      %p120 = por %p118, %p119
      %p121 = scmp.ne.s32.totalorder %s112, %s113
      %p122 = scmp.eq.s32.totalorder %s39, 0
      %p123 = por %p121, %p122
      %p124 = scmp.ne.s32.totalorder %s112, %s113
      %p125 = scmp.eq.s32.totalorder %s40, 1
      %p126 = por %p124, %p125
      %p128 = scmp.ne.s32.totalorder %s113, %s127
      %p129 = scmp.eq.s32.totalorder %s40, 0
      %p130 = por %p128, %p129
      %s132 = sadd.s32 %s131, 1
      %p135 = scmp.eq.s32.totalorder %s34, 1
      %p136 = scmp.ne.s32.totalorder %s131, %s133
      %p137 = scmp.eq.s32.totalorder %s34, 0
      %p138 = por %p136, %p137
      %p139 = scmp.ne.s32.totalorder %s131, %s133
      %p140 = scmp.eq.s32.totalorder %s39, 1
      %p141 = por %p139, %p140
      %p142 = scmp.ne.s32.totalorder %s133, %s134
      %p143 = scmp.eq.s32.totalorder %s39, 0
      %p144 = por %p142, %p143
      %p145 = scmp.ne.s32.totalorder %s133, %s134
      %p146 = scmp.eq.s32.totalorder %s40, 1
      %p147 = por %p145, %p146
      %p149 = scmp.ne.s32.totalorder %s134, %s148
      %p150 = scmp.eq.s32.totalorder %s40, 0
      %p151 = por %p149, %p150
      %s153 = sadd.s32 %s152, 1
      %p156 = scmp.eq.s32.totalorder %s34, 1
      %p157 = scmp.ne.s32.totalorder %s152, %s154
      %p158 = scmp.eq.s32.totalorder %s34, 0
      %p159 = por %p157, %p158
      %p160 = scmp.ne.s32.totalorder %s152, %s154
      %p161 = scmp.eq.s32.totalorder %s39, 1
      %p162 = por %p160, %p161
      %p163 = scmp.ne.s32.totalorder %s154, %s155
      %p164 = scmp.eq.s32.totalorder %s39, 0
      %p165 = por %p163, %p164
      %p166 = scmp.ne.s32.totalorder %s154, %s155
      %p167 = scmp.eq.s32.totalorder %s40, 1
      %p168 = por %p166, %p167
      %p170 = scmp.ne.s32.totalorder %s155, %s169
      %p171 = scmp.eq.s32.totalorder %s40, 0
      %p172 = por %p170, %p171
      %s174 = sadd.s32 %s173, 1
      %p177 = scmp.eq.s32.totalorder %s34, 1
      %p178 = scmp.ne.s32.totalorder %s173, %s175
      %p179 = scmp.eq.s32.totalorder %s34, 0
      %p180 = por %p178, %p179
      %p181 = scmp.ne.s32.totalorder %s173, %s175
      %p182 = scmp.eq.s32.totalorder %s39, 1
      %p183 = por %p181, %p182
      %p184 = scmp.ne.s32.totalorder %s175, %s176
      %p185 = scmp.eq.s32.totalorder %s39, 0
      %p186 = por %p184, %p185
      %p187 = scmp.ne.s32.totalorder %s175, %s176
      %p188 = scmp.eq.s32.totalorder %s40, 1
      %p189 = por %p187, %p188
      %p191 = scmp.ne.s32.totalorder %s176, %s190
      %p192 = scmp.eq.s32.totalorder %s40, 0
      %p193 = por %p191, %p192
      %s195 = sadd.s32 %s194, 1
      %p198 = scmp.eq.s32.totalorder %s34, 1
      %p199 = scmp.ne.s32.totalorder %s194, %s196
      %p200 = scmp.eq.s32.totalorder %s34, 0
      %p201 = por %p199, %p200
      %p202 = scmp.ne.s32.totalorder %s194, %s196
      %p203 = scmp.eq.s32.totalorder %s39, 1
      %p204 = por %p202, %p203
      %p205 = scmp.ne.s32.totalorder %s196, %s197
      %p206 = scmp.eq.s32.totalorder %s39, 0
      %p207 = por %p205, %p206
      %p208 = scmp.ne.s32.totalorder %s196, %s197
      %p209 = scmp.eq.s32.totalorder %s40, 1
      %p210 = por %p208, %p209
      %p212 = scmp.ne.s32.totalorder %s197, %s211
      %p213 = scmp.eq.s32.totalorder %s40, 0
      %p214 = por %p212, %p213
      %s216 = sadd.s32 %s215, 1
      %p219 = scmp.eq.s32.totalorder %s34, 1
      %p220 = scmp.ne.s32.totalorder %s215, %s217
      %p221 = scmp.eq.s32.totalorder %s34, 0
      %p222 = por %p220, %p221
      %p223 = scmp.ne.s32.totalorder %s215, %s217
      %p224 = scmp.eq.s32.totalorder %s39, 1
      %p225 = por %p223, %p224
      %p226 = scmp.ne.s32.totalorder %s217, %s218
      %p227 = scmp.eq.s32.totalorder %s39, 0
      %p228 = por %p226, %p227
      %p229 = scmp.ne.s32.totalorder %s217, %s218
      %p230 = scmp.eq.s32.totalorder %s40, 1
      %p231 = por %p229, %p230
      %p233 = scmp.ne.s32.totalorder %s218, %s232
      %p234 = scmp.eq.s32.totalorder %s40, 0
      %p235 = por %p233, %p234
      %s237 = sadd.s32 %s236, 1
      %p240 = scmp.eq.s32.totalorder %s34, 1
      %p241 = scmp.ne.s32.totalorder %s236, %s238
      %p242 = scmp.eq.s32.totalorder %s34, 0
      %p243 = por %p241, %p242
      %p244 = scmp.ne.s32.totalorder %s236, %s238
      %p245 = scmp.eq.s32.totalorder %s39, 1
      %p246 = por %p244, %p245
      %p247 = scmp.ne.s32.totalorder %s238, %s239
      %p248 = scmp.eq.s32.totalorder %s39, 0
      %p249 = por %p247, %p248
      %p250 = scmp.ne.s32.totalorder %s238, %s239
      %p251 = scmp.eq.s32.totalorder %s40, 1
      %p252 = por %p250, %p251
      %p254 = scmp.ne.s32.totalorder %s239, %s253
      %p255 = scmp.eq.s32.totalorder %s40, 0
      %p256 = por %p254, %p255
      %s258 = sadd.s32 %s257, 1
      %p261 = scmp.eq.s32.totalorder %s34, 1
      %p262 = scmp.ne.s32.totalorder %s257, %s259
      %p263 = scmp.eq.s32.totalorder %s34, 0
      %p264 = por %p262, %p263
      %p265 = scmp.ne.s32.totalorder %s257, %s259
      %p266 = scmp.eq.s32.totalorder %s39, 1
      %p267 = por %p265, %p266
      %p268 = scmp.ne.s32.totalorder %s259, %s260
      %p269 = scmp.eq.s32.totalorder %s39, 0
      %p270 = por %p268, %p269
      %p271 = scmp.ne.s32.totalorder %s259, %s260
      %p272 = scmp.eq.s32.totalorder %s40, 1
      %p273 = por %p271, %p272
      %p275 = scmp.ne.s32.totalorder %s260, %s274
      %p276 = scmp.eq.s32.totalorder %s40, 0
      %p277 = por %p275, %p276
      %s279 = sadd.s32 %s278, 1
      %p282 = scmp.eq.s32.totalorder %s34, 1
      %p283 = scmp.ne.s32.totalorder %s278, %s280
      %p284 = scmp.eq.s32.totalorder %s34, 0
      %p285 = por %p283, %p284
      %p286 = scmp.ne.s32.totalorder %s278, %s280
      %p287 = scmp.eq.s32.totalorder %s39, 1
      %p288 = por %p286, %p287
      %p289 = scmp.ne.s32.totalorder %s280, %s281
      %p290 = scmp.eq.s32.totalorder %s39, 0
      %p291 = por %p289, %p290
      %p292 = scmp.ne.s32.totalorder %s280, %s281
      %p293 = scmp.eq.s32.totalorder %s40, 1
      %p294 = por %p292, %p293
      %p296 = scmp.ne.s32.totalorder %s281, %s295
      %p297 = scmp.eq.s32.totalorder %s40, 0
      %p298 = por %p296, %p297
      %s300 = sadd.s32 %s299, 1
      %p303 = scmp.eq.s32.totalorder %s34, 1
      %p304 = scmp.ne.s32.totalorder %s299, %s301
      %p305 = scmp.eq.s32.totalorder %s34, 0
      %p306 = por %p304, %p305
      %p307 = scmp.ne.s32.totalorder %s299, %s301
      %p308 = scmp.eq.s32.totalorder %s39, 1
      %p309 = por %p307, %p308
      %p310 = scmp.ne.s32.totalorder %s301, %s302
      %p311 = scmp.eq.s32.totalorder %s39, 0
      %p312 = por %p310, %p311
      %p313 = scmp.ne.s32.totalorder %s301, %s302
      %p314 = scmp.eq.s32.totalorder %s40, 1
      %p315 = por %p313, %p314
      %p317 = scmp.ne.s32.totalorder %s302, %s316
      %p318 = scmp.eq.s32.totalorder %s40, 0
      %p319 = por %p317, %p318
      %s321 = sadd.s32 %s320, 1
      %p324 = scmp.eq.s32.totalorder %s34, 1
      %p325 = scmp.ne.s32.totalorder %s320, %s322
      %p326 = scmp.eq.s32.totalorder %s34, 0
      %p327 = por %p325, %p326
      %p328 = scmp.ne.s32.totalorder %s320, %s322
      %p329 = scmp.eq.s32.totalorder %s39, 1
      %p330 = por %p328, %p329
      %p331 = scmp.ne.s32.totalorder %s322, %s323
      %p332 = scmp.eq.s32.totalorder %s39, 0
      %p333 = por %p331, %p332
      %p334 = scmp.ne.s32.totalorder %s322, %s323
      %p335 = scmp.eq.s32.totalorder %s40, 1
      %p336 = por %p334, %p335
      %p338 = scmp.ne.s32.totalorder %s323, %s337
      %p339 = scmp.eq.s32.totalorder %s40, 0
      %p340 = por %p338, %p339
      %s342 = sadd.s32 %s341, 1
      %p345 = scmp.eq.s32.totalorder %s34, 1
      %p346 = scmp.ne.s32.totalorder %s341, %s343
      %p347 = scmp.eq.s32.totalorder %s34, 0
      %p348 = por %p346, %p347
      %p349 = scmp.ne.s32.totalorder %s341, %s343
      %p350 = scmp.eq.s32.totalorder %s39, 1
      %p351 = por %p349, %p350
      %p352 = scmp.ne.s32.totalorder %s343, %s344
      %p353 = scmp.eq.s32.totalorder %s39, 0
      %p354 = por %p352, %p353
      %p355 = scmp.ne.s32.totalorder %s343, %s344
      %p356 = scmp.eq.s32.totalorder %s40, 1
      %p357 = por %p355, %p356
      %p359 = scmp.ne.s32.totalorder %s344, %s358
      %p360 = scmp.eq.s32.totalorder %s40, 0
      %p361 = por %p359, %p360
      %s362 = ssub.s32 %s34, %s41
      %p363 = scmp.eq.s32.totalorder %s362, 0
      %s365 = sadd.s32 %s364, 1
      %s366 = scalar_select %p363, %s364, %s365
      %p369 = pneg %p363
      %p370 = scmp.eq.s32.totalorder %s34, 1
      %p371 = por %p369, %p370
      %p372 = scmp.ne.s32.totalorder %s364, %s367
      %p373 = scmp.eq.s32.totalorder %s34, 0
      %p374 = por %p372, %p373
      %p375 = scmp.ne.s32.totalorder %s364, %s367
      %p376 = scmp.eq.s32.totalorder %s39, 1
      %p377 = por %p375, %p376
      %p378 = scmp.ne.s32.totalorder %s367, %s368
      %p379 = scmp.eq.s32.totalorder %s39, 0
      %p380 = por %p378, %p379
      %p381 = scmp.ne.s32.totalorder %s367, %s368
      %p382 = scmp.eq.s32.totalorder %s40, 1
      %p383 = por %p381, %p382
      %p385 = scmp.ne.s32.totalorder %s368, %s384
      %p386 = scmp.eq.s32.totalorder %s40, 0
      %p387 = por %p385, %p386
      %p388 = scmp.le.s32.totalorder 1, %s34
      %p389 = scmp.lt.s32.totalorder %s34, 3
      %p390 = pnand %p388, %p389
      %p391 = pneg %p390
      // Predicated region
      $region9: #{tpu_custom_call.1} parent=5 // pred_check
        _
      $region10: #{tpu_custom_call.1} parent=5 // pred_check_branch
        %393 = sbr.rel (%p390) target = $region12
      $region11: #{tpu_custom_call.1} parent=5 // pred_region
        %s394 = ssub.s32 %s34, 1
        // Predicated region
        $region13: #{tpu_custom_call.1} parent=11 // pred_check
          %p395 = pneg %p81
        $region14: #{tpu_custom_call.1} parent=11 // pred_check_branch
          %397 = sbr.rel (%p395) target = $region16
        $region15: #{tpu_custom_call.1} parent=11 // pred_region
          %s399 = ssub.s32 128, 128
          %400 = vsyncadd [#allocation7], %s399
          %s402 = sshll.u32 [#allocation6], 4
          %s403 = int_to_ptr.vmem [resolvable:$true] %s402
          %405 = dma.hbm_to_vmem [thread:$0]  %s1, 128, %s403, [#allocation7]
        $region16: #{tpu_custom_call.1} parent=11 // pred_fallthru
          _
        // Predicated region
        $region17: #{tpu_custom_call.1} parent=11 // pred_check
          %p406 = pneg %p102
        $region18: #{tpu_custom_call.1} parent=11 // pred_check_branch
          %408 = sbr.rel (%p406) target = $region20
        $region19: #{tpu_custom_call.1} parent=11 // pred_region
          %s410 = ssub.s32 48, 48
          %411 = vsyncadd [#allocation7], %s410
          %s413 = sshll.u32 [#allocation8], 4
          %s414 = int_to_ptr.vmem [resolvable:$true] %s413
          %416 = dma.hbm_to_vmem [thread:$0]  %s2, 48, %s414, [#allocation7]
        $region20: #{tpu_custom_call.1} parent=11 // pred_fallthru
          _
        // Predicated region
        $region21: #{tpu_custom_call.1} parent=11 // pred_check
          %p417 = pneg %p123
        $region22: #{tpu_custom_call.1} parent=11 // pred_check_branch
          %419 = sbr.rel (%p417) target = $region24
        $region23: #{tpu_custom_call.1} parent=11 // pred_region
          %s421 = ssub.s32 48, 48
          %422 = vsyncadd [#allocation10], %s421
          %s424 = sshll.u32 [#allocation9], 4
          %s425 = int_to_ptr.vmem [resolvable:$true] %s424
          %427 = dma.hbm_to_vmem [thread:$0]  %s3, 48, %s425, [#allocation10]
        $region24: #{tpu_custom_call.1} parent=11 // pred_fallthru
          _
        // Predicated region
        $region25: #{tpu_custom_call.1} parent=11 // pred_check
          %p428 = pneg %p144
        $region26: #{tpu_custom_call.1} parent=11 // pred_check_branch
          %430 = sbr.rel (%p428) target = $region28
        $region27: #{tpu_custom_call.1} parent=11 // pred_region
          %s432 = ssub.s32 9216, 9216
          %433 = vsyncadd [#allocation10], %s432
          %s434 = sshll.u32 [#allocation11], 4
          %s435 = int_to_ptr.vmem [resolvable:$true] %s434
          %440 = dma.hbm_to_vmem [thread:$0]  %s4, 9216, %s435, [#allocation10], 192, 192, 12
        $region28: #{tpu_custom_call.1} parent=11 // pred_fallthru
          _
        // Predicated region
        $region29: #{tpu_custom_call.1} parent=11 // pred_check
          %p441 = pneg %p165
        $region30: #{tpu_custom_call.1} parent=11 // pred_check_branch
          %443 = sbr.rel (%p441) target = $region32
        $region31: #{tpu_custom_call.1} parent=11 // pred_region
          %s445 = ssub.s32 9216, 9216
          %446 = vsyncadd [#allocation13], %s445
          %s447 = sshll.u32 [#allocation12], 4
          %s448 = int_to_ptr.vmem [resolvable:$true] %s447
          %453 = dma.hbm_to_vmem [thread:$0]  %s5, 9216, %s448, [#allocation13], 192, 192, 12
        $region32: #{tpu_custom_call.1} parent=11 // pred_fallthru
          _
        // Predicated region
        $region33: #{tpu_custom_call.1} parent=11 // pred_check
          %p454 = pneg %p186
        $region34: #{tpu_custom_call.1} parent=11 // pred_check_branch
          %456 = sbr.rel (%p454) target = $region36
        $region35: #{tpu_custom_call.1} parent=11 // pred_region
          %s458 = ssub.s32 9216, 9216
          %459 = vsyncadd [#allocation13], %s458
          %s460 = sshll.u32 [#allocation14], 4
          %s461 = int_to_ptr.vmem [resolvable:$true] %s460
          %466 = dma.hbm_to_vmem [thread:$0]  %s6, 9216, %s461, [#allocation13], 192, 192, 12
        $region36: #{tpu_custom_call.1} parent=11 // pred_fallthru
          _
        // Predicated region
        $region37: #{tpu_custom_call.1} parent=11 // pred_check
          %p467 = pneg %p207
        $region38: #{tpu_custom_call.1} parent=11 // pred_check_branch
          %469 = sbr.rel (%p467) target = $region40
        $region39: #{tpu_custom_call.1} parent=11 // pred_region
          %s471 = ssub.s32 9216, 9216
          %472 = vsyncadd [#allocation16], %s471
          %s473 = sshll.u32 [#allocation15], 4
          %s474 = int_to_ptr.vmem [resolvable:$true] %s473
          %479 = dma.hbm_to_vmem [thread:$0]  %s7, 9216, %s474, [#allocation16], 192, 192, 12
        $region40: #{tpu_custom_call.1} parent=11 // pred_fallthru
          _
        // Predicated region
        $region41: #{tpu_custom_call.1} parent=11 // pred_check
          %p480 = pneg %p228
        $region42: #{tpu_custom_call.1} parent=11 // pred_check_branch
          %482 = sbr.rel (%p480) target = $region44
        $region43: #{tpu_custom_call.1} parent=11 // pred_region
          %s484 = ssub.s32 48, 48
          %485 = vsyncadd [#allocation16], %s484
          %s487 = sshll.u32 [#allocation17], 4
          %s488 = int_to_ptr.vmem [resolvable:$true] %s487
          %490 = dma.hbm_to_vmem [thread:$0]  %s8, 48, %s488, [#allocation16]
        $region44: #{tpu_custom_call.1} parent=11 // pred_fallthru
          _
        // Predicated region
        $region45: #{tpu_custom_call.1} parent=11 // pred_check
          %p491 = pneg %p249
        $region46: #{tpu_custom_call.1} parent=11 // pred_check_branch
          %493 = sbr.rel (%p491) target = $region48
        $region47: #{tpu_custom_call.1} parent=11 // pred_region
          %s495 = ssub.s32 48, 48
          %496 = vsyncadd [#allocation19], %s495
          %s498 = sshll.u32 [#allocation18], 4
          %s499 = int_to_ptr.vmem [resolvable:$true] %s498
          %501 = dma.hbm_to_vmem [thread:$0]  %s9, 48, %s499, [#allocation19]
        $region48: #{tpu_custom_call.1} parent=11 // pred_fallthru
          _
        // Predicated region
        $region49: #{tpu_custom_call.1} parent=11 // pred_check
          %p502 = pneg %p270
        $region50: #{tpu_custom_call.1} parent=11 // pred_check_branch
          %504 = sbr.rel (%p502) target = $region52
        $region51: #{tpu_custom_call.1} parent=11 // pred_region
          %s506 = ssub.s32 48, 48
          %507 = vsyncadd [#allocation19], %s506
          %s509 = sshll.u32 [#allocation20], 4
          %s510 = int_to_ptr.vmem [resolvable:$true] %s509
          %512 = dma.hbm_to_vmem [thread:$0]  %s10, 48, %s510, [#allocation19]
        $region52: #{tpu_custom_call.1} parent=11 // pred_fallthru
          _
        // Predicated region
        $region53: #{tpu_custom_call.1} parent=11 // pred_check
          %p513 = pneg %p291
        $region54: #{tpu_custom_call.1} parent=11 // pred_check_branch
          %515 = sbr.rel (%p513) target = $region56
        $region55: #{tpu_custom_call.1} parent=11 // pred_region
          %s517 = ssub.s32 36864, 36864
          %518 = vsyncadd [#allocation22], %s517
          %s519 = sshll.u32 [#allocation21], 4
          %s520 = int_to_ptr.vmem [resolvable:$true] %s519
          %525 = dma.hbm_to_vmem [thread:$0]  %s11, 36864, %s520, [#allocation22], 768, 768, 48
        $region56: #{tpu_custom_call.1} parent=11 // pred_fallthru
          _
        // Predicated region
        $region57: #{tpu_custom_call.1} parent=11 // pred_check
          %p526 = pneg %p312
        $region58: #{tpu_custom_call.1} parent=11 // pred_check_branch
          %528 = sbr.rel (%p526) target = $region60
        $region59: #{tpu_custom_call.1} parent=11 // pred_region
          %s530 = ssub.s32 192, 192
          %531 = vsyncadd [#allocation22], %s530
          %s533 = sshll.u32 [#allocation23], 4
          %s534 = int_to_ptr.vmem [resolvable:$true] %s533
          %536 = dma.hbm_to_vmem [thread:$0]  %s12, 192, %s534, [#allocation22]
        $region60: #{tpu_custom_call.1} parent=11 // pred_fallthru
          _
        // Predicated region
        $region61: #{tpu_custom_call.1} parent=11 // pred_check
          %p537 = pneg %p333
        $region62: #{tpu_custom_call.1} parent=11 // pred_check_branch
          %539 = sbr.rel (%p537) target = $region64
        $region63: #{tpu_custom_call.1} parent=11 // pred_region
          %s541 = ssub.s32 36864, 36864
          %542 = vsyncadd [#allocation25], %s541
          %s543 = sshll.u32 [#allocation24], 4
          %s544 = int_to_ptr.vmem [resolvable:$true] %s543
          %549 = dma.hbm_to_vmem [thread:$0]  %s13, 36864, %s544, [#allocation25], 192, 192, 12
        $region64: #{tpu_custom_call.1} parent=11 // pred_fallthru
          _
        // Predicated region
        $region65: #{tpu_custom_call.1} parent=11 // pred_check
          %p550 = pneg %p354
        $region66: #{tpu_custom_call.1} parent=11 // pred_check_branch
          %552 = sbr.rel (%p550) target = $region68
        $region67: #{tpu_custom_call.1} parent=11 // pred_region
          %s554 = ssub.s32 48, 48
          %555 = vsyncadd [#allocation25], %s554
          %s557 = sshll.u32 [#allocation26], 4
          %s558 = int_to_ptr.vmem [resolvable:$true] %s557
          %560 = dma.hbm_to_vmem [thread:$0]  %s14, 48, %s558, [#allocation25]
        $region68: #{tpu_custom_call.1} parent=11 // pred_fallthru
          _
      $region12: #{tpu_custom_call.1} parent=5 // pred_fallthru
        _
      %p561 = scmp.lt.s32.totalorder %s34, 2
      // Predicated region
      $region69: #{tpu_custom_call.1} parent=5 // pred_check
        %p562 = pneg %p561
      $region70: #{tpu_custom_call.1} parent=5 // pred_check_branch
        %564 = sbr.rel (%p562) target = $region72
      $region71: #{tpu_custom_call.1} parent=5 // pred_region
        // Predicated region
        $region73: #{tpu_custom_call.1} parent=71 // pred_check
          %p565 = pneg %p54
        $region74: #{tpu_custom_call.1} parent=71 // pred_check_branch
          %567 = sbr.rel (%p565) target = $region76
        $region75: #{tpu_custom_call.1} parent=71 // pred_region
          %s568 = sand.u32 %s44, 1
          %s569 = scalar_lea.sflag [#allocation4], %s568
          %s570 = sand.u32 %s44, 1
          %s571 = smul.addr %s570, 24
          %s572 = scalar_lea.vmem [#allocation3], %s571
          %s574 = ssub.s32 384, 384
          %575 = vsyncadd %s569, %s574
          %s576 = smul.addr %s34, 3
          %s577 = smul.addr %s576, 128
          %s578 = scalar_lea.hbm %s0, %s577
          %s580 = sshll.u32 %s572, 4
          %s581 = int_to_ptr.vmem [resolvable:$true] %s580
          %583 = dma.hbm_to_vmem [thread:$0]  %s578, 384, %s581, %s569
        $region76: #{tpu_custom_call.1} parent=71 // pred_fallthru
          _
      $region72: #{tpu_custom_call.1} parent=5 // pred_fallthru
        _
      %p584 = scmp.le.s32.totalorder 1, %s34
      %p585 = scmp.lt.s32.totalorder %s34, 3
      %p586 = pnand %p584, %p585
      %p587 = pneg %p586
      // Predicated region
      $region77: #{tpu_custom_call.1} parent=5 // pred_check
        _
      $region78: #{tpu_custom_call.1} parent=5 // pred_check_branch
        %589 = sbr.rel (%p586) target = $region80
      $region79: #{tpu_custom_call.1} parent=5 // pred_region
        %s590 = ssub.s32 %s34, 1
        %s591 = sand.u32 %s47, 1
        %s592 = scalar_lea.sflag [#allocation4], %s591
        %s593 = sand.u32 %s47, 1
        %s594 = smul.addr %s593, 24
        %s595 = scalar_lea.vmem [#allocation3], %s594
        // Predicated region
        $region81: #{tpu_custom_call.1} parent=79 // pred_check
          %p596 = pneg %p60
        $region82: #{tpu_custom_call.1} parent=79 // pred_check_branch
          %598 = sbr.rel (%p596) target = $region84
        $region83: #{tpu_custom_call.1} parent=79 // pred_region
          %599 = dma.done %s592, 384
        $region84: #{tpu_custom_call.1} parent=79 // pred_fallthru
          _
        // Predicated region
        $region85: #{tpu_custom_call.1} parent=79 // pred_check
          %p600 = pneg %p81
        $region86: #{tpu_custom_call.1} parent=79 // pred_check_branch
          %602 = sbr.rel (%p600) target = $region88
        $region87: #{tpu_custom_call.1} parent=79 // pred_region
          %603 = dma.done [#allocation7], 128
        $region88: #{tpu_custom_call.1} parent=79 // pred_fallthru
          _
        // Predicated region
        $region89: #{tpu_custom_call.1} parent=79 // pred_check
          %p604 = pneg %p102
        $region90: #{tpu_custom_call.1} parent=79 // pred_check_branch
          %606 = sbr.rel (%p604) target = $region92
        $region91: #{tpu_custom_call.1} parent=79 // pred_region
          %607 = dma.done [#allocation7], 48
        $region92: #{tpu_custom_call.1} parent=79 // pred_fallthru
          _
        // Predicated region
        $region93: #{tpu_custom_call.1} parent=79 // pred_check
          %p608 = pneg %p123
        $region94: #{tpu_custom_call.1} parent=79 // pred_check_branch
          %610 = sbr.rel (%p608) target = $region96
        $region95: #{tpu_custom_call.1} parent=79 // pred_region
          %611 = dma.done [#allocation10], 48
        $region96: #{tpu_custom_call.1} parent=79 // pred_fallthru
          _
        // Predicated region
        $region97: #{tpu_custom_call.1} parent=79 // pred_check
          %p612 = pneg %p144
        $region98: #{tpu_custom_call.1} parent=79 // pred_check_branch
          %614 = sbr.rel (%p612) target = $region100
        $region99: #{tpu_custom_call.1} parent=79 // pred_region
          %615 = dma.done [#allocation10], 9216
        $region100: #{tpu_custom_call.1} parent=79 // pred_fallthru
          _
        // Predicated region
        $region101: #{tpu_custom_call.1} parent=79 // pred_check
          %p616 = pneg %p165
        $region102: #{tpu_custom_call.1} parent=79 // pred_check_branch
          %618 = sbr.rel (%p616) target = $region104
        $region103: #{tpu_custom_call.1} parent=79 // pred_region
          %619 = dma.done [#allocation13], 9216
        $region104: #{tpu_custom_call.1} parent=79 // pred_fallthru
          _
        // Predicated region
        $region105: #{tpu_custom_call.1} parent=79 // pred_check
          %p620 = pneg %p186
        $region106: #{tpu_custom_call.1} parent=79 // pred_check_branch
          %622 = sbr.rel (%p620) target = $region108
        $region107: #{tpu_custom_call.1} parent=79 // pred_region
          %623 = dma.done [#allocation13], 9216
        $region108: #{tpu_custom_call.1} parent=79 // pred_fallthru
          _
        // Predicated region
        $region109: #{tpu_custom_call.1} parent=79 // pred_check
          %p624 = pneg %p207
        $region110: #{tpu_custom_call.1} parent=79 // pred_check_branch
          %626 = sbr.rel (%p624) target = $region112
        $region111: #{tpu_custom_call.1} parent=79 // pred_region
          %627 = dma.done [#allocation16], 9216
        $region112: #{tpu_custom_call.1} parent=79 // pred_fallthru
          _
        // Predicated region
        $region113: #{tpu_custom_call.1} parent=79 // pred_check
          %p628 = pneg %p228
        $region114: #{tpu_custom_call.1} parent=79 // pred_check_branch
          %630 = sbr.rel (%p628) target = $region116
        $region115: #{tpu_custom_call.1} parent=79 // pred_region
          %631 = dma.done [#allocation16], 48
        $region116: #{tpu_custom_call.1} parent=79 // pred_fallthru
          _
        // Predicated region
        $region117: #{tpu_custom_call.1} parent=79 // pred_check
          %p632 = pneg %p249
        $region118: #{tpu_custom_call.1} parent=79 // pred_check_branch
          %634 = sbr.rel (%p632) target = $region120
        $region119: #{tpu_custom_call.1} parent=79 // pred_region
          %635 = dma.done [#allocation19], 48
        $region120: #{tpu_custom_call.1} parent=79 // pred_fallthru
          _
        // Predicated region
        $region121: #{tpu_custom_call.1} parent=79 // pred_check
          %p636 = pneg %p270
        $region122: #{tpu_custom_call.1} parent=79 // pred_check_branch
          %638 = sbr.rel (%p636) target = $region124
        $region123: #{tpu_custom_call.1} parent=79 // pred_region
          %639 = dma.done [#allocation19], 48
        $region124: #{tpu_custom_call.1} parent=79 // pred_fallthru
          _
        // Predicated region
        $region125: #{tpu_custom_call.1} parent=79 // pred_check
          %p640 = pneg %p291
        $region126: #{tpu_custom_call.1} parent=79 // pred_check_branch
          %642 = sbr.rel (%p640) target = $region128
        $region127: #{tpu_custom_call.1} parent=79 // pred_region
          %643 = dma.done [#allocation22], 36864
        $region128: #{tpu_custom_call.1} parent=79 // pred_fallthru
          _
        // Predicated region
        $region129: #{tpu_custom_call.1} parent=79 // pred_check
          %p644 = pneg %p312
        $region130: #{tpu_custom_call.1} parent=79 // pred_check_branch
          %646 = sbr.rel (%p644) target = $region132
        $region131: #{tpu_custom_call.1} parent=79 // pred_region
          %647 = dma.done [#allocation22], 192
        $region132: #{tpu_custom_call.1} parent=79 // pred_fallthru
          _
        // Predicated region
        $region133: #{tpu_custom_call.1} parent=79 // pred_check
          %p648 = pneg %p333
        $region134: #{tpu_custom_call.1} parent=79 // pred_check_branch
          %650 = sbr.rel (%p648) target = $region136
        $region135: #{tpu_custom_call.1} parent=79 // pred_region
          %651 = dma.done [#allocation25], 36864
        $region136: #{tpu_custom_call.1} parent=79 // pred_fallthru
          _
        // Predicated region
        $region137: #{tpu_custom_call.1} parent=79 // pred_check
          %p652 = pneg %p354
        $region138: #{tpu_custom_call.1} parent=79 // pred_check_branch
          %654 = sbr.rel (%p652) target = $region140
        $region139: #{tpu_custom_call.1} parent=79 // pred_region
          %655 = dma.done [#allocation25], 48
        $region140: #{tpu_custom_call.1} parent=79 // pred_fallthru
          _
        %s656 = sand.u32 %s47, 1
        %s657 = scalar_lea.sflag [#allocation4], %s656
        %s658 = sand.u32 %s47, 1
        %s659 = smul.addr %s658, 24
        %s660 = scalar_lea.vmem [#allocation3], %s659
        %p661 = pneg %p60
        %p662 = pneg %p57
        %p663 = pneg %p81
        %p664 = pneg %p78
        %p665 = pneg %p102
        %p666 = pneg %p99
        %p667 = pneg %p123
        %p668 = pneg %p120
        %p669 = pneg %p144
        %p670 = pneg %p141
        %p671 = pneg %p165
        %p672 = pneg %p162
        %p673 = pneg %p186
        %p674 = pneg %p183
        %p675 = pneg %p207
        %p676 = pneg %p204
        %p677 = pneg %p228
        %p678 = pneg %p225
        %p679 = pneg %p249
        %p680 = pneg %p246
        %p681 = pneg %p270
        %p682 = pneg %p267
        %p683 = pneg %p291
        %p684 = pneg %p288
        %p685 = pneg %p312
        %p686 = pneg %p309
        %p687 = pneg %p333
        %p688 = pneg %p330
        %p689 = pneg %p354
        %p690 = pneg %p351
        %p691 = pneg %p380
        %p692 = pneg %p377
        %s693 = sand.u32 %s367, 1
        %s694 = scalar_lea.sflag [#allocation5], %s693
        %s695 = sand.u32 %s367, 1
        %s696 = smul.addr %s695, 24
        %s697 = scalar_lea.vmem [#allocation27], %s696
        %v699 = vld [vmem:[%s595] sm:$0xff]
        %v700 = vld [vmem:[%s595 + $0x8] sm:$0xff]
        %v701 = vld [vmem:[%s595 + $0x10] sm:$0xff]
        %v702 = vld [vmem:[#allocation8] sm:$0x7]
        %v703 = vld [vmem:[#allocation9] sm:$0x7]
        %v704 = vadd.f32 %v699, %v700
        %v705 = vadd.f32 %v704, %v701
        %706 = vadd.xlane.f32.xlu0 %v705
        %v707 = vpop.xlane.xlu0 %706
        %v708 = vrcp.pop 384.0
        %v709 = vmul.f32 %v707, %v708
        %v710 = vsub.f32 %v699, %v709
        %v711 = vsub.f32 %v700, %v709
        %v712 = vsub.f32 %v701, %v709
        %v713 = vmul.f32 %v710, %v710
        %v714 = vmul.f32 %v711, %v711
        %v715 = vmul.f32 %v712, %v712
        %v716 = vadd.f32 %v713, %v714
        %v717 = vadd.f32 %v716, %v715
        %718 = vadd.xlane.f32.xlu0 %v717
        %v719 = vpop.xlane.xlu0 %718
        %v720 = vmul.f32 %v719, %v708
        %v721 = vadd.f32 %v720, 1e-05
        %v722 = vrsqrt.pop %v721
        %v723 = vmul.f32 %v710, %v722
        %v724 = vmul.f32 %v711, %v722
        %v725 = vmul.f32 %v712, %v722
        %v727 = vlaneseq
        %v728 = vshrl.u32 %v727, 7
        %v729 = vsub.s32 0, %v728
        %v730 = vrot.slane %v702, %v729
        %v731 = vlaneseq
        %v732 = vshrl.u32 %v731, 7
        %v733 = vsub.s32 1, %v732
        %v734 = vrot.slane %v702, %v733
        %v735 = vlaneseq
        %v736 = vshrl.u32 %v735, 7
        %v737 = vsub.s32 2, %v736
        %v738 = vrot.slane %v702, %v737
        %v742 = vmul.f32 %v723, %v730
        %v743 = vmul.f32 %v724, %v734
        %v744 = vmul.f32 %v725, %v738
        %v746 = vlaneseq
        %v747 = vshrl.u32 %v746, 7
        %v748 = vsub.s32 0, %v747
        %v749 = vrot.slane %v703, %v748
        %v750 = vlaneseq
        %v751 = vshrl.u32 %v750, 7
        %v752 = vsub.s32 1, %v751
        %v753 = vrot.slane %v703, %v752
        %v754 = vlaneseq
        %v755 = vshrl.u32 %v754, 7
        %v756 = vsub.s32 2, %v755
        %v757 = vrot.slane %v703, %v756
        %v761 = vadd.f32 %v742, %v749
        %v762 = vadd.f32 %v743, %v753
        %v763 = vadd.f32 %v744, %v757
        %v764 = vpack.c.bf16 %v761, %v761
        %v765 = vpack.c.bf16 %v762, %v762
        %v766 = vpack.c.bf16 %v763, %v763
        %v767 = vld [vmem:[#allocation11] sm:$0xff]
        %v768 = vld [vmem:[#allocation11 + $0x8] sm:$0xf]
        %v769 = vld [vmem:[#allocation11 + $0xc] sm:$0xff]
        %v770 = vld [vmem:[#allocation11 + $0x14] sm:$0xf]
        %v771 = vld [vmem:[#allocation11 + $0x18] sm:$0xff]
        %v772 = vld [vmem:[#allocation11 + $0x20] sm:$0xf]
        %v773 = vld [vmem:[#allocation11 + $0x24] sm:$0xff]
        %v774 = vld [vmem:[#allocation11 + $0x2c] sm:$0xf]
        %v775 = vld [vmem:[#allocation11 + $0x30] sm:$0xff]
        %v776 = vld [vmem:[#allocation11 + $0x38] sm:$0xf]
        %v777 = vld [vmem:[#allocation11 + $0x3c] sm:$0xff]
        %v778 = vld [vmem:[#allocation11 + $0x44] sm:$0xf]
        %v779 = vld [vmem:[#allocation11 + $0x48] sm:$0xff]
        %v780 = vld [vmem:[#allocation11 + $0x50] sm:$0xf]
        %v781 = vld [vmem:[#allocation11 + $0x54] sm:$0xff]
        %v782 = vld [vmem:[#allocation11 + $0x5c] sm:$0xf]
        %v783 = vld [vmem:[#allocation11 + $0x60] sm:$0xff]
        %v784 = vld [vmem:[#allocation11 + $0x68] sm:$0xf]
        %v785 = vld [vmem:[#allocation11 + $0x6c] sm:$0xff]
        %v786 = vld [vmem:[#allocation11 + $0x74] sm:$0xf]
        %v787 = vld [vmem:[#allocation11 + $0x78] sm:$0xff]
        %v788 = vld [vmem:[#allocation11 + $0x80] sm:$0xf]
        %v789 = vld [vmem:[#allocation11 + $0x84] sm:$0xff]
        %v790 = vld [vmem:[#allocation11 + $0x8c] sm:$0xf]
        %v791 = vld [vmem:[#allocation11 + $0x90] sm:$0xff]
        %v792 = vld [vmem:[#allocation11 + $0x98] sm:$0xf]
        %v793 = vld [vmem:[#allocation11 + $0x9c] sm:$0xff]
        %v794 = vld [vmem:[#allocation11 + $0xa4] sm:$0xf]
        %v795 = vld [vmem:[#allocation11 + $0xa8] sm:$0xff]
        %v796 = vld [vmem:[#allocation11 + $0xb0] sm:$0xf]
        %v797 = vld [vmem:[#allocation11 + $0xb4] sm:$0xff]
        %v798 = vld [vmem:[#allocation11 + $0xbc] sm:$0xf]
        %v799 = vld [vmem:[#allocation11 + $0xc0] sm:$0xff]
        %v800 = vld [vmem:[#allocation11 + $0xc8] sm:$0xf]
        %v801 = vld [vmem:[#allocation11 + $0xcc] sm:$0xff]
        %v802 = vld [vmem:[#allocation11 + $0xd4] sm:$0xf]
        %v803 = vld [vmem:[#allocation11 + $0xd8] sm:$0xff]
        %v804 = vld [vmem:[#allocation11 + $0xe0] sm:$0xf]
        %v805 = vld [vmem:[#allocation11 + $0xe4] sm:$0xff]
        %v806 = vld [vmem:[#allocation11 + $0xec] sm:$0xf]
        %v807 = vld [vmem:[#allocation11 + $0xf0] sm:$0xff]
        %v808 = vld [vmem:[#allocation11 + $0xf8] sm:$0xf]
        %v809 = vld [vmem:[#allocation11 + $0xfc] sm:$0xff]
        %v810 = vld [vmem:[#allocation11 + $0x104] sm:$0xf]
        %v811 = vld [vmem:[#allocation11 + $0x108] sm:$0xff]
        %v812 = vld [vmem:[#allocation11 + $0x110] sm:$0xf]
        %v813 = vld [vmem:[#allocation11 + $0x114] sm:$0xff]
        %v814 = vld [vmem:[#allocation11 + $0x11c] sm:$0xf]
        %v815 = vld [vmem:[#allocation11 + $0x120] sm:$0xff]
        %v816 = vld [vmem:[#allocation11 + $0x128] sm:$0xf]
        %v817 = vld [vmem:[#allocation11 + $0x12c] sm:$0xff]
        %v818 = vld [vmem:[#allocation11 + $0x134] sm:$0xf]
        %v819 = vld [vmem:[#allocation11 + $0x138] sm:$0xff]
        %v820 = vld [vmem:[#allocation11 + $0x140] sm:$0xf]
        %v821 = vld [vmem:[#allocation11 + $0x144] sm:$0xff]
        %v822 = vld [vmem:[#allocation11 + $0x14c] sm:$0xf]
        %v823 = vld [vmem:[#allocation11 + $0x150] sm:$0xff]
        %v824 = vld [vmem:[#allocation11 + $0x158] sm:$0xf]
        %v825 = vld [vmem:[#allocation11 + $0x15c] sm:$0xff]
        %v826 = vld [vmem:[#allocation11 + $0x164] sm:$0xf]
        %v827 = vld [vmem:[#allocation11 + $0x168] sm:$0xff]
        %v828 = vld [vmem:[#allocation11 + $0x170] sm:$0xf]
        %v829 = vld [vmem:[#allocation11 + $0x174] sm:$0xff]
        %v830 = vld [vmem:[#allocation11 + $0x17c] sm:$0xf]
        %v831 = vld [vmem:[#allocation11 + $0x180] sm:$0xff]
        %v832 = vld [vmem:[#allocation11 + $0x188] sm:$0xf]
        %v833 = vld [vmem:[#allocation11 + $0x18c] sm:$0xff]
        %v834 = vld [vmem:[#allocation11 + $0x194] sm:$0xf]
        %v835 = vld [vmem:[#allocation11 + $0x198] sm:$0xff]
        %v836 = vld [vmem:[#allocation11 + $0x1a0] sm:$0xf]
        %v837 = vld [vmem:[#allocation11 + $0x1a4] sm:$0xff]
        %v838 = vld [vmem:[#allocation11 + $0x1ac] sm:$0xf]
        %v839 = vld [vmem:[#allocation11 + $0x1b0] sm:$0xff]
        %v840 = vld [vmem:[#allocation11 + $0x1b8] sm:$0xf]
        %v841 = vld [vmem:[#allocation11 + $0x1bc] sm:$0xff]
        %v842 = vld [vmem:[#allocation11 + $0x1c4] sm:$0xf]
        %v843 = vld [vmem:[#allocation11 + $0x1c8] sm:$0xff]
        %v844 = vld [vmem:[#allocation11 + $0x1d0] sm:$0xf]
        %v845 = vld [vmem:[#allocation11 + $0x1d4] sm:$0xff]
        %v846 = vld [vmem:[#allocation11 + $0x1dc] sm:$0xf]
        %v847 = vld [vmem:[#allocation11 + $0x1e0] sm:$0xff]
        %v848 = vld [vmem:[#allocation11 + $0x1e8] sm:$0xf]
        %v849 = vld [vmem:[#allocation11 + $0x1ec] sm:$0xff]
        %v850 = vld [vmem:[#allocation11 + $0x1f4] sm:$0xf]
        %v851 = vld [vmem:[#allocation11 + $0x1f8] sm:$0xff]
        %v852 = vld [vmem:[#allocation11 + $0x200] sm:$0xf]
        %v853 = vld [vmem:[#allocation11 + $0x204] sm:$0xff]
        %v854 = vld [vmem:[#allocation11 + $0x20c] sm:$0xf]
        %v855 = vld [vmem:[#allocation11 + $0x210] sm:$0xff]
        %v856 = vld [vmem:[#allocation11 + $0x218] sm:$0xf]
        %v857 = vld [vmem:[#allocation11 + $0x21c] sm:$0xff]
        %v858 = vld [vmem:[#allocation11 + $0x224] sm:$0xf]
        %v859 = vld [vmem:[#allocation11 + $0x228] sm:$0xff]
        %v860 = vld [vmem:[#allocation11 + $0x230] sm:$0xf]
        %v861 = vld [vmem:[#allocation11 + $0x234] sm:$0xff]
        %v862 = vld [vmem:[#allocation11 + $0x23c] sm:$0xf]
        %v959 = vunpack.c.l.b16 %v767
        %v960 = vunpack.c.h.b16 %v767
        %v961 = vunpack.c.l.b16 %v768
        %v962 = vunpack.c.l.b16 %v769
        %v963 = vunpack.c.h.b16 %v769
        %v964 = vunpack.c.l.b16 %v770
        %v965 = vunpack.c.l.b16 %v771
        %v966 = vunpack.c.h.b16 %v771
        %v967 = vunpack.c.l.b16 %v772
        %v968 = vunpack.c.l.b16 %v773
        %v969 = vunpack.c.h.b16 %v773
        %v970 = vunpack.c.l.b16 %v774
        %v971 = vunpack.c.l.b16 %v775
        %v972 = vunpack.c.h.b16 %v775
        %v973 = vunpack.c.l.b16 %v776
        %v974 = vunpack.c.l.b16 %v777
        %v975 = vunpack.c.h.b16 %v777
        %v976 = vunpack.c.l.b16 %v778
        %v977 = vunpack.c.l.b16 %v779
        %v978 = vunpack.c.h.b16 %v779
        %v979 = vunpack.c.l.b16 %v780
        %v980 = vunpack.c.l.b16 %v781
        %v981 = vunpack.c.h.b16 %v781
        %v982 = vunpack.c.l.b16 %v782
        %v983 = vunpack.c.l.b16 %v783
        %v984 = vunpack.c.h.b16 %v783
        %v985 = vunpack.c.l.b16 %v784
        %v986 = vunpack.c.l.b16 %v785
        %v987 = vunpack.c.h.b16 %v785
        %v988 = vunpack.c.l.b16 %v786
        %v989 = vunpack.c.l.b16 %v787
        %v990 = vunpack.c.h.b16 %v787
        %v991 = vunpack.c.l.b16 %v788
        %v992 = vunpack.c.l.b16 %v789
        %v993 = vunpack.c.h.b16 %v789
        %v994 = vunpack.c.l.b16 %v790
        %v995 = vunpack.c.l.b16 %v791
        %v996 = vunpack.c.h.b16 %v791
        %v997 = vunpack.c.l.b16 %v792
        %v998 = vunpack.c.l.b16 %v793
        %v999 = vunpack.c.h.b16 %v793
        %v1000 = vunpack.c.l.b16 %v794
        %v1001 = vunpack.c.l.b16 %v795
        %v1002 = vunpack.c.h.b16 %v795
        %v1003 = vunpack.c.l.b16 %v796
        %v1004 = vunpack.c.l.b16 %v797
        %v1005 = vunpack.c.h.b16 %v797
        %v1006 = vunpack.c.l.b16 %v798
        %v1007 = vunpack.c.l.b16 %v799
        %v1008 = vunpack.c.h.b16 %v799
        %v1009 = vunpack.c.l.b16 %v800
        %v1010 = vunpack.c.l.b16 %v801
        %v1011 = vunpack.c.h.b16 %v801
        %v1012 = vunpack.c.l.b16 %v802
        %v1013 = vunpack.c.l.b16 %v803
        %v1014 = vunpack.c.h.b16 %v803
        %v1015 = vunpack.c.l.b16 %v804
        %v1016 = vunpack.c.l.b16 %v805
        %v1017 = vunpack.c.h.b16 %v805
        %v1018 = vunpack.c.l.b16 %v806
        %v1019 = vunpack.c.l.b16 %v807
        %v1020 = vunpack.c.h.b16 %v807
        %v1021 = vunpack.c.l.b16 %v808
        %v1022 = vunpack.c.l.b16 %v809
        %v1023 = vunpack.c.h.b16 %v809
        %v1024 = vunpack.c.l.b16 %v810
        %v1025 = vunpack.c.l.b16 %v811
        %v1026 = vunpack.c.h.b16 %v811
        %v1027 = vunpack.c.l.b16 %v812
        %v1028 = vunpack.c.l.b16 %v813
        %v1029 = vunpack.c.h.b16 %v813
        %v1030 = vunpack.c.l.b16 %v814
        %v1031 = vunpack.c.l.b16 %v815
        %v1032 = vunpack.c.h.b16 %v815
        %v1033 = vunpack.c.l.b16 %v816
        %v1034 = vunpack.c.l.b16 %v817
        %v1035 = vunpack.c.h.b16 %v817
        %v1036 = vunpack.c.l.b16 %v818
        %v1037 = vunpack.c.l.b16 %v819
        %v1038 = vunpack.c.h.b16 %v819
        %v1039 = vunpack.c.l.b16 %v820
        %v1040 = vunpack.c.l.b16 %v821
        %v1041 = vunpack.c.h.b16 %v821
        %v1042 = vunpack.c.l.b16 %v822
        %v1043 = vunpack.c.l.b16 %v823
        %v1044 = vunpack.c.h.b16 %v823
        %v1045 = vunpack.c.l.b16 %v824
        %v1046 = vunpack.c.l.b16 %v825
        %v1047 = vunpack.c.h.b16 %v825
        %v1048 = vunpack.c.l.b16 %v826
        %v1049 = vunpack.c.l.b16 %v827
        %v1050 = vunpack.c.h.b16 %v827
        %v1051 = vunpack.c.l.b16 %v828
        %v1052 = vunpack.c.l.b16 %v829
        %v1053 = vunpack.c.h.b16 %v829
        %v1054 = vunpack.c.l.b16 %v830
        %v1055 = vunpack.c.l.b16 %v831
        %v1056 = vunpack.c.h.b16 %v831
        %v1057 = vunpack.c.l.b16 %v832
        %v1058 = vunpack.c.l.b16 %v833
        %v1059 = vunpack.c.h.b16 %v833
        %v1060 = vunpack.c.l.b16 %v834
        %v1061 = vunpack.c.l.b16 %v835
        %v1062 = vunpack.c.h.b16 %v835
        %v1063 = vunpack.c.l.b16 %v836
        %v1064 = vunpack.c.l.b16 %v837
        %v1065 = vunpack.c.h.b16 %v837
        %v1066 = vunpack.c.l.b16 %v838
        %v1067 = vunpack.c.l.b16 %v839
        %v1068 = vunpack.c.h.b16 %v839
        %v1069 = vunpack.c.l.b16 %v840
        %v1070 = vunpack.c.l.b16 %v841
        %v1071 = vunpack.c.h.b16 %v841
        %v1072 = vunpack.c.l.b16 %v842
        %v1073 = vunpack.c.l.b16 %v843
        %v1074 = vunpack.c.h.b16 %v843
        %v1075 = vunpack.c.l.b16 %v844
        %v1076 = vunpack.c.l.b16 %v845
        %v1077 = vunpack.c.h.b16 %v845
        %v1078 = vunpack.c.l.b16 %v846
        %v1079 = vunpack.c.l.b16 %v847
        %v1080 = vunpack.c.h.b16 %v847
        %v1081 = vunpack.c.l.b16 %v848
        %v1082 = vunpack.c.l.b16 %v849
        %v1083 = vunpack.c.h.b16 %v849
        %v1084 = vunpack.c.l.b16 %v850
        %v1085 = vunpack.c.l.b16 %v851
        %v1086 = vunpack.c.h.b16 %v851
        %v1087 = vunpack.c.l.b16 %v852
        %v1088 = vunpack.c.l.b16 %v853
        %v1089 = vunpack.c.h.b16 %v853
        %v1090 = vunpack.c.l.b16 %v854
        %v1091 = vunpack.c.l.b16 %v855
        %v1092 = vunpack.c.h.b16 %v855
        %v1093 = vunpack.c.l.b16 %v856
        %v1094 = vunpack.c.l.b16 %v857
        %v1095 = vunpack.c.h.b16 %v857
        %v1096 = vunpack.c.l.b16 %v858
        %v1097 = vunpack.c.l.b16 %v859
        %v1098 = vunpack.c.h.b16 %v859
        %v1099 = vunpack.c.l.b16 %v860
        %v1100 = vunpack.c.l.b16 %v861
        %v1101 = vunpack.c.h.b16 %v861
        %v1102 = vunpack.c.l.b16 %v862
        %v1103 = vpack.c.b16 %v962, %v959
        %v1104 = vpack.c.b16 %v963, %v960
        %v1105 = vpack.c.b16 %v964, %v961
        %v1106 = vpack.c.b16 %v968, %v965
        %v1107 = vpack.c.b16 %v969, %v966
        %v1108 = vpack.c.b16 %v970, %v967
        %v1109 = vpack.c.b16 %v974, %v971
        %v1110 = vpack.c.b16 %v975, %v972
        %v1111 = vpack.c.b16 %v976, %v973
        %v1112 = vpack.c.b16 %v980, %v977
        %v1113 = vpack.c.b16 %v981, %v978
        %v1114 = vpack.c.b16 %v982, %v979
        %v1115 = vpack.c.b16 %v986, %v983
        %v1116 = vpack.c.b16 %v987, %v984
        %v1117 = vpack.c.b16 %v988, %v985
        %v1118 = vpack.c.b16 %v992, %v989
        %v1119 = vpack.c.b16 %v993, %v990
        %v1120 = vpack.c.b16 %v994, %v991
        %v1121 = vpack.c.b16 %v998, %v995
        %v1122 = vpack.c.b16 %v999, %v996
        %v1123 = vpack.c.b16 %v1000, %v997
        %v1124 = vpack.c.b16 %v1004, %v1001
        %v1125 = vpack.c.b16 %v1005, %v1002
        %v1126 = vpack.c.b16 %v1006, %v1003
        %v1127 = vpack.c.b16 %v1010, %v1007
        %v1128 = vpack.c.b16 %v1011, %v1008
        %v1129 = vpack.c.b16 %v1012, %v1009
        %v1130 = vpack.c.b16 %v1016, %v1013
        %v1131 = vpack.c.b16 %v1017, %v1014
        %v1132 = vpack.c.b16 %v1018, %v1015
        %v1133 = vpack.c.b16 %v1022, %v1019
        %v1134 = vpack.c.b16 %v1023, %v1020
        %v1135 = vpack.c.b16 %v1024, %v1021
        %v1136 = vpack.c.b16 %v1028, %v1025
        %v1137 = vpack.c.b16 %v1029, %v1026
        %v1138 = vpack.c.b16 %v1030, %v1027
        %v1139 = vpack.c.b16 %v1034, %v1031
        %v1140 = vpack.c.b16 %v1035, %v1032
        %v1141 = vpack.c.b16 %v1036, %v1033
        %v1142 = vpack.c.b16 %v1040, %v1037
        %v1143 = vpack.c.b16 %v1041, %v1038
        %v1144 = vpack.c.b16 %v1042, %v1039
        %v1145 = vpack.c.b16 %v1046, %v1043
        %v1146 = vpack.c.b16 %v1047, %v1044
        %v1147 = vpack.c.b16 %v1048, %v1045
        %v1148 = vpack.c.b16 %v1052, %v1049
        %v1149 = vpack.c.b16 %v1053, %v1050
        %v1150 = vpack.c.b16 %v1054, %v1051
        %v1151 = vpack.c.b16 %v1058, %v1055
        %v1152 = vpack.c.b16 %v1059, %v1056
        %v1153 = vpack.c.b16 %v1060, %v1057
        %v1154 = vpack.c.b16 %v1064, %v1061
        %v1155 = vpack.c.b16 %v1065, %v1062
        %v1156 = vpack.c.b16 %v1066, %v1063
        %v1157 = vpack.c.b16 %v1070, %v1067
        %v1158 = vpack.c.b16 %v1071, %v1068
        %v1159 = vpack.c.b16 %v1072, %v1069
        %v1160 = vpack.c.b16 %v1076, %v1073
        %v1161 = vpack.c.b16 %v1077, %v1074
        %v1162 = vpack.c.b16 %v1078, %v1075
        %v1163 = vpack.c.b16 %v1082, %v1079
        %v1164 = vpack.c.b16 %v1083, %v1080
        %v1165 = vpack.c.b16 %v1084, %v1081
        %v1166 = vpack.c.b16 %v1088, %v1085
        %v1167 = vpack.c.b16 %v1089, %v1086
        %v1168 = vpack.c.b16 %v1090, %v1087
        %v1169 = vpack.c.b16 %v1094, %v1091
        %v1170 = vpack.c.b16 %v1095, %v1092
        %v1171 = vpack.c.b16 %v1096, %v1093
        %v1172 = vpack.c.b16 %v1100, %v1097
        %v1173 = vpack.c.b16 %v1101, %v1098
        %v1174 = vpack.c.b16 %v1102, %v1099
        %1247 = vmatprep.subr.bf16.mxu0 %v1125
        %1248 = vmatpush1.bf16.msra.mxu0 %v1124
        %1249 = vmatprep.subr.bf16.mxu0 %v1122
        %1250 = vmatpush1.bf16.msra.mxu0 %v1121
        %1251 = vmatprep.subr.bf16.mxu0 %v1119
        %1252 = vmatpush1.bf16.msra.mxu0 %v1118
        %1253 = vmatprep.subr.bf16.mxu0 %v1116
        %1254 = vmatpush1.bf16.msra.mxu0 %v1115
        %1255 = vmatprep.subr.bf16.mxu0 %v1113
        %1256 = vmatpush1.bf16.msra.mxu0 %v1112
        %1257 = vmatprep.subr.bf16.mxu0 %v1110
        %1258 = vmatpush1.bf16.msra.mxu0 %v1109
        %1259 = vmatprep.subr.bf16.mxu0 %v1107
        %1260 = vmatpush1.bf16.msra.mxu0 %v1106
        %1261 = vmatprep.subr.bf16.mxu0 %v1104
        %1262 = vmatpush1.bf16.msra.mxu0 %v1103
        %1263 = vmatprep.subr.bf16.mxu0 %v1149
        %1264 = vmatpush2.bf16.msra.mxu0 %v1148
        %1265 = vmatprep.subr.bf16.mxu0 %v1146
        %1266 = vmatpush2.bf16.msra.mxu0 %v1145
        %1267 = vmatprep.subr.bf16.mxu0 %v1143
        %1268 = vmatpush2.bf16.msra.mxu0 %v1142
        %1269 = vmatprep.subr.bf16.mxu0 %v1140
        %1270 = vmatpush2.bf16.msra.mxu0 %v1139
        %1271 = vmatprep.subr.bf16.mxu0 %v1137
        %1272 = vmatpush2.bf16.msra.mxu0 %v1136
        %1273 = vmatprep.subr.bf16.mxu0 %v1134
        %1274 = vmatpush2.bf16.msra.mxu0 %v1133
        %1275 = vmatprep.subr.bf16.mxu0 %v1131
        %1276 = vmatpush2.bf16.msra.mxu0 %v1130
        %1277 = vmatprep.subr.bf16.mxu0 %v1128
        %1278 = vmatpush2.bf16.msra.mxu0 %v1127
        %1279 = vmatprep.mubr.bf16.mxu0 %v765
        %1280 = vmatmul.mubr.bf16.gmra.mxu0 %v764
        %v1281 = vpop.f32.mrf.mxu0
        %v1282 = vadd.f32 0.0, %v1281
        %v1283 = vpop.f32.mrf.mxu0
        %v1284 = vadd.f32 0.0, %v1283
        %v1285 = vpop.f32.mrf.mxu0
        %v1286 = vpop.f32.mrf.mxu0
        %1287 = vdwg.mxu0
        %1288 = vmatprep.subr.bf16.mxu0 %v1173
        %1289 = vmatpush1.bf16.msra.mxu0 %v1172
        %1290 = vmatprep.subr.bf16.mxu0 %v1170
        %1291 = vmatpush1.bf16.msra.mxu0 %v1169
        %1292 = vmatprep.subr.bf16.mxu0 %v1167
        %1293 = vmatpush1.bf16.msra.mxu0 %v1166
        %1294 = vmatprep.subr.bf16.mxu0 %v1164
        %1295 = vmatpush1.bf16.msra.mxu0 %v1163
        %1296 = vmatprep.subr.bf16.mxu0 %v1161
        %1297 = vmatpush1.bf16.msra.mxu0 %v1160
        %1298 = vmatprep.subr.bf16.mxu0 %v1158
        %1299 = vmatpush1.bf16.msra.mxu0 %v1157
        %1300 = vmatprep.subr.bf16.mxu0 %v1155
        %1301 = vmatpush1.bf16.msra.mxu0 %v1154
        %1302 = vmatprep.subr.bf16.mxu0 %v1152
        %1303 = vmatpush1.bf16.msra.mxu0 %v1151
        %1304 = vmatprep.subr.bf16.mxu0 0
        %1305 = vmatpush2.bf16.msra.mxu0 0
        %1306 = vmatprep.subr.bf16.mxu0 0
        %1307 = vmatpush2.bf16.msra.mxu0 0
        %1308 = vmatprep.subr.bf16.mxu0 0
        %1309 = vmatpush2.bf16.msra.mxu0 0
        %1310 = vmatprep.subr.bf16.mxu0 0
        %1311 = vmatpush2.bf16.msra.mxu0 0
        %1312 = vmatprep.subr.bf16.mxu0 0
        %1313 = vmatpush2.bf16.msra.mxu0 0
        %1314 = vmatprep.subr.bf16.mxu0 0
        %1315 = vmatpush2.bf16.msra.mxu0 0
        %1316 = vmatprep.subr.bf16.mxu0 0
        %1317 = vmatpush2.bf16.msra.mxu0 0
        %1318 = vmatprep.subr.bf16.mxu0 0
        %1319 = vmatpush2.bf16.msra.mxu0 0
        %1320 = vmatprep.mubr.bf16.mxu0 0
        %1321 = vmatmul.mubr.bf16.gmra.mxu0 %v766
        %v1322 = vpop.f32.mrf.mxu0
        %v1323 = vadd.f32 %v1282, %v1322
        %v1324 = vpop.f32.mrf.mxu0
        %v1325 = vadd.f32 %v1284, %v1324
        %v1326 = vpop.f32.mrf.mxu0
        %v1327 = vpop.f32.mrf.mxu0
        %1328 = vdwg.mxu0
        %1329 = vmatprep.subr.bf16.mxu0 0
        %1330 = vmatpush1.bf16.msra.mxu0 %v1126
        %1331 = vmatprep.subr.bf16.mxu0 0
        %1332 = vmatpush1.bf16.msra.mxu0 %v1123
        %1333 = vmatprep.subr.bf16.mxu0 0
        %1334 = vmatpush1.bf16.msra.mxu0 %v1120
        %1335 = vmatprep.subr.bf16.mxu0 0
        %1336 = vmatpush1.bf16.msra.mxu0 %v1117
        %1337 = vmatprep.subr.bf16.mxu0 0
        %1338 = vmatpush1.bf16.msra.mxu0 %v1114
        %1339 = vmatprep.subr.bf16.mxu0 0
        %1340 = vmatpush1.bf16.msra.mxu0 %v1111
        %1341 = vmatprep.subr.bf16.mxu0 0
        %1342 = vmatpush1.bf16.msra.mxu0 %v1108
        %1343 = vmatprep.subr.bf16.mxu0 0
        %1344 = vmatpush1.bf16.msra.mxu0 %v1105
        %1345 = vmatprep.subr.bf16.mxu0 0
        %1346 = vmatpush2.bf16.msra.mxu0 %v1150
        %1347 = vmatprep.subr.bf16.mxu0 0
        %1348 = vmatpush2.bf16.msra.mxu0 %v1147
        %1349 = vmatprep.subr.bf16.mxu0 0
        %1350 = vmatpush2.bf16.msra.mxu0 %v1144
        %1351 = vmatprep.subr.bf16.mxu0 0
        %1352 = vmatpush2.bf16.msra.mxu0 %v1141
        %1353 = vmatprep.subr.bf16.mxu0 0
        %1354 = vmatpush2.bf16.msra.mxu0 %v1138
        %1355 = vmatprep.subr.bf16.mxu0 0
        %1356 = vmatpush2.bf16.msra.mxu0 %v1135
        %1357 = vmatprep.subr.bf16.mxu0 0
        %1358 = vmatpush2.bf16.msra.mxu0 %v1132
        %1359 = vmatprep.subr.bf16.mxu0 0
        %1360 = vmatpush2.bf16.msra.mxu0 %v1129
        %1361 = vmatprep.mubr.bf16.mxu0 %v765
        %1362 = vmatmul.mubr.bf16.gmra.mxu0 %v764
        %v1363 = vpop.f32.mrf.mxu0
        %v1364 = vadd.f32 0.0, %v1363
        %v1365 = vpop.f32.mrf.mxu0
        %v1366 = vpop.f32.mrf.mxu0
        %v1367 = vpop.f32.mrf.mxu0
        %1368 = vdwg.mxu0
        %1369 = vmatprep.subr.bf16.mxu0 0
        %1370 = vmatpush1.bf16.msra.mxu0 %v1174
        %1371 = vmatprep.subr.bf16.mxu0 0
        %1372 = vmatpush1.bf16.msra.mxu0 %v1171
        %1373 = vmatprep.subr.bf16.mxu0 0
        %1374 = vmatpush1.bf16.msra.mxu0 %v1168
        %1375 = vmatprep.subr.bf16.mxu0 0
        %1376 = vmatpush1.bf16.msra.mxu0 %v1165
        %1377 = vmatprep.subr.bf16.mxu0 0
        %1378 = vmatpush1.bf16.msra.mxu0 %v1162
        %1379 = vmatprep.subr.bf16.mxu0 0
        %1380 = vmatpush1.bf16.msra.mxu0 %v1159
        %1381 = vmatprep.subr.bf16.mxu0 0
        %1382 = vmatpush1.bf16.msra.mxu0 %v1156
        %1383 = vmatprep.subr.bf16.mxu0 0
        %1384 = vmatpush1.bf16.msra.mxu0 %v1153
        %1385 = vmatprep.subr.bf16.mxu0 0
        %1386 = vmatpush2.bf16.msra.mxu0 0
        %1387 = vmatprep.subr.bf16.mxu0 0
        %1388 = vmatpush2.bf16.msra.mxu0 0
        %1389 = vmatprep.subr.bf16.mxu0 0
        %1390 = vmatpush2.bf16.msra.mxu0 0
        %1391 = vmatprep.subr.bf16.mxu0 0
        %1392 = vmatpush2.bf16.msra.mxu0 0
        %1393 = vmatprep.subr.bf16.mxu0 0
        %1394 = vmatpush2.bf16.msra.mxu0 0
        %1395 = vmatprep.subr.bf16.mxu0 0
        %1396 = vmatpush2.bf16.msra.mxu0 0
        %1397 = vmatprep.subr.bf16.mxu0 0
        %1398 = vmatpush2.bf16.msra.mxu0 0
        %1399 = vmatprep.subr.bf16.mxu0 0
        %1400 = vmatpush2.bf16.msra.mxu0 0
        %1401 = vmatprep.mubr.bf16.mxu0 0
        %1402 = vmatmul.mubr.bf16.gmra.mxu0 %v766
        %v1403 = vpop.f32.mrf.mxu0
        %v1404 = vadd.f32 %v1364, %v1403
        %v1405 = vpop.f32.mrf.mxu0
        %v1406 = vpop.f32.mrf.mxu0
        %v1407 = vpop.f32.mrf.mxu0
        %1408 = vdwg.mxu0
        %v1409 = vmul.f32 %v1323, 0.125
        %v1410 = vmul.f32 %v1325, 0.125
        %v1411 = vmul.f32 %v1404, 0.125
        %v1412 = vpack.c.bf16 %v1409, %v1409
        %v1413 = vpack.c.bf16 %v1410, %v1410
        %v1414 = vpack.c.bf16 %v1411, %v1411
        %v1415 = vld [vmem:[#allocation12] sm:$0xff]
        %v1416 = vld [vmem:[#allocation12 + $0x8] sm:$0xf]
        %v1417 = vld [vmem:[#allocation12 + $0xc] sm:$0xff]
        %v1418 = vld [vmem:[#allocation12 + $0x14] sm:$0xf]
        %v1419 = vld [vmem:[#allocation12 + $0x18] sm:$0xff]
        %v1420 = vld [vmem:[#allocation12 + $0x20] sm:$0xf]
        %v1421 = vld [vmem:[#allocation12 + $0x24] sm:$0xff]
        %v1422 = vld [vmem:[#allocation12 + $0x2c] sm:$0xf]
        %v1423 = vld [vmem:[#allocation12 + $0x30] sm:$0xff]
        %v1424 = vld [vmem:[#allocation12 + $0x38] sm:$0xf]
        %v1425 = vld [vmem:[#allocation12 + $0x3c] sm:$0xff]
        %v1426 = vld [vmem:[#allocation12 + $0x44] sm:$0xf]
        %v1427 = vld [vmem:[#allocation12 + $0x48] sm:$0xff]
        %v1428 = vld [vmem:[#allocation12 + $0x50] sm:$0xf]
        %v1429 = vld [vmem:[#allocation12 + $0x54] sm:$0xff]
        %v1430 = vld [vmem:[#allocation12 + $0x5c] sm:$0xf]
        %v1431 = vld [vmem:[#allocation12 + $0x60] sm:$0xff]
        %v1432 = vld [vmem:[#allocation12 + $0x68] sm:$0xf]
        %v1433 = vld [vmem:[#allocation12 + $0x6c] sm:$0xff]
        %v1434 = vld [vmem:[#allocation12 + $0x74] sm:$0xf]
        %v1435 = vld [vmem:[#allocation12 + $0x78] sm:$0xff]
        %v1436 = vld [vmem:[#allocation12 + $0x80] sm:$0xf]
        %v1437 = vld [vmem:[#allocation12 + $0x84] sm:$0xff]
        %v1438 = vld [vmem:[#allocation12 + $0x8c] sm:$0xf]
        %v1439 = vld [vmem:[#allocation12 + $0x90] sm:$0xff]
        %v1440 = vld [vmem:[#allocation12 + $0x98] sm:$0xf]
        %v1441 = vld [vmem:[#allocation12 + $0x9c] sm:$0xff]
        %v1442 = vld [vmem:[#allocation12 + $0xa4] sm:$0xf]
        %v1443 = vld [vmem:[#allocation12 + $0xa8] sm:$0xff]
        %v1444 = vld [vmem:[#allocation12 + $0xb0] sm:$0xf]
        %v1445 = vld [vmem:[#allocation12 + $0xb4] sm:$0xff]
        %v1446 = vld [vmem:[#allocation12 + $0xbc] sm:$0xf]
        %v1447 = vld [vmem:[#allocation12 + $0xc0] sm:$0xff]
        %v1448 = vld [vmem:[#allocation12 + $0xc8] sm:$0xf]
        %v1449 = vld [vmem:[#allocation12 + $0xcc] sm:$0xff]
        %v1450 = vld [vmem:[#allocation12 + $0xd4] sm:$0xf]
        %v1451 = vld [vmem:[#allocation12 + $0xd8] sm:$0xff]
        %v1452 = vld [vmem:[#allocation12 + $0xe0] sm:$0xf]
        %v1453 = vld [vmem:[#allocation12 + $0xe4] sm:$0xff]
        %v1454 = vld [vmem:[#allocation12 + $0xec] sm:$0xf]
        %v1455 = vld [vmem:[#allocation12 + $0xf0] sm:$0xff]
        %v1456 = vld [vmem:[#allocation12 + $0xf8] sm:$0xf]
        %v1457 = vld [vmem:[#allocation12 + $0xfc] sm:$0xff]
        %v1458 = vld [vmem:[#allocation12 + $0x104] sm:$0xf]
        %v1459 = vld [vmem:[#allocation12 + $0x108] sm:$0xff]
        %v1460 = vld [vmem:[#allocation12 + $0x110] sm:$0xf]
        %v1461 = vld [vmem:[#allocation12 + $0x114] sm:$0xff]
        %v1462 = vld [vmem:[#allocation12 + $0x11c] sm:$0xf]
        %v1463 = vld [vmem:[#allocation12 + $0x120] sm:$0xff]
        %v1464 = vld [vmem:[#allocation12 + $0x128] sm:$0xf]
        %v1465 = vld [vmem:[#allocation12 + $0x12c] sm:$0xff]
        %v1466 = vld [vmem:[#allocation12 + $0x134] sm:$0xf]
        %v1467 = vld [vmem:[#allocation12 + $0x138] sm:$0xff]
        %v1468 = vld [vmem:[#allocation12 + $0x140] sm:$0xf]
        %v1469 = vld [vmem:[#allocation12 + $0x144] sm:$0xff]
        %v1470 = vld [vmem:[#allocation12 + $0x14c] sm:$0xf]
        %v1471 = vld [vmem:[#allocation12 + $0x150] sm:$0xff]
        %v1472 = vld [vmem:[#allocation12 + $0x158] sm:$0xf]
        %v1473 = vld [vmem:[#allocation12 + $0x15c] sm:$0xff]
        %v1474 = vld [vmem:[#allocation12 + $0x164] sm:$0xf]
        %v1475 = vld [vmem:[#allocation12 + $0x168] sm:$0xff]
        %v1476 = vld [vmem:[#allocation12 + $0x170] sm:$0xf]
        %v1477 = vld [vmem:[#allocation12 + $0x174] sm:$0xff]
        %v1478 = vld [vmem:[#allocation12 + $0x17c] sm:$0xf]
        %v1479 = vld [vmem:[#allocation12 + $0x180] sm:$0xff]
        %v1480 = vld [vmem:[#allocation12 + $0x188] sm:$0xf]
        %v1481 = vld [vmem:[#allocation12 + $0x18c] sm:$0xff]
        %v1482 = vld [vmem:[#allocation12 + $0x194] sm:$0xf]
        %v1483 = vld [vmem:[#allocation12 + $0x198] sm:$0xff]
        %v1484 = vld [vmem:[#allocation12 + $0x1a0] sm:$0xf]
        %v1485 = vld [vmem:[#allocation12 + $0x1a4] sm:$0xff]
        %v1486 = vld [vmem:[#allocation12 + $0x1ac] sm:$0xf]
        %v1487 = vld [vmem:[#allocation12 + $0x1b0] sm:$0xff]
        %v1488 = vld [vmem:[#allocation12 + $0x1b8] sm:$0xf]
        %v1489 = vld [vmem:[#allocation12 + $0x1bc] sm:$0xff]
        %v1490 = vld [vmem:[#allocation12 + $0x1c4] sm:$0xf]
        %v1491 = vld [vmem:[#allocation12 + $0x1c8] sm:$0xff]
        %v1492 = vld [vmem:[#allocation12 + $0x1d0] sm:$0xf]
        %v1493 = vld [vmem:[#allocation12 + $0x1d4] sm:$0xff]
        %v1494 = vld [vmem:[#allocation12 + $0x1dc] sm:$0xf]
        %v1495 = vld [vmem:[#allocation12 + $0x1e0] sm:$0xff]
        %v1496 = vld [vmem:[#allocation12 + $0x1e8] sm:$0xf]
        %v1497 = vld [vmem:[#allocation12 + $0x1ec] sm:$0xff]
        %v1498 = vld [vmem:[#allocation12 + $0x1f4] sm:$0xf]
        %v1499 = vld [vmem:[#allocation12 + $0x1f8] sm:$0xff]
        %v1500 = vld [vmem:[#allocation12 + $0x200] sm:$0xf]
        %v1501 = vld [vmem:[#allocation12 + $0x204] sm:$0xff]
        %v1502 = vld [vmem:[#allocation12 + $0x20c] sm:$0xf]
        %v1503 = vld [vmem:[#allocation12 + $0x210] sm:$0xff]
        %v1504 = vld [vmem:[#allocation12 + $0x218] sm:$0xf]
        %v1505 = vld [vmem:[#allocation12 + $0x21c] sm:$0xff]
        %v1506 = vld [vmem:[#allocation12 + $0x224] sm:$0xf]
        %v1507 = vld [vmem:[#allocation12 + $0x228] sm:$0xff]
        %v1508 = vld [vmem:[#allocation12 + $0x230] sm:$0xf]
        %v1509 = vld [vmem:[#allocation12 + $0x234] sm:$0xff]
        %v1510 = vld [vmem:[#allocation12 + $0x23c] sm:$0xf]
        %v1607 = vunpack.c.l.b16 %v1415
        %v1608 = vunpack.c.h.b16 %v1415
        %v1609 = vunpack.c.l.b16 %v1416
        %v1610 = vunpack.c.l.b16 %v1417
        %v1611 = vunpack.c.h.b16 %v1417
        %v1612 = vunpack.c.l.b16 %v1418
        %v1613 = vunpack.c.l.b16 %v1419
        %v1614 = vunpack.c.h.b16 %v1419
        %v1615 = vunpack.c.l.b16 %v1420
        %v1616 = vunpack.c.l.b16 %v1421
        %v1617 = vunpack.c.h.b16 %v1421
        %v1618 = vunpack.c.l.b16 %v1422
        %v1619 = vunpack.c.l.b16 %v1423
        %v1620 = vunpack.c.h.b16 %v1423
        %v1621 = vunpack.c.l.b16 %v1424
        %v1622 = vunpack.c.l.b16 %v1425
        %v1623 = vunpack.c.h.b16 %v1425
        %v1624 = vunpack.c.l.b16 %v1426
        %v1625 = vunpack.c.l.b16 %v1427
        %v1626 = vunpack.c.h.b16 %v1427
        %v1627 = vunpack.c.l.b16 %v1428
        %v1628 = vunpack.c.l.b16 %v1429
        %v1629 = vunpack.c.h.b16 %v1429
        %v1630 = vunpack.c.l.b16 %v1430
        %v1631 = vunpack.c.l.b16 %v1431
        %v1632 = vunpack.c.h.b16 %v1431
        %v1633 = vunpack.c.l.b16 %v1432
        %v1634 = vunpack.c.l.b16 %v1433
        %v1635 = vunpack.c.h.b16 %v1433
        %v1636 = vunpack.c.l.b16 %v1434
        %v1637 = vunpack.c.l.b16 %v1435
        %v1638 = vunpack.c.h.b16 %v1435
        %v1639 = vunpack.c.l.b16 %v1436
        %v1640 = vunpack.c.l.b16 %v1437
        %v1641 = vunpack.c.h.b16 %v1437
        %v1642 = vunpack.c.l.b16 %v1438
        %v1643 = vunpack.c.l.b16 %v1439
        %v1644 = vunpack.c.h.b16 %v1439
        %v1645 = vunpack.c.l.b16 %v1440
        %v1646 = vunpack.c.l.b16 %v1441
        %v1647 = vunpack.c.h.b16 %v1441
        %v1648 = vunpack.c.l.b16 %v1442
        %v1649 = vunpack.c.l.b16 %v1443
        %v1650 = vunpack.c.h.b16 %v1443
        %v1651 = vunpack.c.l.b16 %v1444
        %v1652 = vunpack.c.l.b16 %v1445
        %v1653 = vunpack.c.h.b16 %v1445
        %v1654 = vunpack.c.l.b16 %v1446
        %v1655 = vunpack.c.l.b16 %v1447
        %v1656 = vunpack.c.h.b16 %v1447
        %v1657 = vunpack.c.l.b16 %v1448
        %v1658 = vunpack.c.l.b16 %v1449
        %v1659 = vunpack.c.h.b16 %v1449
        %v1660 = vunpack.c.l.b16 %v1450
        %v1661 = vunpack.c.l.b16 %v1451
        %v1662 = vunpack.c.h.b16 %v1451
        %v1663 = vunpack.c.l.b16 %v1452
        %v1664 = vunpack.c.l.b16 %v1453
        %v1665 = vunpack.c.h.b16 %v1453
        %v1666 = vunpack.c.l.b16 %v1454
        %v1667 = vunpack.c.l.b16 %v1455
        %v1668 = vunpack.c.h.b16 %v1455
        %v1669 = vunpack.c.l.b16 %v1456
        %v1670 = vunpack.c.l.b16 %v1457
        %v1671 = vunpack.c.h.b16 %v1457
        %v1672 = vunpack.c.l.b16 %v1458
        %v1673 = vunpack.c.l.b16 %v1459
        %v1674 = vunpack.c.h.b16 %v1459
        %v1675 = vunpack.c.l.b16 %v1460
        %v1676 = vunpack.c.l.b16 %v1461
        %v1677 = vunpack.c.h.b16 %v1461
        %v1678 = vunpack.c.l.b16 %v1462
        %v1679 = vunpack.c.l.b16 %v1463
        %v1680 = vunpack.c.h.b16 %v1463
        %v1681 = vunpack.c.l.b16 %v1464
        %v1682 = vunpack.c.l.b16 %v1465
        %v1683 = vunpack.c.h.b16 %v1465
        %v1684 = vunpack.c.l.b16 %v1466
        %v1685 = vunpack.c.l.b16 %v1467
        %v1686 = vunpack.c.h.b16 %v1467
        %v1687 = vunpack.c.l.b16 %v1468
        %v1688 = vunpack.c.l.b16 %v1469
        %v1689 = vunpack.c.h.b16 %v1469
        %v1690 = vunpack.c.l.b16 %v1470
        %v1691 = vunpack.c.l.b16 %v1471
        %v1692 = vunpack.c.h.b16 %v1471
        %v1693 = vunpack.c.l.b16 %v1472
        %v1694 = vunpack.c.l.b16 %v1473
        %v1695 = vunpack.c.h.b16 %v1473
        %v1696 = vunpack.c.l.b16 %v1474
        %v1697 = vunpack.c.l.b16 %v1475
        %v1698 = vunpack.c.h.b16 %v1475
        %v1699 = vunpack.c.l.b16 %v1476
        %v1700 = vunpack.c.l.b16 %v1477
        %v1701 = vunpack.c.h.b16 %v1477
        %v1702 = vunpack.c.l.b16 %v1478
        %v1703 = vunpack.c.l.b16 %v1479
        %v1704 = vunpack.c.h.b16 %v1479
        %v1705 = vunpack.c.l.b16 %v1480
        %v1706 = vunpack.c.l.b16 %v1481
        %v1707 = vunpack.c.h.b16 %v1481
        %v1708 = vunpack.c.l.b16 %v1482
        %v1709 = vunpack.c.l.b16 %v1483
        %v1710 = vunpack.c.h.b16 %v1483
        %v1711 = vunpack.c.l.b16 %v1484
        %v1712 = vunpack.c.l.b16 %v1485
        %v1713 = vunpack.c.h.b16 %v1485
        %v1714 = vunpack.c.l.b16 %v1486
        %v1715 = vunpack.c.l.b16 %v1487
        %v1716 = vunpack.c.h.b16 %v1487
        %v1717 = vunpack.c.l.b16 %v1488
        %v1718 = vunpack.c.l.b16 %v1489
        %v1719 = vunpack.c.h.b16 %v1489
        %v1720 = vunpack.c.l.b16 %v1490
        %v1721 = vunpack.c.l.b16 %v1491
        %v1722 = vunpack.c.h.b16 %v1491
        %v1723 = vunpack.c.l.b16 %v1492
        %v1724 = vunpack.c.l.b16 %v1493
        %v1725 = vunpack.c.h.b16 %v1493
        %v1726 = vunpack.c.l.b16 %v1494
        %v1727 = vunpack.c.l.b16 %v1495
        %v1728 = vunpack.c.h.b16 %v1495
        %v1729 = vunpack.c.l.b16 %v1496
        %v1730 = vunpack.c.l.b16 %v1497
        %v1731 = vunpack.c.h.b16 %v1497
        %v1732 = vunpack.c.l.b16 %v1498
        %v1733 = vunpack.c.l.b16 %v1499
        %v1734 = vunpack.c.h.b16 %v1499
        %v1735 = vunpack.c.l.b16 %v1500
        %v1736 = vunpack.c.l.b16 %v1501
        %v1737 = vunpack.c.h.b16 %v1501
        %v1738 = vunpack.c.l.b16 %v1502
        %v1739 = vunpack.c.l.b16 %v1503
        %v1740 = vunpack.c.h.b16 %v1503
        %v1741 = vunpack.c.l.b16 %v1504
        %v1742 = vunpack.c.l.b16 %v1505
        %v1743 = vunpack.c.h.b16 %v1505
        %v1744 = vunpack.c.l.b16 %v1506
        %v1745 = vunpack.c.l.b16 %v1507
        %v1746 = vunpack.c.h.b16 %v1507
        %v1747 = vunpack.c.l.b16 %v1508
        %v1748 = vunpack.c.l.b16 %v1509
        %v1749 = vunpack.c.h.b16 %v1509
        %v1750 = vunpack.c.l.b16 %v1510
        %v1751 = vpack.c.b16 %v1610, %v1607
        %v1752 = vpack.c.b16 %v1611, %v1608
        %v1753 = vpack.c.b16 %v1612, %v1609
        %v1754 = vpack.c.b16 %v1616, %v1613
        %v1755 = vpack.c.b16 %v1617, %v1614
        %v1756 = vpack.c.b16 %v1618, %v1615
        %v1757 = vpack.c.b16 %v1622, %v1619
        %v1758 = vpack.c.b16 %v1623, %v1620
        %v1759 = vpack.c.b16 %v1624, %v1621
        %v1760 = vpack.c.b16 %v1628, %v1625
        %v1761 = vpack.c.b16 %v1629, %v1626
        %v1762 = vpack.c.b16 %v1630, %v1627
        %v1763 = vpack.c.b16 %v1634, %v1631
        %v1764 = vpack.c.b16 %v1635, %v1632
        %v1765 = vpack.c.b16 %v1636, %v1633
        %v1766 = vpack.c.b16 %v1640, %v1637
        %v1767 = vpack.c.b16 %v1641, %v1638
        %v1768 = vpack.c.b16 %v1642, %v1639
        %v1769 = vpack.c.b16 %v1646, %v1643
        %v1770 = vpack.c.b16 %v1647, %v1644
        %v1771 = vpack.c.b16 %v1648, %v1645
        %v1772 = vpack.c.b16 %v1652, %v1649
        %v1773 = vpack.c.b16 %v1653, %v1650
        %v1774 = vpack.c.b16 %v1654, %v1651
        %v1775 = vpack.c.b16 %v1658, %v1655
        %v1776 = vpack.c.b16 %v1659, %v1656
        %v1777 = vpack.c.b16 %v1660, %v1657
        %v1778 = vpack.c.b16 %v1664, %v1661
        %v1779 = vpack.c.b16 %v1665, %v1662
        %v1780 = vpack.c.b16 %v1666, %v1663
        %v1781 = vpack.c.b16 %v1670, %v1667
        %v1782 = vpack.c.b16 %v1671, %v1668
        %v1783 = vpack.c.b16 %v1672, %v1669
        %v1784 = vpack.c.b16 %v1676, %v1673
        %v1785 = vpack.c.b16 %v1677, %v1674
        %v1786 = vpack.c.b16 %v1678, %v1675
        %v1787 = vpack.c.b16 %v1682, %v1679
        %v1788 = vpack.c.b16 %v1683, %v1680
        %v1789 = vpack.c.b16 %v1684, %v1681
        %v1790 = vpack.c.b16 %v1688, %v1685
        %v1791 = vpack.c.b16 %v1689, %v1686
        %v1792 = vpack.c.b16 %v1690, %v1687
        %v1793 = vpack.c.b16 %v1694, %v1691
        %v1794 = vpack.c.b16 %v1695, %v1692
        %v1795 = vpack.c.b16 %v1696, %v1693
        %v1796 = vpack.c.b16 %v1700, %v1697
        %v1797 = vpack.c.b16 %v1701, %v1698
        %v1798 = vpack.c.b16 %v1702, %v1699
        %v1799 = vpack.c.b16 %v1706, %v1703
        %v1800 = vpack.c.b16 %v1707, %v1704
        %v1801 = vpack.c.b16 %v1708, %v1705
        %v1802 = vpack.c.b16 %v1712, %v1709
        %v1803 = vpack.c.b16 %v1713, %v1710
        %v1804 = vpack.c.b16 %v1714, %v1711
        %v1805 = vpack.c.b16 %v1718, %v1715
        %v1806 = vpack.c.b16 %v1719, %v1716
        %v1807 = vpack.c.b16 %v1720, %v1717
        %v1808 = vpack.c.b16 %v1724, %v1721
        %v1809 = vpack.c.b16 %v1725, %v1722
        %v1810 = vpack.c.b16 %v1726, %v1723
        %v1811 = vpack.c.b16 %v1730, %v1727
        %v1812 = vpack.c.b16 %v1731, %v1728
        %v1813 = vpack.c.b16 %v1732, %v1729
        %v1814 = vpack.c.b16 %v1736, %v1733
        %v1815 = vpack.c.b16 %v1737, %v1734
        %v1816 = vpack.c.b16 %v1738, %v1735
        %v1817 = vpack.c.b16 %v1742, %v1739
        %v1818 = vpack.c.b16 %v1743, %v1740
        %v1819 = vpack.c.b16 %v1744, %v1741
        %v1820 = vpack.c.b16 %v1748, %v1745
        %v1821 = vpack.c.b16 %v1749, %v1746
        %v1822 = vpack.c.b16 %v1750, %v1747
        %1895 = vmatprep.subr.bf16.mxu0 %v1773
        %1896 = vmatpush1.bf16.msra.mxu0 %v1772
        %1897 = vmatprep.subr.bf16.mxu0 %v1770
        %1898 = vmatpush1.bf16.msra.mxu0 %v1769
        %1899 = vmatprep.subr.bf16.mxu0 %v1767
        %1900 = vmatpush1.bf16.msra.mxu0 %v1766
        %1901 = vmatprep.subr.bf16.mxu0 %v1764
        %1902 = vmatpush1.bf16.msra.mxu0 %v1763
        %1903 = vmatprep.subr.bf16.mxu0 %v1761
        %1904 = vmatpush1.bf16.msra.mxu0 %v1760
        %1905 = vmatprep.subr.bf16.mxu0 %v1758
        %1906 = vmatpush1.bf16.msra.mxu0 %v1757
        %1907 = vmatprep.subr.bf16.mxu0 %v1755
        %1908 = vmatpush1.bf16.msra.mxu0 %v1754
        %1909 = vmatprep.subr.bf16.mxu0 %v1752
        %1910 = vmatpush1.bf16.msra.mxu0 %v1751
        %1911 = vmatprep.subr.bf16.mxu0 %v1797
        %1912 = vmatpush2.bf16.msra.mxu0 %v1796
        %1913 = vmatprep.subr.bf16.mxu0 %v1794
        %1914 = vmatpush2.bf16.msra.mxu0 %v1793
        %1915 = vmatprep.subr.bf16.mxu0 %v1791
        %1916 = vmatpush2.bf16.msra.mxu0 %v1790
        %1917 = vmatprep.subr.bf16.mxu0 %v1788
        %1918 = vmatpush2.bf16.msra.mxu0 %v1787
        %1919 = vmatprep.subr.bf16.mxu0 %v1785
        %1920 = vmatpush2.bf16.msra.mxu0 %v1784
        %1921 = vmatprep.subr.bf16.mxu0 %v1782
        %1922 = vmatpush2.bf16.msra.mxu0 %v1781
        %1923 = vmatprep.subr.bf16.mxu0 %v1779
        %1924 = vmatpush2.bf16.msra.mxu0 %v1778
        %1925 = vmatprep.subr.bf16.mxu0 %v1776
        %1926 = vmatpush2.bf16.msra.mxu0 %v1775
        %1927 = vmatprep.mubr.bf16.mxu0 %v765
        %1928 = vmatmul.mubr.bf16.gmra.mxu0 %v764
        %v1929 = vpop.f32.mrf.mxu0
        %v1930 = vadd.f32 0.0, %v1929
        %v1931 = vpop.f32.mrf.mxu0
        %v1932 = vadd.f32 0.0, %v1931
        %v1933 = vpop.f32.mrf.mxu0
        %v1934 = vpop.f32.mrf.mxu0
        %1935 = vdwg.mxu0
        %1936 = vmatprep.subr.bf16.mxu0 %v1821
        %1937 = vmatpush1.bf16.msra.mxu0 %v1820
        %1938 = vmatprep.subr.bf16.mxu0 %v1818
        %1939 = vmatpush1.bf16.msra.mxu0 %v1817
        %1940 = vmatprep.subr.bf16.mxu0 %v1815
        %1941 = vmatpush1.bf16.msra.mxu0 %v1814
        %1942 = vmatprep.subr.bf16.mxu0 %v1812
        %1943 = vmatpush1.bf16.msra.mxu0 %v1811
        %1944 = vmatprep.subr.bf16.mxu0 %v1809
        %1945 = vmatpush1.bf16.msra.mxu0 %v1808
        %1946 = vmatprep.subr.bf16.mxu0 %v1806
        %1947 = vmatpush1.bf16.msra.mxu0 %v1805
        %1948 = vmatprep.subr.bf16.mxu0 %v1803
        %1949 = vmatpush1.bf16.msra.mxu0 %v1802
        %1950 = vmatprep.subr.bf16.mxu0 %v1800
        %1951 = vmatpush1.bf16.msra.mxu0 %v1799
        %1952 = vmatprep.subr.bf16.mxu0 0
        %1953 = vmatpush2.bf16.msra.mxu0 0
        %1954 = vmatprep.subr.bf16.mxu0 0
        %1955 = vmatpush2.bf16.msra.mxu0 0
        %1956 = vmatprep.subr.bf16.mxu0 0
        %1957 = vmatpush2.bf16.msra.mxu0 0
        %1958 = vmatprep.subr.bf16.mxu0 0
        %1959 = vmatpush2.bf16.msra.mxu0 0
        %1960 = vmatprep.subr.bf16.mxu0 0
        %1961 = vmatpush2.bf16.msra.mxu0 0
        %1962 = vmatprep.subr.bf16.mxu0 0
        %1963 = vmatpush2.bf16.msra.mxu0 0
        %1964 = vmatprep.subr.bf16.mxu0 0
        %1965 = vmatpush2.bf16.msra.mxu0 0
        %1966 = vmatprep.subr.bf16.mxu0 0
        %1967 = vmatpush2.bf16.msra.mxu0 0
        %1968 = vmatprep.mubr.bf16.mxu0 0
        %1969 = vmatmul.mubr.bf16.gmra.mxu0 %v766
        %v1970 = vpop.f32.mrf.mxu0
        %v1971 = vadd.f32 %v1930, %v1970
        %v1972 = vpop.f32.mrf.mxu0
        %v1973 = vadd.f32 %v1932, %v1972
        %v1974 = vpop.f32.mrf.mxu0
        %v1975 = vpop.f32.mrf.mxu0
        %1976 = vdwg.mxu0
        %1977 = vmatprep.subr.bf16.mxu0 0
        %1978 = vmatpush1.bf16.msra.mxu0 %v1774
        %1979 = vmatprep.subr.bf16.mxu0 0
        %1980 = vmatpush1.bf16.msra.mxu0 %v1771
        %1981 = vmatprep.subr.bf16.mxu0 0
        %1982 = vmatpush1.bf16.msra.mxu0 %v1768
        %1983 = vmatprep.subr.bf16.mxu0 0
        %1984 = vmatpush1.bf16.msra.mxu0 %v1765
        %1985 = vmatprep.subr.bf16.mxu0 0
        %1986 = vmatpush1.bf16.msra.mxu0 %v1762
        %1987 = vmatprep.subr.bf16.mxu0 0
        %1988 = vmatpush1.bf16.msra.mxu0 %v1759
        %1989 = vmatprep.subr.bf16.mxu0 0
        %1990 = vmatpush1.bf16.msra.mxu0 %v1756
        %1991 = vmatprep.subr.bf16.mxu0 0
        %1992 = vmatpush1.bf16.msra.mxu0 %v1753
        %1993 = vmatprep.subr.bf16.mxu0 0
        %1994 = vmatpush2.bf16.msra.mxu0 %v1798
        %1995 = vmatprep.subr.bf16.mxu0 0
        %1996 = vmatpush2.bf16.msra.mxu0 %v1795
        %1997 = vmatprep.subr.bf16.mxu0 0
        %1998 = vmatpush2.bf16.msra.mxu0 %v1792
        %1999 = vmatprep.subr.bf16.mxu0 0
        %2000 = vmatpush2.bf16.msra.mxu0 %v1789
        %2001 = vmatprep.subr.bf16.mxu0 0
        %2002 = vmatpush2.bf16.msra.mxu0 %v1786
        %2003 = vmatprep.subr.bf16.mxu0 0
        %2004 = vmatpush2.bf16.msra.mxu0 %v1783
        %2005 = vmatprep.subr.bf16.mxu0 0
        %2006 = vmatpush2.bf16.msra.mxu0 %v1780
        %2007 = vmatprep.subr.bf16.mxu0 0
        %2008 = vmatpush2.bf16.msra.mxu0 %v1777
        %2009 = vmatprep.mubr.bf16.mxu0 %v765
        %2010 = vmatmul.mubr.bf16.gmra.mxu0 %v764
        %v2011 = vpop.f32.mrf.mxu0
        %v2012 = vadd.f32 0.0, %v2011
        %v2013 = vpop.f32.mrf.mxu0
        %v2014 = vpop.f32.mrf.mxu0
        %v2015 = vpop.f32.mrf.mxu0
        %2016 = vdwg.mxu0
        %2017 = vmatprep.subr.bf16.mxu0 0
        %2018 = vmatpush1.bf16.msra.mxu0 %v1822
        %2019 = vmatprep.subr.bf16.mxu0 0
        %2020 = vmatpush1.bf16.msra.mxu0 %v1819
        %2021 = vmatprep.subr.bf16.mxu0 0
        %2022 = vmatpush1.bf16.msra.mxu0 %v1816
        %2023 = vmatprep.subr.bf16.mxu0 0
        %2024 = vmatpush1.bf16.msra.mxu0 %v1813
        %2025 = vmatprep.subr.bf16.mxu0 0
        %2026 = vmatpush1.bf16.msra.mxu0 %v1810
        %2027 = vmatprep.subr.bf16.mxu0 0
        %2028 = vmatpush1.bf16.msra.mxu0 %v1807
        %2029 = vmatprep.subr.bf16.mxu0 0
        %2030 = vmatpush1.bf16.msra.mxu0 %v1804
        %2031 = vmatprep.subr.bf16.mxu0 0
        %2032 = vmatpush1.bf16.msra.mxu0 %v1801
        %2033 = vmatprep.subr.bf16.mxu0 0
        %2034 = vmatpush2.bf16.msra.mxu0 0
        %2035 = vmatprep.subr.bf16.mxu0 0
        %2036 = vmatpush2.bf16.msra.mxu0 0
        %2037 = vmatprep.subr.bf16.mxu0 0
        %2038 = vmatpush2.bf16.msra.mxu0 0
        %2039 = vmatprep.subr.bf16.mxu0 0
        %2040 = vmatpush2.bf16.msra.mxu0 0
        %2041 = vmatprep.subr.bf16.mxu0 0
        %2042 = vmatpush2.bf16.msra.mxu0 0
        %2043 = vmatprep.subr.bf16.mxu0 0
        %2044 = vmatpush2.bf16.msra.mxu0 0
        %2045 = vmatprep.subr.bf16.mxu0 0
        %2046 = vmatpush2.bf16.msra.mxu0 0
        %2047 = vmatprep.subr.bf16.mxu0 0
        %2048 = vmatpush2.bf16.msra.mxu0 0
        %2049 = vmatprep.mubr.bf16.mxu0 0
        %2050 = vmatmul.mubr.bf16.gmra.mxu0 %v766
        %v2051 = vpop.f32.mrf.mxu0
        %v2052 = vadd.f32 %v2012, %v2051
        %v2053 = vpop.f32.mrf.mxu0
        %v2054 = vpop.f32.mrf.mxu0
        %v2055 = vpop.f32.mrf.mxu0
        %2056 = vdwg.mxu0
        %v2057 = vpack.c.bf16 %v1971, %v1971
        %v2058 = vpack.c.bf16 %v1973, %v1973
        %v2059 = vpack.c.bf16 %v2052, %v2052
        %v2060 = vld [vmem:[#allocation14] sm:$0xff]
        %v2061 = vld [vmem:[#allocation14 + $0x8] sm:$0xf]
        %v2062 = vld [vmem:[#allocation14 + $0xc] sm:$0xff]
        %v2063 = vld [vmem:[#allocation14 + $0x14] sm:$0xf]
        %v2064 = vld [vmem:[#allocation14 + $0x18] sm:$0xff]
        %v2065 = vld [vmem:[#allocation14 + $0x20] sm:$0xf]
        %v2066 = vld [vmem:[#allocation14 + $0x24] sm:$0xff]
        %v2067 = vld [vmem:[#allocation14 + $0x2c] sm:$0xf]
        %v2068 = vld [vmem:[#allocation14 + $0x30] sm:$0xff]
        %v2069 = vld [vmem:[#allocation14 + $0x38] sm:$0xf]
        %v2070 = vld [vmem:[#allocation14 + $0x3c] sm:$0xff]
        %v2071 = vld [vmem:[#allocation14 + $0x44] sm:$0xf]
        %v2072 = vld [vmem:[#allocation14 + $0x48] sm:$0xff]
        %v2073 = vld [vmem:[#allocation14 + $0x50] sm:$0xf]
        %v2074 = vld [vmem:[#allocation14 + $0x54] sm:$0xff]
        %v2075 = vld [vmem:[#allocation14 + $0x5c] sm:$0xf]
        %v2076 = vld [vmem:[#allocation14 + $0x60] sm:$0xff]
        %v2077 = vld [vmem:[#allocation14 + $0x68] sm:$0xf]
        %v2078 = vld [vmem:[#allocation14 + $0x6c] sm:$0xff]
        %v2079 = vld [vmem:[#allocation14 + $0x74] sm:$0xf]
        %v2080 = vld [vmem:[#allocation14 + $0x78] sm:$0xff]
        %v2081 = vld [vmem:[#allocation14 + $0x80] sm:$0xf]
        %v2082 = vld [vmem:[#allocation14 + $0x84] sm:$0xff]
        %v2083 = vld [vmem:[#allocation14 + $0x8c] sm:$0xf]
        %v2084 = vld [vmem:[#allocation14 + $0x90] sm:$0xff]
        %v2085 = vld [vmem:[#allocation14 + $0x98] sm:$0xf]
        %v2086 = vld [vmem:[#allocation14 + $0x9c] sm:$0xff]
        %v2087 = vld [vmem:[#allocation14 + $0xa4] sm:$0xf]
        %v2088 = vld [vmem:[#allocation14 + $0xa8] sm:$0xff]
        %v2089 = vld [vmem:[#allocation14 + $0xb0] sm:$0xf]
        %v2090 = vld [vmem:[#allocation14 + $0xb4] sm:$0xff]
        %v2091 = vld [vmem:[#allocation14 + $0xbc] sm:$0xf]
        %v2092 = vld [vmem:[#allocation14 + $0xc0] sm:$0xff]
        %v2093 = vld [vmem:[#allocation14 + $0xc8] sm:$0xf]
        %v2094 = vld [vmem:[#allocation14 + $0xcc] sm:$0xff]
        %v2095 = vld [vmem:[#allocation14 + $0xd4] sm:$0xf]
        %v2096 = vld [vmem:[#allocation14 + $0xd8] sm:$0xff]
        %v2097 = vld [vmem:[#allocation14 + $0xe0] sm:$0xf]
        %v2098 = vld [vmem:[#allocation14 + $0xe4] sm:$0xff]
        %v2099 = vld [vmem:[#allocation14 + $0xec] sm:$0xf]
        %v2100 = vld [vmem:[#allocation14 + $0xf0] sm:$0xff]
        %v2101 = vld [vmem:[#allocation14 + $0xf8] sm:$0xf]
        %v2102 = vld [vmem:[#allocation14 + $0xfc] sm:$0xff]
        %v2103 = vld [vmem:[#allocation14 + $0x104] sm:$0xf]
        %v2104 = vld [vmem:[#allocation14 + $0x108] sm:$0xff]
        %v2105 = vld [vmem:[#allocation14 + $0x110] sm:$0xf]
        %v2106 = vld [vmem:[#allocation14 + $0x114] sm:$0xff]
        %v2107 = vld [vmem:[#allocation14 + $0x11c] sm:$0xf]
        %v2108 = vld [vmem:[#allocation14 + $0x120] sm:$0xff]
        %v2109 = vld [vmem:[#allocation14 + $0x128] sm:$0xf]
        %v2110 = vld [vmem:[#allocation14 + $0x12c] sm:$0xff]
        %v2111 = vld [vmem:[#allocation14 + $0x134] sm:$0xf]
        %v2112 = vld [vmem:[#allocation14 + $0x138] sm:$0xff]
        %v2113 = vld [vmem:[#allocation14 + $0x140] sm:$0xf]
        %v2114 = vld [vmem:[#allocation14 + $0x144] sm:$0xff]
        %v2115 = vld [vmem:[#allocation14 + $0x14c] sm:$0xf]
        %v2116 = vld [vmem:[#allocation14 + $0x150] sm:$0xff]
        %v2117 = vld [vmem:[#allocation14 + $0x158] sm:$0xf]
        %v2118 = vld [vmem:[#allocation14 + $0x15c] sm:$0xff]
        %v2119 = vld [vmem:[#allocation14 + $0x164] sm:$0xf]
        %v2120 = vld [vmem:[#allocation14 + $0x168] sm:$0xff]
        %v2121 = vld [vmem:[#allocation14 + $0x170] sm:$0xf]
        %v2122 = vld [vmem:[#allocation14 + $0x174] sm:$0xff]
        %v2123 = vld [vmem:[#allocation14 + $0x17c] sm:$0xf]
        %v2124 = vld [vmem:[#allocation14 + $0x180] sm:$0xff]
        %v2125 = vld [vmem:[#allocation14 + $0x188] sm:$0xf]
        %v2126 = vld [vmem:[#allocation14 + $0x18c] sm:$0xff]
        %v2127 = vld [vmem:[#allocation14 + $0x194] sm:$0xf]
        %v2128 = vld [vmem:[#allocation14 + $0x198] sm:$0xff]
        %v2129 = vld [vmem:[#allocation14 + $0x1a0] sm:$0xf]
        %v2130 = vld [vmem:[#allocation14 + $0x1a4] sm:$0xff]
        %v2131 = vld [vmem:[#allocation14 + $0x1ac] sm:$0xf]
        %v2132 = vld [vmem:[#allocation14 + $0x1b0] sm:$0xff]
        %v2133 = vld [vmem:[#allocation14 + $0x1b8] sm:$0xf]
        %v2134 = vld [vmem:[#allocation14 + $0x1bc] sm:$0xff]
        %v2135 = vld [vmem:[#allocation14 + $0x1c4] sm:$0xf]
        %v2136 = vld [vmem:[#allocation14 + $0x1c8] sm:$0xff]
        %v2137 = vld [vmem:[#allocation14 + $0x1d0] sm:$0xf]
        %v2138 = vld [vmem:[#allocation14 + $0x1d4] sm:$0xff]
        %v2139 = vld [vmem:[#allocation14 + $0x1dc] sm:$0xf]
        %v2140 = vld [vmem:[#allocation14 + $0x1e0] sm:$0xff]
        %v2141 = vld [vmem:[#allocation14 + $0x1e8] sm:$0xf]
        %v2142 = vld [vmem:[#allocation14 + $0x1ec] sm:$0xff]
        %v2143 = vld [vmem:[#allocation14 + $0x1f4] sm:$0xf]
        %v2144 = vld [vmem:[#allocation14 + $0x1f8] sm:$0xff]
        %v2145 = vld [vmem:[#allocation14 + $0x200] sm:$0xf]
        %v2146 = vld [vmem:[#allocation14 + $0x204] sm:$0xff]
        %v2147 = vld [vmem:[#allocation14 + $0x20c] sm:$0xf]
        %v2148 = vld [vmem:[#allocation14 + $0x210] sm:$0xff]
        %v2149 = vld [vmem:[#allocation14 + $0x218] sm:$0xf]
        %v2150 = vld [vmem:[#allocation14 + $0x21c] sm:$0xff]
        %v2151 = vld [vmem:[#allocation14 + $0x224] sm:$0xf]
        %v2152 = vld [vmem:[#allocation14 + $0x228] sm:$0xff]
        %v2153 = vld [vmem:[#allocation14 + $0x230] sm:$0xf]
        %v2154 = vld [vmem:[#allocation14 + $0x234] sm:$0xff]
        %v2155 = vld [vmem:[#allocation14 + $0x23c] sm:$0xf]
        %v2252 = vunpack.c.l.b16 %v2060
        %v2253 = vunpack.c.h.b16 %v2060
        %v2254 = vunpack.c.l.b16 %v2061
        %v2255 = vunpack.c.l.b16 %v2062
        %v2256 = vunpack.c.h.b16 %v2062
        %v2257 = vunpack.c.l.b16 %v2063
        %v2258 = vunpack.c.l.b16 %v2064
        %v2259 = vunpack.c.h.b16 %v2064
        %v2260 = vunpack.c.l.b16 %v2065
        %v2261 = vunpack.c.l.b16 %v2066
        %v2262 = vunpack.c.h.b16 %v2066
        %v2263 = vunpack.c.l.b16 %v2067
        %v2264 = vunpack.c.l.b16 %v2068
        %v2265 = vunpack.c.h.b16 %v2068
        %v2266 = vunpack.c.l.b16 %v2069
        %v2267 = vunpack.c.l.b16 %v2070
        %v2268 = vunpack.c.h.b16 %v2070
        %v2269 = vunpack.c.l.b16 %v2071
        %v2270 = vunpack.c.l.b16 %v2072
        %v2271 = vunpack.c.h.b16 %v2072
        %v2272 = vunpack.c.l.b16 %v2073
        %v2273 = vunpack.c.l.b16 %v2074
        %v2274 = vunpack.c.h.b16 %v2074
        %v2275 = vunpack.c.l.b16 %v2075
        %v2276 = vunpack.c.l.b16 %v2076
        %v2277 = vunpack.c.h.b16 %v2076
        %v2278 = vunpack.c.l.b16 %v2077
        %v2279 = vunpack.c.l.b16 %v2078
        %v2280 = vunpack.c.h.b16 %v2078
        %v2281 = vunpack.c.l.b16 %v2079
        %v2282 = vunpack.c.l.b16 %v2080
        %v2283 = vunpack.c.h.b16 %v2080
        %v2284 = vunpack.c.l.b16 %v2081
        %v2285 = vunpack.c.l.b16 %v2082
        %v2286 = vunpack.c.h.b16 %v2082
        %v2287 = vunpack.c.l.b16 %v2083
        %v2288 = vunpack.c.l.b16 %v2084
        %v2289 = vunpack.c.h.b16 %v2084
        %v2290 = vunpack.c.l.b16 %v2085
        %v2291 = vunpack.c.l.b16 %v2086
        %v2292 = vunpack.c.h.b16 %v2086
        %v2293 = vunpack.c.l.b16 %v2087
        %v2294 = vunpack.c.l.b16 %v2088
        %v2295 = vunpack.c.h.b16 %v2088
        %v2296 = vunpack.c.l.b16 %v2089
        %v2297 = vunpack.c.l.b16 %v2090
        %v2298 = vunpack.c.h.b16 %v2090
        %v2299 = vunpack.c.l.b16 %v2091
        %v2300 = vunpack.c.l.b16 %v2092
        %v2301 = vunpack.c.h.b16 %v2092
        %v2302 = vunpack.c.l.b16 %v2093
        %v2303 = vunpack.c.l.b16 %v2094
        %v2304 = vunpack.c.h.b16 %v2094
        %v2305 = vunpack.c.l.b16 %v2095
        %v2306 = vunpack.c.l.b16 %v2096
        %v2307 = vunpack.c.h.b16 %v2096
        %v2308 = vunpack.c.l.b16 %v2097
        %v2309 = vunpack.c.l.b16 %v2098
        %v2310 = vunpack.c.h.b16 %v2098
        %v2311 = vunpack.c.l.b16 %v2099
        %v2312 = vunpack.c.l.b16 %v2100
        %v2313 = vunpack.c.h.b16 %v2100
        %v2314 = vunpack.c.l.b16 %v2101
        %v2315 = vunpack.c.l.b16 %v2102
        %v2316 = vunpack.c.h.b16 %v2102
        %v2317 = vunpack.c.l.b16 %v2103
        %v2318 = vunpack.c.l.b16 %v2104
        %v2319 = vunpack.c.h.b16 %v2104
        %v2320 = vunpack.c.l.b16 %v2105
        %v2321 = vunpack.c.l.b16 %v2106
        %v2322 = vunpack.c.h.b16 %v2106
        %v2323 = vunpack.c.l.b16 %v2107
        %v2324 = vunpack.c.l.b16 %v2108
        %v2325 = vunpack.c.h.b16 %v2108
        %v2326 = vunpack.c.l.b16 %v2109
        %v2327 = vunpack.c.l.b16 %v2110
        %v2328 = vunpack.c.h.b16 %v2110
        %v2329 = vunpack.c.l.b16 %v2111
        %v2330 = vunpack.c.l.b16 %v2112
        %v2331 = vunpack.c.h.b16 %v2112
        %v2332 = vunpack.c.l.b16 %v2113
        %v2333 = vunpack.c.l.b16 %v2114
        %v2334 = vunpack.c.h.b16 %v2114
        %v2335 = vunpack.c.l.b16 %v2115
        %v2336 = vunpack.c.l.b16 %v2116
        %v2337 = vunpack.c.h.b16 %v2116
        %v2338 = vunpack.c.l.b16 %v2117
        %v2339 = vunpack.c.l.b16 %v2118
        %v2340 = vunpack.c.h.b16 %v2118
        %v2341 = vunpack.c.l.b16 %v2119
        %v2342 = vunpack.c.l.b16 %v2120
        %v2343 = vunpack.c.h.b16 %v2120
        %v2344 = vunpack.c.l.b16 %v2121
        %v2345 = vunpack.c.l.b16 %v2122
        %v2346 = vunpack.c.h.b16 %v2122
        %v2347 = vunpack.c.l.b16 %v2123
        %v2348 = vunpack.c.l.b16 %v2124
        %v2349 = vunpack.c.h.b16 %v2124
        %v2350 = vunpack.c.l.b16 %v2125
        %v2351 = vunpack.c.l.b16 %v2126
        %v2352 = vunpack.c.h.b16 %v2126
        %v2353 = vunpack.c.l.b16 %v2127
        %v2354 = vunpack.c.l.b16 %v2128
        %v2355 = vunpack.c.h.b16 %v2128
        %v2356 = vunpack.c.l.b16 %v2129
        %v2357 = vunpack.c.l.b16 %v2130
        %v2358 = vunpack.c.h.b16 %v2130
        %v2359 = vunpack.c.l.b16 %v2131
        %v2360 = vunpack.c.l.b16 %v2132
        %v2361 = vunpack.c.h.b16 %v2132
        %v2362 = vunpack.c.l.b16 %v2133
        %v2363 = vunpack.c.l.b16 %v2134
        %v2364 = vunpack.c.h.b16 %v2134
        %v2365 = vunpack.c.l.b16 %v2135
        %v2366 = vunpack.c.l.b16 %v2136
        %v2367 = vunpack.c.h.b16 %v2136
        %v2368 = vunpack.c.l.b16 %v2137
        %v2369 = vunpack.c.l.b16 %v2138
        %v2370 = vunpack.c.h.b16 %v2138
        %v2371 = vunpack.c.l.b16 %v2139
        %v2372 = vunpack.c.l.b16 %v2140
        %v2373 = vunpack.c.h.b16 %v2140
        %v2374 = vunpack.c.l.b16 %v2141
        %v2375 = vunpack.c.l.b16 %v2142
        %v2376 = vunpack.c.h.b16 %v2142
        %v2377 = vunpack.c.l.b16 %v2143
        %v2378 = vunpack.c.l.b16 %v2144
        %v2379 = vunpack.c.h.b16 %v2144
        %v2380 = vunpack.c.l.b16 %v2145
        %v2381 = vunpack.c.l.b16 %v2146
        %v2382 = vunpack.c.h.b16 %v2146
        %v2383 = vunpack.c.l.b16 %v2147
        %v2384 = vunpack.c.l.b16 %v2148
        %v2385 = vunpack.c.h.b16 %v2148
        %v2386 = vunpack.c.l.b16 %v2149
        %v2387 = vunpack.c.l.b16 %v2150
        %v2388 = vunpack.c.h.b16 %v2150
        %v2389 = vunpack.c.l.b16 %v2151
        %v2390 = vunpack.c.l.b16 %v2152
        %v2391 = vunpack.c.h.b16 %v2152
        %v2392 = vunpack.c.l.b16 %v2153
        %v2393 = vunpack.c.l.b16 %v2154
        %v2394 = vunpack.c.h.b16 %v2154
        %v2395 = vunpack.c.l.b16 %v2155
        %v2396 = vpack.c.b16 %v2255, %v2252
        %v2397 = vpack.c.b16 %v2256, %v2253
        %v2398 = vpack.c.b16 %v2257, %v2254
        %v2399 = vpack.c.b16 %v2261, %v2258
        %v2400 = vpack.c.b16 %v2262, %v2259
        %v2401 = vpack.c.b16 %v2263, %v2260
        %v2402 = vpack.c.b16 %v2267, %v2264
        %v2403 = vpack.c.b16 %v2268, %v2265
        %v2404 = vpack.c.b16 %v2269, %v2266
        %v2405 = vpack.c.b16 %v2273, %v2270
        %v2406 = vpack.c.b16 %v2274, %v2271
        %v2407 = vpack.c.b16 %v2275, %v2272
        %v2408 = vpack.c.b16 %v2279, %v2276
        %v2409 = vpack.c.b16 %v2280, %v2277
        %v2410 = vpack.c.b16 %v2281, %v2278
        %v2411 = vpack.c.b16 %v2285, %v2282
        %v2412 = vpack.c.b16 %v2286, %v2283
        %v2413 = vpack.c.b16 %v2287, %v2284
        %v2414 = vpack.c.b16 %v2291, %v2288
        %v2415 = vpack.c.b16 %v2292, %v2289
        %v2416 = vpack.c.b16 %v2293, %v2290
        %v2417 = vpack.c.b16 %v2297, %v2294
        %v2418 = vpack.c.b16 %v2298, %v2295
        %v2419 = vpack.c.b16 %v2299, %v2296
        %v2420 = vpack.c.b16 %v2303, %v2300
        %v2421 = vpack.c.b16 %v2304, %v2301
        %v2422 = vpack.c.b16 %v2305, %v2302
        %v2423 = vpack.c.b16 %v2309, %v2306
        %v2424 = vpack.c.b16 %v2310, %v2307
        %v2425 = vpack.c.b16 %v2311, %v2308
        %v2426 = vpack.c.b16 %v2315, %v2312
        %v2427 = vpack.c.b16 %v2316, %v2313
        %v2428 = vpack.c.b16 %v2317, %v2314
        %v2429 = vpack.c.b16 %v2321, %v2318
        %v2430 = vpack.c.b16 %v2322, %v2319
        %v2431 = vpack.c.b16 %v2323, %v2320
        %v2432 = vpack.c.b16 %v2327, %v2324
        %v2433 = vpack.c.b16 %v2328, %v2325
        %v2434 = vpack.c.b16 %v2329, %v2326
        %v2435 = vpack.c.b16 %v2333, %v2330
        %v2436 = vpack.c.b16 %v2334, %v2331
        %v2437 = vpack.c.b16 %v2335, %v2332
        %v2438 = vpack.c.b16 %v2339, %v2336
        %v2439 = vpack.c.b16 %v2340, %v2337
        %v2440 = vpack.c.b16 %v2341, %v2338
        %v2441 = vpack.c.b16 %v2345, %v2342
        %v2442 = vpack.c.b16 %v2346, %v2343
        %v2443 = vpack.c.b16 %v2347, %v2344
        %v2444 = vpack.c.b16 %v2351, %v2348
        %v2445 = vpack.c.b16 %v2352, %v2349
        %v2446 = vpack.c.b16 %v2353, %v2350
        %v2447 = vpack.c.b16 %v2357, %v2354
        %v2448 = vpack.c.b16 %v2358, %v2355
        %v2449 = vpack.c.b16 %v2359, %v2356
        %v2450 = vpack.c.b16 %v2363, %v2360
        %v2451 = vpack.c.b16 %v2364, %v2361
        %v2452 = vpack.c.b16 %v2365, %v2362
        %v2453 = vpack.c.b16 %v2369, %v2366
        %v2454 = vpack.c.b16 %v2370, %v2367
        %v2455 = vpack.c.b16 %v2371, %v2368
        %v2456 = vpack.c.b16 %v2375, %v2372
        %v2457 = vpack.c.b16 %v2376, %v2373
        %v2458 = vpack.c.b16 %v2377, %v2374
        %v2459 = vpack.c.b16 %v2381, %v2378
        %v2460 = vpack.c.b16 %v2382, %v2379
        %v2461 = vpack.c.b16 %v2383, %v2380
        %v2462 = vpack.c.b16 %v2387, %v2384
        %v2463 = vpack.c.b16 %v2388, %v2385
        %v2464 = vpack.c.b16 %v2389, %v2386
        %v2465 = vpack.c.b16 %v2393, %v2390
        %v2466 = vpack.c.b16 %v2394, %v2391
        %v2467 = vpack.c.b16 %v2395, %v2392
        %2540 = vmatprep.subr.bf16.mxu0 %v2418
        %2541 = vmatpush1.bf16.msra.mxu0 %v2417
        %2542 = vmatprep.subr.bf16.mxu0 %v2415
        %2543 = vmatpush1.bf16.msra.mxu0 %v2414
        %2544 = vmatprep.subr.bf16.mxu0 %v2412
        %2545 = vmatpush1.bf16.msra.mxu0 %v2411
        %2546 = vmatprep.subr.bf16.mxu0 %v2409
        %2547 = vmatpush1.bf16.msra.mxu0 %v2408
        %2548 = vmatprep.subr.bf16.mxu0 %v2406
        %2549 = vmatpush1.bf16.msra.mxu0 %v2405
        %2550 = vmatprep.subr.bf16.mxu0 %v2403
        %2551 = vmatpush1.bf16.msra.mxu0 %v2402
        %2552 = vmatprep.subr.bf16.mxu0 %v2400
        %2553 = vmatpush1.bf16.msra.mxu0 %v2399
        %2554 = vmatprep.subr.bf16.mxu0 %v2397
        %2555 = vmatpush1.bf16.msra.mxu0 %v2396
        %2556 = vmatprep.subr.bf16.mxu0 %v2442
        %2557 = vmatpush2.bf16.msra.mxu0 %v2441
        %2558 = vmatprep.subr.bf16.mxu0 %v2439
        %2559 = vmatpush2.bf16.msra.mxu0 %v2438
        %2560 = vmatprep.subr.bf16.mxu0 %v2436
        %2561 = vmatpush2.bf16.msra.mxu0 %v2435
        %2562 = vmatprep.subr.bf16.mxu0 %v2433
        %2563 = vmatpush2.bf16.msra.mxu0 %v2432
        %2564 = vmatprep.subr.bf16.mxu0 %v2430
        %2565 = vmatpush2.bf16.msra.mxu0 %v2429
        %2566 = vmatprep.subr.bf16.mxu0 %v2427
        %2567 = vmatpush2.bf16.msra.mxu0 %v2426
        %2568 = vmatprep.subr.bf16.mxu0 %v2424
        %2569 = vmatpush2.bf16.msra.mxu0 %v2423
        %2570 = vmatprep.subr.bf16.mxu0 %v2421
        %2571 = vmatpush2.bf16.msra.mxu0 %v2420
        %2572 = vmatprep.mubr.bf16.mxu0 %v765
        %2573 = vmatmul.mubr.bf16.gmra.mxu0 %v764
        %v2574 = vpop.f32.mrf.mxu0
        %v2575 = vadd.f32 0.0, %v2574
        %v2576 = vpop.f32.mrf.mxu0
        %v2577 = vadd.f32 0.0, %v2576
        %v2578 = vpop.f32.mrf.mxu0
        %v2579 = vpop.f32.mrf.mxu0
        %2580 = vdwg.mxu0
        %2581 = vmatprep.subr.bf16.mxu0 %v2466
        %2582 = vmatpush1.bf16.msra.mxu0 %v2465
        %2583 = vmatprep.subr.bf16.mxu0 %v2463
        %2584 = vmatpush1.bf16.msra.mxu0 %v2462
        %2585 = vmatprep.subr.bf16.mxu0 %v2460
        %2586 = vmatpush1.bf16.msra.mxu0 %v2459
        %2587 = vmatprep.subr.bf16.mxu0 %v2457
        %2588 = vmatpush1.bf16.msra.mxu0 %v2456
        %2589 = vmatprep.subr.bf16.mxu0 %v2454
        %2590 = vmatpush1.bf16.msra.mxu0 %v2453
        %2591 = vmatprep.subr.bf16.mxu0 %v2451
        %2592 = vmatpush1.bf16.msra.mxu0 %v2450
        %2593 = vmatprep.subr.bf16.mxu0 %v2448
        %2594 = vmatpush1.bf16.msra.mxu0 %v2447
        %2595 = vmatprep.subr.bf16.mxu0 %v2445
        %2596 = vmatpush1.bf16.msra.mxu0 %v2444
        %2597 = vmatprep.subr.bf16.mxu0 0
        %2598 = vmatpush2.bf16.msra.mxu0 0
        %2599 = vmatprep.subr.bf16.mxu0 0
        %2600 = vmatpush2.bf16.msra.mxu0 0
        %2601 = vmatprep.subr.bf16.mxu0 0
        %2602 = vmatpush2.bf16.msra.mxu0 0
        %2603 = vmatprep.subr.bf16.mxu0 0
        %2604 = vmatpush2.bf16.msra.mxu0 0
        %2605 = vmatprep.subr.bf16.mxu0 0
        %2606 = vmatpush2.bf16.msra.mxu0 0
        %2607 = vmatprep.subr.bf16.mxu0 0
        %2608 = vmatpush2.bf16.msra.mxu0 0
        %2609 = vmatprep.subr.bf16.mxu0 0
        %2610 = vmatpush2.bf16.msra.mxu0 0
        %2611 = vmatprep.subr.bf16.mxu0 0
        %2612 = vmatpush2.bf16.msra.mxu0 0
        %2613 = vmatprep.mubr.bf16.mxu0 0
        %2614 = vmatmul.mubr.bf16.gmra.mxu0 %v766
        %v2615 = vpop.f32.mrf.mxu0
        %v2616 = vadd.f32 %v2575, %v2615
        %v2617 = vpop.f32.mrf.mxu0
        %v2618 = vadd.f32 %v2577, %v2617
        %v2619 = vpop.f32.mrf.mxu0
        %v2620 = vpop.f32.mrf.mxu0
        %2621 = vdwg.mxu0
        %2622 = vmatprep.subr.bf16.mxu0 0
        %2623 = vmatpush1.bf16.msra.mxu0 %v2419
        %2624 = vmatprep.subr.bf16.mxu0 0
        %2625 = vmatpush1.bf16.msra.mxu0 %v2416
        %2626 = vmatprep.subr.bf16.mxu0 0
        %2627 = vmatpush1.bf16.msra.mxu0 %v2413
        %2628 = vmatprep.subr.bf16.mxu0 0
        %2629 = vmatpush1.bf16.msra.mxu0 %v2410
        %2630 = vmatprep.subr.bf16.mxu0 0
        %2631 = vmatpush1.bf16.msra.mxu0 %v2407
        %2632 = vmatprep.subr.bf16.mxu0 0
        %2633 = vmatpush1.bf16.msra.mxu0 %v2404
        %2634 = vmatprep.subr.bf16.mxu0 0
        %2635 = vmatpush1.bf16.msra.mxu0 %v2401
        %2636 = vmatprep.subr.bf16.mxu0 0
        %2637 = vmatpush1.bf16.msra.mxu0 %v2398
        %2638 = vmatprep.subr.bf16.mxu0 0
        %2639 = vmatpush2.bf16.msra.mxu0 %v2443
        %2640 = vmatprep.subr.bf16.mxu0 0
        %2641 = vmatpush2.bf16.msra.mxu0 %v2440
        %2642 = vmatprep.subr.bf16.mxu0 0
        %2643 = vmatpush2.bf16.msra.mxu0 %v2437
        %2644 = vmatprep.subr.bf16.mxu0 0
        %2645 = vmatpush2.bf16.msra.mxu0 %v2434
        %2646 = vmatprep.subr.bf16.mxu0 0
        %2647 = vmatpush2.bf16.msra.mxu0 %v2431
        %2648 = vmatprep.subr.bf16.mxu0 0
        %2649 = vmatpush2.bf16.msra.mxu0 %v2428
        %2650 = vmatprep.subr.bf16.mxu0 0
        %2651 = vmatpush2.bf16.msra.mxu0 %v2425
        %2652 = vmatprep.subr.bf16.mxu0 0
        %2653 = vmatpush2.bf16.msra.mxu0 %v2422
        %2654 = vmatprep.mubr.bf16.mxu0 %v765
        %2655 = vmatmul.mubr.bf16.gmra.mxu0 %v764
        %v2656 = vpop.f32.mrf.mxu0
        %v2657 = vadd.f32 0.0, %v2656
        %v2658 = vpop.f32.mrf.mxu0
        %v2659 = vpop.f32.mrf.mxu0
        %v2660 = vpop.f32.mrf.mxu0
        %2661 = vdwg.mxu0
        %2662 = vmatprep.subr.bf16.mxu0 0
        %2663 = vmatpush1.bf16.msra.mxu0 %v2467
        %2664 = vmatprep.subr.bf16.mxu0 0
        %2665 = vmatpush1.bf16.msra.mxu0 %v2464
        %2666 = vmatprep.subr.bf16.mxu0 0
        %2667 = vmatpush1.bf16.msra.mxu0 %v2461
        %2668 = vmatprep.subr.bf16.mxu0 0
        %2669 = vmatpush1.bf16.msra.mxu0 %v2458
        %2670 = vmatprep.subr.bf16.mxu0 0
        %2671 = vmatpush1.bf16.msra.mxu0 %v2455
        %2672 = vmatprep.subr.bf16.mxu0 0
        %2673 = vmatpush1.bf16.msra.mxu0 %v2452
        %2674 = vmatprep.subr.bf16.mxu0 0
        %2675 = vmatpush1.bf16.msra.mxu0 %v2449
        %2676 = vmatprep.subr.bf16.mxu0 0
        %2677 = vmatpush1.bf16.msra.mxu0 %v2446
        %2678 = vmatprep.subr.bf16.mxu0 0
        %2679 = vmatpush2.bf16.msra.mxu0 0
        %2680 = vmatprep.subr.bf16.mxu0 0
        %2681 = vmatpush2.bf16.msra.mxu0 0
        %2682 = vmatprep.subr.bf16.mxu0 0
        %2683 = vmatpush2.bf16.msra.mxu0 0
        %2684 = vmatprep.subr.bf16.mxu0 0
        %2685 = vmatpush2.bf16.msra.mxu0 0
        %2686 = vmatprep.subr.bf16.mxu0 0
        %2687 = vmatpush2.bf16.msra.mxu0 0
        %2688 = vmatprep.subr.bf16.mxu0 0
        %2689 = vmatpush2.bf16.msra.mxu0 0
        %2690 = vmatprep.subr.bf16.mxu0 0
        %2691 = vmatpush2.bf16.msra.mxu0 0
        %2692 = vmatprep.subr.bf16.mxu0 0
        %2693 = vmatpush2.bf16.msra.mxu0 0
        %2694 = vmatprep.mubr.bf16.mxu0 0
        %2695 = vmatmul.mubr.bf16.gmra.mxu0 %v766
        %v2696 = vpop.f32.mrf.mxu0
        %v2697 = vadd.f32 %v2657, %v2696
        %v2698 = vpop.f32.mrf.mxu0
        %v2699 = vpop.f32.mrf.mxu0
        %v2700 = vpop.f32.mrf.mxu0
        %2701 = vdwg.mxu0
        %v2702 = vpack.c.bf16 %v2616, %v2616
        %v2703 = vpack.c.bf16 %v2618, %v2618
        %v2704 = vpack.c.bf16 %v2697, %v2697
        %v2705 = vld [vmem:[#allocation6] sm:$0xff]
        %vm2706 = vcmask 523264
        %v2708 = vsel %vm2706, %v1412, 0
        %v2711 = vsel %vm2706, %v2057, 0
        %2713 = vmatprep.subr.bf16.mxu0 0
        %2714 = vmatpush1.bf16.xpose.msra.mxu0 0
        %2715 = vmatprep.subr.bf16.mxu0 0
        %2716 = vmatpush1.bf16.xpose.msra.mxu0 0
        %2717 = vmatprep.subr.bf16.mxu0 0
        %2718 = vmatpush1.bf16.xpose.msra.mxu0 0
        %2719 = vmatprep.subr.bf16.mxu0 0
        %2720 = vmatpush1.bf16.xpose.msra.mxu0 0
        %2721 = vmatprep.subr.bf16.mxu0 0
        %2722 = vmatpush1.bf16.xpose.msra.mxu0 0
        %2723 = vmatprep.subr.bf16.mxu0 0
        %2724 = vmatpush1.bf16.xpose.msra.mxu0 0
        %2725 = vmatprep.subr.bf16.mxu0 0
        %2726 = vmatpush1.bf16.xpose.msra.mxu0 0
        %2727 = vmatprep.subr.bf16.mxu0 0
        %2728 = vmatpush1.bf16.xpose.msra.mxu0 %v2711
        %2729 = vmatprep.subr.bf16.mxu0 0
        %2730 = vmatpush2.bf16.xpose.msra.mxu0 0
        %2731 = vmatprep.subr.bf16.mxu0 0
        %2732 = vmatpush2.bf16.xpose.msra.mxu0 0
        %2733 = vmatprep.subr.bf16.mxu0 0
        %2734 = vmatpush2.bf16.xpose.msra.mxu0 0
        %2735 = vmatprep.subr.bf16.mxu0 0
        %2736 = vmatpush2.bf16.xpose.msra.mxu0 0
        %2737 = vmatprep.subr.bf16.mxu0 0
        %2738 = vmatpush2.bf16.xpose.msra.mxu0 0
        %2739 = vmatprep.subr.bf16.mxu0 0
        %2740 = vmatpush2.bf16.xpose.msra.mxu0 0
        %2741 = vmatprep.subr.bf16.mxu0 0
        %2742 = vmatpush2.bf16.xpose.msra.mxu0 0
        %2743 = vmatprep.subr.bf16.mxu0 0
        %2744 = vmatpush2.bf16.xpose.msra.mxu0 0
        %2745 = vmatprep.mubr.bf16.mxu0 0
        %2746 = vmatmul.mubr.bf16.gmra.mxu0 %v2708
        %v2747 = vpop.f32.mrf.mxu0
        %v2748 = vadd.f32 %v2705, %v2747
        %v2749 = vpop.f32.mrf.mxu0
        %v2750 = vpop.f32.mrf.mxu0
        %v2751 = vpop.f32.mrf.mxu0
        %2752 = vdwg.mxu0
        %vm2753 = vcmask 64512
        %v2754 = vsel %vm2753, %v2748, -inf
        %2755 = vmax.xlane.f32.xlu0 %v2754
        %v2756 = vpop.xlane.xlu0 %2755
        %v2757 = vsub.f32 %v2748, %v2756
        %v2758 = vmul.f32 %v2757, 1.442695
        %v2759 = vpow.pop %v2758
        %v2760 = vsel %vm2753, %v2759, 0.0
        %2761 = vadd.xlane.f32.xlu0 %v2760
        %v2762 = vpop.xlane.xlu0 %2761
        %v2763 = vrcp.pop %v2762
        %v2764 = vmul.f32 %v2759, %v2763
        %v2765 = vpack.c.bf16 %v2764, %v2764
        %v2767 = vsel %vm2753, %v2765, 0
        %vm2769 = vcmask 1043456
        %v2771 = vsel %vm2769, %v2702, 0
        %2773 = vmatprep.subr.bf16.mxu0 0
        %2774 = vmatpush1.bf16.msra.mxu0 0
        %2775 = vmatprep.subr.bf16.mxu0 0
        %2776 = vmatpush1.bf16.msra.mxu0 0
        %2777 = vmatprep.subr.bf16.mxu0 0
        %2778 = vmatpush1.bf16.msra.mxu0 0
        %2779 = vmatprep.subr.bf16.mxu0 0
        %2780 = vmatpush1.bf16.msra.mxu0 0
        %2781 = vmatprep.subr.bf16.mxu0 0
        %2782 = vmatpush1.bf16.msra.mxu0 0
        %2783 = vmatprep.subr.bf16.mxu0 0
        %2784 = vmatpush1.bf16.msra.mxu0 0
        %2785 = vmatprep.subr.bf16.mxu0 0
        %2786 = vmatpush1.bf16.msra.mxu0 0
        %2787 = vmatprep.subr.bf16.mxu0 0
        %2788 = vmatpush1.bf16.msra.mxu0 %v2771
        %2789 = vmatprep.subr.bf16.mxu0 0
        %2790 = vmatpush2.bf16.msra.mxu0 0
        %2791 = vmatprep.subr.bf16.mxu0 0
        %2792 = vmatpush2.bf16.msra.mxu0 0
        %2793 = vmatprep.subr.bf16.mxu0 0
        %2794 = vmatpush2.bf16.msra.mxu0 0
        %2795 = vmatprep.subr.bf16.mxu0 0
        %2796 = vmatpush2.bf16.msra.mxu0 0
        %2797 = vmatprep.subr.bf16.mxu0 0
        %2798 = vmatpush2.bf16.msra.mxu0 0
        %2799 = vmatprep.subr.bf16.mxu0 0
        %2800 = vmatpush2.bf16.msra.mxu0 0
        %2801 = vmatprep.subr.bf16.mxu0 0
        %2802 = vmatpush2.bf16.msra.mxu0 0
        %2803 = vmatprep.subr.bf16.mxu0 0
        %2804 = vmatpush2.bf16.msra.mxu0 0
        %2805 = vmatprep.mubr.bf16.mxu0 0
        %2806 = vmatmul.mubr.bf16.gmra.mxu0 %v2767
        %v2807 = vpop.f32.mrf.mxu0
        %v2808 = vadd.f32 0.0, %v2807
        %v2809 = vpop.f32.mrf.mxu0
        %v2810 = vpop.f32.mrf.mxu0
        %v2811 = vpop.f32.mrf.mxu0
        %2812 = vdwg.mxu0
        %2813 = vst.msk [vmem:[#allocation2] sm:$0xff] %vm2706, %v2808
        %2815 = vrot.lane.b32.xlu0 %v1412, 64
        %v2816 = vpop.permute.xlu0 %2815
        %2818 = vrot.lane.b32.xlu0 %v2057, 64
        %v2819 = vpop.permute.xlu0 %2818
        %v2821 = vsel %vm2706, %v2816, 0
        %v2824 = vsel %vm2706, %v2819, 0
        %2826 = vmatprep.subr.bf16.mxu0 0
        %2827 = vmatpush1.bf16.xpose.msra.mxu0 0
        %2828 = vmatprep.subr.bf16.mxu0 0
        %2829 = vmatpush1.bf16.xpose.msra.mxu0 0
        %2830 = vmatprep.subr.bf16.mxu0 0
        %2831 = vmatpush1.bf16.xpose.msra.mxu0 0
        %2832 = vmatprep.subr.bf16.mxu0 0
        %2833 = vmatpush1.bf16.xpose.msra.mxu0 0
        %2834 = vmatprep.subr.bf16.mxu0 0
        %2835 = vmatpush1.bf16.xpose.msra.mxu0 0
        %2836 = vmatprep.subr.bf16.mxu0 0
        %2837 = vmatpush1.bf16.xpose.msra.mxu0 0
        %2838 = vmatprep.subr.bf16.mxu0 0
        %2839 = vmatpush1.bf16.xpose.msra.mxu0 0
        %2840 = vmatprep.subr.bf16.mxu0 0
        %2841 = vmatpush1.bf16.xpose.msra.mxu0 %v2824
        %2842 = vmatprep.subr.bf16.mxu0 0
        %2843 = vmatpush2.bf16.xpose.msra.mxu0 0
        %2844 = vmatprep.subr.bf16.mxu0 0
        %2845 = vmatpush2.bf16.xpose.msra.mxu0 0
        %2846 = vmatprep.subr.bf16.mxu0 0
        %2847 = vmatpush2.bf16.xpose.msra.mxu0 0
        %2848 = vmatprep.subr.bf16.mxu0 0
        %2849 = vmatpush2.bf16.xpose.msra.mxu0 0
        %2850 = vmatprep.subr.bf16.mxu0 0
        %2851 = vmatpush2.bf16.xpose.msra.mxu0 0
        %2852 = vmatprep.subr.bf16.mxu0 0
        %2853 = vmatpush2.bf16.xpose.msra.mxu0 0
        %2854 = vmatprep.subr.bf16.mxu0 0
        %2855 = vmatpush2.bf16.xpose.msra.mxu0 0
        %2856 = vmatprep.subr.bf16.mxu0 0
        %2857 = vmatpush2.bf16.xpose.msra.mxu0 0
        %2858 = vmatprep.mubr.bf16.mxu0 0
        %2859 = vmatmul.mubr.bf16.gmra.mxu0 %v2821
        %v2860 = vpop.f32.mrf.mxu0
        %v2861 = vadd.f32 %v2705, %v2860
        %v2862 = vpop.f32.mrf.mxu0
        %v2863 = vpop.f32.mrf.mxu0
        %v2864 = vpop.f32.mrf.mxu0
        %2865 = vdwg.mxu0
        %v2866 = vsel %vm2753, %v2861, -inf
        %2867 = vmax.xlane.f32.xlu0 %v2866
        %v2868 = vpop.xlane.xlu0 %2867
        %v2869 = vsub.f32 %v2861, %v2868
        %v2870 = vmul.f32 %v2869, 1.442695
        %v2871 = vpow.pop %v2870
        %v2872 = vsel %vm2753, %v2871, 0.0
        %2873 = vadd.xlane.f32.xlu0 %v2872
        %v2874 = vpop.xlane.xlu0 %2873
        %v2875 = vrcp.pop %v2874
        %v2876 = vmul.f32 %v2871, %v2875
        %v2877 = vpack.c.bf16 %v2876, %v2876
        %2879 = vrot.lane.b32.xlu0 %v2702, 64
        %v2880 = vpop.permute.xlu0 %2879
        %v2882 = vsel %vm2753, %v2877, 0
        %v2885 = vsel %vm2769, %v2880, 0
        %2887 = vmatprep.subr.bf16.mxu0 0
        %2888 = vmatpush1.bf16.msra.mxu0 0
        %2889 = vmatprep.subr.bf16.mxu0 0
        %2890 = vmatpush1.bf16.msra.mxu0 0
        %2891 = vmatprep.subr.bf16.mxu0 0
        %2892 = vmatpush1.bf16.msra.mxu0 0
        %2893 = vmatprep.subr.bf16.mxu0 0
        %2894 = vmatpush1.bf16.msra.mxu0 0
        %2895 = vmatprep.subr.bf16.mxu0 0
        %2896 = vmatpush1.bf16.msra.mxu0 0
        %2897 = vmatprep.subr.bf16.mxu0 0
        %2898 = vmatpush1.bf16.msra.mxu0 0
        %2899 = vmatprep.subr.bf16.mxu0 0
        %2900 = vmatpush1.bf16.msra.mxu0 0
        %2901 = vmatprep.subr.bf16.mxu0 0
        %2902 = vmatpush1.bf16.msra.mxu0 %v2885
        %2903 = vmatprep.subr.bf16.mxu0 0
        %2904 = vmatpush2.bf16.msra.mxu0 0
        %2905 = vmatprep.subr.bf16.mxu0 0
        %2906 = vmatpush2.bf16.msra.mxu0 0
        %2907 = vmatprep.subr.bf16.mxu0 0
        %2908 = vmatpush2.bf16.msra.mxu0 0
        %2909 = vmatprep.subr.bf16.mxu0 0
        %2910 = vmatpush2.bf16.msra.mxu0 0
        %2911 = vmatprep.subr.bf16.mxu0 0
        %2912 = vmatpush2.bf16.msra.mxu0 0
        %2913 = vmatprep.subr.bf16.mxu0 0
        %2914 = vmatpush2.bf16.msra.mxu0 0
        %2915 = vmatprep.subr.bf16.mxu0 0
        %2916 = vmatpush2.bf16.msra.mxu0 0
        %2917 = vmatprep.subr.bf16.mxu0 0
        %2918 = vmatpush2.bf16.msra.mxu0 0
        %2919 = vmatprep.mubr.bf16.mxu0 0
        %2920 = vmatmul.mubr.bf16.gmra.mxu0 %v2882
        %v2921 = vpop.f32.mrf.mxu0
        %v2922 = vadd.f32 0.0, %v2921
        %v2923 = vpop.f32.mrf.mxu0
        %v2924 = vpop.f32.mrf.mxu0
        %v2925 = vpop.f32.mrf.mxu0
        %2926 = vdwg.mxu0
        %2928 = vrot.lane.b32.xlu0 %v2922, 64
        %v2929 = vpop.permute.xlu0 %2928
        %vm2931 = vcmask 1048064
        %2932 = vst.msk [vmem:[#allocation2] sm:$0xff] %vm2931, %v2929
        %v2934 = vsel %vm2706, %v1413, 0
        %v2937 = vsel %vm2706, %v2058, 0
        %2939 = vmatprep.subr.bf16.mxu0 0
        %2940 = vmatpush1.bf16.xpose.msra.mxu0 0
        %2941 = vmatprep.subr.bf16.mxu0 0
        %2942 = vmatpush1.bf16.xpose.msra.mxu0 0
        %2943 = vmatprep.subr.bf16.mxu0 0
        %2944 = vmatpush1.bf16.xpose.msra.mxu0 0
        %2945 = vmatprep.subr.bf16.mxu0 0
        %2946 = vmatpush1.bf16.xpose.msra.mxu0 0
        %2947 = vmatprep.subr.bf16.mxu0 0
        %2948 = vmatpush1.bf16.xpose.msra.mxu0 0
        %2949 = vmatprep.subr.bf16.mxu0 0
        %2950 = vmatpush1.bf16.xpose.msra.mxu0 0
        %2951 = vmatprep.subr.bf16.mxu0 0
        %2952 = vmatpush1.bf16.xpose.msra.mxu0 0
        %2953 = vmatprep.subr.bf16.mxu0 0
        %2954 = vmatpush1.bf16.xpose.msra.mxu0 %v2937
        %2955 = vmatprep.subr.bf16.mxu0 0
        %2956 = vmatpush2.bf16.xpose.msra.mxu0 0
        %2957 = vmatprep.subr.bf16.mxu0 0
        %2958 = vmatpush2.bf16.xpose.msra.mxu0 0
        %2959 = vmatprep.subr.bf16.mxu0 0
        %2960 = vmatpush2.bf16.xpose.msra.mxu0 0
        %2961 = vmatprep.subr.bf16.mxu0 0
        %2962 = vmatpush2.bf16.xpose.msra.mxu0 0
        %2963 = vmatprep.subr.bf16.mxu0 0
        %2964 = vmatpush2.bf16.xpose.msra.mxu0 0
        %2965 = vmatprep.subr.bf16.mxu0 0
        %2966 = vmatpush2.bf16.xpose.msra.mxu0 0
        %2967 = vmatprep.subr.bf16.mxu0 0
        %2968 = vmatpush2.bf16.xpose.msra.mxu0 0
        %2969 = vmatprep.subr.bf16.mxu0 0
        %2970 = vmatpush2.bf16.xpose.msra.mxu0 0
        %2971 = vmatprep.mubr.bf16.mxu0 0
        %2972 = vmatmul.mubr.bf16.gmra.mxu0 %v2934
        %v2973 = vpop.f32.mrf.mxu0
        %v2974 = vadd.f32 %v2705, %v2973
        %v2975 = vpop.f32.mrf.mxu0
        %v2976 = vpop.f32.mrf.mxu0
        %v2977 = vpop.f32.mrf.mxu0
        %2978 = vdwg.mxu0
        %v2979 = vsel %vm2753, %v2974, -inf
        %2980 = vmax.xlane.f32.xlu0 %v2979
        %v2981 = vpop.xlane.xlu0 %2980
        %v2982 = vsub.f32 %v2974, %v2981
        %v2983 = vmul.f32 %v2982, 1.442695
        %v2984 = vpow.pop %v2983
        %v2985 = vsel %vm2753, %v2984, 0.0
        %2986 = vadd.xlane.f32.xlu0 %v2985
        %v2987 = vpop.xlane.xlu0 %2986
        %v2988 = vrcp.pop %v2987
        %v2989 = vmul.f32 %v2984, %v2988
        %v2990 = vpack.c.bf16 %v2989, %v2989
        %v2992 = vsel %vm2753, %v2990, 0
        %v2995 = vsel %vm2769, %v2703, 0
        %2997 = vmatprep.subr.bf16.mxu0 0
        %2998 = vmatpush1.bf16.msra.mxu0 0
        %2999 = vmatprep.subr.bf16.mxu0 0
        %3000 = vmatpush1.bf16.msra.mxu0 0
        %3001 = vmatprep.subr.bf16.mxu0 0
        %3002 = vmatpush1.bf16.msra.mxu0 0
        %3003 = vmatprep.subr.bf16.mxu0 0
        %3004 = vmatpush1.bf16.msra.mxu0 0
        %3005 = vmatprep.subr.bf16.mxu0 0
        %3006 = vmatpush1.bf16.msra.mxu0 0
        %3007 = vmatprep.subr.bf16.mxu0 0
        %3008 = vmatpush1.bf16.msra.mxu0 0
        %3009 = vmatprep.subr.bf16.mxu0 0
        %3010 = vmatpush1.bf16.msra.mxu0 0
        %3011 = vmatprep.subr.bf16.mxu0 0
        %3012 = vmatpush1.bf16.msra.mxu0 %v2995
        %3013 = vmatprep.subr.bf16.mxu0 0
        %3014 = vmatpush2.bf16.msra.mxu0 0
        %3015 = vmatprep.subr.bf16.mxu0 0
        %3016 = vmatpush2.bf16.msra.mxu0 0
        %3017 = vmatprep.subr.bf16.mxu0 0
        %3018 = vmatpush2.bf16.msra.mxu0 0
        %3019 = vmatprep.subr.bf16.mxu0 0
        %3020 = vmatpush2.bf16.msra.mxu0 0
        %3021 = vmatprep.subr.bf16.mxu0 0
        %3022 = vmatpush2.bf16.msra.mxu0 0
        %3023 = vmatprep.subr.bf16.mxu0 0
        %3024 = vmatpush2.bf16.msra.mxu0 0
        %3025 = vmatprep.subr.bf16.mxu0 0
        %3026 = vmatpush2.bf16.msra.mxu0 0
        %3027 = vmatprep.subr.bf16.mxu0 0
        %3028 = vmatpush2.bf16.msra.mxu0 0
        %3029 = vmatprep.mubr.bf16.mxu0 0
        %3030 = vmatmul.mubr.bf16.gmra.mxu0 %v2992
        %v3031 = vpop.f32.mrf.mxu0
        %v3032 = vadd.f32 0.0, %v3031
        %v3033 = vpop.f32.mrf.mxu0
        %v3034 = vpop.f32.mrf.mxu0
        %v3035 = vpop.f32.mrf.mxu0
        %3036 = vdwg.mxu0
        %3037 = vst.msk [vmem:[#allocation2 + $0x8] sm:$0xff] %vm2706, %v3032
        %3039 = vrot.lane.b32.xlu0 %v1413, 64
        %v3040 = vpop.permute.xlu0 %3039
        %3042 = vrot.lane.b32.xlu0 %v2058, 64
        %v3043 = vpop.permute.xlu0 %3042
        %v3045 = vsel %vm2706, %v3040, 0
        %v3048 = vsel %vm2706, %v3043, 0
        %3050 = vmatprep.subr.bf16.mxu0 0
        %3051 = vmatpush1.bf16.xpose.msra.mxu0 0
        %3052 = vmatprep.subr.bf16.mxu0 0
        %3053 = vmatpush1.bf16.xpose.msra.mxu0 0
        %3054 = vmatprep.subr.bf16.mxu0 0
        %3055 = vmatpush1.bf16.xpose.msra.mxu0 0
        %3056 = vmatprep.subr.bf16.mxu0 0
        %3057 = vmatpush1.bf16.xpose.msra.mxu0 0
        %3058 = vmatprep.subr.bf16.mxu0 0
        %3059 = vmatpush1.bf16.xpose.msra.mxu0 0
        %3060 = vmatprep.subr.bf16.mxu0 0
        %3061 = vmatpush1.bf16.xpose.msra.mxu0 0
        %3062 = vmatprep.subr.bf16.mxu0 0
        %3063 = vmatpush1.bf16.xpose.msra.mxu0 0
        %3064 = vmatprep.subr.bf16.mxu0 0
        %3065 = vmatpush1.bf16.xpose.msra.mxu0 %v3048
        %3066 = vmatprep.subr.bf16.mxu0 0
        %3067 = vmatpush2.bf16.xpose.msra.mxu0 0
        %3068 = vmatprep.subr.bf16.mxu0 0
        %3069 = vmatpush2.bf16.xpose.msra.mxu0 0
        %3070 = vmatprep.subr.bf16.mxu0 0
        %3071 = vmatpush2.bf16.xpose.msra.mxu0 0
        %3072 = vmatprep.subr.bf16.mxu0 0
        %3073 = vmatpush2.bf16.xpose.msra.mxu0 0
        %3074 = vmatprep.subr.bf16.mxu0 0
        %3075 = vmatpush2.bf16.xpose.msra.mxu0 0
        %3076 = vmatprep.subr.bf16.mxu0 0
        %3077 = vmatpush2.bf16.xpose.msra.mxu0 0
        %3078 = vmatprep.subr.bf16.mxu0 0
        %3079 = vmatpush2.bf16.xpose.msra.mxu0 0
        %3080 = vmatprep.subr.bf16.mxu0 0
        %3081 = vmatpush2.bf16.xpose.msra.mxu0 0
        %3082 = vmatprep.mubr.bf16.mxu0 0
        %3083 = vmatmul.mubr.bf16.gmra.mxu0 %v3045
        %v3084 = vpop.f32.mrf.mxu0
        %v3085 = vadd.f32 %v2705, %v3084
        %v3086 = vpop.f32.mrf.mxu0
        %v3087 = vpop.f32.mrf.mxu0
        %v3088 = vpop.f32.mrf.mxu0
        %3089 = vdwg.mxu0
        %v3090 = vsel %vm2753, %v3085, -inf
        %3091 = vmax.xlane.f32.xlu0 %v3090
        %v3092 = vpop.xlane.xlu0 %3091
        %v3093 = vsub.f32 %v3085, %v3092
        %v3094 = vmul.f32 %v3093, 1.442695
        %v3095 = vpow.pop %v3094
        %v3096 = vsel %vm2753, %v3095, 0.0
        %3097 = vadd.xlane.f32.xlu0 %v3096
        %v3098 = vpop.xlane.xlu0 %3097
        %v3099 = vrcp.pop %v3098
        %v3100 = vmul.f32 %v3095, %v3099
        %v3101 = vpack.c.bf16 %v3100, %v3100
        %3103 = vrot.lane.b32.xlu0 %v2703, 64
        %v3104 = vpop.permute.xlu0 %3103
        %v3106 = vsel %vm2753, %v3101, 0
        %v3109 = vsel %vm2769, %v3104, 0
        %3111 = vmatprep.subr.bf16.mxu0 0
        %3112 = vmatpush1.bf16.msra.mxu0 0
        %3113 = vmatprep.subr.bf16.mxu0 0
        %3114 = vmatpush1.bf16.msra.mxu0 0
        %3115 = vmatprep.subr.bf16.mxu0 0
        %3116 = vmatpush1.bf16.msra.mxu0 0
        %3117 = vmatprep.subr.bf16.mxu0 0
        %3118 = vmatpush1.bf16.msra.mxu0 0
        %3119 = vmatprep.subr.bf16.mxu0 0
        %3120 = vmatpush1.bf16.msra.mxu0 0
        %3121 = vmatprep.subr.bf16.mxu0 0
        %3122 = vmatpush1.bf16.msra.mxu0 0
        %3123 = vmatprep.subr.bf16.mxu0 0
        %3124 = vmatpush1.bf16.msra.mxu0 0
        %3125 = vmatprep.subr.bf16.mxu0 0
        %3126 = vmatpush1.bf16.msra.mxu0 %v3109
        %3127 = vmatprep.subr.bf16.mxu0 0
        %3128 = vmatpush2.bf16.msra.mxu0 0
        %3129 = vmatprep.subr.bf16.mxu0 0
        %3130 = vmatpush2.bf16.msra.mxu0 0
        %3131 = vmatprep.subr.bf16.mxu0 0
        %3132 = vmatpush2.bf16.msra.mxu0 0
        %3133 = vmatprep.subr.bf16.mxu0 0
        %3134 = vmatpush2.bf16.msra.mxu0 0
        %3135 = vmatprep.subr.bf16.mxu0 0
        %3136 = vmatpush2.bf16.msra.mxu0 0
        %3137 = vmatprep.subr.bf16.mxu0 0
        %3138 = vmatpush2.bf16.msra.mxu0 0
        %3139 = vmatprep.subr.bf16.mxu0 0
        %3140 = vmatpush2.bf16.msra.mxu0 0
        %3141 = vmatprep.subr.bf16.mxu0 0
        %3142 = vmatpush2.bf16.msra.mxu0 0
        %3143 = vmatprep.mubr.bf16.mxu0 0
        %3144 = vmatmul.mubr.bf16.gmra.mxu0 %v3106
        %v3145 = vpop.f32.mrf.mxu0
        %v3146 = vadd.f32 0.0, %v3145
        %v3147 = vpop.f32.mrf.mxu0
        %v3148 = vpop.f32.mrf.mxu0
        %v3149 = vpop.f32.mrf.mxu0
        %3150 = vdwg.mxu0
        %3152 = vrot.lane.b32.xlu0 %v3146, 64
        %v3153 = vpop.permute.xlu0 %3152
        %3155 = vst.msk [vmem:[#allocation2 + $0x8] sm:$0xff] %vm2931, %v3153
        %v3157 = vsel %vm2706, %v1414, 0
        %v3160 = vsel %vm2706, %v2059, 0
        %3162 = vmatprep.subr.bf16.mxu0 0
        %3163 = vmatpush1.bf16.xpose.msra.mxu0 0
        %3164 = vmatprep.subr.bf16.mxu0 0
        %3165 = vmatpush1.bf16.xpose.msra.mxu0 0
        %3166 = vmatprep.subr.bf16.mxu0 0
        %3167 = vmatpush1.bf16.xpose.msra.mxu0 0
        %3168 = vmatprep.subr.bf16.mxu0 0
        %3169 = vmatpush1.bf16.xpose.msra.mxu0 0
        %3170 = vmatprep.subr.bf16.mxu0 0
        %3171 = vmatpush1.bf16.xpose.msra.mxu0 0
        %3172 = vmatprep.subr.bf16.mxu0 0
        %3173 = vmatpush1.bf16.xpose.msra.mxu0 0
        %3174 = vmatprep.subr.bf16.mxu0 0
        %3175 = vmatpush1.bf16.xpose.msra.mxu0 0
        %3176 = vmatprep.subr.bf16.mxu0 0
        %3177 = vmatpush1.bf16.xpose.msra.mxu0 %v3160
        %3178 = vmatprep.subr.bf16.mxu0 0
        %3179 = vmatpush2.bf16.xpose.msra.mxu0 0
        %3180 = vmatprep.subr.bf16.mxu0 0
        %3181 = vmatpush2.bf16.xpose.msra.mxu0 0
        %3182 = vmatprep.subr.bf16.mxu0 0
        %3183 = vmatpush2.bf16.xpose.msra.mxu0 0
        %3184 = vmatprep.subr.bf16.mxu0 0
        %3185 = vmatpush2.bf16.xpose.msra.mxu0 0
        %3186 = vmatprep.subr.bf16.mxu0 0
        %3187 = vmatpush2.bf16.xpose.msra.mxu0 0
        %3188 = vmatprep.subr.bf16.mxu0 0
        %3189 = vmatpush2.bf16.xpose.msra.mxu0 0
        %3190 = vmatprep.subr.bf16.mxu0 0
        %3191 = vmatpush2.bf16.xpose.msra.mxu0 0
        %3192 = vmatprep.subr.bf16.mxu0 0
        %3193 = vmatpush2.bf16.xpose.msra.mxu0 0
        %3194 = vmatprep.mubr.bf16.mxu0 0
        %3195 = vmatmul.mubr.bf16.gmra.mxu0 %v3157
        %v3196 = vpop.f32.mrf.mxu0
        %v3197 = vadd.f32 %v2705, %v3196
        %v3198 = vpop.f32.mrf.mxu0
        %v3199 = vpop.f32.mrf.mxu0
        %v3200 = vpop.f32.mrf.mxu0
        %3201 = vdwg.mxu0
        %v3202 = vsel %vm2753, %v3197, -inf
        %3203 = vmax.xlane.f32.xlu0 %v3202
        %v3204 = vpop.xlane.xlu0 %3203
        %v3205 = vsub.f32 %v3197, %v3204
        %v3206 = vmul.f32 %v3205, 1.442695
        %v3207 = vpow.pop %v3206
        %v3208 = vsel %vm2753, %v3207, 0.0
        %3209 = vadd.xlane.f32.xlu0 %v3208
        %v3210 = vpop.xlane.xlu0 %3209
        %v3211 = vrcp.pop %v3210
        %v3212 = vmul.f32 %v3207, %v3211
        %v3213 = vpack.c.bf16 %v3212, %v3212
        %v3215 = vsel %vm2753, %v3213, 0
        %v3218 = vsel %vm2769, %v2704, 0
        %3220 = vmatprep.subr.bf16.mxu0 0
        %3221 = vmatpush1.bf16.msra.mxu0 0
        %3222 = vmatprep.subr.bf16.mxu0 0
        %3223 = vmatpush1.bf16.msra.mxu0 0
        %3224 = vmatprep.subr.bf16.mxu0 0
        %3225 = vmatpush1.bf16.msra.mxu0 0
        %3226 = vmatprep.subr.bf16.mxu0 0
        %3227 = vmatpush1.bf16.msra.mxu0 0
        %3228 = vmatprep.subr.bf16.mxu0 0
        %3229 = vmatpush1.bf16.msra.mxu0 0
        %3230 = vmatprep.subr.bf16.mxu0 0
        %3231 = vmatpush1.bf16.msra.mxu0 0
        %3232 = vmatprep.subr.bf16.mxu0 0
        %3233 = vmatpush1.bf16.msra.mxu0 0
        %3234 = vmatprep.subr.bf16.mxu0 0
        %3235 = vmatpush1.bf16.msra.mxu0 %v3218
        %3236 = vmatprep.subr.bf16.mxu0 0
        %3237 = vmatpush2.bf16.msra.mxu0 0
        %3238 = vmatprep.subr.bf16.mxu0 0
        %3239 = vmatpush2.bf16.msra.mxu0 0
        %3240 = vmatprep.subr.bf16.mxu0 0
        %3241 = vmatpush2.bf16.msra.mxu0 0
        %3242 = vmatprep.subr.bf16.mxu0 0
        %3243 = vmatpush2.bf16.msra.mxu0 0
        %3244 = vmatprep.subr.bf16.mxu0 0
        %3245 = vmatpush2.bf16.msra.mxu0 0
        %3246 = vmatprep.subr.bf16.mxu0 0
        %3247 = vmatpush2.bf16.msra.mxu0 0
        %3248 = vmatprep.subr.bf16.mxu0 0
        %3249 = vmatpush2.bf16.msra.mxu0 0
        %3250 = vmatprep.subr.bf16.mxu0 0
        %3251 = vmatpush2.bf16.msra.mxu0 0
        %3252 = vmatprep.mubr.bf16.mxu0 0
        %3253 = vmatmul.mubr.bf16.gmra.mxu0 %v3215
        %v3254 = vpop.f32.mrf.mxu0
        %v3255 = vadd.f32 0.0, %v3254
        %v3256 = vpop.f32.mrf.mxu0
        %v3257 = vpop.f32.mrf.mxu0
        %v3258 = vpop.f32.mrf.mxu0
        %3259 = vdwg.mxu0
        %3260 = vst.msk [vmem:[#allocation2 + $0x10] sm:$0xff] %vm2706, %v3255
        %3262 = vrot.lane.b32.xlu0 %v1414, 64
        %v3263 = vpop.permute.xlu0 %3262
        %3265 = vrot.lane.b32.xlu0 %v2059, 64
        %v3266 = vpop.permute.xlu0 %3265
        %v3268 = vsel %vm2706, %v3263, 0
        %v3271 = vsel %vm2706, %v3266, 0
        %3273 = vmatprep.subr.bf16.mxu0 0
        %3274 = vmatpush1.bf16.xpose.msra.mxu0 0
        %3275 = vmatprep.subr.bf16.mxu0 0
        %3276 = vmatpush1.bf16.xpose.msra.mxu0 0
        %3277 = vmatprep.subr.bf16.mxu0 0
        %3278 = vmatpush1.bf16.xpose.msra.mxu0 0
        %3279 = vmatprep.subr.bf16.mxu0 0
        %3280 = vmatpush1.bf16.xpose.msra.mxu0 0
        %3281 = vmatprep.subr.bf16.mxu0 0
        %3282 = vmatpush1.bf16.xpose.msra.mxu0 0
        %3283 = vmatprep.subr.bf16.mxu0 0
        %3284 = vmatpush1.bf16.xpose.msra.mxu0 0
        %3285 = vmatprep.subr.bf16.mxu0 0
        %3286 = vmatpush1.bf16.xpose.msra.mxu0 0
        %3287 = vmatprep.subr.bf16.mxu0 0
        %3288 = vmatpush1.bf16.xpose.msra.mxu0 %v3271
        %3289 = vmatprep.subr.bf16.mxu0 0
        %3290 = vmatpush2.bf16.xpose.msra.mxu0 0
        %3291 = vmatprep.subr.bf16.mxu0 0
        %3292 = vmatpush2.bf16.xpose.msra.mxu0 0
        %3293 = vmatprep.subr.bf16.mxu0 0
        %3294 = vmatpush2.bf16.xpose.msra.mxu0 0
        %3295 = vmatprep.subr.bf16.mxu0 0
        %3296 = vmatpush2.bf16.xpose.msra.mxu0 0
        %3297 = vmatprep.subr.bf16.mxu0 0
        %3298 = vmatpush2.bf16.xpose.msra.mxu0 0
        %3299 = vmatprep.subr.bf16.mxu0 0
        %3300 = vmatpush2.bf16.xpose.msra.mxu0 0
        %3301 = vmatprep.subr.bf16.mxu0 0
        %3302 = vmatpush2.bf16.xpose.msra.mxu0 0
        %3303 = vmatprep.subr.bf16.mxu0 0
        %3304 = vmatpush2.bf16.xpose.msra.mxu0 0
        %3305 = vmatprep.mubr.bf16.mxu0 0
        %3306 = vmatmul.mubr.bf16.gmra.mxu0 %v3268
        %v3307 = vpop.f32.mrf.mxu0
        %v3308 = vadd.f32 %v2705, %v3307
        %v3309 = vpop.f32.mrf.mxu0
        %v3310 = vpop.f32.mrf.mxu0
        %v3311 = vpop.f32.mrf.mxu0
        %3312 = vdwg.mxu0
        %v3313 = vsel %vm2753, %v3308, -inf
        %3314 = vmax.xlane.f32.xlu0 %v3313
        %v3315 = vpop.xlane.xlu0 %3314
        %v3316 = vsub.f32 %v3308, %v3315
        %v3317 = vmul.f32 %v3316, 1.442695
        %v3318 = vpow.pop %v3317
        %v3319 = vsel %vm2753, %v3318, 0.0
        %3320 = vadd.xlane.f32.xlu0 %v3319
        %v3321 = vpop.xlane.xlu0 %3320
        %v3322 = vrcp.pop %v3321
        %v3323 = vmul.f32 %v3318, %v3322
        %v3324 = vpack.c.bf16 %v3323, %v3323
        %3326 = vrot.lane.b32.xlu0 %v2704, 64
        %v3327 = vpop.permute.xlu0 %3326
        %v3329 = vsel %vm2753, %v3324, 0
        %v3332 = vsel %vm2769, %v3327, 0
        %3334 = vmatprep.subr.bf16.mxu0 0
        %3335 = vmatpush1.bf16.msra.mxu0 0
        %3336 = vmatprep.subr.bf16.mxu0 0
        %3337 = vmatpush1.bf16.msra.mxu0 0
        %3338 = vmatprep.subr.bf16.mxu0 0
        %3339 = vmatpush1.bf16.msra.mxu0 0
        %3340 = vmatprep.subr.bf16.mxu0 0
        %3341 = vmatpush1.bf16.msra.mxu0 0
        %3342 = vmatprep.subr.bf16.mxu0 0
        %3343 = vmatpush1.bf16.msra.mxu0 0
        %3344 = vmatprep.subr.bf16.mxu0 0
        %3345 = vmatpush1.bf16.msra.mxu0 0
        %3346 = vmatprep.subr.bf16.mxu0 0
        %3347 = vmatpush1.bf16.msra.mxu0 0
        %3348 = vmatprep.subr.bf16.mxu0 0
        %3349 = vmatpush1.bf16.msra.mxu0 %v3332
        %3350 = vmatprep.subr.bf16.mxu0 0
        %3351 = vmatpush2.bf16.msra.mxu0 0
        %3352 = vmatprep.subr.bf16.mxu0 0
        %3353 = vmatpush2.bf16.msra.mxu0 0
        %3354 = vmatprep.subr.bf16.mxu0 0
        %3355 = vmatpush2.bf16.msra.mxu0 0
        %3356 = vmatprep.subr.bf16.mxu0 0
        %3357 = vmatpush2.bf16.msra.mxu0 0
        %3358 = vmatprep.subr.bf16.mxu0 0
        %3359 = vmatpush2.bf16.msra.mxu0 0
        %3360 = vmatprep.subr.bf16.mxu0 0
        %3361 = vmatpush2.bf16.msra.mxu0 0
        %3362 = vmatprep.subr.bf16.mxu0 0
        %3363 = vmatpush2.bf16.msra.mxu0 0
        %3364 = vmatprep.subr.bf16.mxu0 0
        %3365 = vmatpush2.bf16.msra.mxu0 0
        %3366 = vmatprep.mubr.bf16.mxu0 0
        %3367 = vmatmul.mubr.bf16.gmra.mxu0 %v3329
        %v3368 = vpop.f32.mrf.mxu0
        %v3369 = vadd.f32 0.0, %v3368
        %v3370 = vpop.f32.mrf.mxu0
        %v3371 = vpop.f32.mrf.mxu0
        %v3372 = vpop.f32.mrf.mxu0
        %3373 = vdwg.mxu0
        %3375 = vrot.lane.b32.xlu0 %v3369, 64
        %v3376 = vpop.permute.xlu0 %3375
        %3378 = vst.msk [vmem:[#allocation2 + $0x10] sm:$0xff] %vm2931, %v3376
        %v3379 = vld [vmem:[#allocation2] sm:$0xff]
        %v3380 = vld [vmem:[#allocation2 + $0x8] sm:$0xff]
        %v3381 = vld [vmem:[#allocation2 + $0x10] sm:$0xff]
        %v3382 = vpack.c.bf16 %v3379, %v3379
        %v3383 = vpack.c.bf16 %v3380, %v3380
        %v3384 = vpack.c.bf16 %v3381, %v3381
        %v3385 = vld [vmem:[#allocation15] sm:$0xff]
        %v3386 = vld [vmem:[#allocation15 + $0x8] sm:$0xf]
        %v3387 = vld [vmem:[#allocation15 + $0xc] sm:$0xff]
        %v3388 = vld [vmem:[#allocation15 + $0x14] sm:$0xf]
        %v3389 = vld [vmem:[#allocation15 + $0x18] sm:$0xff]
        %v3390 = vld [vmem:[#allocation15 + $0x20] sm:$0xf]
        %v3391 = vld [vmem:[#allocation15 + $0x24] sm:$0xff]
        %v3392 = vld [vmem:[#allocation15 + $0x2c] sm:$0xf]
        %v3393 = vld [vmem:[#allocation15 + $0x30] sm:$0xff]
        %v3394 = vld [vmem:[#allocation15 + $0x38] sm:$0xf]
        %v3395 = vld [vmem:[#allocation15 + $0x3c] sm:$0xff]
        %v3396 = vld [vmem:[#allocation15 + $0x44] sm:$0xf]
        %v3397 = vld [vmem:[#allocation15 + $0x48] sm:$0xff]
        %v3398 = vld [vmem:[#allocation15 + $0x50] sm:$0xf]
        %v3399 = vld [vmem:[#allocation15 + $0x54] sm:$0xff]
        %v3400 = vld [vmem:[#allocation15 + $0x5c] sm:$0xf]
        %v3401 = vld [vmem:[#allocation15 + $0x60] sm:$0xff]
        %v3402 = vld [vmem:[#allocation15 + $0x68] sm:$0xf]
        %v3403 = vld [vmem:[#allocation15 + $0x6c] sm:$0xff]
        %v3404 = vld [vmem:[#allocation15 + $0x74] sm:$0xf]
        %v3405 = vld [vmem:[#allocation15 + $0x78] sm:$0xff]
        %v3406 = vld [vmem:[#allocation15 + $0x80] sm:$0xf]
        %v3407 = vld [vmem:[#allocation15 + $0x84] sm:$0xff]
        %v3408 = vld [vmem:[#allocation15 + $0x8c] sm:$0xf]
        %v3409 = vld [vmem:[#allocation15 + $0x90] sm:$0xff]
        %v3410 = vld [vmem:[#allocation15 + $0x98] sm:$0xf]
        %v3411 = vld [vmem:[#allocation15 + $0x9c] sm:$0xff]
        %v3412 = vld [vmem:[#allocation15 + $0xa4] sm:$0xf]
        %v3413 = vld [vmem:[#allocation15 + $0xa8] sm:$0xff]
        %v3414 = vld [vmem:[#allocation15 + $0xb0] sm:$0xf]
        %v3415 = vld [vmem:[#allocation15 + $0xb4] sm:$0xff]
        %v3416 = vld [vmem:[#allocation15 + $0xbc] sm:$0xf]
        %v3417 = vld [vmem:[#allocation15 + $0xc0] sm:$0xff]
        %v3418 = vld [vmem:[#allocation15 + $0xc8] sm:$0xf]
        %v3419 = vld [vmem:[#allocation15 + $0xcc] sm:$0xff]
        %v3420 = vld [vmem:[#allocation15 + $0xd4] sm:$0xf]
        %v3421 = vld [vmem:[#allocation15 + $0xd8] sm:$0xff]
        %v3422 = vld [vmem:[#allocation15 + $0xe0] sm:$0xf]
        %v3423 = vld [vmem:[#allocation15 + $0xe4] sm:$0xff]
        %v3424 = vld [vmem:[#allocation15 + $0xec] sm:$0xf]
        %v3425 = vld [vmem:[#allocation15 + $0xf0] sm:$0xff]
        %v3426 = vld [vmem:[#allocation15 + $0xf8] sm:$0xf]
        %v3427 = vld [vmem:[#allocation15 + $0xfc] sm:$0xff]
        %v3428 = vld [vmem:[#allocation15 + $0x104] sm:$0xf]
        %v3429 = vld [vmem:[#allocation15 + $0x108] sm:$0xff]
        %v3430 = vld [vmem:[#allocation15 + $0x110] sm:$0xf]
        %v3431 = vld [vmem:[#allocation15 + $0x114] sm:$0xff]
        %v3432 = vld [vmem:[#allocation15 + $0x11c] sm:$0xf]
        %v3433 = vld [vmem:[#allocation15 + $0x120] sm:$0xff]
        %v3434 = vld [vmem:[#allocation15 + $0x128] sm:$0xf]
        %v3435 = vld [vmem:[#allocation15 + $0x12c] sm:$0xff]
        %v3436 = vld [vmem:[#allocation15 + $0x134] sm:$0xf]
        %v3437 = vld [vmem:[#allocation15 + $0x138] sm:$0xff]
        %v3438 = vld [vmem:[#allocation15 + $0x140] sm:$0xf]
        %v3439 = vld [vmem:[#allocation15 + $0x144] sm:$0xff]
        %v3440 = vld [vmem:[#allocation15 + $0x14c] sm:$0xf]
        %v3441 = vld [vmem:[#allocation15 + $0x150] sm:$0xff]
        %v3442 = vld [vmem:[#allocation15 + $0x158] sm:$0xf]
        %v3443 = vld [vmem:[#allocation15 + $0x15c] sm:$0xff]
        %v3444 = vld [vmem:[#allocation15 + $0x164] sm:$0xf]
        %v3445 = vld [vmem:[#allocation15 + $0x168] sm:$0xff]
        %v3446 = vld [vmem:[#allocation15 + $0x170] sm:$0xf]
        %v3447 = vld [vmem:[#allocation15 + $0x174] sm:$0xff]
        %v3448 = vld [vmem:[#allocation15 + $0x17c] sm:$0xf]
        %v3449 = vld [vmem:[#allocation15 + $0x180] sm:$0xff]
        %v3450 = vld [vmem:[#allocation15 + $0x188] sm:$0xf]
        %v3451 = vld [vmem:[#allocation15 + $0x18c] sm:$0xff]
        %v3452 = vld [vmem:[#allocation15 + $0x194] sm:$0xf]
        %v3453 = vld [vmem:[#allocation15 + $0x198] sm:$0xff]
        %v3454 = vld [vmem:[#allocation15 + $0x1a0] sm:$0xf]
        %v3455 = vld [vmem:[#allocation15 + $0x1a4] sm:$0xff]
        %v3456 = vld [vmem:[#allocation15 + $0x1ac] sm:$0xf]
        %v3457 = vld [vmem:[#allocation15 + $0x1b0] sm:$0xff]
        %v3458 = vld [vmem:[#allocation15 + $0x1b8] sm:$0xf]
        %v3459 = vld [vmem:[#allocation15 + $0x1bc] sm:$0xff]
        %v3460 = vld [vmem:[#allocation15 + $0x1c4] sm:$0xf]
        %v3461 = vld [vmem:[#allocation15 + $0x1c8] sm:$0xff]
        %v3462 = vld [vmem:[#allocation15 + $0x1d0] sm:$0xf]
        %v3463 = vld [vmem:[#allocation15 + $0x1d4] sm:$0xff]
        %v3464 = vld [vmem:[#allocation15 + $0x1dc] sm:$0xf]
        %v3465 = vld [vmem:[#allocation15 + $0x1e0] sm:$0xff]
        %v3466 = vld [vmem:[#allocation15 + $0x1e8] sm:$0xf]
        %v3467 = vld [vmem:[#allocation15 + $0x1ec] sm:$0xff]
        %v3468 = vld [vmem:[#allocation15 + $0x1f4] sm:$0xf]
        %v3469 = vld [vmem:[#allocation15 + $0x1f8] sm:$0xff]
        %v3470 = vld [vmem:[#allocation15 + $0x200] sm:$0xf]
        %v3471 = vld [vmem:[#allocation15 + $0x204] sm:$0xff]
        %v3472 = vld [vmem:[#allocation15 + $0x20c] sm:$0xf]
        %v3473 = vld [vmem:[#allocation15 + $0x210] sm:$0xff]
        %v3474 = vld [vmem:[#allocation15 + $0x218] sm:$0xf]
        %v3475 = vld [vmem:[#allocation15 + $0x21c] sm:$0xff]
        %v3476 = vld [vmem:[#allocation15 + $0x224] sm:$0xf]
        %v3477 = vld [vmem:[#allocation15 + $0x228] sm:$0xff]
        %v3478 = vld [vmem:[#allocation15 + $0x230] sm:$0xf]
        %v3479 = vld [vmem:[#allocation15 + $0x234] sm:$0xff]
        %v3480 = vld [vmem:[#allocation15 + $0x23c] sm:$0xf]
        %v3481 = vld [vmem:[#allocation17] sm:$0x7]
        %v3483 = vlaneseq
        %v3484 = vshrl.u32 %v3483, 7
        %v3485 = vsub.s32 0, %v3484
        %v3486 = vrot.slane %v3481, %v3485
        %v3487 = vlaneseq
        %v3488 = vshrl.u32 %v3487, 7
        %v3489 = vsub.s32 1, %v3488
        %v3490 = vrot.slane %v3481, %v3489
        %v3491 = vlaneseq
        %v3492 = vshrl.u32 %v3491, 7
        %v3493 = vsub.s32 2, %v3492
        %v3494 = vrot.slane %v3481, %v3493
        %v3594 = vunpack.c.l.b16 %v3385
        %v3595 = vunpack.c.h.b16 %v3385
        %v3596 = vunpack.c.l.b16 %v3386
        %v3597 = vunpack.c.l.b16 %v3387
        %v3598 = vunpack.c.h.b16 %v3387
        %v3599 = vunpack.c.l.b16 %v3388
        %v3600 = vunpack.c.l.b16 %v3389
        %v3601 = vunpack.c.h.b16 %v3389
        %v3602 = vunpack.c.l.b16 %v3390
        %v3603 = vunpack.c.l.b16 %v3391
        %v3604 = vunpack.c.h.b16 %v3391
        %v3605 = vunpack.c.l.b16 %v3392
        %v3606 = vunpack.c.l.b16 %v3393
        %v3607 = vunpack.c.h.b16 %v3393
        %v3608 = vunpack.c.l.b16 %v3394
        %v3609 = vunpack.c.l.b16 %v3395
        %v3610 = vunpack.c.h.b16 %v3395
        %v3611 = vunpack.c.l.b16 %v3396
        %v3612 = vunpack.c.l.b16 %v3397
        %v3613 = vunpack.c.h.b16 %v3397
        %v3614 = vunpack.c.l.b16 %v3398
        %v3615 = vunpack.c.l.b16 %v3399
        %v3616 = vunpack.c.h.b16 %v3399
        %v3617 = vunpack.c.l.b16 %v3400
        %v3618 = vunpack.c.l.b16 %v3401
        %v3619 = vunpack.c.h.b16 %v3401
        %v3620 = vunpack.c.l.b16 %v3402
        %v3621 = vunpack.c.l.b16 %v3403
        %v3622 = vunpack.c.h.b16 %v3403
        %v3623 = vunpack.c.l.b16 %v3404
        %v3624 = vunpack.c.l.b16 %v3405
        %v3625 = vunpack.c.h.b16 %v3405
        %v3626 = vunpack.c.l.b16 %v3406
        %v3627 = vunpack.c.l.b16 %v3407
        %v3628 = vunpack.c.h.b16 %v3407
        %v3629 = vunpack.c.l.b16 %v3408
        %v3630 = vunpack.c.l.b16 %v3409
        %v3631 = vunpack.c.h.b16 %v3409
        %v3632 = vunpack.c.l.b16 %v3410
        %v3633 = vunpack.c.l.b16 %v3411
        %v3634 = vunpack.c.h.b16 %v3411
        %v3635 = vunpack.c.l.b16 %v3412
        %v3636 = vunpack.c.l.b16 %v3413
        %v3637 = vunpack.c.h.b16 %v3413
        %v3638 = vunpack.c.l.b16 %v3414
        %v3639 = vunpack.c.l.b16 %v3415
        %v3640 = vunpack.c.h.b16 %v3415
        %v3641 = vunpack.c.l.b16 %v3416
        %v3642 = vunpack.c.l.b16 %v3417
        %v3643 = vunpack.c.h.b16 %v3417
        %v3644 = vunpack.c.l.b16 %v3418
        %v3645 = vunpack.c.l.b16 %v3419
        %v3646 = vunpack.c.h.b16 %v3419
        %v3647 = vunpack.c.l.b16 %v3420
        %v3648 = vunpack.c.l.b16 %v3421
        %v3649 = vunpack.c.h.b16 %v3421
        %v3650 = vunpack.c.l.b16 %v3422
        %v3651 = vunpack.c.l.b16 %v3423
        %v3652 = vunpack.c.h.b16 %v3423
        %v3653 = vunpack.c.l.b16 %v3424
        %v3654 = vunpack.c.l.b16 %v3425
        %v3655 = vunpack.c.h.b16 %v3425
        %v3656 = vunpack.c.l.b16 %v3426
        %v3657 = vunpack.c.l.b16 %v3427
        %v3658 = vunpack.c.h.b16 %v3427
        %v3659 = vunpack.c.l.b16 %v3428
        %v3660 = vunpack.c.l.b16 %v3429
        %v3661 = vunpack.c.h.b16 %v3429
        %v3662 = vunpack.c.l.b16 %v3430
        %v3663 = vunpack.c.l.b16 %v3431
        %v3664 = vunpack.c.h.b16 %v3431
        %v3665 = vunpack.c.l.b16 %v3432
        %v3666 = vunpack.c.l.b16 %v3433
        %v3667 = vunpack.c.h.b16 %v3433
        %v3668 = vunpack.c.l.b16 %v3434
        %v3669 = vunpack.c.l.b16 %v3435
        %v3670 = vunpack.c.h.b16 %v3435
        %v3671 = vunpack.c.l.b16 %v3436
        %v3672 = vunpack.c.l.b16 %v3437
        %v3673 = vunpack.c.h.b16 %v3437
        %v3674 = vunpack.c.l.b16 %v3438
        %v3675 = vunpack.c.l.b16 %v3439
        %v3676 = vunpack.c.h.b16 %v3439
        %v3677 = vunpack.c.l.b16 %v3440
        %v3678 = vunpack.c.l.b16 %v3441
        %v3679 = vunpack.c.h.b16 %v3441
        %v3680 = vunpack.c.l.b16 %v3442
        %v3681 = vunpack.c.l.b16 %v3443
        %v3682 = vunpack.c.h.b16 %v3443
        %v3683 = vunpack.c.l.b16 %v3444
        %v3684 = vunpack.c.l.b16 %v3445
        %v3685 = vunpack.c.h.b16 %v3445
        %v3686 = vunpack.c.l.b16 %v3446
        %v3687 = vunpack.c.l.b16 %v3447
        %v3688 = vunpack.c.h.b16 %v3447
        %v3689 = vunpack.c.l.b16 %v3448
        %v3690 = vunpack.c.l.b16 %v3449
        %v3691 = vunpack.c.h.b16 %v3449
        %v3692 = vunpack.c.l.b16 %v3450
        %v3693 = vunpack.c.l.b16 %v3451
        %v3694 = vunpack.c.h.b16 %v3451
        %v3695 = vunpack.c.l.b16 %v3452
        %v3696 = vunpack.c.l.b16 %v3453
        %v3697 = vunpack.c.h.b16 %v3453
        %v3698 = vunpack.c.l.b16 %v3454
        %v3699 = vunpack.c.l.b16 %v3455
        %v3700 = vunpack.c.h.b16 %v3455
        %v3701 = vunpack.c.l.b16 %v3456
        %v3702 = vunpack.c.l.b16 %v3457
        %v3703 = vunpack.c.h.b16 %v3457
        %v3704 = vunpack.c.l.b16 %v3458
        %v3705 = vunpack.c.l.b16 %v3459
        %v3706 = vunpack.c.h.b16 %v3459
        %v3707 = vunpack.c.l.b16 %v3460
        %v3708 = vunpack.c.l.b16 %v3461
        %v3709 = vunpack.c.h.b16 %v3461
        %v3710 = vunpack.c.l.b16 %v3462
        %v3711 = vunpack.c.l.b16 %v3463
        %v3712 = vunpack.c.h.b16 %v3463
        %v3713 = vunpack.c.l.b16 %v3464
        %v3714 = vunpack.c.l.b16 %v3465
        %v3715 = vunpack.c.h.b16 %v3465
        %v3716 = vunpack.c.l.b16 %v3466
        %v3717 = vunpack.c.l.b16 %v3467
        %v3718 = vunpack.c.h.b16 %v3467
        %v3719 = vunpack.c.l.b16 %v3468
        %v3720 = vunpack.c.l.b16 %v3469
        %v3721 = vunpack.c.h.b16 %v3469
        %v3722 = vunpack.c.l.b16 %v3470
        %v3723 = vunpack.c.l.b16 %v3471
        %v3724 = vunpack.c.h.b16 %v3471
        %v3725 = vunpack.c.l.b16 %v3472
        %v3726 = vunpack.c.l.b16 %v3473
        %v3727 = vunpack.c.h.b16 %v3473
        %v3728 = vunpack.c.l.b16 %v3474
        %v3729 = vunpack.c.l.b16 %v3475
        %v3730 = vunpack.c.h.b16 %v3475
        %v3731 = vunpack.c.l.b16 %v3476
        %v3732 = vunpack.c.l.b16 %v3477
        %v3733 = vunpack.c.h.b16 %v3477
        %v3734 = vunpack.c.l.b16 %v3478
        %v3735 = vunpack.c.l.b16 %v3479
        %v3736 = vunpack.c.h.b16 %v3479
        %v3737 = vunpack.c.l.b16 %v3480
        %v3738 = vpack.c.b16 %v3597, %v3594
        %v3739 = vpack.c.b16 %v3598, %v3595
        %v3740 = vpack.c.b16 %v3599, %v3596
        %v3741 = vpack.c.b16 %v3603, %v3600
        %v3742 = vpack.c.b16 %v3604, %v3601
        %v3743 = vpack.c.b16 %v3605, %v3602
        %v3744 = vpack.c.b16 %v3609, %v3606
        %v3745 = vpack.c.b16 %v3610, %v3607
        %v3746 = vpack.c.b16 %v3611, %v3608
        %v3747 = vpack.c.b16 %v3615, %v3612
        %v3748 = vpack.c.b16 %v3616, %v3613
        %v3749 = vpack.c.b16 %v3617, %v3614
        %v3750 = vpack.c.b16 %v3621, %v3618
        %v3751 = vpack.c.b16 %v3622, %v3619
        %v3752 = vpack.c.b16 %v3623, %v3620
        %v3753 = vpack.c.b16 %v3627, %v3624
        %v3754 = vpack.c.b16 %v3628, %v3625
        %v3755 = vpack.c.b16 %v3629, %v3626
        %v3756 = vpack.c.b16 %v3633, %v3630
        %v3757 = vpack.c.b16 %v3634, %v3631
        %v3758 = vpack.c.b16 %v3635, %v3632
        %v3759 = vpack.c.b16 %v3639, %v3636
        %v3760 = vpack.c.b16 %v3640, %v3637
        %v3761 = vpack.c.b16 %v3641, %v3638
        %v3762 = vpack.c.b16 %v3645, %v3642
        %v3763 = vpack.c.b16 %v3646, %v3643
        %v3764 = vpack.c.b16 %v3647, %v3644
        %v3765 = vpack.c.b16 %v3651, %v3648
        %v3766 = vpack.c.b16 %v3652, %v3649
        %v3767 = vpack.c.b16 %v3653, %v3650
        %v3768 = vpack.c.b16 %v3657, %v3654
        %v3769 = vpack.c.b16 %v3658, %v3655
        %v3770 = vpack.c.b16 %v3659, %v3656
        %v3771 = vpack.c.b16 %v3663, %v3660
        %v3772 = vpack.c.b16 %v3664, %v3661
        %v3773 = vpack.c.b16 %v3665, %v3662
        %v3774 = vpack.c.b16 %v3669, %v3666
        %v3775 = vpack.c.b16 %v3670, %v3667
        %v3776 = vpack.c.b16 %v3671, %v3668
        %v3777 = vpack.c.b16 %v3675, %v3672
        %v3778 = vpack.c.b16 %v3676, %v3673
        %v3779 = vpack.c.b16 %v3677, %v3674
        %v3780 = vpack.c.b16 %v3681, %v3678
        %v3781 = vpack.c.b16 %v3682, %v3679
        %v3782 = vpack.c.b16 %v3683, %v3680
        %v3783 = vpack.c.b16 %v3687, %v3684
        %v3784 = vpack.c.b16 %v3688, %v3685
        %v3785 = vpack.c.b16 %v3689, %v3686
        %v3786 = vpack.c.b16 %v3693, %v3690
        %v3787 = vpack.c.b16 %v3694, %v3691
        %v3788 = vpack.c.b16 %v3695, %v3692
        %v3789 = vpack.c.b16 %v3699, %v3696
        %v3790 = vpack.c.b16 %v3700, %v3697
        %v3791 = vpack.c.b16 %v3701, %v3698
        %v3792 = vpack.c.b16 %v3705, %v3702
        %v3793 = vpack.c.b16 %v3706, %v3703
        %v3794 = vpack.c.b16 %v3707, %v3704
        %v3795 = vpack.c.b16 %v3711, %v3708
        %v3796 = vpack.c.b16 %v3712, %v3709
        %v3797 = vpack.c.b16 %v3713, %v3710
        %v3798 = vpack.c.b16 %v3717, %v3714
        %v3799 = vpack.c.b16 %v3718, %v3715
        %v3800 = vpack.c.b16 %v3719, %v3716
        %v3801 = vpack.c.b16 %v3723, %v3720
        %v3802 = vpack.c.b16 %v3724, %v3721
        %v3803 = vpack.c.b16 %v3725, %v3722
        %v3804 = vpack.c.b16 %v3729, %v3726
        %v3805 = vpack.c.b16 %v3730, %v3727
        %v3806 = vpack.c.b16 %v3731, %v3728
        %v3807 = vpack.c.b16 %v3735, %v3732
        %v3808 = vpack.c.b16 %v3736, %v3733
        %v3809 = vpack.c.b16 %v3737, %v3734
        %3882 = vmatprep.subr.bf16.mxu0 %v3760
        %3883 = vmatpush1.bf16.msra.mxu0 %v3759
        %3884 = vmatprep.subr.bf16.mxu0 %v3757
        %3885 = vmatpush1.bf16.msra.mxu0 %v3756
        %3886 = vmatprep.subr.bf16.mxu0 %v3754
        %3887 = vmatpush1.bf16.msra.mxu0 %v3753
        %3888 = vmatprep.subr.bf16.mxu0 %v3751
        %3889 = vmatpush1.bf16.msra.mxu0 %v3750
        %3890 = vmatprep.subr.bf16.mxu0 %v3748
        %3891 = vmatpush1.bf16.msra.mxu0 %v3747
        %3892 = vmatprep.subr.bf16.mxu0 %v3745
        %3893 = vmatpush1.bf16.msra.mxu0 %v3744
        %3894 = vmatprep.subr.bf16.mxu0 %v3742
        %3895 = vmatpush1.bf16.msra.mxu0 %v3741
        %3896 = vmatprep.subr.bf16.mxu0 %v3739
        %3897 = vmatpush1.bf16.msra.mxu0 %v3738
        %3898 = vmatprep.subr.bf16.mxu0 %v3784
        %3899 = vmatpush2.bf16.msra.mxu0 %v3783
        %3900 = vmatprep.subr.bf16.mxu0 %v3781
        %3901 = vmatpush2.bf16.msra.mxu0 %v3780
        %3902 = vmatprep.subr.bf16.mxu0 %v3778
        %3903 = vmatpush2.bf16.msra.mxu0 %v3777
        %3904 = vmatprep.subr.bf16.mxu0 %v3775
        %3905 = vmatpush2.bf16.msra.mxu0 %v3774
        %3906 = vmatprep.subr.bf16.mxu0 %v3772
        %3907 = vmatpush2.bf16.msra.mxu0 %v3771
        %3908 = vmatprep.subr.bf16.mxu0 %v3769
        %3909 = vmatpush2.bf16.msra.mxu0 %v3768
        %3910 = vmatprep.subr.bf16.mxu0 %v3766
        %3911 = vmatpush2.bf16.msra.mxu0 %v3765
        %3912 = vmatprep.subr.bf16.mxu0 %v3763
        %3913 = vmatpush2.bf16.msra.mxu0 %v3762
        %3914 = vmatprep.mubr.bf16.mxu0 %v3383
        %3915 = vmatmul.mubr.bf16.gmra.mxu0 %v3382
        %v3916 = vpop.f32.mrf.mxu0
        %v3917 = vadd.f32 %v3486, %v3916
        %v3918 = vpop.f32.mrf.mxu0
        %v3919 = vadd.f32 %v3490, %v3918
        %v3920 = vpop.f32.mrf.mxu0
        %v3921 = vpop.f32.mrf.mxu0
        %3922 = vdwg.mxu0
        %3923 = vmatprep.subr.bf16.mxu0 %v3808
        %3924 = vmatpush1.bf16.msra.mxu0 %v3807
        %3925 = vmatprep.subr.bf16.mxu0 %v3805
        %3926 = vmatpush1.bf16.msra.mxu0 %v3804
        %3927 = vmatprep.subr.bf16.mxu0 %v3802
        %3928 = vmatpush1.bf16.msra.mxu0 %v3801
        %3929 = vmatprep.subr.bf16.mxu0 %v3799
        %3930 = vmatpush1.bf16.msra.mxu0 %v3798
        %3931 = vmatprep.subr.bf16.mxu0 %v3796
        %3932 = vmatpush1.bf16.msra.mxu0 %v3795
        %3933 = vmatprep.subr.bf16.mxu0 %v3793
        %3934 = vmatpush1.bf16.msra.mxu0 %v3792
        %3935 = vmatprep.subr.bf16.mxu0 %v3790
        %3936 = vmatpush1.bf16.msra.mxu0 %v3789
        %3937 = vmatprep.subr.bf16.mxu0 %v3787
        %3938 = vmatpush1.bf16.msra.mxu0 %v3786
        %3939 = vmatprep.subr.bf16.mxu0 0
        %3940 = vmatpush2.bf16.msra.mxu0 0
        %3941 = vmatprep.subr.bf16.mxu0 0
        %3942 = vmatpush2.bf16.msra.mxu0 0
        %3943 = vmatprep.subr.bf16.mxu0 0
        %3944 = vmatpush2.bf16.msra.mxu0 0
        %3945 = vmatprep.subr.bf16.mxu0 0
        %3946 = vmatpush2.bf16.msra.mxu0 0
        %3947 = vmatprep.subr.bf16.mxu0 0
        %3948 = vmatpush2.bf16.msra.mxu0 0
        %3949 = vmatprep.subr.bf16.mxu0 0
        %3950 = vmatpush2.bf16.msra.mxu0 0
        %3951 = vmatprep.subr.bf16.mxu0 0
        %3952 = vmatpush2.bf16.msra.mxu0 0
        %3953 = vmatprep.subr.bf16.mxu0 0
        %3954 = vmatpush2.bf16.msra.mxu0 0
        %3955 = vmatprep.mubr.bf16.mxu0 0
        %3956 = vmatmul.mubr.bf16.gmra.mxu0 %v3384
        %v3957 = vpop.f32.mrf.mxu0
        %v3958 = vadd.f32 %v3917, %v3957
        %v3959 = vpop.f32.mrf.mxu0
        %v3960 = vadd.f32 %v3919, %v3959
        %v3961 = vpop.f32.mrf.mxu0
        %v3962 = vpop.f32.mrf.mxu0
        %3963 = vdwg.mxu0
        %3964 = vmatprep.subr.bf16.mxu0 0
        %3965 = vmatpush1.bf16.msra.mxu0 %v3761
        %3966 = vmatprep.subr.bf16.mxu0 0
        %3967 = vmatpush1.bf16.msra.mxu0 %v3758
        %3968 = vmatprep.subr.bf16.mxu0 0
        %3969 = vmatpush1.bf16.msra.mxu0 %v3755
        %3970 = vmatprep.subr.bf16.mxu0 0
        %3971 = vmatpush1.bf16.msra.mxu0 %v3752
        %3972 = vmatprep.subr.bf16.mxu0 0
        %3973 = vmatpush1.bf16.msra.mxu0 %v3749
        %3974 = vmatprep.subr.bf16.mxu0 0
        %3975 = vmatpush1.bf16.msra.mxu0 %v3746
        %3976 = vmatprep.subr.bf16.mxu0 0
        %3977 = vmatpush1.bf16.msra.mxu0 %v3743
        %3978 = vmatprep.subr.bf16.mxu0 0
        %3979 = vmatpush1.bf16.msra.mxu0 %v3740
        %3980 = vmatprep.subr.bf16.mxu0 0
        %3981 = vmatpush2.bf16.msra.mxu0 %v3785
        %3982 = vmatprep.subr.bf16.mxu0 0
        %3983 = vmatpush2.bf16.msra.mxu0 %v3782
        %3984 = vmatprep.subr.bf16.mxu0 0
        %3985 = vmatpush2.bf16.msra.mxu0 %v3779
        %3986 = vmatprep.subr.bf16.mxu0 0
        %3987 = vmatpush2.bf16.msra.mxu0 %v3776
        %3988 = vmatprep.subr.bf16.mxu0 0
        %3989 = vmatpush2.bf16.msra.mxu0 %v3773
        %3990 = vmatprep.subr.bf16.mxu0 0
        %3991 = vmatpush2.bf16.msra.mxu0 %v3770
        %3992 = vmatprep.subr.bf16.mxu0 0
        %3993 = vmatpush2.bf16.msra.mxu0 %v3767
        %3994 = vmatprep.subr.bf16.mxu0 0
        %3995 = vmatpush2.bf16.msra.mxu0 %v3764
        %3996 = vmatprep.mubr.bf16.mxu0 %v3383
        %3997 = vmatmul.mubr.bf16.gmra.mxu0 %v3382
        %v3998 = vpop.f32.mrf.mxu0
        %v3999 = vadd.f32 %v3494, %v3998
        %v4000 = vpop.f32.mrf.mxu0
        %v4001 = vpop.f32.mrf.mxu0
        %v4002 = vpop.f32.mrf.mxu0
        %4003 = vdwg.mxu0
        %4004 = vmatprep.subr.bf16.mxu0 0
        %4005 = vmatpush1.bf16.msra.mxu0 %v3809
        %4006 = vmatprep.subr.bf16.mxu0 0
        %4007 = vmatpush1.bf16.msra.mxu0 %v3806
        %4008 = vmatprep.subr.bf16.mxu0 0
        %4009 = vmatpush1.bf16.msra.mxu0 %v3803
        %4010 = vmatprep.subr.bf16.mxu0 0
        %4011 = vmatpush1.bf16.msra.mxu0 %v3800
        %4012 = vmatprep.subr.bf16.mxu0 0
        %4013 = vmatpush1.bf16.msra.mxu0 %v3797
        %4014 = vmatprep.subr.bf16.mxu0 0
        %4015 = vmatpush1.bf16.msra.mxu0 %v3794
        %4016 = vmatprep.subr.bf16.mxu0 0
        %4017 = vmatpush1.bf16.msra.mxu0 %v3791
        %4018 = vmatprep.subr.bf16.mxu0 0
        %4019 = vmatpush1.bf16.msra.mxu0 %v3788
        %4020 = vmatprep.subr.bf16.mxu0 0
        %4021 = vmatpush2.bf16.msra.mxu0 0
        %4022 = vmatprep.subr.bf16.mxu0 0
        %4023 = vmatpush2.bf16.msra.mxu0 0
        %4024 = vmatprep.subr.bf16.mxu0 0
        %4025 = vmatpush2.bf16.msra.mxu0 0
        %4026 = vmatprep.subr.bf16.mxu0 0
        %4027 = vmatpush2.bf16.msra.mxu0 0
        %4028 = vmatprep.subr.bf16.mxu0 0
        %4029 = vmatpush2.bf16.msra.mxu0 0
        %4030 = vmatprep.subr.bf16.mxu0 0
        %4031 = vmatpush2.bf16.msra.mxu0 0
        %4032 = vmatprep.subr.bf16.mxu0 0
        %4033 = vmatpush2.bf16.msra.mxu0 0
        %4034 = vmatprep.subr.bf16.mxu0 0
        %4035 = vmatpush2.bf16.msra.mxu0 0
        %4036 = vmatprep.mubr.bf16.mxu0 0
        %4037 = vmatmul.mubr.bf16.gmra.mxu0 %v3384
        %v4038 = vpop.f32.mrf.mxu0
        %v4039 = vadd.f32 %v3999, %v4038
        %v4040 = vpop.f32.mrf.mxu0
        %v4041 = vpop.f32.mrf.mxu0
        %v4042 = vpop.f32.mrf.mxu0
        %4043 = vdwg.mxu0
        %v4044 = vadd.f32 %v699, %v3958
        %v4045 = vadd.f32 %v700, %v3960
        %v4046 = vadd.f32 %v701, %v4039
        %v4047 = vld [vmem:[#allocation18] sm:$0x7]
        %v4048 = vld [vmem:[#allocation20] sm:$0x7]
        %v4049 = vadd.f32 %v4044, %v4045
        %v4050 = vadd.f32 %v4049, %v4046
        %4051 = vadd.xlane.f32.xlu0 %v4050
        %v4052 = vpop.xlane.xlu0 %4051
        %v4053 = vmul.f32 %v4052, %v708
        %v4054 = vsub.f32 %v4044, %v4053
        %v4055 = vsub.f32 %v4045, %v4053
        %v4056 = vsub.f32 %v4046, %v4053
        %v4057 = vmul.f32 %v4054, %v4054
        %v4058 = vmul.f32 %v4055, %v4055
        %v4059 = vmul.f32 %v4056, %v4056
        %v4060 = vadd.f32 %v4057, %v4058
        %v4061 = vadd.f32 %v4060, %v4059
        %4062 = vadd.xlane.f32.xlu0 %v4061
        %v4063 = vpop.xlane.xlu0 %4062
        %v4064 = vmul.f32 %v4063, %v708
        %v4065 = vadd.f32 %v4064, 1e-05
        %v4066 = vrsqrt.pop %v4065
        %v4067 = vmul.f32 %v4054, %v4066
        %v4068 = vmul.f32 %v4055, %v4066
        %v4069 = vmul.f32 %v4056, %v4066
        %v4071 = vlaneseq
        %v4072 = vshrl.u32 %v4071, 7
        %v4073 = vsub.s32 0, %v4072
        %v4074 = vrot.slane %v4047, %v4073
        %v4075 = vlaneseq
        %v4076 = vshrl.u32 %v4075, 7
        %v4077 = vsub.s32 1, %v4076
        %v4078 = vrot.slane %v4047, %v4077
        %v4079 = vlaneseq
        %v4080 = vshrl.u32 %v4079, 7
        %v4081 = vsub.s32 2, %v4080
        %v4082 = vrot.slane %v4047, %v4081
        %v4086 = vmul.f32 %v4067, %v4074
        %v4087 = vmul.f32 %v4068, %v4078
        %v4088 = vmul.f32 %v4069, %v4082
        %v4090 = vlaneseq
        %v4091 = vshrl.u32 %v4090, 7
        %v4092 = vsub.s32 0, %v4091
        %v4093 = vrot.slane %v4048, %v4092
        %v4094 = vlaneseq
        %v4095 = vshrl.u32 %v4094, 7
        %v4096 = vsub.s32 1, %v4095
        %v4097 = vrot.slane %v4048, %v4096
        %v4098 = vlaneseq
        %v4099 = vshrl.u32 %v4098, 7
        %v4100 = vsub.s32 2, %v4099
        %v4101 = vrot.slane %v4048, %v4100
        %v4105 = vadd.f32 %v4086, %v4093
        %v4106 = vadd.f32 %v4087, %v4097
        %v4107 = vadd.f32 %v4088, %v4101
        %v4108 = vpack.c.bf16 %v4105, %v4105
        %v4109 = vpack.c.bf16 %v4106, %v4106
        %v4110 = vpack.c.bf16 %v4107, %v4107
        %v4111 = vld [vmem:[#allocation21] sm:$0xff]
        %v4112 = vld [vmem:[#allocation21 + $0x8] sm:$0xff]
        %v4113 = vld [vmem:[#allocation21 + $0x10] sm:$0xff]
        %v4114 = vld [vmem:[#allocation21 + $0x18] sm:$0xff]
        %v4115 = vld [vmem:[#allocation21 + $0x20] sm:$0xff]
        %v4116 = vld [vmem:[#allocation21 + $0x28] sm:$0xff]
        %v4117 = vld [vmem:[#allocation21 + $0x30] sm:$0xff]
        %v4118 = vld [vmem:[#allocation21 + $0x38] sm:$0xff]
        %v4119 = vld [vmem:[#allocation21 + $0x40] sm:$0xff]
        %v4120 = vld [vmem:[#allocation21 + $0x48] sm:$0xff]
        %v4121 = vld [vmem:[#allocation21 + $0x50] sm:$0xff]
        %v4122 = vld [vmem:[#allocation21 + $0x58] sm:$0xff]
        %v4123 = vld [vmem:[#allocation21 + $0x60] sm:$0xff]
        %v4124 = vld [vmem:[#allocation21 + $0x68] sm:$0xff]
        %v4125 = vld [vmem:[#allocation21 + $0x70] sm:$0xff]
        %v4126 = vld [vmem:[#allocation21 + $0x78] sm:$0xff]
        %v4127 = vld [vmem:[#allocation21 + $0x80] sm:$0xff]
        %v4128 = vld [vmem:[#allocation21 + $0x88] sm:$0xff]
        %v4129 = vld [vmem:[#allocation21 + $0x90] sm:$0xff]
        %v4130 = vld [vmem:[#allocation21 + $0x98] sm:$0xff]
        %v4131 = vld [vmem:[#allocation21 + $0xa0] sm:$0xff]
        %v4132 = vld [vmem:[#allocation21 + $0xa8] sm:$0xff]
        %v4133 = vld [vmem:[#allocation21 + $0xb0] sm:$0xff]
        %v4134 = vld [vmem:[#allocation21 + $0xb8] sm:$0xff]
        %v4135 = vld [vmem:[#allocation21 + $0xc0] sm:$0xff]
        %v4136 = vld [vmem:[#allocation21 + $0xc8] sm:$0xff]
        %v4137 = vld [vmem:[#allocation21 + $0xd0] sm:$0xff]
        %v4138 = vld [vmem:[#allocation21 + $0xd8] sm:$0xff]
        %v4139 = vld [vmem:[#allocation21 + $0xe0] sm:$0xff]
        %v4140 = vld [vmem:[#allocation21 + $0xe8] sm:$0xff]
        %v4141 = vld [vmem:[#allocation21 + $0xf0] sm:$0xff]
        %v4142 = vld [vmem:[#allocation21 + $0xf8] sm:$0xff]
        %v4143 = vld [vmem:[#allocation21 + $0x100] sm:$0xff]
        %v4144 = vld [vmem:[#allocation21 + $0x108] sm:$0xff]
        %v4145 = vld [vmem:[#allocation21 + $0x110] sm:$0xff]
        %v4146 = vld [vmem:[#allocation21 + $0x118] sm:$0xff]
        %v4147 = vld [vmem:[#allocation21 + $0x120] sm:$0xff]
        %v4148 = vld [vmem:[#allocation21 + $0x128] sm:$0xff]
        %v4149 = vld [vmem:[#allocation21 + $0x130] sm:$0xff]
        %v4150 = vld [vmem:[#allocation21 + $0x138] sm:$0xff]
        %v4151 = vld [vmem:[#allocation21 + $0x140] sm:$0xff]
        %v4152 = vld [vmem:[#allocation21 + $0x148] sm:$0xff]
        %v4153 = vld [vmem:[#allocation21 + $0x150] sm:$0xff]
        %v4154 = vld [vmem:[#allocation21 + $0x158] sm:$0xff]
        %v4155 = vld [vmem:[#allocation21 + $0x160] sm:$0xff]
        %v4156 = vld [vmem:[#allocation21 + $0x168] sm:$0xff]
        %v4157 = vld [vmem:[#allocation21 + $0x170] sm:$0xff]
        %v4158 = vld [vmem:[#allocation21 + $0x178] sm:$0xff]
        %v4159 = vld [vmem:[#allocation21 + $0x180] sm:$0xff]
        %v4160 = vld [vmem:[#allocation21 + $0x188] sm:$0xff]
        %v4161 = vld [vmem:[#allocation21 + $0x190] sm:$0xff]
        %v4162 = vld [vmem:[#allocation21 + $0x198] sm:$0xff]
        %v4163 = vld [vmem:[#allocation21 + $0x1a0] sm:$0xff]
        %v4164 = vld [vmem:[#allocation21 + $0x1a8] sm:$0xff]
        %v4165 = vld [vmem:[#allocation21 + $0x1b0] sm:$0xff]
        %v4166 = vld [vmem:[#allocation21 + $0x1b8] sm:$0xff]
        %v4167 = vld [vmem:[#allocation21 + $0x1c0] sm:$0xff]
        %v4168 = vld [vmem:[#allocation21 + $0x1c8] sm:$0xff]
        %v4169 = vld [vmem:[#allocation21 + $0x1d0] sm:$0xff]
        %v4170 = vld [vmem:[#allocation21 + $0x1d8] sm:$0xff]
        %v4171 = vld [vmem:[#allocation21 + $0x1e0] sm:$0xff]
        %v4172 = vld [vmem:[#allocation21 + $0x1e8] sm:$0xff]
        %v4173 = vld [vmem:[#allocation21 + $0x1f0] sm:$0xff]
        %v4174 = vld [vmem:[#allocation21 + $0x1f8] sm:$0xff]
        %v4175 = vld [vmem:[#allocation21 + $0x200] sm:$0xff]
        %v4176 = vld [vmem:[#allocation21 + $0x208] sm:$0xff]
        %v4177 = vld [vmem:[#allocation21 + $0x210] sm:$0xff]
        %v4178 = vld [vmem:[#allocation21 + $0x218] sm:$0xff]
        %v4179 = vld [vmem:[#allocation21 + $0x220] sm:$0xff]
        %v4180 = vld [vmem:[#allocation21 + $0x228] sm:$0xff]
        %v4181 = vld [vmem:[#allocation21 + $0x230] sm:$0xff]
        %v4182 = vld [vmem:[#allocation21 + $0x238] sm:$0xff]
        %v4183 = vld [vmem:[#allocation21 + $0x240] sm:$0xff]
        %v4184 = vld [vmem:[#allocation21 + $0x248] sm:$0xff]
        %v4185 = vld [vmem:[#allocation21 + $0x250] sm:$0xff]
        %v4186 = vld [vmem:[#allocation21 + $0x258] sm:$0xff]
        %v4187 = vld [vmem:[#allocation21 + $0x260] sm:$0xff]
        %v4188 = vld [vmem:[#allocation21 + $0x268] sm:$0xff]
        %v4189 = vld [vmem:[#allocation21 + $0x270] sm:$0xff]
        %v4190 = vld [vmem:[#allocation21 + $0x278] sm:$0xff]
        %v4191 = vld [vmem:[#allocation21 + $0x280] sm:$0xff]
        %v4192 = vld [vmem:[#allocation21 + $0x288] sm:$0xff]
        %v4193 = vld [vmem:[#allocation21 + $0x290] sm:$0xff]
        %v4194 = vld [vmem:[#allocation21 + $0x298] sm:$0xff]
        %v4195 = vld [vmem:[#allocation21 + $0x2a0] sm:$0xff]
        %v4196 = vld [vmem:[#allocation21 + $0x2a8] sm:$0xff]
        %v4197 = vld [vmem:[#allocation21 + $0x2b0] sm:$0xff]
        %v4198 = vld [vmem:[#allocation21 + $0x2b8] sm:$0xff]
        %v4199 = vld [vmem:[#allocation21 + $0x2c0] sm:$0xff]
        %v4200 = vld [vmem:[#allocation21 + $0x2c8] sm:$0xff]
        %v4201 = vld [vmem:[#allocation21 + $0x2d0] sm:$0xff]
        %v4202 = vld [vmem:[#allocation21 + $0x2d8] sm:$0xff]
        %v4203 = vld [vmem:[#allocation21 + $0x2e0] sm:$0xff]
        %v4204 = vld [vmem:[#allocation21 + $0x2e8] sm:$0xff]
        %v4205 = vld [vmem:[#allocation21 + $0x2f0] sm:$0xff]
        %v4206 = vld [vmem:[#allocation21 + $0x2f8] sm:$0xff]
        %v4207 = vld [vmem:[#allocation21 + $0x300] sm:$0xff]
        %v4208 = vld [vmem:[#allocation21 + $0x308] sm:$0xff]
        %v4209 = vld [vmem:[#allocation21 + $0x310] sm:$0xff]
        %v4210 = vld [vmem:[#allocation21 + $0x318] sm:$0xff]
        %v4211 = vld [vmem:[#allocation21 + $0x320] sm:$0xff]
        %v4212 = vld [vmem:[#allocation21 + $0x328] sm:$0xff]
        %v4213 = vld [vmem:[#allocation21 + $0x330] sm:$0xff]
        %v4214 = vld [vmem:[#allocation21 + $0x338] sm:$0xff]
        %v4215 = vld [vmem:[#allocation21 + $0x340] sm:$0xff]
        %v4216 = vld [vmem:[#allocation21 + $0x348] sm:$0xff]
        %v4217 = vld [vmem:[#allocation21 + $0x350] sm:$0xff]
        %v4218 = vld [vmem:[#allocation21 + $0x358] sm:$0xff]
        %v4219 = vld [vmem:[#allocation21 + $0x360] sm:$0xff]
        %v4220 = vld [vmem:[#allocation21 + $0x368] sm:$0xff]
        %v4221 = vld [vmem:[#allocation21 + $0x370] sm:$0xff]
        %v4222 = vld [vmem:[#allocation21 + $0x378] sm:$0xff]
        %v4223 = vld [vmem:[#allocation21 + $0x380] sm:$0xff]
        %v4224 = vld [vmem:[#allocation21 + $0x388] sm:$0xff]
        %v4225 = vld [vmem:[#allocation21 + $0x390] sm:$0xff]
        %v4226 = vld [vmem:[#allocation21 + $0x398] sm:$0xff]
        %v4227 = vld [vmem:[#allocation21 + $0x3a0] sm:$0xff]
        %v4228 = vld [vmem:[#allocation21 + $0x3a8] sm:$0xff]
        %v4229 = vld [vmem:[#allocation21 + $0x3b0] sm:$0xff]
        %v4230 = vld [vmem:[#allocation21 + $0x3b8] sm:$0xff]
        %v4231 = vld [vmem:[#allocation21 + $0x3c0] sm:$0xff]
        %v4232 = vld [vmem:[#allocation21 + $0x3c8] sm:$0xff]
        %v4233 = vld [vmem:[#allocation21 + $0x3d0] sm:$0xff]
        %v4234 = vld [vmem:[#allocation21 + $0x3d8] sm:$0xff]
        %v4235 = vld [vmem:[#allocation21 + $0x3e0] sm:$0xff]
        %v4236 = vld [vmem:[#allocation21 + $0x3e8] sm:$0xff]
        %v4237 = vld [vmem:[#allocation21 + $0x3f0] sm:$0xff]
        %v4238 = vld [vmem:[#allocation21 + $0x3f8] sm:$0xff]
        %v4239 = vld [vmem:[#allocation21 + $0x400] sm:$0xff]
        %v4240 = vld [vmem:[#allocation21 + $0x408] sm:$0xff]
        %v4241 = vld [vmem:[#allocation21 + $0x410] sm:$0xff]
        %v4242 = vld [vmem:[#allocation21 + $0x418] sm:$0xff]
        %v4243 = vld [vmem:[#allocation21 + $0x420] sm:$0xff]
        %v4244 = vld [vmem:[#allocation21 + $0x428] sm:$0xff]
        %v4245 = vld [vmem:[#allocation21 + $0x430] sm:$0xff]
        %v4246 = vld [vmem:[#allocation21 + $0x438] sm:$0xff]
        %v4247 = vld [vmem:[#allocation21 + $0x440] sm:$0xff]
        %v4248 = vld [vmem:[#allocation21 + $0x448] sm:$0xff]
        %v4249 = vld [vmem:[#allocation21 + $0x450] sm:$0xff]
        %v4250 = vld [vmem:[#allocation21 + $0x458] sm:$0xff]
        %v4251 = vld [vmem:[#allocation21 + $0x460] sm:$0xff]
        %v4252 = vld [vmem:[#allocation21 + $0x468] sm:$0xff]
        %v4253 = vld [vmem:[#allocation21 + $0x470] sm:$0xff]
        %v4254 = vld [vmem:[#allocation21 + $0x478] sm:$0xff]
        %v4255 = vld [vmem:[#allocation21 + $0x480] sm:$0xff]
        %v4256 = vld [vmem:[#allocation21 + $0x488] sm:$0xff]
        %v4257 = vld [vmem:[#allocation21 + $0x490] sm:$0xff]
        %v4258 = vld [vmem:[#allocation21 + $0x498] sm:$0xff]
        %v4259 = vld [vmem:[#allocation21 + $0x4a0] sm:$0xff]
        %v4260 = vld [vmem:[#allocation21 + $0x4a8] sm:$0xff]
        %v4261 = vld [vmem:[#allocation21 + $0x4b0] sm:$0xff]
        %v4262 = vld [vmem:[#allocation21 + $0x4b8] sm:$0xff]
        %v4263 = vld [vmem:[#allocation21 + $0x4c0] sm:$0xff]
        %v4264 = vld [vmem:[#allocation21 + $0x4c8] sm:$0xff]
        %v4265 = vld [vmem:[#allocation21 + $0x4d0] sm:$0xff]
        %v4266 = vld [vmem:[#allocation21 + $0x4d8] sm:$0xff]
        %v4267 = vld [vmem:[#allocation21 + $0x4e0] sm:$0xff]
        %v4268 = vld [vmem:[#allocation21 + $0x4e8] sm:$0xff]
        %v4269 = vld [vmem:[#allocation21 + $0x4f0] sm:$0xff]
        %v4270 = vld [vmem:[#allocation21 + $0x4f8] sm:$0xff]
        %v4271 = vld [vmem:[#allocation21 + $0x500] sm:$0xff]
        %v4272 = vld [vmem:[#allocation21 + $0x508] sm:$0xff]
        %v4273 = vld [vmem:[#allocation21 + $0x510] sm:$0xff]
        %v4274 = vld [vmem:[#allocation21 + $0x518] sm:$0xff]
        %v4275 = vld [vmem:[#allocation21 + $0x520] sm:$0xff]
        %v4276 = vld [vmem:[#allocation21 + $0x528] sm:$0xff]
        %v4277 = vld [vmem:[#allocation21 + $0x530] sm:$0xff]
        %v4278 = vld [vmem:[#allocation21 + $0x538] sm:$0xff]
        %v4279 = vld [vmem:[#allocation21 + $0x540] sm:$0xff]
        %v4280 = vld [vmem:[#allocation21 + $0x548] sm:$0xff]
        %v4281 = vld [vmem:[#allocation21 + $0x550] sm:$0xff]
        %v4282 = vld [vmem:[#allocation21 + $0x558] sm:$0xff]
        %v4283 = vld [vmem:[#allocation21 + $0x560] sm:$0xff]
        %v4284 = vld [vmem:[#allocation21 + $0x568] sm:$0xff]
        %v4285 = vld [vmem:[#allocation21 + $0x570] sm:$0xff]
        %v4286 = vld [vmem:[#allocation21 + $0x578] sm:$0xff]
        %v4287 = vld [vmem:[#allocation21 + $0x580] sm:$0xff]
        %v4288 = vld [vmem:[#allocation21 + $0x588] sm:$0xff]
        %v4289 = vld [vmem:[#allocation21 + $0x590] sm:$0xff]
        %v4290 = vld [vmem:[#allocation21 + $0x598] sm:$0xff]
        %v4291 = vld [vmem:[#allocation21 + $0x5a0] sm:$0xff]
        %v4292 = vld [vmem:[#allocation21 + $0x5a8] sm:$0xff]
        %v4293 = vld [vmem:[#allocation21 + $0x5b0] sm:$0xff]
        %v4294 = vld [vmem:[#allocation21 + $0x5b8] sm:$0xff]
        %v4295 = vld [vmem:[#allocation21 + $0x5c0] sm:$0xff]
        %v4296 = vld [vmem:[#allocation21 + $0x5c8] sm:$0xff]
        %v4297 = vld [vmem:[#allocation21 + $0x5d0] sm:$0xff]
        %v4298 = vld [vmem:[#allocation21 + $0x5d8] sm:$0xff]
        %v4299 = vld [vmem:[#allocation21 + $0x5e0] sm:$0xff]
        %v4300 = vld [vmem:[#allocation21 + $0x5e8] sm:$0xff]
        %v4301 = vld [vmem:[#allocation21 + $0x5f0] sm:$0xff]
        %v4302 = vld [vmem:[#allocation21 + $0x5f8] sm:$0xff]
        %v4303 = vld [vmem:[#allocation21 + $0x600] sm:$0xff]
        %v4304 = vld [vmem:[#allocation21 + $0x608] sm:$0xff]
        %v4305 = vld [vmem:[#allocation21 + $0x610] sm:$0xff]
        %v4306 = vld [vmem:[#allocation21 + $0x618] sm:$0xff]
        %v4307 = vld [vmem:[#allocation21 + $0x620] sm:$0xff]
        %v4308 = vld [vmem:[#allocation21 + $0x628] sm:$0xff]
        %v4309 = vld [vmem:[#allocation21 + $0x630] sm:$0xff]
        %v4310 = vld [vmem:[#allocation21 + $0x638] sm:$0xff]
        %v4311 = vld [vmem:[#allocation21 + $0x640] sm:$0xff]
        %v4312 = vld [vmem:[#allocation21 + $0x648] sm:$0xff]
        %v4313 = vld [vmem:[#allocation21 + $0x650] sm:$0xff]
        %v4314 = vld [vmem:[#allocation21 + $0x658] sm:$0xff]
        %v4315 = vld [vmem:[#allocation21 + $0x660] sm:$0xff]
        %v4316 = vld [vmem:[#allocation21 + $0x668] sm:$0xff]
        %v4317 = vld [vmem:[#allocation21 + $0x670] sm:$0xff]
        %v4318 = vld [vmem:[#allocation21 + $0x678] sm:$0xff]
        %v4319 = vld [vmem:[#allocation21 + $0x680] sm:$0xff]
        %v4320 = vld [vmem:[#allocation21 + $0x688] sm:$0xff]
        %v4321 = vld [vmem:[#allocation21 + $0x690] sm:$0xff]
        %v4322 = vld [vmem:[#allocation21 + $0x698] sm:$0xff]
        %v4323 = vld [vmem:[#allocation21 + $0x6a0] sm:$0xff]
        %v4324 = vld [vmem:[#allocation21 + $0x6a8] sm:$0xff]
        %v4325 = vld [vmem:[#allocation21 + $0x6b0] sm:$0xff]
        %v4326 = vld [vmem:[#allocation21 + $0x6b8] sm:$0xff]
        %v4327 = vld [vmem:[#allocation21 + $0x6c0] sm:$0xff]
        %v4328 = vld [vmem:[#allocation21 + $0x6c8] sm:$0xff]
        %v4329 = vld [vmem:[#allocation21 + $0x6d0] sm:$0xff]
        %v4330 = vld [vmem:[#allocation21 + $0x6d8] sm:$0xff]
        %v4331 = vld [vmem:[#allocation21 + $0x6e0] sm:$0xff]
        %v4332 = vld [vmem:[#allocation21 + $0x6e8] sm:$0xff]
        %v4333 = vld [vmem:[#allocation21 + $0x6f0] sm:$0xff]
        %v4334 = vld [vmem:[#allocation21 + $0x6f8] sm:$0xff]
        %v4335 = vld [vmem:[#allocation21 + $0x700] sm:$0xff]
        %v4336 = vld [vmem:[#allocation21 + $0x708] sm:$0xff]
        %v4337 = vld [vmem:[#allocation21 + $0x710] sm:$0xff]
        %v4338 = vld [vmem:[#allocation21 + $0x718] sm:$0xff]
        %v4339 = vld [vmem:[#allocation21 + $0x720] sm:$0xff]
        %v4340 = vld [vmem:[#allocation21 + $0x728] sm:$0xff]
        %v4341 = vld [vmem:[#allocation21 + $0x730] sm:$0xff]
        %v4342 = vld [vmem:[#allocation21 + $0x738] sm:$0xff]
        %v4343 = vld [vmem:[#allocation21 + $0x740] sm:$0xff]
        %v4344 = vld [vmem:[#allocation21 + $0x748] sm:$0xff]
        %v4345 = vld [vmem:[#allocation21 + $0x750] sm:$0xff]
        %v4346 = vld [vmem:[#allocation21 + $0x758] sm:$0xff]
        %v4347 = vld [vmem:[#allocation21 + $0x760] sm:$0xff]
        %v4348 = vld [vmem:[#allocation21 + $0x768] sm:$0xff]
        %v4349 = vld [vmem:[#allocation21 + $0x770] sm:$0xff]
        %v4350 = vld [vmem:[#allocation21 + $0x778] sm:$0xff]
        %v4351 = vld [vmem:[#allocation21 + $0x780] sm:$0xff]
        %v4352 = vld [vmem:[#allocation21 + $0x788] sm:$0xff]
        %v4353 = vld [vmem:[#allocation21 + $0x790] sm:$0xff]
        %v4354 = vld [vmem:[#allocation21 + $0x798] sm:$0xff]
        %v4355 = vld [vmem:[#allocation21 + $0x7a0] sm:$0xff]
        %v4356 = vld [vmem:[#allocation21 + $0x7a8] sm:$0xff]
        %v4357 = vld [vmem:[#allocation21 + $0x7b0] sm:$0xff]
        %v4358 = vld [vmem:[#allocation21 + $0x7b8] sm:$0xff]
        %v4359 = vld [vmem:[#allocation21 + $0x7c0] sm:$0xff]
        %v4360 = vld [vmem:[#allocation21 + $0x7c8] sm:$0xff]
        %v4361 = vld [vmem:[#allocation21 + $0x7d0] sm:$0xff]
        %v4362 = vld [vmem:[#allocation21 + $0x7d8] sm:$0xff]
        %v4363 = vld [vmem:[#allocation21 + $0x7e0] sm:$0xff]
        %v4364 = vld [vmem:[#allocation21 + $0x7e8] sm:$0xff]
        %v4365 = vld [vmem:[#allocation21 + $0x7f0] sm:$0xff]
        %v4366 = vld [vmem:[#allocation21 + $0x7f8] sm:$0xff]
        %v4367 = vld [vmem:[#allocation21 + $0x800] sm:$0xff]
        %v4368 = vld [vmem:[#allocation21 + $0x808] sm:$0xff]
        %v4369 = vld [vmem:[#allocation21 + $0x810] sm:$0xff]
        %v4370 = vld [vmem:[#allocation21 + $0x818] sm:$0xff]
        %v4371 = vld [vmem:[#allocation21 + $0x820] sm:$0xff]
        %v4372 = vld [vmem:[#allocation21 + $0x828] sm:$0xff]
        %v4373 = vld [vmem:[#allocation21 + $0x830] sm:$0xff]
        %v4374 = vld [vmem:[#allocation21 + $0x838] sm:$0xff]
        %v4375 = vld [vmem:[#allocation21 + $0x840] sm:$0xff]
        %v4376 = vld [vmem:[#allocation21 + $0x848] sm:$0xff]
        %v4377 = vld [vmem:[#allocation21 + $0x850] sm:$0xff]
        %v4378 = vld [vmem:[#allocation21 + $0x858] sm:$0xff]
        %v4379 = vld [vmem:[#allocation21 + $0x860] sm:$0xff]
        %v4380 = vld [vmem:[#allocation21 + $0x868] sm:$0xff]
        %v4381 = vld [vmem:[#allocation21 + $0x870] sm:$0xff]
        %v4382 = vld [vmem:[#allocation21 + $0x878] sm:$0xff]
        %v4383 = vld [vmem:[#allocation21 + $0x880] sm:$0xff]
        %v4384 = vld [vmem:[#allocation21 + $0x888] sm:$0xff]
        %v4385 = vld [vmem:[#allocation21 + $0x890] sm:$0xff]
        %v4386 = vld [vmem:[#allocation21 + $0x898] sm:$0xff]
        %v4387 = vld [vmem:[#allocation21 + $0x8a0] sm:$0xff]
        %v4388 = vld [vmem:[#allocation21 + $0x8a8] sm:$0xff]
        %v4389 = vld [vmem:[#allocation21 + $0x8b0] sm:$0xff]
        %v4390 = vld [vmem:[#allocation21 + $0x8b8] sm:$0xff]
        %v4391 = vld [vmem:[#allocation21 + $0x8c0] sm:$0xff]
        %v4392 = vld [vmem:[#allocation21 + $0x8c8] sm:$0xff]
        %v4393 = vld [vmem:[#allocation21 + $0x8d0] sm:$0xff]
        %v4394 = vld [vmem:[#allocation21 + $0x8d8] sm:$0xff]
        %v4395 = vld [vmem:[#allocation21 + $0x8e0] sm:$0xff]
        %v4396 = vld [vmem:[#allocation21 + $0x8e8] sm:$0xff]
        %v4397 = vld [vmem:[#allocation21 + $0x8f0] sm:$0xff]
        %v4398 = vld [vmem:[#allocation21 + $0x8f8] sm:$0xff]
        %v4399 = vld [vmem:[#allocation23] sm:$0xff]
        %v4400 = vld [vmem:[#allocation23 + $0x8] sm:$0xf]
        %v4403 = vlaneseq
        %v4404 = vshrl.u32 %v4403, 7
        %v4405 = vsub.s32 0, %v4404
        %v4406 = vrot.slane %v4399, %v4405
        %v4407 = vlaneseq
        %v4408 = vshrl.u32 %v4407, 7
        %v4409 = vsub.s32 1, %v4408
        %v4410 = vrot.slane %v4399, %v4409
        %v4411 = vlaneseq
        %v4412 = vshrl.u32 %v4411, 7
        %v4413 = vsub.s32 2, %v4412
        %v4414 = vrot.slane %v4399, %v4413
        %v4415 = vlaneseq
        %v4416 = vshrl.u32 %v4415, 7
        %v4417 = vsub.s32 3, %v4416
        %v4418 = vrot.slane %v4399, %v4417
        %v4419 = vlaneseq
        %v4420 = vshrl.u32 %v4419, 7
        %v4421 = vsub.s32 4, %v4420
        %v4422 = vrot.slane %v4399, %v4421
        %v4423 = vlaneseq
        %v4424 = vshrl.u32 %v4423, 7
        %v4425 = vsub.s32 5, %v4424
        %v4426 = vrot.slane %v4399, %v4425
        %v4427 = vlaneseq
        %v4428 = vshrl.u32 %v4427, 7
        %v4429 = vsub.s32 6, %v4428
        %v4430 = vrot.slane %v4399, %v4429
        %v4431 = vlaneseq
        %v4432 = vshrl.u32 %v4431, 7
        %v4433 = vsub.s32 7, %v4432
        %v4434 = vrot.slane %v4399, %v4433
        %v4435 = vlaneseq
        %v4436 = vshrl.u32 %v4435, 7
        %v4437 = vsub.s32 0, %v4436
        %v4438 = vrot.slane %v4400, %v4437
        %v4439 = vlaneseq
        %v4440 = vshrl.u32 %v4439, 7
        %v4441 = vsub.s32 1, %v4440
        %v4442 = vrot.slane %v4400, %v4441
        %v4443 = vlaneseq
        %v4444 = vshrl.u32 %v4443, 7
        %v4445 = vsub.s32 2, %v4444
        %v4446 = vrot.slane %v4400, %v4445
        %v4447 = vlaneseq
        %v4448 = vshrl.u32 %v4447, 7
        %v4449 = vsub.s32 3, %v4448
        %v4450 = vrot.slane %v4400, %v4449
        %v4751 = vunpack.c.l.b16 %v4111
        %v4752 = vunpack.c.h.b16 %v4111
        %v4753 = vunpack.c.l.b16 %v4112
        %v4754 = vunpack.c.h.b16 %v4112
        %v4755 = vunpack.c.l.b16 %v4113
        %v4756 = vunpack.c.h.b16 %v4113
        %v4757 = vunpack.c.l.b16 %v4114
        %v4758 = vunpack.c.h.b16 %v4114
        %v4759 = vunpack.c.l.b16 %v4115
        %v4760 = vunpack.c.h.b16 %v4115
        %v4761 = vunpack.c.l.b16 %v4116
        %v4762 = vunpack.c.h.b16 %v4116
        %v4763 = vunpack.c.l.b16 %v4117
        %v4764 = vunpack.c.h.b16 %v4117
        %v4765 = vunpack.c.l.b16 %v4118
        %v4766 = vunpack.c.h.b16 %v4118
        %v4767 = vunpack.c.l.b16 %v4119
        %v4768 = vunpack.c.h.b16 %v4119
        %v4769 = vunpack.c.l.b16 %v4120
        %v4770 = vunpack.c.h.b16 %v4120
        %v4771 = vunpack.c.l.b16 %v4121
        %v4772 = vunpack.c.h.b16 %v4121
        %v4773 = vunpack.c.l.b16 %v4122
        %v4774 = vunpack.c.h.b16 %v4122
        %v4775 = vunpack.c.l.b16 %v4123
        %v4776 = vunpack.c.h.b16 %v4123
        %v4777 = vunpack.c.l.b16 %v4124
        %v4778 = vunpack.c.h.b16 %v4124
        %v4779 = vunpack.c.l.b16 %v4125
        %v4780 = vunpack.c.h.b16 %v4125
        %v4781 = vunpack.c.l.b16 %v4126
        %v4782 = vunpack.c.h.b16 %v4126
        %v4783 = vunpack.c.l.b16 %v4127
        %v4784 = vunpack.c.h.b16 %v4127
        %v4785 = vunpack.c.l.b16 %v4128
        %v4786 = vunpack.c.h.b16 %v4128
        %v4787 = vunpack.c.l.b16 %v4129
        %v4788 = vunpack.c.h.b16 %v4129
        %v4789 = vunpack.c.l.b16 %v4130
        %v4790 = vunpack.c.h.b16 %v4130
        %v4791 = vunpack.c.l.b16 %v4131
        %v4792 = vunpack.c.h.b16 %v4131
        %v4793 = vunpack.c.l.b16 %v4132
        %v4794 = vunpack.c.h.b16 %v4132
        %v4795 = vunpack.c.l.b16 %v4133
        %v4796 = vunpack.c.h.b16 %v4133
        %v4797 = vunpack.c.l.b16 %v4134
        %v4798 = vunpack.c.h.b16 %v4134
        %v4799 = vunpack.c.l.b16 %v4135
        %v4800 = vunpack.c.h.b16 %v4135
        %v4801 = vunpack.c.l.b16 %v4136
        %v4802 = vunpack.c.h.b16 %v4136
        %v4803 = vunpack.c.l.b16 %v4137
        %v4804 = vunpack.c.h.b16 %v4137
        %v4805 = vunpack.c.l.b16 %v4138
        %v4806 = vunpack.c.h.b16 %v4138
        %v4807 = vunpack.c.l.b16 %v4139
        %v4808 = vunpack.c.h.b16 %v4139
        %v4809 = vunpack.c.l.b16 %v4140
        %v4810 = vunpack.c.h.b16 %v4140
        %v4811 = vunpack.c.l.b16 %v4141
        %v4812 = vunpack.c.h.b16 %v4141
        %v4813 = vunpack.c.l.b16 %v4142
        %v4814 = vunpack.c.h.b16 %v4142
        %v4815 = vunpack.c.l.b16 %v4143
        %v4816 = vunpack.c.h.b16 %v4143
        %v4817 = vunpack.c.l.b16 %v4144
        %v4818 = vunpack.c.h.b16 %v4144
        %v4819 = vunpack.c.l.b16 %v4145
        %v4820 = vunpack.c.h.b16 %v4145
        %v4821 = vunpack.c.l.b16 %v4146
        %v4822 = vunpack.c.h.b16 %v4146
        %v4823 = vunpack.c.l.b16 %v4147
        %v4824 = vunpack.c.h.b16 %v4147
        %v4825 = vunpack.c.l.b16 %v4148
        %v4826 = vunpack.c.h.b16 %v4148
        %v4827 = vunpack.c.l.b16 %v4149
        %v4828 = vunpack.c.h.b16 %v4149
        %v4829 = vunpack.c.l.b16 %v4150
        %v4830 = vunpack.c.h.b16 %v4150
        %v4831 = vunpack.c.l.b16 %v4151
        %v4832 = vunpack.c.h.b16 %v4151
        %v4833 = vunpack.c.l.b16 %v4152
        %v4834 = vunpack.c.h.b16 %v4152
        %v4835 = vunpack.c.l.b16 %v4153
        %v4836 = vunpack.c.h.b16 %v4153
        %v4837 = vunpack.c.l.b16 %v4154
        %v4838 = vunpack.c.h.b16 %v4154
        %v4839 = vunpack.c.l.b16 %v4155
        %v4840 = vunpack.c.h.b16 %v4155
        %v4841 = vunpack.c.l.b16 %v4156
        %v4842 = vunpack.c.h.b16 %v4156
        %v4843 = vunpack.c.l.b16 %v4157
        %v4844 = vunpack.c.h.b16 %v4157
        %v4845 = vunpack.c.l.b16 %v4158
        %v4846 = vunpack.c.h.b16 %v4158
        %v4847 = vunpack.c.l.b16 %v4159
        %v4848 = vunpack.c.h.b16 %v4159
        %v4849 = vunpack.c.l.b16 %v4160
        %v4850 = vunpack.c.h.b16 %v4160
        %v4851 = vunpack.c.l.b16 %v4161
        %v4852 = vunpack.c.h.b16 %v4161
        %v4853 = vunpack.c.l.b16 %v4162
        %v4854 = vunpack.c.h.b16 %v4162
        %v4855 = vunpack.c.l.b16 %v4163
        %v4856 = vunpack.c.h.b16 %v4163
        %v4857 = vunpack.c.l.b16 %v4164
        %v4858 = vunpack.c.h.b16 %v4164
        %v4859 = vunpack.c.l.b16 %v4165
        %v4860 = vunpack.c.h.b16 %v4165
        %v4861 = vunpack.c.l.b16 %v4166
        %v4862 = vunpack.c.h.b16 %v4166
        %v4863 = vunpack.c.l.b16 %v4167
        %v4864 = vunpack.c.h.b16 %v4167
        %v4865 = vunpack.c.l.b16 %v4168
        %v4866 = vunpack.c.h.b16 %v4168
        %v4867 = vunpack.c.l.b16 %v4169
        %v4868 = vunpack.c.h.b16 %v4169
        %v4869 = vunpack.c.l.b16 %v4170
        %v4870 = vunpack.c.h.b16 %v4170
        %v4871 = vunpack.c.l.b16 %v4171
        %v4872 = vunpack.c.h.b16 %v4171
        %v4873 = vunpack.c.l.b16 %v4172
        %v4874 = vunpack.c.h.b16 %v4172
        %v4875 = vunpack.c.l.b16 %v4173
        %v4876 = vunpack.c.h.b16 %v4173
        %v4877 = vunpack.c.l.b16 %v4174
        %v4878 = vunpack.c.h.b16 %v4174
        %v4879 = vunpack.c.l.b16 %v4175
        %v4880 = vunpack.c.h.b16 %v4175
        %v4881 = vunpack.c.l.b16 %v4176
        %v4882 = vunpack.c.h.b16 %v4176
        %v4883 = vunpack.c.l.b16 %v4177
        %v4884 = vunpack.c.h.b16 %v4177
        %v4885 = vunpack.c.l.b16 %v4178
        %v4886 = vunpack.c.h.b16 %v4178
        %v4887 = vunpack.c.l.b16 %v4179
        %v4888 = vunpack.c.h.b16 %v4179
        %v4889 = vunpack.c.l.b16 %v4180
        %v4890 = vunpack.c.h.b16 %v4180
        %v4891 = vunpack.c.l.b16 %v4181
        %v4892 = vunpack.c.h.b16 %v4181
        %v4893 = vunpack.c.l.b16 %v4182
        %v4894 = vunpack.c.h.b16 %v4182
        %v4895 = vunpack.c.l.b16 %v4183
        %v4896 = vunpack.c.h.b16 %v4183
        %v4897 = vunpack.c.l.b16 %v4184
        %v4898 = vunpack.c.h.b16 %v4184
        %v4899 = vunpack.c.l.b16 %v4185
        %v4900 = vunpack.c.h.b16 %v4185
        %v4901 = vunpack.c.l.b16 %v4186
        %v4902 = vunpack.c.h.b16 %v4186
        %v4903 = vunpack.c.l.b16 %v4187
        %v4904 = vunpack.c.h.b16 %v4187
        %v4905 = vunpack.c.l.b16 %v4188
        %v4906 = vunpack.c.h.b16 %v4188
        %v4907 = vunpack.c.l.b16 %v4189
        %v4908 = vunpack.c.h.b16 %v4189
        %v4909 = vunpack.c.l.b16 %v4190
        %v4910 = vunpack.c.h.b16 %v4190
        %v4911 = vunpack.c.l.b16 %v4191
        %v4912 = vunpack.c.h.b16 %v4191
        %v4913 = vunpack.c.l.b16 %v4192
        %v4914 = vunpack.c.h.b16 %v4192
        %v4915 = vunpack.c.l.b16 %v4193
        %v4916 = vunpack.c.h.b16 %v4193
        %v4917 = vunpack.c.l.b16 %v4194
        %v4918 = vunpack.c.h.b16 %v4194
        %v4919 = vunpack.c.l.b16 %v4195
        %v4920 = vunpack.c.h.b16 %v4195
        %v4921 = vunpack.c.l.b16 %v4196
        %v4922 = vunpack.c.h.b16 %v4196
        %v4923 = vunpack.c.l.b16 %v4197
        %v4924 = vunpack.c.h.b16 %v4197
        %v4925 = vunpack.c.l.b16 %v4198
        %v4926 = vunpack.c.h.b16 %v4198
        %v4927 = vunpack.c.l.b16 %v4199
        %v4928 = vunpack.c.h.b16 %v4199
        %v4929 = vunpack.c.l.b16 %v4200
        %v4930 = vunpack.c.h.b16 %v4200
        %v4931 = vunpack.c.l.b16 %v4201
        %v4932 = vunpack.c.h.b16 %v4201
        %v4933 = vunpack.c.l.b16 %v4202
        %v4934 = vunpack.c.h.b16 %v4202
        %v4935 = vunpack.c.l.b16 %v4203
        %v4936 = vunpack.c.h.b16 %v4203
        %v4937 = vunpack.c.l.b16 %v4204
        %v4938 = vunpack.c.h.b16 %v4204
        %v4939 = vunpack.c.l.b16 %v4205
        %v4940 = vunpack.c.h.b16 %v4205
        %v4941 = vunpack.c.l.b16 %v4206
        %v4942 = vunpack.c.h.b16 %v4206
        %v4943 = vunpack.c.l.b16 %v4207
        %v4944 = vunpack.c.h.b16 %v4207
        %v4945 = vunpack.c.l.b16 %v4208
        %v4946 = vunpack.c.h.b16 %v4208
        %v4947 = vunpack.c.l.b16 %v4209
        %v4948 = vunpack.c.h.b16 %v4209
        %v4949 = vunpack.c.l.b16 %v4210
        %v4950 = vunpack.c.h.b16 %v4210
        %v4951 = vunpack.c.l.b16 %v4211
        %v4952 = vunpack.c.h.b16 %v4211
        %v4953 = vunpack.c.l.b16 %v4212
        %v4954 = vunpack.c.h.b16 %v4212
        %v4955 = vunpack.c.l.b16 %v4213
        %v4956 = vunpack.c.h.b16 %v4213
        %v4957 = vunpack.c.l.b16 %v4214
        %v4958 = vunpack.c.h.b16 %v4214
        %v4959 = vunpack.c.l.b16 %v4215
        %v4960 = vunpack.c.h.b16 %v4215
        %v4961 = vunpack.c.l.b16 %v4216
        %v4962 = vunpack.c.h.b16 %v4216
        %v4963 = vunpack.c.l.b16 %v4217
        %v4964 = vunpack.c.h.b16 %v4217
        %v4965 = vunpack.c.l.b16 %v4218
        %v4966 = vunpack.c.h.b16 %v4218
        %v4967 = vunpack.c.l.b16 %v4219
        %v4968 = vunpack.c.h.b16 %v4219
        %v4969 = vunpack.c.l.b16 %v4220
        %v4970 = vunpack.c.h.b16 %v4220
        %v4971 = vunpack.c.l.b16 %v4221
        %v4972 = vunpack.c.h.b16 %v4221
        %v4973 = vunpack.c.l.b16 %v4222
        %v4974 = vunpack.c.h.b16 %v4222
        %v4975 = vunpack.c.l.b16 %v4223
        %v4976 = vunpack.c.h.b16 %v4223
        %v4977 = vunpack.c.l.b16 %v4224
        %v4978 = vunpack.c.h.b16 %v4224
        %v4979 = vunpack.c.l.b16 %v4225
        %v4980 = vunpack.c.h.b16 %v4225
        %v4981 = vunpack.c.l.b16 %v4226
        %v4982 = vunpack.c.h.b16 %v4226
        %v4983 = vunpack.c.l.b16 %v4227
        %v4984 = vunpack.c.h.b16 %v4227
        %v4985 = vunpack.c.l.b16 %v4228
        %v4986 = vunpack.c.h.b16 %v4228
        %v4987 = vunpack.c.l.b16 %v4229
        %v4988 = vunpack.c.h.b16 %v4229
        %v4989 = vunpack.c.l.b16 %v4230
        %v4990 = vunpack.c.h.b16 %v4230
        %v4991 = vunpack.c.l.b16 %v4231
        %v4992 = vunpack.c.h.b16 %v4231
        %v4993 = vunpack.c.l.b16 %v4232
        %v4994 = vunpack.c.h.b16 %v4232
        %v4995 = vunpack.c.l.b16 %v4233
        %v4996 = vunpack.c.h.b16 %v4233
        %v4997 = vunpack.c.l.b16 %v4234
        %v4998 = vunpack.c.h.b16 %v4234
        %v4999 = vunpack.c.l.b16 %v4235
        %v5000 = vunpack.c.h.b16 %v4235
        %v5001 = vunpack.c.l.b16 %v4236
        %v5002 = vunpack.c.h.b16 %v4236
        %v5003 = vunpack.c.l.b16 %v4237
        %v5004 = vunpack.c.h.b16 %v4237
        %v5005 = vunpack.c.l.b16 %v4238
        %v5006 = vunpack.c.h.b16 %v4238
        %v5007 = vunpack.c.l.b16 %v4239
        %v5008 = vunpack.c.h.b16 %v4239
        %v5009 = vunpack.c.l.b16 %v4240
        %v5010 = vunpack.c.h.b16 %v4240
        %v5011 = vunpack.c.l.b16 %v4241
        %v5012 = vunpack.c.h.b16 %v4241
        %v5013 = vunpack.c.l.b16 %v4242
        %v5014 = vunpack.c.h.b16 %v4242
        %v5015 = vunpack.c.l.b16 %v4243
        %v5016 = vunpack.c.h.b16 %v4243
        %v5017 = vunpack.c.l.b16 %v4244
        %v5018 = vunpack.c.h.b16 %v4244
        %v5019 = vunpack.c.l.b16 %v4245
        %v5020 = vunpack.c.h.b16 %v4245
        %v5021 = vunpack.c.l.b16 %v4246
        %v5022 = vunpack.c.h.b16 %v4246
        %v5023 = vunpack.c.l.b16 %v4247
        %v5024 = vunpack.c.h.b16 %v4247
        %v5025 = vunpack.c.l.b16 %v4248
        %v5026 = vunpack.c.h.b16 %v4248
        %v5027 = vunpack.c.l.b16 %v4249
        %v5028 = vunpack.c.h.b16 %v4249
        %v5029 = vunpack.c.l.b16 %v4250
        %v5030 = vunpack.c.h.b16 %v4250
        %v5031 = vunpack.c.l.b16 %v4251
        %v5032 = vunpack.c.h.b16 %v4251
        %v5033 = vunpack.c.l.b16 %v4252
        %v5034 = vunpack.c.h.b16 %v4252
        %v5035 = vunpack.c.l.b16 %v4253
        %v5036 = vunpack.c.h.b16 %v4253
        %v5037 = vunpack.c.l.b16 %v4254
        %v5038 = vunpack.c.h.b16 %v4254
        %v5039 = vunpack.c.l.b16 %v4255
        %v5040 = vunpack.c.h.b16 %v4255
        %v5041 = vunpack.c.l.b16 %v4256
        %v5042 = vunpack.c.h.b16 %v4256
        %v5043 = vunpack.c.l.b16 %v4257
        %v5044 = vunpack.c.h.b16 %v4257
        %v5045 = vunpack.c.l.b16 %v4258
        %v5046 = vunpack.c.h.b16 %v4258
        %v5047 = vunpack.c.l.b16 %v4259
        %v5048 = vunpack.c.h.b16 %v4259
        %v5049 = vunpack.c.l.b16 %v4260
        %v5050 = vunpack.c.h.b16 %v4260
        %v5051 = vunpack.c.l.b16 %v4261
        %v5052 = vunpack.c.h.b16 %v4261
        %v5053 = vunpack.c.l.b16 %v4262
        %v5054 = vunpack.c.h.b16 %v4262
        %v5055 = vunpack.c.l.b16 %v4263
        %v5056 = vunpack.c.h.b16 %v4263
        %v5057 = vunpack.c.l.b16 %v4264
        %v5058 = vunpack.c.h.b16 %v4264
        %v5059 = vunpack.c.l.b16 %v4265
        %v5060 = vunpack.c.h.b16 %v4265
        %v5061 = vunpack.c.l.b16 %v4266
        %v5062 = vunpack.c.h.b16 %v4266
        %v5063 = vunpack.c.l.b16 %v4267
        %v5064 = vunpack.c.h.b16 %v4267
        %v5065 = vunpack.c.l.b16 %v4268
        %v5066 = vunpack.c.h.b16 %v4268
        %v5067 = vunpack.c.l.b16 %v4269
        %v5068 = vunpack.c.h.b16 %v4269
        %v5069 = vunpack.c.l.b16 %v4270
        %v5070 = vunpack.c.h.b16 %v4270
        %v5071 = vunpack.c.l.b16 %v4271
        %v5072 = vunpack.c.h.b16 %v4271
        %v5073 = vunpack.c.l.b16 %v4272
        %v5074 = vunpack.c.h.b16 %v4272
        %v5075 = vunpack.c.l.b16 %v4273
        %v5076 = vunpack.c.h.b16 %v4273
        %v5077 = vunpack.c.l.b16 %v4274
        %v5078 = vunpack.c.h.b16 %v4274
        %v5079 = vunpack.c.l.b16 %v4275
        %v5080 = vunpack.c.h.b16 %v4275
        %v5081 = vunpack.c.l.b16 %v4276
        %v5082 = vunpack.c.h.b16 %v4276
        %v5083 = vunpack.c.l.b16 %v4277
        %v5084 = vunpack.c.h.b16 %v4277
        %v5085 = vunpack.c.l.b16 %v4278
        %v5086 = vunpack.c.h.b16 %v4278
        %v5087 = vunpack.c.l.b16 %v4279
        %v5088 = vunpack.c.h.b16 %v4279
        %v5089 = vunpack.c.l.b16 %v4280
        %v5090 = vunpack.c.h.b16 %v4280
        %v5091 = vunpack.c.l.b16 %v4281
        %v5092 = vunpack.c.h.b16 %v4281
        %v5093 = vunpack.c.l.b16 %v4282
        %v5094 = vunpack.c.h.b16 %v4282
        %v5095 = vunpack.c.l.b16 %v4283
        %v5096 = vunpack.c.h.b16 %v4283
        %v5097 = vunpack.c.l.b16 %v4284
        %v5098 = vunpack.c.h.b16 %v4284
        %v5099 = vunpack.c.l.b16 %v4285
        %v5100 = vunpack.c.h.b16 %v4285
        %v5101 = vunpack.c.l.b16 %v4286
        %v5102 = vunpack.c.h.b16 %v4286
        %v5103 = vunpack.c.l.b16 %v4287
        %v5104 = vunpack.c.h.b16 %v4287
        %v5105 = vunpack.c.l.b16 %v4288
        %v5106 = vunpack.c.h.b16 %v4288
        %v5107 = vunpack.c.l.b16 %v4289
        %v5108 = vunpack.c.h.b16 %v4289
        %v5109 = vunpack.c.l.b16 %v4290
        %v5110 = vunpack.c.h.b16 %v4290
        %v5111 = vunpack.c.l.b16 %v4291
        %v5112 = vunpack.c.h.b16 %v4291
        %v5113 = vunpack.c.l.b16 %v4292
        %v5114 = vunpack.c.h.b16 %v4292
        %v5115 = vunpack.c.l.b16 %v4293
        %v5116 = vunpack.c.h.b16 %v4293
        %v5117 = vunpack.c.l.b16 %v4294
        %v5118 = vunpack.c.h.b16 %v4294
        %v5119 = vunpack.c.l.b16 %v4295
        %v5120 = vunpack.c.h.b16 %v4295
        %v5121 = vunpack.c.l.b16 %v4296
        %v5122 = vunpack.c.h.b16 %v4296
        %v5123 = vunpack.c.l.b16 %v4297
        %v5124 = vunpack.c.h.b16 %v4297
        %v5125 = vunpack.c.l.b16 %v4298
        %v5126 = vunpack.c.h.b16 %v4298
        %v5127 = vunpack.c.l.b16 %v4299
        %v5128 = vunpack.c.h.b16 %v4299
        %v5129 = vunpack.c.l.b16 %v4300
        %v5130 = vunpack.c.h.b16 %v4300
        %v5131 = vunpack.c.l.b16 %v4301
        %v5132 = vunpack.c.h.b16 %v4301
        %v5133 = vunpack.c.l.b16 %v4302
        %v5134 = vunpack.c.h.b16 %v4302
        %v5135 = vunpack.c.l.b16 %v4303
        %v5136 = vunpack.c.h.b16 %v4303
        %v5137 = vunpack.c.l.b16 %v4304
        %v5138 = vunpack.c.h.b16 %v4304
        %v5139 = vunpack.c.l.b16 %v4305
        %v5140 = vunpack.c.h.b16 %v4305
        %v5141 = vunpack.c.l.b16 %v4306
        %v5142 = vunpack.c.h.b16 %v4306
        %v5143 = vunpack.c.l.b16 %v4307
        %v5144 = vunpack.c.h.b16 %v4307
        %v5145 = vunpack.c.l.b16 %v4308
        %v5146 = vunpack.c.h.b16 %v4308
        %v5147 = vunpack.c.l.b16 %v4309
        %v5148 = vunpack.c.h.b16 %v4309
        %v5149 = vunpack.c.l.b16 %v4310
        %v5150 = vunpack.c.h.b16 %v4310
        %v5151 = vunpack.c.l.b16 %v4311
        %v5152 = vunpack.c.h.b16 %v4311
        %v5153 = vunpack.c.l.b16 %v4312
        %v5154 = vunpack.c.h.b16 %v4312
        %v5155 = vunpack.c.l.b16 %v4313
        %v5156 = vunpack.c.h.b16 %v4313
        %v5157 = vunpack.c.l.b16 %v4314
        %v5158 = vunpack.c.h.b16 %v4314
        %v5159 = vunpack.c.l.b16 %v4315
        %v5160 = vunpack.c.h.b16 %v4315
        %v5161 = vunpack.c.l.b16 %v4316
        %v5162 = vunpack.c.h.b16 %v4316
        %v5163 = vunpack.c.l.b16 %v4317
        %v5164 = vunpack.c.h.b16 %v4317
        %v5165 = vunpack.c.l.b16 %v4318
        %v5166 = vunpack.c.h.b16 %v4318
        %v5167 = vunpack.c.l.b16 %v4319
        %v5168 = vunpack.c.h.b16 %v4319
        %v5169 = vunpack.c.l.b16 %v4320
        %v5170 = vunpack.c.h.b16 %v4320
        %v5171 = vunpack.c.l.b16 %v4321
        %v5172 = vunpack.c.h.b16 %v4321
        %v5173 = vunpack.c.l.b16 %v4322
        %v5174 = vunpack.c.h.b16 %v4322
        %v5175 = vunpack.c.l.b16 %v4323
        %v5176 = vunpack.c.h.b16 %v4323
        %v5177 = vunpack.c.l.b16 %v4324
        %v5178 = vunpack.c.h.b16 %v4324
        %v5179 = vunpack.c.l.b16 %v4325
        %v5180 = vunpack.c.h.b16 %v4325
        %v5181 = vunpack.c.l.b16 %v4326
        %v5182 = vunpack.c.h.b16 %v4326
        %v5183 = vunpack.c.l.b16 %v4327
        %v5184 = vunpack.c.h.b16 %v4327
        %v5185 = vunpack.c.l.b16 %v4328
        %v5186 = vunpack.c.h.b16 %v4328
        %v5187 = vunpack.c.l.b16 %v4329
        %v5188 = vunpack.c.h.b16 %v4329
        %v5189 = vunpack.c.l.b16 %v4330
        %v5190 = vunpack.c.h.b16 %v4330
        %v5191 = vunpack.c.l.b16 %v4331
        %v5192 = vunpack.c.h.b16 %v4331
        %v5193 = vunpack.c.l.b16 %v4332
        %v5194 = vunpack.c.h.b16 %v4332
        %v5195 = vunpack.c.l.b16 %v4333
        %v5196 = vunpack.c.h.b16 %v4333
        %v5197 = vunpack.c.l.b16 %v4334
        %v5198 = vunpack.c.h.b16 %v4334
        %v5199 = vunpack.c.l.b16 %v4335
        %v5200 = vunpack.c.h.b16 %v4335
        %v5201 = vunpack.c.l.b16 %v4336
        %v5202 = vunpack.c.h.b16 %v4336
        %v5203 = vunpack.c.l.b16 %v4337
        %v5204 = vunpack.c.h.b16 %v4337
        %v5205 = vunpack.c.l.b16 %v4338
        %v5206 = vunpack.c.h.b16 %v4338
        %v5207 = vunpack.c.l.b16 %v4339
        %v5208 = vunpack.c.h.b16 %v4339
        %v5209 = vunpack.c.l.b16 %v4340
        %v5210 = vunpack.c.h.b16 %v4340
        %v5211 = vunpack.c.l.b16 %v4341
        %v5212 = vunpack.c.h.b16 %v4341
        %v5213 = vunpack.c.l.b16 %v4342
        %v5214 = vunpack.c.h.b16 %v4342
        %v5215 = vunpack.c.l.b16 %v4343
        %v5216 = vunpack.c.h.b16 %v4343
        %v5217 = vunpack.c.l.b16 %v4344
        %v5218 = vunpack.c.h.b16 %v4344
        %v5219 = vunpack.c.l.b16 %v4345
        %v5220 = vunpack.c.h.b16 %v4345
        %v5221 = vunpack.c.l.b16 %v4346
        %v5222 = vunpack.c.h.b16 %v4346
        %v5223 = vunpack.c.l.b16 %v4347
        %v5224 = vunpack.c.h.b16 %v4347
        %v5225 = vunpack.c.l.b16 %v4348
        %v5226 = vunpack.c.h.b16 %v4348
        %v5227 = vunpack.c.l.b16 %v4349
        %v5228 = vunpack.c.h.b16 %v4349
        %v5229 = vunpack.c.l.b16 %v4350
        %v5230 = vunpack.c.h.b16 %v4350
        %v5231 = vunpack.c.l.b16 %v4351
        %v5232 = vunpack.c.h.b16 %v4351
        %v5233 = vunpack.c.l.b16 %v4352
        %v5234 = vunpack.c.h.b16 %v4352
        %v5235 = vunpack.c.l.b16 %v4353
        %v5236 = vunpack.c.h.b16 %v4353
        %v5237 = vunpack.c.l.b16 %v4354
        %v5238 = vunpack.c.h.b16 %v4354
        %v5239 = vunpack.c.l.b16 %v4355
        %v5240 = vunpack.c.h.b16 %v4355
        %v5241 = vunpack.c.l.b16 %v4356
        %v5242 = vunpack.c.h.b16 %v4356
        %v5243 = vunpack.c.l.b16 %v4357
        %v5244 = vunpack.c.h.b16 %v4357
        %v5245 = vunpack.c.l.b16 %v4358
        %v5246 = vunpack.c.h.b16 %v4358
        %v5247 = vunpack.c.l.b16 %v4359
        %v5248 = vunpack.c.h.b16 %v4359
        %v5249 = vunpack.c.l.b16 %v4360
        %v5250 = vunpack.c.h.b16 %v4360
        %v5251 = vunpack.c.l.b16 %v4361
        %v5252 = vunpack.c.h.b16 %v4361
        %v5253 = vunpack.c.l.b16 %v4362
        %v5254 = vunpack.c.h.b16 %v4362
        %v5255 = vunpack.c.l.b16 %v4363
        %v5256 = vunpack.c.h.b16 %v4363
        %v5257 = vunpack.c.l.b16 %v4364
        %v5258 = vunpack.c.h.b16 %v4364
        %v5259 = vunpack.c.l.b16 %v4365
        %v5260 = vunpack.c.h.b16 %v4365
        %v5261 = vunpack.c.l.b16 %v4366
        %v5262 = vunpack.c.h.b16 %v4366
        %v5263 = vunpack.c.l.b16 %v4367
        %v5264 = vunpack.c.h.b16 %v4367
        %v5265 = vunpack.c.l.b16 %v4368
        %v5266 = vunpack.c.h.b16 %v4368
        %v5267 = vunpack.c.l.b16 %v4369
        %v5268 = vunpack.c.h.b16 %v4369
        %v5269 = vunpack.c.l.b16 %v4370
        %v5270 = vunpack.c.h.b16 %v4370
        %v5271 = vunpack.c.l.b16 %v4371
        %v5272 = vunpack.c.h.b16 %v4371
        %v5273 = vunpack.c.l.b16 %v4372
        %v5274 = vunpack.c.h.b16 %v4372
        %v5275 = vunpack.c.l.b16 %v4373
        %v5276 = vunpack.c.h.b16 %v4373
        %v5277 = vunpack.c.l.b16 %v4374
        %v5278 = vunpack.c.h.b16 %v4374
        %v5279 = vunpack.c.l.b16 %v4375
        %v5280 = vunpack.c.h.b16 %v4375
        %v5281 = vunpack.c.l.b16 %v4376
        %v5282 = vunpack.c.h.b16 %v4376
        %v5283 = vunpack.c.l.b16 %v4377
        %v5284 = vunpack.c.h.b16 %v4377
        %v5285 = vunpack.c.l.b16 %v4378
        %v5286 = vunpack.c.h.b16 %v4378
        %v5287 = vunpack.c.l.b16 %v4379
        %v5288 = vunpack.c.h.b16 %v4379
        %v5289 = vunpack.c.l.b16 %v4380
        %v5290 = vunpack.c.h.b16 %v4380
        %v5291 = vunpack.c.l.b16 %v4381
        %v5292 = vunpack.c.h.b16 %v4381
        %v5293 = vunpack.c.l.b16 %v4382
        %v5294 = vunpack.c.h.b16 %v4382
        %v5295 = vunpack.c.l.b16 %v4383
        %v5296 = vunpack.c.h.b16 %v4383
        %v5297 = vunpack.c.l.b16 %v4384
        %v5298 = vunpack.c.h.b16 %v4384
        %v5299 = vunpack.c.l.b16 %v4385
        %v5300 = vunpack.c.h.b16 %v4385
        %v5301 = vunpack.c.l.b16 %v4386
        %v5302 = vunpack.c.h.b16 %v4386
        %v5303 = vunpack.c.l.b16 %v4387
        %v5304 = vunpack.c.h.b16 %v4387
        %v5305 = vunpack.c.l.b16 %v4388
        %v5306 = vunpack.c.h.b16 %v4388
        %v5307 = vunpack.c.l.b16 %v4389
        %v5308 = vunpack.c.h.b16 %v4389
        %v5309 = vunpack.c.l.b16 %v4390
        %v5310 = vunpack.c.h.b16 %v4390
        %v5311 = vunpack.c.l.b16 %v4391
        %v5312 = vunpack.c.h.b16 %v4391
        %v5313 = vunpack.c.l.b16 %v4392
        %v5314 = vunpack.c.h.b16 %v4392
        %v5315 = vunpack.c.l.b16 %v4393
        %v5316 = vunpack.c.h.b16 %v4393
        %v5317 = vunpack.c.l.b16 %v4394
        %v5318 = vunpack.c.h.b16 %v4394
        %v5319 = vunpack.c.l.b16 %v4395
        %v5320 = vunpack.c.h.b16 %v4395
        %v5321 = vunpack.c.l.b16 %v4396
        %v5322 = vunpack.c.h.b16 %v4396
        %v5323 = vunpack.c.l.b16 %v4397
        %v5324 = vunpack.c.h.b16 %v4397
        %v5325 = vunpack.c.l.b16 %v4398
        %v5326 = vunpack.c.h.b16 %v4398
        %v5327 = vpack.c.b16 %v4763, %v4751
        %v5328 = vpack.c.b16 %v4764, %v4752
        %v5329 = vpack.c.b16 %v4765, %v4753
        %v5330 = vpack.c.b16 %v4766, %v4754
        %v5331 = vpack.c.b16 %v4767, %v4755
        %v5332 = vpack.c.b16 %v4768, %v4756
        %v5333 = vpack.c.b16 %v4769, %v4757
        %v5334 = vpack.c.b16 %v4770, %v4758
        %v5335 = vpack.c.b16 %v4771, %v4759
        %v5336 = vpack.c.b16 %v4772, %v4760
        %v5337 = vpack.c.b16 %v4773, %v4761
        %v5338 = vpack.c.b16 %v4774, %v4762
        %v5339 = vpack.c.b16 %v4787, %v4775
        %v5340 = vpack.c.b16 %v4788, %v4776
        %v5341 = vpack.c.b16 %v4789, %v4777
        %v5342 = vpack.c.b16 %v4790, %v4778
        %v5343 = vpack.c.b16 %v4791, %v4779
        %v5344 = vpack.c.b16 %v4792, %v4780
        %v5345 = vpack.c.b16 %v4793, %v4781
        %v5346 = vpack.c.b16 %v4794, %v4782
        %v5347 = vpack.c.b16 %v4795, %v4783
        %v5348 = vpack.c.b16 %v4796, %v4784
        %v5349 = vpack.c.b16 %v4797, %v4785
        %v5350 = vpack.c.b16 %v4798, %v4786
        %v5351 = vpack.c.b16 %v4811, %v4799
        %v5352 = vpack.c.b16 %v4812, %v4800
        %v5353 = vpack.c.b16 %v4813, %v4801
        %v5354 = vpack.c.b16 %v4814, %v4802
        %v5355 = vpack.c.b16 %v4815, %v4803
        %v5356 = vpack.c.b16 %v4816, %v4804
        %v5357 = vpack.c.b16 %v4817, %v4805
        %v5358 = vpack.c.b16 %v4818, %v4806
        %v5359 = vpack.c.b16 %v4819, %v4807
        %v5360 = vpack.c.b16 %v4820, %v4808
        %v5361 = vpack.c.b16 %v4821, %v4809
        %v5362 = vpack.c.b16 %v4822, %v4810
        %v5363 = vpack.c.b16 %v4835, %v4823
        %v5364 = vpack.c.b16 %v4836, %v4824
        %v5365 = vpack.c.b16 %v4837, %v4825
        %v5366 = vpack.c.b16 %v4838, %v4826
        %v5367 = vpack.c.b16 %v4839, %v4827
        %v5368 = vpack.c.b16 %v4840, %v4828
        %v5369 = vpack.c.b16 %v4841, %v4829
        %v5370 = vpack.c.b16 %v4842, %v4830
        %v5371 = vpack.c.b16 %v4843, %v4831
        %v5372 = vpack.c.b16 %v4844, %v4832
        %v5373 = vpack.c.b16 %v4845, %v4833
        %v5374 = vpack.c.b16 %v4846, %v4834
        %v5375 = vpack.c.b16 %v4859, %v4847
        %v5376 = vpack.c.b16 %v4860, %v4848
        %v5377 = vpack.c.b16 %v4861, %v4849
        %v5378 = vpack.c.b16 %v4862, %v4850
        %v5379 = vpack.c.b16 %v4863, %v4851
        %v5380 = vpack.c.b16 %v4864, %v4852
        %v5381 = vpack.c.b16 %v4865, %v4853
        %v5382 = vpack.c.b16 %v4866, %v4854
        %v5383 = vpack.c.b16 %v4867, %v4855
        %v5384 = vpack.c.b16 %v4868, %v4856
        %v5385 = vpack.c.b16 %v4869, %v4857
        %v5386 = vpack.c.b16 %v4870, %v4858
        %v5387 = vpack.c.b16 %v4883, %v4871
        %v5388 = vpack.c.b16 %v4884, %v4872
        %v5389 = vpack.c.b16 %v4885, %v4873
        %v5390 = vpack.c.b16 %v4886, %v4874
        %v5391 = vpack.c.b16 %v4887, %v4875
        %v5392 = vpack.c.b16 %v4888, %v4876
        %v5393 = vpack.c.b16 %v4889, %v4877
        %v5394 = vpack.c.b16 %v4890, %v4878
        %v5395 = vpack.c.b16 %v4891, %v4879
        %v5396 = vpack.c.b16 %v4892, %v4880
        %v5397 = vpack.c.b16 %v4893, %v4881
        %v5398 = vpack.c.b16 %v4894, %v4882
        %v5399 = vpack.c.b16 %v4907, %v4895
        %v5400 = vpack.c.b16 %v4908, %v4896
        %v5401 = vpack.c.b16 %v4909, %v4897
        %v5402 = vpack.c.b16 %v4910, %v4898
        %v5403 = vpack.c.b16 %v4911, %v4899
        %v5404 = vpack.c.b16 %v4912, %v4900
        %v5405 = vpack.c.b16 %v4913, %v4901
        %v5406 = vpack.c.b16 %v4914, %v4902
        %v5407 = vpack.c.b16 %v4915, %v4903
        %v5408 = vpack.c.b16 %v4916, %v4904
        %v5409 = vpack.c.b16 %v4917, %v4905
        %v5410 = vpack.c.b16 %v4918, %v4906
        %v5411 = vpack.c.b16 %v4931, %v4919
        %v5412 = vpack.c.b16 %v4932, %v4920
        %v5413 = vpack.c.b16 %v4933, %v4921
        %v5414 = vpack.c.b16 %v4934, %v4922
        %v5415 = vpack.c.b16 %v4935, %v4923
        %v5416 = vpack.c.b16 %v4936, %v4924
        %v5417 = vpack.c.b16 %v4937, %v4925
        %v5418 = vpack.c.b16 %v4938, %v4926
        %v5419 = vpack.c.b16 %v4939, %v4927
        %v5420 = vpack.c.b16 %v4940, %v4928
        %v5421 = vpack.c.b16 %v4941, %v4929
        %v5422 = vpack.c.b16 %v4942, %v4930
        %v5423 = vpack.c.b16 %v4955, %v4943
        %v5424 = vpack.c.b16 %v4956, %v4944
        %v5425 = vpack.c.b16 %v4957, %v4945
        %v5426 = vpack.c.b16 %v4958, %v4946
        %v5427 = vpack.c.b16 %v4959, %v4947
        %v5428 = vpack.c.b16 %v4960, %v4948
        %v5429 = vpack.c.b16 %v4961, %v4949
        %v5430 = vpack.c.b16 %v4962, %v4950
        %v5431 = vpack.c.b16 %v4963, %v4951
        %v5432 = vpack.c.b16 %v4964, %v4952
        %v5433 = vpack.c.b16 %v4965, %v4953
        %v5434 = vpack.c.b16 %v4966, %v4954
        %v5435 = vpack.c.b16 %v4979, %v4967
        %v5436 = vpack.c.b16 %v4980, %v4968
        %v5437 = vpack.c.b16 %v4981, %v4969
        %v5438 = vpack.c.b16 %v4982, %v4970
        %v5439 = vpack.c.b16 %v4983, %v4971
        %v5440 = vpack.c.b16 %v4984, %v4972
        %v5441 = vpack.c.b16 %v4985, %v4973
        %v5442 = vpack.c.b16 %v4986, %v4974
        %v5443 = vpack.c.b16 %v4987, %v4975
        %v5444 = vpack.c.b16 %v4988, %v4976
        %v5445 = vpack.c.b16 %v4989, %v4977
        %v5446 = vpack.c.b16 %v4990, %v4978
        %v5447 = vpack.c.b16 %v5003, %v4991
        %v5448 = vpack.c.b16 %v5004, %v4992
        %v5449 = vpack.c.b16 %v5005, %v4993
        %v5450 = vpack.c.b16 %v5006, %v4994
        %v5451 = vpack.c.b16 %v5007, %v4995
        %v5452 = vpack.c.b16 %v5008, %v4996
        %v5453 = vpack.c.b16 %v5009, %v4997
        %v5454 = vpack.c.b16 %v5010, %v4998
        %v5455 = vpack.c.b16 %v5011, %v4999
        %v5456 = vpack.c.b16 %v5012, %v5000
        %v5457 = vpack.c.b16 %v5013, %v5001
        %v5458 = vpack.c.b16 %v5014, %v5002
        %v5459 = vpack.c.b16 %v5027, %v5015
        %v5460 = vpack.c.b16 %v5028, %v5016
        %v5461 = vpack.c.b16 %v5029, %v5017
        %v5462 = vpack.c.b16 %v5030, %v5018
        %v5463 = vpack.c.b16 %v5031, %v5019
        %v5464 = vpack.c.b16 %v5032, %v5020
        %v5465 = vpack.c.b16 %v5033, %v5021
        %v5466 = vpack.c.b16 %v5034, %v5022
        %v5467 = vpack.c.b16 %v5035, %v5023
        %v5468 = vpack.c.b16 %v5036, %v5024
        %v5469 = vpack.c.b16 %v5037, %v5025
        %v5470 = vpack.c.b16 %v5038, %v5026
        %v5471 = vpack.c.b16 %v5051, %v5039
        %v5472 = vpack.c.b16 %v5052, %v5040
        %v5473 = vpack.c.b16 %v5053, %v5041
        %v5474 = vpack.c.b16 %v5054, %v5042
        %v5475 = vpack.c.b16 %v5055, %v5043
        %v5476 = vpack.c.b16 %v5056, %v5044
        %v5477 = vpack.c.b16 %v5057, %v5045
        %v5478 = vpack.c.b16 %v5058, %v5046
        %v5479 = vpack.c.b16 %v5059, %v5047
        %v5480 = vpack.c.b16 %v5060, %v5048
        %v5481 = vpack.c.b16 %v5061, %v5049
        %v5482 = vpack.c.b16 %v5062, %v5050
        %v5483 = vpack.c.b16 %v5075, %v5063
        %v5484 = vpack.c.b16 %v5076, %v5064
        %v5485 = vpack.c.b16 %v5077, %v5065
        %v5486 = vpack.c.b16 %v5078, %v5066
        %v5487 = vpack.c.b16 %v5079, %v5067
        %v5488 = vpack.c.b16 %v5080, %v5068
        %v5489 = vpack.c.b16 %v5081, %v5069
        %v5490 = vpack.c.b16 %v5082, %v5070
        %v5491 = vpack.c.b16 %v5083, %v5071
        %v5492 = vpack.c.b16 %v5084, %v5072
        %v5493 = vpack.c.b16 %v5085, %v5073
        %v5494 = vpack.c.b16 %v5086, %v5074
        %v5495 = vpack.c.b16 %v5099, %v5087
        %v5496 = vpack.c.b16 %v5100, %v5088
        %v5497 = vpack.c.b16 %v5101, %v5089
        %v5498 = vpack.c.b16 %v5102, %v5090
        %v5499 = vpack.c.b16 %v5103, %v5091
        %v5500 = vpack.c.b16 %v5104, %v5092
        %v5501 = vpack.c.b16 %v5105, %v5093
        %v5502 = vpack.c.b16 %v5106, %v5094
        %v5503 = vpack.c.b16 %v5107, %v5095
        %v5504 = vpack.c.b16 %v5108, %v5096
        %v5505 = vpack.c.b16 %v5109, %v5097
        %v5506 = vpack.c.b16 %v5110, %v5098
        %v5507 = vpack.c.b16 %v5123, %v5111
        %v5508 = vpack.c.b16 %v5124, %v5112
        %v5509 = vpack.c.b16 %v5125, %v5113
        %v5510 = vpack.c.b16 %v5126, %v5114
        %v5511 = vpack.c.b16 %v5127, %v5115
        %v5512 = vpack.c.b16 %v5128, %v5116
        %v5513 = vpack.c.b16 %v5129, %v5117
        %v5514 = vpack.c.b16 %v5130, %v5118
        %v5515 = vpack.c.b16 %v5131, %v5119
        %v5516 = vpack.c.b16 %v5132, %v5120
        %v5517 = vpack.c.b16 %v5133, %v5121
        %v5518 = vpack.c.b16 %v5134, %v5122
        %v5519 = vpack.c.b16 %v5147, %v5135
        %v5520 = vpack.c.b16 %v5148, %v5136
        %v5521 = vpack.c.b16 %v5149, %v5137
        %v5522 = vpack.c.b16 %v5150, %v5138
        %v5523 = vpack.c.b16 %v5151, %v5139
        %v5524 = vpack.c.b16 %v5152, %v5140
        %v5525 = vpack.c.b16 %v5153, %v5141
        %v5526 = vpack.c.b16 %v5154, %v5142
        %v5527 = vpack.c.b16 %v5155, %v5143
        %v5528 = vpack.c.b16 %v5156, %v5144
        %v5529 = vpack.c.b16 %v5157, %v5145
        %v5530 = vpack.c.b16 %v5158, %v5146
        %v5531 = vpack.c.b16 %v5171, %v5159
        %v5532 = vpack.c.b16 %v5172, %v5160
        %v5533 = vpack.c.b16 %v5173, %v5161
        %v5534 = vpack.c.b16 %v5174, %v5162
        %v5535 = vpack.c.b16 %v5175, %v5163
        %v5536 = vpack.c.b16 %v5176, %v5164
        %v5537 = vpack.c.b16 %v5177, %v5165
        %v5538 = vpack.c.b16 %v5178, %v5166
        %v5539 = vpack.c.b16 %v5179, %v5167
        %v5540 = vpack.c.b16 %v5180, %v5168
        %v5541 = vpack.c.b16 %v5181, %v5169
        %v5542 = vpack.c.b16 %v5182, %v5170
        %v5543 = vpack.c.b16 %v5195, %v5183
        %v5544 = vpack.c.b16 %v5196, %v5184
        %v5545 = vpack.c.b16 %v5197, %v5185
        %v5546 = vpack.c.b16 %v5198, %v5186
        %v5547 = vpack.c.b16 %v5199, %v5187
        %v5548 = vpack.c.b16 %v5200, %v5188
        %v5549 = vpack.c.b16 %v5201, %v5189
        %v5550 = vpack.c.b16 %v5202, %v5190
        %v5551 = vpack.c.b16 %v5203, %v5191
        %v5552 = vpack.c.b16 %v5204, %v5192
        %v5553 = vpack.c.b16 %v5205, %v5193
        %v5554 = vpack.c.b16 %v5206, %v5194
        %v5555 = vpack.c.b16 %v5219, %v5207
        %v5556 = vpack.c.b16 %v5220, %v5208
        %v5557 = vpack.c.b16 %v5221, %v5209
        %v5558 = vpack.c.b16 %v5222, %v5210
        %v5559 = vpack.c.b16 %v5223, %v5211
        %v5560 = vpack.c.b16 %v5224, %v5212
        %v5561 = vpack.c.b16 %v5225, %v5213
        %v5562 = vpack.c.b16 %v5226, %v5214
        %v5563 = vpack.c.b16 %v5227, %v5215
        %v5564 = vpack.c.b16 %v5228, %v5216
        %v5565 = vpack.c.b16 %v5229, %v5217
        %v5566 = vpack.c.b16 %v5230, %v5218
        %v5567 = vpack.c.b16 %v5243, %v5231
        %v5568 = vpack.c.b16 %v5244, %v5232
        %v5569 = vpack.c.b16 %v5245, %v5233
        %v5570 = vpack.c.b16 %v5246, %v5234
        %v5571 = vpack.c.b16 %v5247, %v5235
        %v5572 = vpack.c.b16 %v5248, %v5236
        %v5573 = vpack.c.b16 %v5249, %v5237
        %v5574 = vpack.c.b16 %v5250, %v5238
        %v5575 = vpack.c.b16 %v5251, %v5239
        %v5576 = vpack.c.b16 %v5252, %v5240
        %v5577 = vpack.c.b16 %v5253, %v5241
        %v5578 = vpack.c.b16 %v5254, %v5242
        %v5579 = vpack.c.b16 %v5267, %v5255
        %v5580 = vpack.c.b16 %v5268, %v5256
        %v5581 = vpack.c.b16 %v5269, %v5257
        %v5582 = vpack.c.b16 %v5270, %v5258
        %v5583 = vpack.c.b16 %v5271, %v5259
        %v5584 = vpack.c.b16 %v5272, %v5260
        %v5585 = vpack.c.b16 %v5273, %v5261
        %v5586 = vpack.c.b16 %v5274, %v5262
        %v5587 = vpack.c.b16 %v5275, %v5263
        %v5588 = vpack.c.b16 %v5276, %v5264
        %v5589 = vpack.c.b16 %v5277, %v5265
        %v5590 = vpack.c.b16 %v5278, %v5266
        %v5591 = vpack.c.b16 %v5291, %v5279
        %v5592 = vpack.c.b16 %v5292, %v5280
        %v5593 = vpack.c.b16 %v5293, %v5281
        %v5594 = vpack.c.b16 %v5294, %v5282
        %v5595 = vpack.c.b16 %v5295, %v5283
        %v5596 = vpack.c.b16 %v5296, %v5284
        %v5597 = vpack.c.b16 %v5297, %v5285
        %v5598 = vpack.c.b16 %v5298, %v5286
        %v5599 = vpack.c.b16 %v5299, %v5287
        %v5600 = vpack.c.b16 %v5300, %v5288
        %v5601 = vpack.c.b16 %v5301, %v5289
        %v5602 = vpack.c.b16 %v5302, %v5290
        %v5603 = vpack.c.b16 %v5315, %v5303
        %v5604 = vpack.c.b16 %v5316, %v5304
        %v5605 = vpack.c.b16 %v5317, %v5305
        %v5606 = vpack.c.b16 %v5318, %v5306
        %v5607 = vpack.c.b16 %v5319, %v5307
        %v5608 = vpack.c.b16 %v5320, %v5308
        %v5609 = vpack.c.b16 %v5321, %v5309
        %v5610 = vpack.c.b16 %v5322, %v5310
        %v5611 = vpack.c.b16 %v5323, %v5311
        %v5612 = vpack.c.b16 %v5324, %v5312
        %v5613 = vpack.c.b16 %v5325, %v5313
        %v5614 = vpack.c.b16 %v5326, %v5314
        %5903 = vmatprep.subr.bf16.mxu0 %v5412
        %5904 = vmatpush1.bf16.msra.mxu0 %v5411
        %5905 = vmatprep.subr.bf16.mxu0 %v5400
        %5906 = vmatpush1.bf16.msra.mxu0 %v5399
        %5907 = vmatprep.subr.bf16.mxu0 %v5388
        %5908 = vmatpush1.bf16.msra.mxu0 %v5387
        %5909 = vmatprep.subr.bf16.mxu0 %v5376
        %5910 = vmatpush1.bf16.msra.mxu0 %v5375
        %5911 = vmatprep.subr.bf16.mxu0 %v5364
        %5912 = vmatpush1.bf16.msra.mxu0 %v5363
        %5913 = vmatprep.subr.bf16.mxu0 %v5352
        %5914 = vmatpush1.bf16.msra.mxu0 %v5351
        %5915 = vmatprep.subr.bf16.mxu0 %v5340
        %5916 = vmatpush1.bf16.msra.mxu0 %v5339
        %5917 = vmatprep.subr.bf16.mxu0 %v5328
        %5918 = vmatpush1.bf16.msra.mxu0 %v5327
        %5919 = vmatprep.subr.bf16.mxu0 %v5508
        %5920 = vmatpush2.bf16.msra.mxu0 %v5507
        %5921 = vmatprep.subr.bf16.mxu0 %v5496
        %5922 = vmatpush2.bf16.msra.mxu0 %v5495
        %5923 = vmatprep.subr.bf16.mxu0 %v5484
        %5924 = vmatpush2.bf16.msra.mxu0 %v5483
        %5925 = vmatprep.subr.bf16.mxu0 %v5472
        %5926 = vmatpush2.bf16.msra.mxu0 %v5471
        %5927 = vmatprep.subr.bf16.mxu0 %v5460
        %5928 = vmatpush2.bf16.msra.mxu0 %v5459
        %5929 = vmatprep.subr.bf16.mxu0 %v5448
        %5930 = vmatpush2.bf16.msra.mxu0 %v5447
        %5931 = vmatprep.subr.bf16.mxu0 %v5436
        %5932 = vmatpush2.bf16.msra.mxu0 %v5435
        %5933 = vmatprep.subr.bf16.mxu0 %v5424
        %5934 = vmatpush2.bf16.msra.mxu0 %v5423
        %5935 = vmatprep.mubr.bf16.mxu0 %v4109
        %5936 = vmatmul.mubr.bf16.gmra.mxu0 %v4108
        %v5937 = vpop.f32.mrf.mxu0
        %v5938 = vadd.f32 %v4406, %v5937
        %v5939 = vpop.f32.mrf.mxu0
        %v5940 = vadd.f32 %v4410, %v5939
        %v5941 = vpop.f32.mrf.mxu0
        %v5942 = vpop.f32.mrf.mxu0
        %5943 = vdwg.mxu0
        %5944 = vmatprep.subr.bf16.mxu0 %v5604
        %5945 = vmatpush1.bf16.msra.mxu0 %v5603
        %5946 = vmatprep.subr.bf16.mxu0 %v5592
        %5947 = vmatpush1.bf16.msra.mxu0 %v5591
        %5948 = vmatprep.subr.bf16.mxu0 %v5580
        %5949 = vmatpush1.bf16.msra.mxu0 %v5579
        %5950 = vmatprep.subr.bf16.mxu0 %v5568
        %5951 = vmatpush1.bf16.msra.mxu0 %v5567
        %5952 = vmatprep.subr.bf16.mxu0 %v5556
        %5953 = vmatpush1.bf16.msra.mxu0 %v5555
        %5954 = vmatprep.subr.bf16.mxu0 %v5544
        %5955 = vmatpush1.bf16.msra.mxu0 %v5543
        %5956 = vmatprep.subr.bf16.mxu0 %v5532
        %5957 = vmatpush1.bf16.msra.mxu0 %v5531
        %5958 = vmatprep.subr.bf16.mxu0 %v5520
        %5959 = vmatpush1.bf16.msra.mxu0 %v5519
        %5960 = vmatprep.subr.bf16.mxu0 0
        %5961 = vmatpush2.bf16.msra.mxu0 0
        %5962 = vmatprep.subr.bf16.mxu0 0
        %5963 = vmatpush2.bf16.msra.mxu0 0
        %5964 = vmatprep.subr.bf16.mxu0 0
        %5965 = vmatpush2.bf16.msra.mxu0 0
        %5966 = vmatprep.subr.bf16.mxu0 0
        %5967 = vmatpush2.bf16.msra.mxu0 0
        %5968 = vmatprep.subr.bf16.mxu0 0
        %5969 = vmatpush2.bf16.msra.mxu0 0
        %5970 = vmatprep.subr.bf16.mxu0 0
        %5971 = vmatpush2.bf16.msra.mxu0 0
        %5972 = vmatprep.subr.bf16.mxu0 0
        %5973 = vmatpush2.bf16.msra.mxu0 0
        %5974 = vmatprep.subr.bf16.mxu0 0
        %5975 = vmatpush2.bf16.msra.mxu0 0
        %5976 = vmatprep.mubr.bf16.mxu0 0
        %5977 = vmatmul.mubr.bf16.gmra.mxu0 %v4110
        %v5978 = vpop.f32.mrf.mxu0
        %v5979 = vadd.f32 %v5938, %v5978
        %v5980 = vpop.f32.mrf.mxu0
        %v5981 = vadd.f32 %v5940, %v5980
        %v5982 = vpop.f32.mrf.mxu0
        %v5983 = vpop.f32.mrf.mxu0
        %5984 = vdwg.mxu0
        %5985 = vmatprep.subr.bf16.mxu0 %v5414
        %5986 = vmatpush1.bf16.msra.mxu0 %v5413
        %5987 = vmatprep.subr.bf16.mxu0 %v5402
        %5988 = vmatpush1.bf16.msra.mxu0 %v5401
        %5989 = vmatprep.subr.bf16.mxu0 %v5390
        %5990 = vmatpush1.bf16.msra.mxu0 %v5389
        %5991 = vmatprep.subr.bf16.mxu0 %v5378
        %5992 = vmatpush1.bf16.msra.mxu0 %v5377
        %5993 = vmatprep.subr.bf16.mxu0 %v5366
        %5994 = vmatpush1.bf16.msra.mxu0 %v5365
        %5995 = vmatprep.subr.bf16.mxu0 %v5354
        %5996 = vmatpush1.bf16.msra.mxu0 %v5353
        %5997 = vmatprep.subr.bf16.mxu0 %v5342
        %5998 = vmatpush1.bf16.msra.mxu0 %v5341
        %5999 = vmatprep.subr.bf16.mxu0 %v5330
        %6000 = vmatpush1.bf16.msra.mxu0 %v5329
        %6001 = vmatprep.subr.bf16.mxu0 %v5510
        %6002 = vmatpush2.bf16.msra.mxu0 %v5509
        %6003 = vmatprep.subr.bf16.mxu0 %v5498
        %6004 = vmatpush2.bf16.msra.mxu0 %v5497
        %6005 = vmatprep.subr.bf16.mxu0 %v5486
        %6006 = vmatpush2.bf16.msra.mxu0 %v5485
        %6007 = vmatprep.subr.bf16.mxu0 %v5474
        %6008 = vmatpush2.bf16.msra.mxu0 %v5473
        %6009 = vmatprep.subr.bf16.mxu0 %v5462
        %6010 = vmatpush2.bf16.msra.mxu0 %v5461
        %6011 = vmatprep.subr.bf16.mxu0 %v5450
        %6012 = vmatpush2.bf16.msra.mxu0 %v5449
        %6013 = vmatprep.subr.bf16.mxu0 %v5438
        %6014 = vmatpush2.bf16.msra.mxu0 %v5437
        %6015 = vmatprep.subr.bf16.mxu0 %v5426
        %6016 = vmatpush2.bf16.msra.mxu0 %v5425
        %6017 = vmatprep.mubr.bf16.mxu0 %v4109
        %6018 = vmatmul.mubr.bf16.gmra.mxu0 %v4108
        %v6019 = vpop.f32.mrf.mxu0
        %v6020 = vadd.f32 %v4414, %v6019
        %v6021 = vpop.f32.mrf.mxu0
        %v6022 = vadd.f32 %v4418, %v6021
        %v6023 = vpop.f32.mrf.mxu0
        %v6024 = vpop.f32.mrf.mxu0
        %6025 = vdwg.mxu0
        %6026 = vmatprep.subr.bf16.mxu0 %v5606
        %6027 = vmatpush1.bf16.msra.mxu0 %v5605
        %6028 = vmatprep.subr.bf16.mxu0 %v5594
        %6029 = vmatpush1.bf16.msra.mxu0 %v5593
        %6030 = vmatprep.subr.bf16.mxu0 %v5582
        %6031 = vmatpush1.bf16.msra.mxu0 %v5581
        %6032 = vmatprep.subr.bf16.mxu0 %v5570
        %6033 = vmatpush1.bf16.msra.mxu0 %v5569
        %6034 = vmatprep.subr.bf16.mxu0 %v5558
        %6035 = vmatpush1.bf16.msra.mxu0 %v5557
        %6036 = vmatprep.subr.bf16.mxu0 %v5546
        %6037 = vmatpush1.bf16.msra.mxu0 %v5545
        %6038 = vmatprep.subr.bf16.mxu0 %v5534
        %6039 = vmatpush1.bf16.msra.mxu0 %v5533
        %6040 = vmatprep.subr.bf16.mxu0 %v5522
        %6041 = vmatpush1.bf16.msra.mxu0 %v5521
        %6042 = vmatprep.subr.bf16.mxu0 0
        %6043 = vmatpush2.bf16.msra.mxu0 0
        %6044 = vmatprep.subr.bf16.mxu0 0
        %6045 = vmatpush2.bf16.msra.mxu0 0
        %6046 = vmatprep.subr.bf16.mxu0 0
        %6047 = vmatpush2.bf16.msra.mxu0 0
        %6048 = vmatprep.subr.bf16.mxu0 0
        %6049 = vmatpush2.bf16.msra.mxu0 0
        %6050 = vmatprep.subr.bf16.mxu0 0
        %6051 = vmatpush2.bf16.msra.mxu0 0
        %6052 = vmatprep.subr.bf16.mxu0 0
        %6053 = vmatpush2.bf16.msra.mxu0 0
        %6054 = vmatprep.subr.bf16.mxu0 0
        %6055 = vmatpush2.bf16.msra.mxu0 0
        %6056 = vmatprep.subr.bf16.mxu0 0
        %6057 = vmatpush2.bf16.msra.mxu0 0
        %6058 = vmatprep.mubr.bf16.mxu0 0
        %6059 = vmatmul.mubr.bf16.gmra.mxu0 %v4110
        %v6060 = vpop.f32.mrf.mxu0
        %v6061 = vadd.f32 %v6020, %v6060
        %v6062 = vpop.f32.mrf.mxu0
        %v6063 = vadd.f32 %v6022, %v6062
        %v6064 = vpop.f32.mrf.mxu0
        %v6065 = vpop.f32.mrf.mxu0
        %6066 = vdwg.mxu0
        %6067 = vmatprep.subr.bf16.mxu0 %v5416
        %6068 = vmatpush1.bf16.msra.mxu0 %v5415
        %6069 = vmatprep.subr.bf16.mxu0 %v5404
        %6070 = vmatpush1.bf16.msra.mxu0 %v5403
        %6071 = vmatprep.subr.bf16.mxu0 %v5392
        %6072 = vmatpush1.bf16.msra.mxu0 %v5391
        %6073 = vmatprep.subr.bf16.mxu0 %v5380
        %6074 = vmatpush1.bf16.msra.mxu0 %v5379
        %6075 = vmatprep.subr.bf16.mxu0 %v5368
        %6076 = vmatpush1.bf16.msra.mxu0 %v5367
        %6077 = vmatprep.subr.bf16.mxu0 %v5356
        %6078 = vmatpush1.bf16.msra.mxu0 %v5355
        %6079 = vmatprep.subr.bf16.mxu0 %v5344
        %6080 = vmatpush1.bf16.msra.mxu0 %v5343
        %6081 = vmatprep.subr.bf16.mxu0 %v5332
        %6082 = vmatpush1.bf16.msra.mxu0 %v5331
        %6083 = vmatprep.subr.bf16.mxu0 %v5512
        %6084 = vmatpush2.bf16.msra.mxu0 %v5511
        %6085 = vmatprep.subr.bf16.mxu0 %v5500
        %6086 = vmatpush2.bf16.msra.mxu0 %v5499
        %6087 = vmatprep.subr.bf16.mxu0 %v5488
        %6088 = vmatpush2.bf16.msra.mxu0 %v5487
        %6089 = vmatprep.subr.bf16.mxu0 %v5476
        %6090 = vmatpush2.bf16.msra.mxu0 %v5475
        %6091 = vmatprep.subr.bf16.mxu0 %v5464
        %6092 = vmatpush2.bf16.msra.mxu0 %v5463
        %6093 = vmatprep.subr.bf16.mxu0 %v5452
        %6094 = vmatpush2.bf16.msra.mxu0 %v5451
        %6095 = vmatprep.subr.bf16.mxu0 %v5440
        %6096 = vmatpush2.bf16.msra.mxu0 %v5439
        %6097 = vmatprep.subr.bf16.mxu0 %v5428
        %6098 = vmatpush2.bf16.msra.mxu0 %v5427
        %6099 = vmatprep.mubr.bf16.mxu0 %v4109
        %6100 = vmatmul.mubr.bf16.gmra.mxu0 %v4108
        %v6101 = vpop.f32.mrf.mxu0
        %v6102 = vadd.f32 %v4422, %v6101
        %v6103 = vpop.f32.mrf.mxu0
        %v6104 = vadd.f32 %v4426, %v6103
        %v6105 = vpop.f32.mrf.mxu0
        %v6106 = vpop.f32.mrf.mxu0
        %6107 = vdwg.mxu0
        %6108 = vmatprep.subr.bf16.mxu0 %v5608
        %6109 = vmatpush1.bf16.msra.mxu0 %v5607
        %6110 = vmatprep.subr.bf16.mxu0 %v5596
        %6111 = vmatpush1.bf16.msra.mxu0 %v5595
        %6112 = vmatprep.subr.bf16.mxu0 %v5584
        %6113 = vmatpush1.bf16.msra.mxu0 %v5583
        %6114 = vmatprep.subr.bf16.mxu0 %v5572
        %6115 = vmatpush1.bf16.msra.mxu0 %v5571
        %6116 = vmatprep.subr.bf16.mxu0 %v5560
        %6117 = vmatpush1.bf16.msra.mxu0 %v5559
        %6118 = vmatprep.subr.bf16.mxu0 %v5548
        %6119 = vmatpush1.bf16.msra.mxu0 %v5547
        %6120 = vmatprep.subr.bf16.mxu0 %v5536
        %6121 = vmatpush1.bf16.msra.mxu0 %v5535
        %6122 = vmatprep.subr.bf16.mxu0 %v5524
        %6123 = vmatpush1.bf16.msra.mxu0 %v5523
        %6124 = vmatprep.subr.bf16.mxu0 0
        %6125 = vmatpush2.bf16.msra.mxu0 0
        %6126 = vmatprep.subr.bf16.mxu0 0
        %6127 = vmatpush2.bf16.msra.mxu0 0
        %6128 = vmatprep.subr.bf16.mxu0 0
        %6129 = vmatpush2.bf16.msra.mxu0 0
        %6130 = vmatprep.subr.bf16.mxu0 0
        %6131 = vmatpush2.bf16.msra.mxu0 0
        %6132 = vmatprep.subr.bf16.mxu0 0
        %6133 = vmatpush2.bf16.msra.mxu0 0
        %6134 = vmatprep.subr.bf16.mxu0 0
        %6135 = vmatpush2.bf16.msra.mxu0 0
        %6136 = vmatprep.subr.bf16.mxu0 0
        %6137 = vmatpush2.bf16.msra.mxu0 0
        %6138 = vmatprep.subr.bf16.mxu0 0
        %6139 = vmatpush2.bf16.msra.mxu0 0
        %6140 = vmatprep.mubr.bf16.mxu0 0
        %6141 = vmatmul.mubr.bf16.gmra.mxu0 %v4110
        %v6142 = vpop.f32.mrf.mxu0
        %v6143 = vadd.f32 %v6102, %v6142
        %v6144 = vpop.f32.mrf.mxu0
        %v6145 = vadd.f32 %v6104, %v6144
        %v6146 = vpop.f32.mrf.mxu0
        %v6147 = vpop.f32.mrf.mxu0
        %6148 = vdwg.mxu0
        %6149 = vmatprep.subr.bf16.mxu0 %v5418
        %6150 = vmatpush1.bf16.msra.mxu0 %v5417
        %6151 = vmatprep.subr.bf16.mxu0 %v5406
        %6152 = vmatpush1.bf16.msra.mxu0 %v5405
        %6153 = vmatprep.subr.bf16.mxu0 %v5394
        %6154 = vmatpush1.bf16.msra.mxu0 %v5393
        %6155 = vmatprep.subr.bf16.mxu0 %v5382
        %6156 = vmatpush1.bf16.msra.mxu0 %v5381
        %6157 = vmatprep.subr.bf16.mxu0 %v5370
        %6158 = vmatpush1.bf16.msra.mxu0 %v5369
        %6159 = vmatprep.subr.bf16.mxu0 %v5358
        %6160 = vmatpush1.bf16.msra.mxu0 %v5357
        %6161 = vmatprep.subr.bf16.mxu0 %v5346
        %6162 = vmatpush1.bf16.msra.mxu0 %v5345
        %6163 = vmatprep.subr.bf16.mxu0 %v5334
        %6164 = vmatpush1.bf16.msra.mxu0 %v5333
        %6165 = vmatprep.subr.bf16.mxu0 %v5514
        %6166 = vmatpush2.bf16.msra.mxu0 %v5513
        %6167 = vmatprep.subr.bf16.mxu0 %v5502
        %6168 = vmatpush2.bf16.msra.mxu0 %v5501
        %6169 = vmatprep.subr.bf16.mxu0 %v5490
        %6170 = vmatpush2.bf16.msra.mxu0 %v5489
        %6171 = vmatprep.subr.bf16.mxu0 %v5478
        %6172 = vmatpush2.bf16.msra.mxu0 %v5477
        %6173 = vmatprep.subr.bf16.mxu0 %v5466
        %6174 = vmatpush2.bf16.msra.mxu0 %v5465
        %6175 = vmatprep.subr.bf16.mxu0 %v5454
        %6176 = vmatpush2.bf16.msra.mxu0 %v5453
        %6177 = vmatprep.subr.bf16.mxu0 %v5442
        %6178 = vmatpush2.bf16.msra.mxu0 %v5441
        %6179 = vmatprep.subr.bf16.mxu0 %v5430
        %6180 = vmatpush2.bf16.msra.mxu0 %v5429
        %6181 = vmatprep.mubr.bf16.mxu0 %v4109
        %6182 = vmatmul.mubr.bf16.gmra.mxu0 %v4108
        %v6183 = vpop.f32.mrf.mxu0
        %v6184 = vadd.f32 %v4430, %v6183
        %v6185 = vpop.f32.mrf.mxu0
        %v6186 = vadd.f32 %v4434, %v6185
        %v6187 = vpop.f32.mrf.mxu0
        %v6188 = vpop.f32.mrf.mxu0
        %6189 = vdwg.mxu0
        %6190 = vmatprep.subr.bf16.mxu0 %v5610
        %6191 = vmatpush1.bf16.msra.mxu0 %v5609
        %6192 = vmatprep.subr.bf16.mxu0 %v5598
        %6193 = vmatpush1.bf16.msra.mxu0 %v5597
        %6194 = vmatprep.subr.bf16.mxu0 %v5586
        %6195 = vmatpush1.bf16.msra.mxu0 %v5585
        %6196 = vmatprep.subr.bf16.mxu0 %v5574
        %6197 = vmatpush1.bf16.msra.mxu0 %v5573
        %6198 = vmatprep.subr.bf16.mxu0 %v5562
        %6199 = vmatpush1.bf16.msra.mxu0 %v5561
        %6200 = vmatprep.subr.bf16.mxu0 %v5550
        %6201 = vmatpush1.bf16.msra.mxu0 %v5549
        %6202 = vmatprep.subr.bf16.mxu0 %v5538
        %6203 = vmatpush1.bf16.msra.mxu0 %v5537
        %6204 = vmatprep.subr.bf16.mxu0 %v5526
        %6205 = vmatpush1.bf16.msra.mxu0 %v5525
        %6206 = vmatprep.subr.bf16.mxu0 0
        %6207 = vmatpush2.bf16.msra.mxu0 0
        %6208 = vmatprep.subr.bf16.mxu0 0
        %6209 = vmatpush2.bf16.msra.mxu0 0
        %6210 = vmatprep.subr.bf16.mxu0 0
        %6211 = vmatpush2.bf16.msra.mxu0 0
        %6212 = vmatprep.subr.bf16.mxu0 0
        %6213 = vmatpush2.bf16.msra.mxu0 0
        %6214 = vmatprep.subr.bf16.mxu0 0
        %6215 = vmatpush2.bf16.msra.mxu0 0
        %6216 = vmatprep.subr.bf16.mxu0 0
        %6217 = vmatpush2.bf16.msra.mxu0 0
        %6218 = vmatprep.subr.bf16.mxu0 0
        %6219 = vmatpush2.bf16.msra.mxu0 0
        %6220 = vmatprep.subr.bf16.mxu0 0
        %6221 = vmatpush2.bf16.msra.mxu0 0
        %6222 = vmatprep.mubr.bf16.mxu0 0
        %6223 = vmatmul.mubr.bf16.gmra.mxu0 %v4110
        %v6224 = vpop.f32.mrf.mxu0
        %v6225 = vadd.f32 %v6184, %v6224
        %v6226 = vpop.f32.mrf.mxu0
        %v6227 = vadd.f32 %v6186, %v6226
        %v6228 = vpop.f32.mrf.mxu0
        %v6229 = vpop.f32.mrf.mxu0
        %6230 = vdwg.mxu0
        %6231 = vmatprep.subr.bf16.mxu0 %v5420
        %6232 = vmatpush1.bf16.msra.mxu0 %v5419
        %6233 = vmatprep.subr.bf16.mxu0 %v5408
        %6234 = vmatpush1.bf16.msra.mxu0 %v5407
        %6235 = vmatprep.subr.bf16.mxu0 %v5396
        %6236 = vmatpush1.bf16.msra.mxu0 %v5395
        %6237 = vmatprep.subr.bf16.mxu0 %v5384
        %6238 = vmatpush1.bf16.msra.mxu0 %v5383
        %6239 = vmatprep.subr.bf16.mxu0 %v5372
        %6240 = vmatpush1.bf16.msra.mxu0 %v5371
        %6241 = vmatprep.subr.bf16.mxu0 %v5360
        %6242 = vmatpush1.bf16.msra.mxu0 %v5359
        %6243 = vmatprep.subr.bf16.mxu0 %v5348
        %6244 = vmatpush1.bf16.msra.mxu0 %v5347
        %6245 = vmatprep.subr.bf16.mxu0 %v5336
        %6246 = vmatpush1.bf16.msra.mxu0 %v5335
        %6247 = vmatprep.subr.bf16.mxu0 %v5516
        %6248 = vmatpush2.bf16.msra.mxu0 %v5515
        %6249 = vmatprep.subr.bf16.mxu0 %v5504
        %6250 = vmatpush2.bf16.msra.mxu0 %v5503
        %6251 = vmatprep.subr.bf16.mxu0 %v5492
        %6252 = vmatpush2.bf16.msra.mxu0 %v5491
        %6253 = vmatprep.subr.bf16.mxu0 %v5480
        %6254 = vmatpush2.bf16.msra.mxu0 %v5479
        %6255 = vmatprep.subr.bf16.mxu0 %v5468
        %6256 = vmatpush2.bf16.msra.mxu0 %v5467
        %6257 = vmatprep.subr.bf16.mxu0 %v5456
        %6258 = vmatpush2.bf16.msra.mxu0 %v5455
        %6259 = vmatprep.subr.bf16.mxu0 %v5444
        %6260 = vmatpush2.bf16.msra.mxu0 %v5443
        %6261 = vmatprep.subr.bf16.mxu0 %v5432
        %6262 = vmatpush2.bf16.msra.mxu0 %v5431
        %6263 = vmatprep.mubr.bf16.mxu0 %v4109
        %6264 = vmatmul.mubr.bf16.gmra.mxu0 %v4108
        %v6265 = vpop.f32.mrf.mxu0
        %v6266 = vadd.f32 %v4438, %v6265
        %v6267 = vpop.f32.mrf.mxu0
        %v6268 = vadd.f32 %v4442, %v6267
        %v6269 = vpop.f32.mrf.mxu0
        %v6270 = vpop.f32.mrf.mxu0
        %6271 = vdwg.mxu0
        %6272 = vmatprep.subr.bf16.mxu0 %v5612
        %6273 = vmatpush1.bf16.msra.mxu0 %v5611
        %6274 = vmatprep.subr.bf16.mxu0 %v5600
        %6275 = vmatpush1.bf16.msra.mxu0 %v5599
        %6276 = vmatprep.subr.bf16.mxu0 %v5588
        %6277 = vmatpush1.bf16.msra.mxu0 %v5587
        %6278 = vmatprep.subr.bf16.mxu0 %v5576
        %6279 = vmatpush1.bf16.msra.mxu0 %v5575
        %6280 = vmatprep.subr.bf16.mxu0 %v5564
        %6281 = vmatpush1.bf16.msra.mxu0 %v5563
        %6282 = vmatprep.subr.bf16.mxu0 %v5552
        %6283 = vmatpush1.bf16.msra.mxu0 %v5551
        %6284 = vmatprep.subr.bf16.mxu0 %v5540
        %6285 = vmatpush1.bf16.msra.mxu0 %v5539
        %6286 = vmatprep.subr.bf16.mxu0 %v5528
        %6287 = vmatpush1.bf16.msra.mxu0 %v5527
        %6288 = vmatprep.subr.bf16.mxu0 0
        %6289 = vmatpush2.bf16.msra.mxu0 0
        %6290 = vmatprep.subr.bf16.mxu0 0
        %6291 = vmatpush2.bf16.msra.mxu0 0
        %6292 = vmatprep.subr.bf16.mxu0 0
        %6293 = vmatpush2.bf16.msra.mxu0 0
        %6294 = vmatprep.subr.bf16.mxu0 0
        %6295 = vmatpush2.bf16.msra.mxu0 0
        %6296 = vmatprep.subr.bf16.mxu0 0
        %6297 = vmatpush2.bf16.msra.mxu0 0
        %6298 = vmatprep.subr.bf16.mxu0 0
        %6299 = vmatpush2.bf16.msra.mxu0 0
        %6300 = vmatprep.subr.bf16.mxu0 0
        %6301 = vmatpush2.bf16.msra.mxu0 0
        %6302 = vmatprep.subr.bf16.mxu0 0
        %6303 = vmatpush2.bf16.msra.mxu0 0
        %6304 = vmatprep.mubr.bf16.mxu0 0
        %6305 = vmatmul.mubr.bf16.gmra.mxu0 %v4110
        %v6306 = vpop.f32.mrf.mxu0
        %v6307 = vadd.f32 %v6266, %v6306
        %v6308 = vpop.f32.mrf.mxu0
        %v6309 = vadd.f32 %v6268, %v6308
        %v6310 = vpop.f32.mrf.mxu0
        %v6311 = vpop.f32.mrf.mxu0
        %6312 = vdwg.mxu0
        %6313 = vmatprep.subr.bf16.mxu0 %v5422
        %6314 = vmatpush1.bf16.msra.mxu0 %v5421
        %6315 = vmatprep.subr.bf16.mxu0 %v5410
        %6316 = vmatpush1.bf16.msra.mxu0 %v5409
        %6317 = vmatprep.subr.bf16.mxu0 %v5398
        %6318 = vmatpush1.bf16.msra.mxu0 %v5397
        %6319 = vmatprep.subr.bf16.mxu0 %v5386
        %6320 = vmatpush1.bf16.msra.mxu0 %v5385
        %6321 = vmatprep.subr.bf16.mxu0 %v5374
        %6322 = vmatpush1.bf16.msra.mxu0 %v5373
        %6323 = vmatprep.subr.bf16.mxu0 %v5362
        %6324 = vmatpush1.bf16.msra.mxu0 %v5361
        %6325 = vmatprep.subr.bf16.mxu0 %v5350
        %6326 = vmatpush1.bf16.msra.mxu0 %v5349
        %6327 = vmatprep.subr.bf16.mxu0 %v5338
        %6328 = vmatpush1.bf16.msra.mxu0 %v5337
        %6329 = vmatprep.subr.bf16.mxu0 %v5518
        %6330 = vmatpush2.bf16.msra.mxu0 %v5517
        %6331 = vmatprep.subr.bf16.mxu0 %v5506
        %6332 = vmatpush2.bf16.msra.mxu0 %v5505
        %6333 = vmatprep.subr.bf16.mxu0 %v5494
        %6334 = vmatpush2.bf16.msra.mxu0 %v5493
        %6335 = vmatprep.subr.bf16.mxu0 %v5482
        %6336 = vmatpush2.bf16.msra.mxu0 %v5481
        %6337 = vmatprep.subr.bf16.mxu0 %v5470
        %6338 = vmatpush2.bf16.msra.mxu0 %v5469
        %6339 = vmatprep.subr.bf16.mxu0 %v5458
        %6340 = vmatpush2.bf16.msra.mxu0 %v5457
        %6341 = vmatprep.subr.bf16.mxu0 %v5446
        %6342 = vmatpush2.bf16.msra.mxu0 %v5445
        %6343 = vmatprep.subr.bf16.mxu0 %v5434
        %6344 = vmatpush2.bf16.msra.mxu0 %v5433
        %6345 = vmatprep.mubr.bf16.mxu0 %v4109
        %6346 = vmatmul.mubr.bf16.gmra.mxu0 %v4108
        %v6347 = vpop.f32.mrf.mxu0
        %v6348 = vadd.f32 %v4446, %v6347
        %v6349 = vpop.f32.mrf.mxu0
        %v6350 = vadd.f32 %v4450, %v6349
        %v6351 = vpop.f32.mrf.mxu0
        %v6352 = vpop.f32.mrf.mxu0
        %6353 = vdwg.mxu0
        %6354 = vmatprep.subr.bf16.mxu0 %v5614
        %6355 = vmatpush1.bf16.msra.mxu0 %v5613
        %6356 = vmatprep.subr.bf16.mxu0 %v5602
        %6357 = vmatpush1.bf16.msra.mxu0 %v5601
        %6358 = vmatprep.subr.bf16.mxu0 %v5590
        %6359 = vmatpush1.bf16.msra.mxu0 %v5589
        %6360 = vmatprep.subr.bf16.mxu0 %v5578
        %6361 = vmatpush1.bf16.msra.mxu0 %v5577
        %6362 = vmatprep.subr.bf16.mxu0 %v5566
        %6363 = vmatpush1.bf16.msra.mxu0 %v5565
        %6364 = vmatprep.subr.bf16.mxu0 %v5554
        %6365 = vmatpush1.bf16.msra.mxu0 %v5553
        %6366 = vmatprep.subr.bf16.mxu0 %v5542
        %6367 = vmatpush1.bf16.msra.mxu0 %v5541
        %6368 = vmatprep.subr.bf16.mxu0 %v5530
        %6369 = vmatpush1.bf16.msra.mxu0 %v5529
        %6370 = vmatprep.subr.bf16.mxu0 0
        %6371 = vmatpush2.bf16.msra.mxu0 0
        %6372 = vmatprep.subr.bf16.mxu0 0
        %6373 = vmatpush2.bf16.msra.mxu0 0
        %6374 = vmatprep.subr.bf16.mxu0 0
        %6375 = vmatpush2.bf16.msra.mxu0 0
        %6376 = vmatprep.subr.bf16.mxu0 0
        %6377 = vmatpush2.bf16.msra.mxu0 0
        %6378 = vmatprep.subr.bf16.mxu0 0
        %6379 = vmatpush2.bf16.msra.mxu0 0
        %6380 = vmatprep.subr.bf16.mxu0 0
        %6381 = vmatpush2.bf16.msra.mxu0 0
        %6382 = vmatprep.subr.bf16.mxu0 0
        %6383 = vmatpush2.bf16.msra.mxu0 0
        %6384 = vmatprep.subr.bf16.mxu0 0
        %6385 = vmatpush2.bf16.msra.mxu0 0
        %6386 = vmatprep.mubr.bf16.mxu0 0
        %6387 = vmatmul.mubr.bf16.gmra.mxu0 %v4110
        %v6388 = vpop.f32.mrf.mxu0
        %v6389 = vadd.f32 %v6348, %v6388
        %v6390 = vpop.f32.mrf.mxu0
        %v6391 = vadd.f32 %v6350, %v6390
        %v6392 = vpop.f32.mrf.mxu0
        %v6393 = vpop.f32.mrf.mxu0
        %6394 = vdwg.mxu0
        %v6395 = vmax.f32 %v5979, 0.0
        %v6396 = vmax.f32 %v5981, 0.0
        %v6397 = vmax.f32 %v6061, 0.0
        %v6398 = vmax.f32 %v6063, 0.0
        %v6399 = vmax.f32 %v6143, 0.0
        %v6400 = vmax.f32 %v6145, 0.0
        %v6401 = vmax.f32 %v6225, 0.0
        %v6402 = vmax.f32 %v6227, 0.0
        %v6403 = vmax.f32 %v6307, 0.0
        %v6404 = vmax.f32 %v6309, 0.0
        %v6405 = vmax.f32 %v6389, 0.0
        %v6406 = vmax.f32 %v6391, 0.0
        %v6407 = vpack.c.bf16 %v6395, %v6395
        %v6408 = vpack.c.bf16 %v6396, %v6396
        %v6409 = vpack.c.bf16 %v6397, %v6397
        %v6410 = vpack.c.bf16 %v6398, %v6398
        %v6411 = vpack.c.bf16 %v6399, %v6399
        %v6412 = vpack.c.bf16 %v6400, %v6400
        %v6413 = vpack.c.bf16 %v6401, %v6401
        %v6414 = vpack.c.bf16 %v6402, %v6402
        %v6415 = vpack.c.bf16 %v6403, %v6403
        %v6416 = vpack.c.bf16 %v6404, %v6404
        %v6417 = vpack.c.bf16 %v6405, %v6405
        %v6418 = vpack.c.bf16 %v6406, %v6406
        %v6419 = vld [vmem:[#allocation24] sm:$0xff]
        %v6420 = vld [vmem:[#allocation24 + $0x8] sm:$0xf]
        %v6421 = vld [vmem:[#allocation24 + $0xc] sm:$0xff]
        %v6422 = vld [vmem:[#allocation24 + $0x14] sm:$0xf]
        %v6423 = vld [vmem:[#allocation24 + $0x18] sm:$0xff]
        %v6424 = vld [vmem:[#allocation24 + $0x20] sm:$0xf]
        %v6425 = vld [vmem:[#allocation24 + $0x24] sm:$0xff]
        %v6426 = vld [vmem:[#allocation24 + $0x2c] sm:$0xf]
        %v6427 = vld [vmem:[#allocation24 + $0x30] sm:$0xff]
        %v6428 = vld [vmem:[#allocation24 + $0x38] sm:$0xf]
        %v6429 = vld [vmem:[#allocation24 + $0x3c] sm:$0xff]
        %v6430 = vld [vmem:[#allocation24 + $0x44] sm:$0xf]
        %v6431 = vld [vmem:[#allocation24 + $0x48] sm:$0xff]
        %v6432 = vld [vmem:[#allocation24 + $0x50] sm:$0xf]
        %v6433 = vld [vmem:[#allocation24 + $0x54] sm:$0xff]
        %v6434 = vld [vmem:[#allocation24 + $0x5c] sm:$0xf]
        %v6435 = vld [vmem:[#allocation24 + $0x60] sm:$0xff]
        %v6436 = vld [vmem:[#allocation24 + $0x68] sm:$0xf]
        %v6437 = vld [vmem:[#allocation24 + $0x6c] sm:$0xff]
        %v6438 = vld [vmem:[#allocation24 + $0x74] sm:$0xf]
        %v6439 = vld [vmem:[#allocation24 + $0x78] sm:$0xff]
        %v6440 = vld [vmem:[#allocation24 + $0x80] sm:$0xf]
        %v6441 = vld [vmem:[#allocation24 + $0x84] sm:$0xff]
        %v6442 = vld [vmem:[#allocation24 + $0x8c] sm:$0xf]
        %v6443 = vld [vmem:[#allocation24 + $0x90] sm:$0xff]
        %v6444 = vld [vmem:[#allocation24 + $0x98] sm:$0xf]
        %v6445 = vld [vmem:[#allocation24 + $0x9c] sm:$0xff]
        %v6446 = vld [vmem:[#allocation24 + $0xa4] sm:$0xf]
        %v6447 = vld [vmem:[#allocation24 + $0xa8] sm:$0xff]
        %v6448 = vld [vmem:[#allocation24 + $0xb0] sm:$0xf]
        %v6449 = vld [vmem:[#allocation24 + $0xb4] sm:$0xff]
        %v6450 = vld [vmem:[#allocation24 + $0xbc] sm:$0xf]
        %v6451 = vld [vmem:[#allocation24 + $0xc0] sm:$0xff]
        %v6452 = vld [vmem:[#allocation24 + $0xc8] sm:$0xf]
        %v6453 = vld [vmem:[#allocation24 + $0xcc] sm:$0xff]
        %v6454 = vld [vmem:[#allocation24 + $0xd4] sm:$0xf]
        %v6455 = vld [vmem:[#allocation24 + $0xd8] sm:$0xff]
        %v6456 = vld [vmem:[#allocation24 + $0xe0] sm:$0xf]
        %v6457 = vld [vmem:[#allocation24 + $0xe4] sm:$0xff]
        %v6458 = vld [vmem:[#allocation24 + $0xec] sm:$0xf]
        %v6459 = vld [vmem:[#allocation24 + $0xf0] sm:$0xff]
        %v6460 = vld [vmem:[#allocation24 + $0xf8] sm:$0xf]
        %v6461 = vld [vmem:[#allocation24 + $0xfc] sm:$0xff]
        %v6462 = vld [vmem:[#allocation24 + $0x104] sm:$0xf]
        %v6463 = vld [vmem:[#allocation24 + $0x108] sm:$0xff]
        %v6464 = vld [vmem:[#allocation24 + $0x110] sm:$0xf]
        %v6465 = vld [vmem:[#allocation24 + $0x114] sm:$0xff]
        %v6466 = vld [vmem:[#allocation24 + $0x11c] sm:$0xf]
        %v6467 = vld [vmem:[#allocation24 + $0x120] sm:$0xff]
        %v6468 = vld [vmem:[#allocation24 + $0x128] sm:$0xf]
        %v6469 = vld [vmem:[#allocation24 + $0x12c] sm:$0xff]
        %v6470 = vld [vmem:[#allocation24 + $0x134] sm:$0xf]
        %v6471 = vld [vmem:[#allocation24 + $0x138] sm:$0xff]
        %v6472 = vld [vmem:[#allocation24 + $0x140] sm:$0xf]
        %v6473 = vld [vmem:[#allocation24 + $0x144] sm:$0xff]
        %v6474 = vld [vmem:[#allocation24 + $0x14c] sm:$0xf]
        %v6475 = vld [vmem:[#allocation24 + $0x150] sm:$0xff]
        %v6476 = vld [vmem:[#allocation24 + $0x158] sm:$0xf]
        %v6477 = vld [vmem:[#allocation24 + $0x15c] sm:$0xff]
        %v6478 = vld [vmem:[#allocation24 + $0x164] sm:$0xf]
        %v6479 = vld [vmem:[#allocation24 + $0x168] sm:$0xff]
        %v6480 = vld [vmem:[#allocation24 + $0x170] sm:$0xf]
        %v6481 = vld [vmem:[#allocation24 + $0x174] sm:$0xff]
        %v6482 = vld [vmem:[#allocation24 + $0x17c] sm:$0xf]
        %v6483 = vld [vmem:[#allocation24 + $0x180] sm:$0xff]
        %v6484 = vld [vmem:[#allocation24 + $0x188] sm:$0xf]
        %v6485 = vld [vmem:[#allocation24 + $0x18c] sm:$0xff]
        %v6486 = vld [vmem:[#allocation24 + $0x194] sm:$0xf]
        %v6487 = vld [vmem:[#allocation24 + $0x198] sm:$0xff]
        %v6488 = vld [vmem:[#allocation24 + $0x1a0] sm:$0xf]
        %v6489 = vld [vmem:[#allocation24 + $0x1a4] sm:$0xff]
        %v6490 = vld [vmem:[#allocation24 + $0x1ac] sm:$0xf]
        %v6491 = vld [vmem:[#allocation24 + $0x1b0] sm:$0xff]
        %v6492 = vld [vmem:[#allocation24 + $0x1b8] sm:$0xf]
        %v6493 = vld [vmem:[#allocation24 + $0x1bc] sm:$0xff]
        %v6494 = vld [vmem:[#allocation24 + $0x1c4] sm:$0xf]
        %v6495 = vld [vmem:[#allocation24 + $0x1c8] sm:$0xff]
        %v6496 = vld [vmem:[#allocation24 + $0x1d0] sm:$0xf]
        %v6497 = vld [vmem:[#allocation24 + $0x1d4] sm:$0xff]
        %v6498 = vld [vmem:[#allocation24 + $0x1dc] sm:$0xf]
        %v6499 = vld [vmem:[#allocation24 + $0x1e0] sm:$0xff]
        %v6500 = vld [vmem:[#allocation24 + $0x1e8] sm:$0xf]
        %v6501 = vld [vmem:[#allocation24 + $0x1ec] sm:$0xff]
        %v6502 = vld [vmem:[#allocation24 + $0x1f4] sm:$0xf]
        %v6503 = vld [vmem:[#allocation24 + $0x1f8] sm:$0xff]
        %v6504 = vld [vmem:[#allocation24 + $0x200] sm:$0xf]
        %v6505 = vld [vmem:[#allocation24 + $0x204] sm:$0xff]
        %v6506 = vld [vmem:[#allocation24 + $0x20c] sm:$0xf]
        %v6507 = vld [vmem:[#allocation24 + $0x210] sm:$0xff]
        %v6508 = vld [vmem:[#allocation24 + $0x218] sm:$0xf]
        %v6509 = vld [vmem:[#allocation24 + $0x21c] sm:$0xff]
        %v6510 = vld [vmem:[#allocation24 + $0x224] sm:$0xf]
        %v6511 = vld [vmem:[#allocation24 + $0x228] sm:$0xff]
        %v6512 = vld [vmem:[#allocation24 + $0x230] sm:$0xf]
        %v6513 = vld [vmem:[#allocation24 + $0x234] sm:$0xff]
        %v6514 = vld [vmem:[#allocation24 + $0x23c] sm:$0xf]
        %v6515 = vld [vmem:[#allocation24 + $0x240] sm:$0xff]
        %v6516 = vld [vmem:[#allocation24 + $0x248] sm:$0xf]
        %v6517 = vld [vmem:[#allocation24 + $0x24c] sm:$0xff]
        %v6518 = vld [vmem:[#allocation24 + $0x254] sm:$0xf]
        %v6519 = vld [vmem:[#allocation24 + $0x258] sm:$0xff]
        %v6520 = vld [vmem:[#allocation24 + $0x260] sm:$0xf]
        %v6521 = vld [vmem:[#allocation24 + $0x264] sm:$0xff]
        %v6522 = vld [vmem:[#allocation24 + $0x26c] sm:$0xf]
        %v6523 = vld [vmem:[#allocation24 + $0x270] sm:$0xff]
        %v6524 = vld [vmem:[#allocation24 + $0x278] sm:$0xf]
        %v6525 = vld [vmem:[#allocation24 + $0x27c] sm:$0xff]
        %v6526 = vld [vmem:[#allocation24 + $0x284] sm:$0xf]
        %v6527 = vld [vmem:[#allocation24 + $0x288] sm:$0xff]
        %v6528 = vld [vmem:[#allocation24 + $0x290] sm:$0xf]
        %v6529 = vld [vmem:[#allocation24 + $0x294] sm:$0xff]
        %v6530 = vld [vmem:[#allocation24 + $0x29c] sm:$0xf]
        %v6531 = vld [vmem:[#allocation24 + $0x2a0] sm:$0xff]
        %v6532 = vld [vmem:[#allocation24 + $0x2a8] sm:$0xf]
        %v6533 = vld [vmem:[#allocation24 + $0x2ac] sm:$0xff]
        %v6534 = vld [vmem:[#allocation24 + $0x2b4] sm:$0xf]
        %v6535 = vld [vmem:[#allocation24 + $0x2b8] sm:$0xff]
        %v6536 = vld [vmem:[#allocation24 + $0x2c0] sm:$0xf]
        %v6537 = vld [vmem:[#allocation24 + $0x2c4] sm:$0xff]
        %v6538 = vld [vmem:[#allocation24 + $0x2cc] sm:$0xf]
        %v6539 = vld [vmem:[#allocation24 + $0x2d0] sm:$0xff]
        %v6540 = vld [vmem:[#allocation24 + $0x2d8] sm:$0xf]
        %v6541 = vld [vmem:[#allocation24 + $0x2dc] sm:$0xff]
        %v6542 = vld [vmem:[#allocation24 + $0x2e4] sm:$0xf]
        %v6543 = vld [vmem:[#allocation24 + $0x2e8] sm:$0xff]
        %v6544 = vld [vmem:[#allocation24 + $0x2f0] sm:$0xf]
        %v6545 = vld [vmem:[#allocation24 + $0x2f4] sm:$0xff]
        %v6546 = vld [vmem:[#allocation24 + $0x2fc] sm:$0xf]
        %v6547 = vld [vmem:[#allocation24 + $0x300] sm:$0xff]
        %v6548 = vld [vmem:[#allocation24 + $0x308] sm:$0xf]
        %v6549 = vld [vmem:[#allocation24 + $0x30c] sm:$0xff]
        %v6550 = vld [vmem:[#allocation24 + $0x314] sm:$0xf]
        %v6551 = vld [vmem:[#allocation24 + $0x318] sm:$0xff]
        %v6552 = vld [vmem:[#allocation24 + $0x320] sm:$0xf]
        %v6553 = vld [vmem:[#allocation24 + $0x324] sm:$0xff]
        %v6554 = vld [vmem:[#allocation24 + $0x32c] sm:$0xf]
        %v6555 = vld [vmem:[#allocation24 + $0x330] sm:$0xff]
        %v6556 = vld [vmem:[#allocation24 + $0x338] sm:$0xf]
        %v6557 = vld [vmem:[#allocation24 + $0x33c] sm:$0xff]
        %v6558 = vld [vmem:[#allocation24 + $0x344] sm:$0xf]
        %v6559 = vld [vmem:[#allocation24 + $0x348] sm:$0xff]
        %v6560 = vld [vmem:[#allocation24 + $0x350] sm:$0xf]
        %v6561 = vld [vmem:[#allocation24 + $0x354] sm:$0xff]
        %v6562 = vld [vmem:[#allocation24 + $0x35c] sm:$0xf]
        %v6563 = vld [vmem:[#allocation24 + $0x360] sm:$0xff]
        %v6564 = vld [vmem:[#allocation24 + $0x368] sm:$0xf]
        %v6565 = vld [vmem:[#allocation24 + $0x36c] sm:$0xff]
        %v6566 = vld [vmem:[#allocation24 + $0x374] sm:$0xf]
        %v6567 = vld [vmem:[#allocation24 + $0x378] sm:$0xff]
        %v6568 = vld [vmem:[#allocation24 + $0x380] sm:$0xf]
        %v6569 = vld [vmem:[#allocation24 + $0x384] sm:$0xff]
        %v6570 = vld [vmem:[#allocation24 + $0x38c] sm:$0xf]
        %v6571 = vld [vmem:[#allocation24 + $0x390] sm:$0xff]
        %v6572 = vld [vmem:[#allocation24 + $0x398] sm:$0xf]
        %v6573 = vld [vmem:[#allocation24 + $0x39c] sm:$0xff]
        %v6574 = vld [vmem:[#allocation24 + $0x3a4] sm:$0xf]
        %v6575 = vld [vmem:[#allocation24 + $0x3a8] sm:$0xff]
        %v6576 = vld [vmem:[#allocation24 + $0x3b0] sm:$0xf]
        %v6577 = vld [vmem:[#allocation24 + $0x3b4] sm:$0xff]
        %v6578 = vld [vmem:[#allocation24 + $0x3bc] sm:$0xf]
        %v6579 = vld [vmem:[#allocation24 + $0x3c0] sm:$0xff]
        %v6580 = vld [vmem:[#allocation24 + $0x3c8] sm:$0xf]
        %v6581 = vld [vmem:[#allocation24 + $0x3cc] sm:$0xff]
        %v6582 = vld [vmem:[#allocation24 + $0x3d4] sm:$0xf]
        %v6583 = vld [vmem:[#allocation24 + $0x3d8] sm:$0xff]
        %v6584 = vld [vmem:[#allocation24 + $0x3e0] sm:$0xf]
        %v6585 = vld [vmem:[#allocation24 + $0x3e4] sm:$0xff]
        %v6586 = vld [vmem:[#allocation24 + $0x3ec] sm:$0xf]
        %v6587 = vld [vmem:[#allocation24 + $0x3f0] sm:$0xff]
        %v6588 = vld [vmem:[#allocation24 + $0x3f8] sm:$0xf]
        %v6589 = vld [vmem:[#allocation24 + $0x3fc] sm:$0xff]
        %v6590 = vld [vmem:[#allocation24 + $0x404] sm:$0xf]
        %v6591 = vld [vmem:[#allocation24 + $0x408] sm:$0xff]
        %v6592 = vld [vmem:[#allocation24 + $0x410] sm:$0xf]
        %v6593 = vld [vmem:[#allocation24 + $0x414] sm:$0xff]
        %v6594 = vld [vmem:[#allocation24 + $0x41c] sm:$0xf]
        %v6595 = vld [vmem:[#allocation24 + $0x420] sm:$0xff]
        %v6596 = vld [vmem:[#allocation24 + $0x428] sm:$0xf]
        %v6597 = vld [vmem:[#allocation24 + $0x42c] sm:$0xff]
        %v6598 = vld [vmem:[#allocation24 + $0x434] sm:$0xf]
        %v6599 = vld [vmem:[#allocation24 + $0x438] sm:$0xff]
        %v6600 = vld [vmem:[#allocation24 + $0x440] sm:$0xf]
        %v6601 = vld [vmem:[#allocation24 + $0x444] sm:$0xff]
        %v6602 = vld [vmem:[#allocation24 + $0x44c] sm:$0xf]
        %v6603 = vld [vmem:[#allocation24 + $0x450] sm:$0xff]
        %v6604 = vld [vmem:[#allocation24 + $0x458] sm:$0xf]
        %v6605 = vld [vmem:[#allocation24 + $0x45c] sm:$0xff]
        %v6606 = vld [vmem:[#allocation24 + $0x464] sm:$0xf]
        %v6607 = vld [vmem:[#allocation24 + $0x468] sm:$0xff]
        %v6608 = vld [vmem:[#allocation24 + $0x470] sm:$0xf]
        %v6609 = vld [vmem:[#allocation24 + $0x474] sm:$0xff]
        %v6610 = vld [vmem:[#allocation24 + $0x47c] sm:$0xf]
        %v6611 = vld [vmem:[#allocation24 + $0x480] sm:$0xff]
        %v6612 = vld [vmem:[#allocation24 + $0x488] sm:$0xf]
        %v6613 = vld [vmem:[#allocation24 + $0x48c] sm:$0xff]
        %v6614 = vld [vmem:[#allocation24 + $0x494] sm:$0xf]
        %v6615 = vld [vmem:[#allocation24 + $0x498] sm:$0xff]
        %v6616 = vld [vmem:[#allocation24 + $0x4a0] sm:$0xf]
        %v6617 = vld [vmem:[#allocation24 + $0x4a4] sm:$0xff]
        %v6618 = vld [vmem:[#allocation24 + $0x4ac] sm:$0xf]
        %v6619 = vld [vmem:[#allocation24 + $0x4b0] sm:$0xff]
        %v6620 = vld [vmem:[#allocation24 + $0x4b8] sm:$0xf]
        %v6621 = vld [vmem:[#allocation24 + $0x4bc] sm:$0xff]
        %v6622 = vld [vmem:[#allocation24 + $0x4c4] sm:$0xf]
        %v6623 = vld [vmem:[#allocation24 + $0x4c8] sm:$0xff]
        %v6624 = vld [vmem:[#allocation24 + $0x4d0] sm:$0xf]
        %v6625 = vld [vmem:[#allocation24 + $0x4d4] sm:$0xff]
        %v6626 = vld [vmem:[#allocation24 + $0x4dc] sm:$0xf]
        %v6627 = vld [vmem:[#allocation24 + $0x4e0] sm:$0xff]
        %v6628 = vld [vmem:[#allocation24 + $0x4e8] sm:$0xf]
        %v6629 = vld [vmem:[#allocation24 + $0x4ec] sm:$0xff]
        %v6630 = vld [vmem:[#allocation24 + $0x4f4] sm:$0xf]
        %v6631 = vld [vmem:[#allocation24 + $0x4f8] sm:$0xff]
        %v6632 = vld [vmem:[#allocation24 + $0x500] sm:$0xf]
        %v6633 = vld [vmem:[#allocation24 + $0x504] sm:$0xff]
        %v6634 = vld [vmem:[#allocation24 + $0x50c] sm:$0xf]
        %v6635 = vld [vmem:[#allocation24 + $0x510] sm:$0xff]
        %v6636 = vld [vmem:[#allocation24 + $0x518] sm:$0xf]
        %v6637 = vld [vmem:[#allocation24 + $0x51c] sm:$0xff]
        %v6638 = vld [vmem:[#allocation24 + $0x524] sm:$0xf]
        %v6639 = vld [vmem:[#allocation24 + $0x528] sm:$0xff]
        %v6640 = vld [vmem:[#allocation24 + $0x530] sm:$0xf]
        %v6641 = vld [vmem:[#allocation24 + $0x534] sm:$0xff]
        %v6642 = vld [vmem:[#allocation24 + $0x53c] sm:$0xf]
        %v6643 = vld [vmem:[#allocation24 + $0x540] sm:$0xff]
        %v6644 = vld [vmem:[#allocation24 + $0x548] sm:$0xf]
        %v6645 = vld [vmem:[#allocation24 + $0x54c] sm:$0xff]
        %v6646 = vld [vmem:[#allocation24 + $0x554] sm:$0xf]
        %v6647 = vld [vmem:[#allocation24 + $0x558] sm:$0xff]
        %v6648 = vld [vmem:[#allocation24 + $0x560] sm:$0xf]
        %v6649 = vld [vmem:[#allocation24 + $0x564] sm:$0xff]
        %v6650 = vld [vmem:[#allocation24 + $0x56c] sm:$0xf]
        %v6651 = vld [vmem:[#allocation24 + $0x570] sm:$0xff]
        %v6652 = vld [vmem:[#allocation24 + $0x578] sm:$0xf]
        %v6653 = vld [vmem:[#allocation24 + $0x57c] sm:$0xff]
        %v6654 = vld [vmem:[#allocation24 + $0x584] sm:$0xf]
        %v6655 = vld [vmem:[#allocation24 + $0x588] sm:$0xff]
        %v6656 = vld [vmem:[#allocation24 + $0x590] sm:$0xf]
        %v6657 = vld [vmem:[#allocation24 + $0x594] sm:$0xff]
        %v6658 = vld [vmem:[#allocation24 + $0x59c] sm:$0xf]
        %v6659 = vld [vmem:[#allocation24 + $0x5a0] sm:$0xff]
        %v6660 = vld [vmem:[#allocation24 + $0x5a8] sm:$0xf]
        %v6661 = vld [vmem:[#allocation24 + $0x5ac] sm:$0xff]
        %v6662 = vld [vmem:[#allocation24 + $0x5b4] sm:$0xf]
        %v6663 = vld [vmem:[#allocation24 + $0x5b8] sm:$0xff]
        %v6664 = vld [vmem:[#allocation24 + $0x5c0] sm:$0xf]
        %v6665 = vld [vmem:[#allocation24 + $0x5c4] sm:$0xff]
        %v6666 = vld [vmem:[#allocation24 + $0x5cc] sm:$0xf]
        %v6667 = vld [vmem:[#allocation24 + $0x5d0] sm:$0xff]
        %v6668 = vld [vmem:[#allocation24 + $0x5d8] sm:$0xf]
        %v6669 = vld [vmem:[#allocation24 + $0x5dc] sm:$0xff]
        %v6670 = vld [vmem:[#allocation24 + $0x5e4] sm:$0xf]
        %v6671 = vld [vmem:[#allocation24 + $0x5e8] sm:$0xff]
        %v6672 = vld [vmem:[#allocation24 + $0x5f0] sm:$0xf]
        %v6673 = vld [vmem:[#allocation24 + $0x5f4] sm:$0xff]
        %v6674 = vld [vmem:[#allocation24 + $0x5fc] sm:$0xf]
        %v6675 = vld [vmem:[#allocation24 + $0x600] sm:$0xff]
        %v6676 = vld [vmem:[#allocation24 + $0x608] sm:$0xf]
        %v6677 = vld [vmem:[#allocation24 + $0x60c] sm:$0xff]
        %v6678 = vld [vmem:[#allocation24 + $0x614] sm:$0xf]
        %v6679 = vld [vmem:[#allocation24 + $0x618] sm:$0xff]
        %v6680 = vld [vmem:[#allocation24 + $0x620] sm:$0xf]
        %v6681 = vld [vmem:[#allocation24 + $0x624] sm:$0xff]
        %v6682 = vld [vmem:[#allocation24 + $0x62c] sm:$0xf]
        %v6683 = vld [vmem:[#allocation24 + $0x630] sm:$0xff]
        %v6684 = vld [vmem:[#allocation24 + $0x638] sm:$0xf]
        %v6685 = vld [vmem:[#allocation24 + $0x63c] sm:$0xff]
        %v6686 = vld [vmem:[#allocation24 + $0x644] sm:$0xf]
        %v6687 = vld [vmem:[#allocation24 + $0x648] sm:$0xff]
        %v6688 = vld [vmem:[#allocation24 + $0x650] sm:$0xf]
        %v6689 = vld [vmem:[#allocation24 + $0x654] sm:$0xff]
        %v6690 = vld [vmem:[#allocation24 + $0x65c] sm:$0xf]
        %v6691 = vld [vmem:[#allocation24 + $0x660] sm:$0xff]
        %v6692 = vld [vmem:[#allocation24 + $0x668] sm:$0xf]
        %v6693 = vld [vmem:[#allocation24 + $0x66c] sm:$0xff]
        %v6694 = vld [vmem:[#allocation24 + $0x674] sm:$0xf]
        %v6695 = vld [vmem:[#allocation24 + $0x678] sm:$0xff]
        %v6696 = vld [vmem:[#allocation24 + $0x680] sm:$0xf]
        %v6697 = vld [vmem:[#allocation24 + $0x684] sm:$0xff]
        %v6698 = vld [vmem:[#allocation24 + $0x68c] sm:$0xf]
        %v6699 = vld [vmem:[#allocation24 + $0x690] sm:$0xff]
        %v6700 = vld [vmem:[#allocation24 + $0x698] sm:$0xf]
        %v6701 = vld [vmem:[#allocation24 + $0x69c] sm:$0xff]
        %v6702 = vld [vmem:[#allocation24 + $0x6a4] sm:$0xf]
        %v6703 = vld [vmem:[#allocation24 + $0x6a8] sm:$0xff]
        %v6704 = vld [vmem:[#allocation24 + $0x6b0] sm:$0xf]
        %v6705 = vld [vmem:[#allocation24 + $0x6b4] sm:$0xff]
        %v6706 = vld [vmem:[#allocation24 + $0x6bc] sm:$0xf]
        %v6707 = vld [vmem:[#allocation24 + $0x6c0] sm:$0xff]
        %v6708 = vld [vmem:[#allocation24 + $0x6c8] sm:$0xf]
        %v6709 = vld [vmem:[#allocation24 + $0x6cc] sm:$0xff]
        %v6710 = vld [vmem:[#allocation24 + $0x6d4] sm:$0xf]
        %v6711 = vld [vmem:[#allocation24 + $0x6d8] sm:$0xff]
        %v6712 = vld [vmem:[#allocation24 + $0x6e0] sm:$0xf]
        %v6713 = vld [vmem:[#allocation24 + $0x6e4] sm:$0xff]
        %v6714 = vld [vmem:[#allocation24 + $0x6ec] sm:$0xf]
        %v6715 = vld [vmem:[#allocation24 + $0x6f0] sm:$0xff]
        %v6716 = vld [vmem:[#allocation24 + $0x6f8] sm:$0xf]
        %v6717 = vld [vmem:[#allocation24 + $0x6fc] sm:$0xff]
        %v6718 = vld [vmem:[#allocation24 + $0x704] sm:$0xf]
        %v6719 = vld [vmem:[#allocation24 + $0x708] sm:$0xff]
        %v6720 = vld [vmem:[#allocation24 + $0x710] sm:$0xf]
        %v6721 = vld [vmem:[#allocation24 + $0x714] sm:$0xff]
        %v6722 = vld [vmem:[#allocation24 + $0x71c] sm:$0xf]
        %v6723 = vld [vmem:[#allocation24 + $0x720] sm:$0xff]
        %v6724 = vld [vmem:[#allocation24 + $0x728] sm:$0xf]
        %v6725 = vld [vmem:[#allocation24 + $0x72c] sm:$0xff]
        %v6726 = vld [vmem:[#allocation24 + $0x734] sm:$0xf]
        %v6727 = vld [vmem:[#allocation24 + $0x738] sm:$0xff]
        %v6728 = vld [vmem:[#allocation24 + $0x740] sm:$0xf]
        %v6729 = vld [vmem:[#allocation24 + $0x744] sm:$0xff]
        %v6730 = vld [vmem:[#allocation24 + $0x74c] sm:$0xf]
        %v6731 = vld [vmem:[#allocation24 + $0x750] sm:$0xff]
        %v6732 = vld [vmem:[#allocation24 + $0x758] sm:$0xf]
        %v6733 = vld [vmem:[#allocation24 + $0x75c] sm:$0xff]
        %v6734 = vld [vmem:[#allocation24 + $0x764] sm:$0xf]
        %v6735 = vld [vmem:[#allocation24 + $0x768] sm:$0xff]
        %v6736 = vld [vmem:[#allocation24 + $0x770] sm:$0xf]
        %v6737 = vld [vmem:[#allocation24 + $0x774] sm:$0xff]
        %v6738 = vld [vmem:[#allocation24 + $0x77c] sm:$0xf]
        %v6739 = vld [vmem:[#allocation24 + $0x780] sm:$0xff]
        %v6740 = vld [vmem:[#allocation24 + $0x788] sm:$0xf]
        %v6741 = vld [vmem:[#allocation24 + $0x78c] sm:$0xff]
        %v6742 = vld [vmem:[#allocation24 + $0x794] sm:$0xf]
        %v6743 = vld [vmem:[#allocation24 + $0x798] sm:$0xff]
        %v6744 = vld [vmem:[#allocation24 + $0x7a0] sm:$0xf]
        %v6745 = vld [vmem:[#allocation24 + $0x7a4] sm:$0xff]
        %v6746 = vld [vmem:[#allocation24 + $0x7ac] sm:$0xf]
        %v6747 = vld [vmem:[#allocation24 + $0x7b0] sm:$0xff]
        %v6748 = vld [vmem:[#allocation24 + $0x7b8] sm:$0xf]
        %v6749 = vld [vmem:[#allocation24 + $0x7bc] sm:$0xff]
        %v6750 = vld [vmem:[#allocation24 + $0x7c4] sm:$0xf]
        %v6751 = vld [vmem:[#allocation24 + $0x7c8] sm:$0xff]
        %v6752 = vld [vmem:[#allocation24 + $0x7d0] sm:$0xf]
        %v6753 = vld [vmem:[#allocation24 + $0x7d4] sm:$0xff]
        %v6754 = vld [vmem:[#allocation24 + $0x7dc] sm:$0xf]
        %v6755 = vld [vmem:[#allocation24 + $0x7e0] sm:$0xff]
        %v6756 = vld [vmem:[#allocation24 + $0x7e8] sm:$0xf]
        %v6757 = vld [vmem:[#allocation24 + $0x7ec] sm:$0xff]
        %v6758 = vld [vmem:[#allocation24 + $0x7f4] sm:$0xf]
        %v6759 = vld [vmem:[#allocation24 + $0x7f8] sm:$0xff]
        %v6760 = vld [vmem:[#allocation24 + $0x800] sm:$0xf]
        %v6761 = vld [vmem:[#allocation24 + $0x804] sm:$0xff]
        %v6762 = vld [vmem:[#allocation24 + $0x80c] sm:$0xf]
        %v6763 = vld [vmem:[#allocation24 + $0x810] sm:$0xff]
        %v6764 = vld [vmem:[#allocation24 + $0x818] sm:$0xf]
        %v6765 = vld [vmem:[#allocation24 + $0x81c] sm:$0xff]
        %v6766 = vld [vmem:[#allocation24 + $0x824] sm:$0xf]
        %v6767 = vld [vmem:[#allocation24 + $0x828] sm:$0xff]
        %v6768 = vld [vmem:[#allocation24 + $0x830] sm:$0xf]
        %v6769 = vld [vmem:[#allocation24 + $0x834] sm:$0xff]
        %v6770 = vld [vmem:[#allocation24 + $0x83c] sm:$0xf]
        %v6771 = vld [vmem:[#allocation24 + $0x840] sm:$0xff]
        %v6772 = vld [vmem:[#allocation24 + $0x848] sm:$0xf]
        %v6773 = vld [vmem:[#allocation24 + $0x84c] sm:$0xff]
        %v6774 = vld [vmem:[#allocation24 + $0x854] sm:$0xf]
        %v6775 = vld [vmem:[#allocation24 + $0x858] sm:$0xff]
        %v6776 = vld [vmem:[#allocation24 + $0x860] sm:$0xf]
        %v6777 = vld [vmem:[#allocation24 + $0x864] sm:$0xff]
        %v6778 = vld [vmem:[#allocation24 + $0x86c] sm:$0xf]
        %v6779 = vld [vmem:[#allocation24 + $0x870] sm:$0xff]
        %v6780 = vld [vmem:[#allocation24 + $0x878] sm:$0xf]
        %v6781 = vld [vmem:[#allocation24 + $0x87c] sm:$0xff]
        %v6782 = vld [vmem:[#allocation24 + $0x884] sm:$0xf]
        %v6783 = vld [vmem:[#allocation24 + $0x888] sm:$0xff]
        %v6784 = vld [vmem:[#allocation24 + $0x890] sm:$0xf]
        %v6785 = vld [vmem:[#allocation24 + $0x894] sm:$0xff]
        %v6786 = vld [vmem:[#allocation24 + $0x89c] sm:$0xf]
        %v6787 = vld [vmem:[#allocation24 + $0x8a0] sm:$0xff]
        %v6788 = vld [vmem:[#allocation24 + $0x8a8] sm:$0xf]
        %v6789 = vld [vmem:[#allocation24 + $0x8ac] sm:$0xff]
        %v6790 = vld [vmem:[#allocation24 + $0x8b4] sm:$0xf]
        %v6791 = vld [vmem:[#allocation24 + $0x8b8] sm:$0xff]
        %v6792 = vld [vmem:[#allocation24 + $0x8c0] sm:$0xf]
        %v6793 = vld [vmem:[#allocation24 + $0x8c4] sm:$0xff]
        %v6794 = vld [vmem:[#allocation24 + $0x8cc] sm:$0xf]
        %v6795 = vld [vmem:[#allocation24 + $0x8d0] sm:$0xff]
        %v6796 = vld [vmem:[#allocation24 + $0x8d8] sm:$0xf]
        %v6797 = vld [vmem:[#allocation24 + $0x8dc] sm:$0xff]
        %v6798 = vld [vmem:[#allocation24 + $0x8e4] sm:$0xf]
        %v6799 = vld [vmem:[#allocation24 + $0x8e8] sm:$0xff]
        %v6800 = vld [vmem:[#allocation24 + $0x8f0] sm:$0xf]
        %v6801 = vld [vmem:[#allocation24 + $0x8f4] sm:$0xff]
        %v6802 = vld [vmem:[#allocation24 + $0x8fc] sm:$0xf]
        %v6803 = vld [vmem:[#allocation26] sm:$0x7]
        %v6805 = vlaneseq
        %v6806 = vshrl.u32 %v6805, 7
        %v6807 = vsub.s32 0, %v6806
        %v6808 = vrot.slane %v6803, %v6807
        %v6809 = vlaneseq
        %v6810 = vshrl.u32 %v6809, 7
        %v6811 = vsub.s32 1, %v6810
        %v6812 = vrot.slane %v6803, %v6811
        %v6813 = vlaneseq
        %v6814 = vshrl.u32 %v6813, 7
        %v6815 = vsub.s32 2, %v6814
        %v6816 = vrot.slane %v6803, %v6815
        %v7204 = vunpack.c.l.b16 %v6419
        %v7205 = vunpack.c.h.b16 %v6419
        %v7206 = vunpack.c.l.b16 %v6420
        %v7207 = vunpack.c.l.b16 %v6421
        %v7208 = vunpack.c.h.b16 %v6421
        %v7209 = vunpack.c.l.b16 %v6422
        %v7210 = vunpack.c.l.b16 %v6423
        %v7211 = vunpack.c.h.b16 %v6423
        %v7212 = vunpack.c.l.b16 %v6424
        %v7213 = vunpack.c.l.b16 %v6425
        %v7214 = vunpack.c.h.b16 %v6425
        %v7215 = vunpack.c.l.b16 %v6426
        %v7216 = vunpack.c.l.b16 %v6427
        %v7217 = vunpack.c.h.b16 %v6427
        %v7218 = vunpack.c.l.b16 %v6428
        %v7219 = vunpack.c.l.b16 %v6429
        %v7220 = vunpack.c.h.b16 %v6429
        %v7221 = vunpack.c.l.b16 %v6430
        %v7222 = vunpack.c.l.b16 %v6431
        %v7223 = vunpack.c.h.b16 %v6431
        %v7224 = vunpack.c.l.b16 %v6432
        %v7225 = vunpack.c.l.b16 %v6433
        %v7226 = vunpack.c.h.b16 %v6433
        %v7227 = vunpack.c.l.b16 %v6434
        %v7228 = vunpack.c.l.b16 %v6435
        %v7229 = vunpack.c.h.b16 %v6435
        %v7230 = vunpack.c.l.b16 %v6436
        %v7231 = vunpack.c.l.b16 %v6437
        %v7232 = vunpack.c.h.b16 %v6437
        %v7233 = vunpack.c.l.b16 %v6438
        %v7234 = vunpack.c.l.b16 %v6439
        %v7235 = vunpack.c.h.b16 %v6439
        %v7236 = vunpack.c.l.b16 %v6440
        %v7237 = vunpack.c.l.b16 %v6441
        %v7238 = vunpack.c.h.b16 %v6441
        %v7239 = vunpack.c.l.b16 %v6442
        %v7240 = vunpack.c.l.b16 %v6443
        %v7241 = vunpack.c.h.b16 %v6443
        %v7242 = vunpack.c.l.b16 %v6444
        %v7243 = vunpack.c.l.b16 %v6445
        %v7244 = vunpack.c.h.b16 %v6445
        %v7245 = vunpack.c.l.b16 %v6446
        %v7246 = vunpack.c.l.b16 %v6447
        %v7247 = vunpack.c.h.b16 %v6447
        %v7248 = vunpack.c.l.b16 %v6448
        %v7249 = vunpack.c.l.b16 %v6449
        %v7250 = vunpack.c.h.b16 %v6449
        %v7251 = vunpack.c.l.b16 %v6450
        %v7252 = vunpack.c.l.b16 %v6451
        %v7253 = vunpack.c.h.b16 %v6451
        %v7254 = vunpack.c.l.b16 %v6452
        %v7255 = vunpack.c.l.b16 %v6453
        %v7256 = vunpack.c.h.b16 %v6453
        %v7257 = vunpack.c.l.b16 %v6454
        %v7258 = vunpack.c.l.b16 %v6455
        %v7259 = vunpack.c.h.b16 %v6455
        %v7260 = vunpack.c.l.b16 %v6456
        %v7261 = vunpack.c.l.b16 %v6457
        %v7262 = vunpack.c.h.b16 %v6457
        %v7263 = vunpack.c.l.b16 %v6458
        %v7264 = vunpack.c.l.b16 %v6459
        %v7265 = vunpack.c.h.b16 %v6459
        %v7266 = vunpack.c.l.b16 %v6460
        %v7267 = vunpack.c.l.b16 %v6461
        %v7268 = vunpack.c.h.b16 %v6461
        %v7269 = vunpack.c.l.b16 %v6462
        %v7270 = vunpack.c.l.b16 %v6463
        %v7271 = vunpack.c.h.b16 %v6463
        %v7272 = vunpack.c.l.b16 %v6464
        %v7273 = vunpack.c.l.b16 %v6465
        %v7274 = vunpack.c.h.b16 %v6465
        %v7275 = vunpack.c.l.b16 %v6466
        %v7276 = vunpack.c.l.b16 %v6467
        %v7277 = vunpack.c.h.b16 %v6467
        %v7278 = vunpack.c.l.b16 %v6468
        %v7279 = vunpack.c.l.b16 %v6469
        %v7280 = vunpack.c.h.b16 %v6469
        %v7281 = vunpack.c.l.b16 %v6470
        %v7282 = vunpack.c.l.b16 %v6471
        %v7283 = vunpack.c.h.b16 %v6471
        %v7284 = vunpack.c.l.b16 %v6472
        %v7285 = vunpack.c.l.b16 %v6473
        %v7286 = vunpack.c.h.b16 %v6473
        %v7287 = vunpack.c.l.b16 %v6474
        %v7288 = vunpack.c.l.b16 %v6475
        %v7289 = vunpack.c.h.b16 %v6475
        %v7290 = vunpack.c.l.b16 %v6476
        %v7291 = vunpack.c.l.b16 %v6477
        %v7292 = vunpack.c.h.b16 %v6477
        %v7293 = vunpack.c.l.b16 %v6478
        %v7294 = vunpack.c.l.b16 %v6479
        %v7295 = vunpack.c.h.b16 %v6479
        %v7296 = vunpack.c.l.b16 %v6480
        %v7297 = vunpack.c.l.b16 %v6481
        %v7298 = vunpack.c.h.b16 %v6481
        %v7299 = vunpack.c.l.b16 %v6482
        %v7300 = vunpack.c.l.b16 %v6483
        %v7301 = vunpack.c.h.b16 %v6483
        %v7302 = vunpack.c.l.b16 %v6484
        %v7303 = vunpack.c.l.b16 %v6485
        %v7304 = vunpack.c.h.b16 %v6485
        %v7305 = vunpack.c.l.b16 %v6486
        %v7306 = vunpack.c.l.b16 %v6487
        %v7307 = vunpack.c.h.b16 %v6487
        %v7308 = vunpack.c.l.b16 %v6488
        %v7309 = vunpack.c.l.b16 %v6489
        %v7310 = vunpack.c.h.b16 %v6489
        %v7311 = vunpack.c.l.b16 %v6490
        %v7312 = vunpack.c.l.b16 %v6491
        %v7313 = vunpack.c.h.b16 %v6491
        %v7314 = vunpack.c.l.b16 %v6492
        %v7315 = vunpack.c.l.b16 %v6493
        %v7316 = vunpack.c.h.b16 %v6493
        %v7317 = vunpack.c.l.b16 %v6494
        %v7318 = vunpack.c.l.b16 %v6495
        %v7319 = vunpack.c.h.b16 %v6495
        %v7320 = vunpack.c.l.b16 %v6496
        %v7321 = vunpack.c.l.b16 %v6497
        %v7322 = vunpack.c.h.b16 %v6497
        %v7323 = vunpack.c.l.b16 %v6498
        %v7324 = vunpack.c.l.b16 %v6499
        %v7325 = vunpack.c.h.b16 %v6499
        %v7326 = vunpack.c.l.b16 %v6500
        %v7327 = vunpack.c.l.b16 %v6501
        %v7328 = vunpack.c.h.b16 %v6501
        %v7329 = vunpack.c.l.b16 %v6502
        %v7330 = vunpack.c.l.b16 %v6503
        %v7331 = vunpack.c.h.b16 %v6503
        %v7332 = vunpack.c.l.b16 %v6504
        %v7333 = vunpack.c.l.b16 %v6505
        %v7334 = vunpack.c.h.b16 %v6505
        %v7335 = vunpack.c.l.b16 %v6506
        %v7336 = vunpack.c.l.b16 %v6507
        %v7337 = vunpack.c.h.b16 %v6507
        %v7338 = vunpack.c.l.b16 %v6508
        %v7339 = vunpack.c.l.b16 %v6509
        %v7340 = vunpack.c.h.b16 %v6509
        %v7341 = vunpack.c.l.b16 %v6510
        %v7342 = vunpack.c.l.b16 %v6511
        %v7343 = vunpack.c.h.b16 %v6511
        %v7344 = vunpack.c.l.b16 %v6512
        %v7345 = vunpack.c.l.b16 %v6513
        %v7346 = vunpack.c.h.b16 %v6513
        %v7347 = vunpack.c.l.b16 %v6514
        %v7348 = vunpack.c.l.b16 %v6515
        %v7349 = vunpack.c.h.b16 %v6515
        %v7350 = vunpack.c.l.b16 %v6516
        %v7351 = vunpack.c.l.b16 %v6517
        %v7352 = vunpack.c.h.b16 %v6517
        %v7353 = vunpack.c.l.b16 %v6518
        %v7354 = vunpack.c.l.b16 %v6519
        %v7355 = vunpack.c.h.b16 %v6519
        %v7356 = vunpack.c.l.b16 %v6520
        %v7357 = vunpack.c.l.b16 %v6521
        %v7358 = vunpack.c.h.b16 %v6521
        %v7359 = vunpack.c.l.b16 %v6522
        %v7360 = vunpack.c.l.b16 %v6523
        %v7361 = vunpack.c.h.b16 %v6523
        %v7362 = vunpack.c.l.b16 %v6524
        %v7363 = vunpack.c.l.b16 %v6525
        %v7364 = vunpack.c.h.b16 %v6525
        %v7365 = vunpack.c.l.b16 %v6526
        %v7366 = vunpack.c.l.b16 %v6527
        %v7367 = vunpack.c.h.b16 %v6527
        %v7368 = vunpack.c.l.b16 %v6528
        %v7369 = vunpack.c.l.b16 %v6529
        %v7370 = vunpack.c.h.b16 %v6529
        %v7371 = vunpack.c.l.b16 %v6530
        %v7372 = vunpack.c.l.b16 %v6531
        %v7373 = vunpack.c.h.b16 %v6531
        %v7374 = vunpack.c.l.b16 %v6532
        %v7375 = vunpack.c.l.b16 %v6533
        %v7376 = vunpack.c.h.b16 %v6533
        %v7377 = vunpack.c.l.b16 %v6534
        %v7378 = vunpack.c.l.b16 %v6535
        %v7379 = vunpack.c.h.b16 %v6535
        %v7380 = vunpack.c.l.b16 %v6536
        %v7381 = vunpack.c.l.b16 %v6537
        %v7382 = vunpack.c.h.b16 %v6537
        %v7383 = vunpack.c.l.b16 %v6538
        %v7384 = vunpack.c.l.b16 %v6539
        %v7385 = vunpack.c.h.b16 %v6539
        %v7386 = vunpack.c.l.b16 %v6540
        %v7387 = vunpack.c.l.b16 %v6541
        %v7388 = vunpack.c.h.b16 %v6541
        %v7389 = vunpack.c.l.b16 %v6542
        %v7390 = vunpack.c.l.b16 %v6543
        %v7391 = vunpack.c.h.b16 %v6543
        %v7392 = vunpack.c.l.b16 %v6544
        %v7393 = vunpack.c.l.b16 %v6545
        %v7394 = vunpack.c.h.b16 %v6545
        %v7395 = vunpack.c.l.b16 %v6546
        %v7396 = vunpack.c.l.b16 %v6547
        %v7397 = vunpack.c.h.b16 %v6547
        %v7398 = vunpack.c.l.b16 %v6548
        %v7399 = vunpack.c.l.b16 %v6549
        %v7400 = vunpack.c.h.b16 %v6549
        %v7401 = vunpack.c.l.b16 %v6550
        %v7402 = vunpack.c.l.b16 %v6551
        %v7403 = vunpack.c.h.b16 %v6551
        %v7404 = vunpack.c.l.b16 %v6552
        %v7405 = vunpack.c.l.b16 %v6553
        %v7406 = vunpack.c.h.b16 %v6553
        %v7407 = vunpack.c.l.b16 %v6554
        %v7408 = vunpack.c.l.b16 %v6555
        %v7409 = vunpack.c.h.b16 %v6555
        %v7410 = vunpack.c.l.b16 %v6556
        %v7411 = vunpack.c.l.b16 %v6557
        %v7412 = vunpack.c.h.b16 %v6557
        %v7413 = vunpack.c.l.b16 %v6558
        %v7414 = vunpack.c.l.b16 %v6559
        %v7415 = vunpack.c.h.b16 %v6559
        %v7416 = vunpack.c.l.b16 %v6560
        %v7417 = vunpack.c.l.b16 %v6561
        %v7418 = vunpack.c.h.b16 %v6561
        %v7419 = vunpack.c.l.b16 %v6562
        %v7420 = vunpack.c.l.b16 %v6563
        %v7421 = vunpack.c.h.b16 %v6563
        %v7422 = vunpack.c.l.b16 %v6564
        %v7423 = vunpack.c.l.b16 %v6565
        %v7424 = vunpack.c.h.b16 %v6565
        %v7425 = vunpack.c.l.b16 %v6566
        %v7426 = vunpack.c.l.b16 %v6567
        %v7427 = vunpack.c.h.b16 %v6567
        %v7428 = vunpack.c.l.b16 %v6568
        %v7429 = vunpack.c.l.b16 %v6569
        %v7430 = vunpack.c.h.b16 %v6569
        %v7431 = vunpack.c.l.b16 %v6570
        %v7432 = vunpack.c.l.b16 %v6571
        %v7433 = vunpack.c.h.b16 %v6571
        %v7434 = vunpack.c.l.b16 %v6572
        %v7435 = vunpack.c.l.b16 %v6573
        %v7436 = vunpack.c.h.b16 %v6573
        %v7437 = vunpack.c.l.b16 %v6574
        %v7438 = vunpack.c.l.b16 %v6575
        %v7439 = vunpack.c.h.b16 %v6575
        %v7440 = vunpack.c.l.b16 %v6576
        %v7441 = vunpack.c.l.b16 %v6577
        %v7442 = vunpack.c.h.b16 %v6577
        %v7443 = vunpack.c.l.b16 %v6578
        %v7444 = vunpack.c.l.b16 %v6579
        %v7445 = vunpack.c.h.b16 %v6579
        %v7446 = vunpack.c.l.b16 %v6580
        %v7447 = vunpack.c.l.b16 %v6581
        %v7448 = vunpack.c.h.b16 %v6581
        %v7449 = vunpack.c.l.b16 %v6582
        %v7450 = vunpack.c.l.b16 %v6583
        %v7451 = vunpack.c.h.b16 %v6583
        %v7452 = vunpack.c.l.b16 %v6584
        %v7453 = vunpack.c.l.b16 %v6585
        %v7454 = vunpack.c.h.b16 %v6585
        %v7455 = vunpack.c.l.b16 %v6586
        %v7456 = vunpack.c.l.b16 %v6587
        %v7457 = vunpack.c.h.b16 %v6587
        %v7458 = vunpack.c.l.b16 %v6588
        %v7459 = vunpack.c.l.b16 %v6589
        %v7460 = vunpack.c.h.b16 %v6589
        %v7461 = vunpack.c.l.b16 %v6590
        %v7462 = vunpack.c.l.b16 %v6591
        %v7463 = vunpack.c.h.b16 %v6591
        %v7464 = vunpack.c.l.b16 %v6592
        %v7465 = vunpack.c.l.b16 %v6593
        %v7466 = vunpack.c.h.b16 %v6593
        %v7467 = vunpack.c.l.b16 %v6594
        %v7468 = vunpack.c.l.b16 %v6595
        %v7469 = vunpack.c.h.b16 %v6595
        %v7470 = vunpack.c.l.b16 %v6596
        %v7471 = vunpack.c.l.b16 %v6597
        %v7472 = vunpack.c.h.b16 %v6597
        %v7473 = vunpack.c.l.b16 %v6598
        %v7474 = vunpack.c.l.b16 %v6599
        %v7475 = vunpack.c.h.b16 %v6599
        %v7476 = vunpack.c.l.b16 %v6600
        %v7477 = vunpack.c.l.b16 %v6601
        %v7478 = vunpack.c.h.b16 %v6601
        %v7479 = vunpack.c.l.b16 %v6602
        %v7480 = vunpack.c.l.b16 %v6603
        %v7481 = vunpack.c.h.b16 %v6603
        %v7482 = vunpack.c.l.b16 %v6604
        %v7483 = vunpack.c.l.b16 %v6605
        %v7484 = vunpack.c.h.b16 %v6605
        %v7485 = vunpack.c.l.b16 %v6606
        %v7486 = vunpack.c.l.b16 %v6607
        %v7487 = vunpack.c.h.b16 %v6607
        %v7488 = vunpack.c.l.b16 %v6608
        %v7489 = vunpack.c.l.b16 %v6609
        %v7490 = vunpack.c.h.b16 %v6609
        %v7491 = vunpack.c.l.b16 %v6610
        %v7492 = vunpack.c.l.b16 %v6611
        %v7493 = vunpack.c.h.b16 %v6611
        %v7494 = vunpack.c.l.b16 %v6612
        %v7495 = vunpack.c.l.b16 %v6613
        %v7496 = vunpack.c.h.b16 %v6613
        %v7497 = vunpack.c.l.b16 %v6614
        %v7498 = vunpack.c.l.b16 %v6615
        %v7499 = vunpack.c.h.b16 %v6615
        %v7500 = vunpack.c.l.b16 %v6616
        %v7501 = vunpack.c.l.b16 %v6617
        %v7502 = vunpack.c.h.b16 %v6617
        %v7503 = vunpack.c.l.b16 %v6618
        %v7504 = vunpack.c.l.b16 %v6619
        %v7505 = vunpack.c.h.b16 %v6619
        %v7506 = vunpack.c.l.b16 %v6620
        %v7507 = vunpack.c.l.b16 %v6621
        %v7508 = vunpack.c.h.b16 %v6621
        %v7509 = vunpack.c.l.b16 %v6622
        %v7510 = vunpack.c.l.b16 %v6623
        %v7511 = vunpack.c.h.b16 %v6623
        %v7512 = vunpack.c.l.b16 %v6624
        %v7513 = vunpack.c.l.b16 %v6625
        %v7514 = vunpack.c.h.b16 %v6625
        %v7515 = vunpack.c.l.b16 %v6626
        %v7516 = vunpack.c.l.b16 %v6627
        %v7517 = vunpack.c.h.b16 %v6627
        %v7518 = vunpack.c.l.b16 %v6628
        %v7519 = vunpack.c.l.b16 %v6629
        %v7520 = vunpack.c.h.b16 %v6629
        %v7521 = vunpack.c.l.b16 %v6630
        %v7522 = vunpack.c.l.b16 %v6631
        %v7523 = vunpack.c.h.b16 %v6631
        %v7524 = vunpack.c.l.b16 %v6632
        %v7525 = vunpack.c.l.b16 %v6633
        %v7526 = vunpack.c.h.b16 %v6633
        %v7527 = vunpack.c.l.b16 %v6634
        %v7528 = vunpack.c.l.b16 %v6635
        %v7529 = vunpack.c.h.b16 %v6635
        %v7530 = vunpack.c.l.b16 %v6636
        %v7531 = vunpack.c.l.b16 %v6637
        %v7532 = vunpack.c.h.b16 %v6637
        %v7533 = vunpack.c.l.b16 %v6638
        %v7534 = vunpack.c.l.b16 %v6639
        %v7535 = vunpack.c.h.b16 %v6639
        %v7536 = vunpack.c.l.b16 %v6640
        %v7537 = vunpack.c.l.b16 %v6641
        %v7538 = vunpack.c.h.b16 %v6641
        %v7539 = vunpack.c.l.b16 %v6642
        %v7540 = vunpack.c.l.b16 %v6643
        %v7541 = vunpack.c.h.b16 %v6643
        %v7542 = vunpack.c.l.b16 %v6644
        %v7543 = vunpack.c.l.b16 %v6645
        %v7544 = vunpack.c.h.b16 %v6645
        %v7545 = vunpack.c.l.b16 %v6646
        %v7546 = vunpack.c.l.b16 %v6647
        %v7547 = vunpack.c.h.b16 %v6647
        %v7548 = vunpack.c.l.b16 %v6648
        %v7549 = vunpack.c.l.b16 %v6649
        %v7550 = vunpack.c.h.b16 %v6649
        %v7551 = vunpack.c.l.b16 %v6650
        %v7552 = vunpack.c.l.b16 %v6651
        %v7553 = vunpack.c.h.b16 %v6651
        %v7554 = vunpack.c.l.b16 %v6652
        %v7555 = vunpack.c.l.b16 %v6653
        %v7556 = vunpack.c.h.b16 %v6653
        %v7557 = vunpack.c.l.b16 %v6654
        %v7558 = vunpack.c.l.b16 %v6655
        %v7559 = vunpack.c.h.b16 %v6655
        %v7560 = vunpack.c.l.b16 %v6656
        %v7561 = vunpack.c.l.b16 %v6657
        %v7562 = vunpack.c.h.b16 %v6657
        %v7563 = vunpack.c.l.b16 %v6658
        %v7564 = vunpack.c.l.b16 %v6659
        %v7565 = vunpack.c.h.b16 %v6659
        %v7566 = vunpack.c.l.b16 %v6660
        %v7567 = vunpack.c.l.b16 %v6661
        %v7568 = vunpack.c.h.b16 %v6661
        %v7569 = vunpack.c.l.b16 %v6662
        %v7570 = vunpack.c.l.b16 %v6663
        %v7571 = vunpack.c.h.b16 %v6663
        %v7572 = vunpack.c.l.b16 %v6664
        %v7573 = vunpack.c.l.b16 %v6665
        %v7574 = vunpack.c.h.b16 %v6665
        %v7575 = vunpack.c.l.b16 %v6666
        %v7576 = vunpack.c.l.b16 %v6667
        %v7577 = vunpack.c.h.b16 %v6667
        %v7578 = vunpack.c.l.b16 %v6668
        %v7579 = vunpack.c.l.b16 %v6669
        %v7580 = vunpack.c.h.b16 %v6669
        %v7581 = vunpack.c.l.b16 %v6670
        %v7582 = vunpack.c.l.b16 %v6671
        %v7583 = vunpack.c.h.b16 %v6671
        %v7584 = vunpack.c.l.b16 %v6672
        %v7585 = vunpack.c.l.b16 %v6673
        %v7586 = vunpack.c.h.b16 %v6673
        %v7587 = vunpack.c.l.b16 %v6674
        %v7588 = vunpack.c.l.b16 %v6675
        %v7589 = vunpack.c.h.b16 %v6675
        %v7590 = vunpack.c.l.b16 %v6676
        %v7591 = vunpack.c.l.b16 %v6677
        %v7592 = vunpack.c.h.b16 %v6677
        %v7593 = vunpack.c.l.b16 %v6678
        %v7594 = vunpack.c.l.b16 %v6679
        %v7595 = vunpack.c.h.b16 %v6679
        %v7596 = vunpack.c.l.b16 %v6680
        %v7597 = vunpack.c.l.b16 %v6681
        %v7598 = vunpack.c.h.b16 %v6681
        %v7599 = vunpack.c.l.b16 %v6682
        %v7600 = vunpack.c.l.b16 %v6683
        %v7601 = vunpack.c.h.b16 %v6683
        %v7602 = vunpack.c.l.b16 %v6684
        %v7603 = vunpack.c.l.b16 %v6685
        %v7604 = vunpack.c.h.b16 %v6685
        %v7605 = vunpack.c.l.b16 %v6686
        %v7606 = vunpack.c.l.b16 %v6687
        %v7607 = vunpack.c.h.b16 %v6687
        %v7608 = vunpack.c.l.b16 %v6688
        %v7609 = vunpack.c.l.b16 %v6689
        %v7610 = vunpack.c.h.b16 %v6689
        %v7611 = vunpack.c.l.b16 %v6690
        %v7612 = vunpack.c.l.b16 %v6691
        %v7613 = vunpack.c.h.b16 %v6691
        %v7614 = vunpack.c.l.b16 %v6692
        %v7615 = vunpack.c.l.b16 %v6693
        %v7616 = vunpack.c.h.b16 %v6693
        %v7617 = vunpack.c.l.b16 %v6694
        %v7618 = vunpack.c.l.b16 %v6695
        %v7619 = vunpack.c.h.b16 %v6695
        %v7620 = vunpack.c.l.b16 %v6696
        %v7621 = vunpack.c.l.b16 %v6697
        %v7622 = vunpack.c.h.b16 %v6697
        %v7623 = vunpack.c.l.b16 %v6698
        %v7624 = vunpack.c.l.b16 %v6699
        %v7625 = vunpack.c.h.b16 %v6699
        %v7626 = vunpack.c.l.b16 %v6700
        %v7627 = vunpack.c.l.b16 %v6701
        %v7628 = vunpack.c.h.b16 %v6701
        %v7629 = vunpack.c.l.b16 %v6702
        %v7630 = vunpack.c.l.b16 %v6703
        %v7631 = vunpack.c.h.b16 %v6703
        %v7632 = vunpack.c.l.b16 %v6704
        %v7633 = vunpack.c.l.b16 %v6705
        %v7634 = vunpack.c.h.b16 %v6705
        %v7635 = vunpack.c.l.b16 %v6706
        %v7636 = vunpack.c.l.b16 %v6707
        %v7637 = vunpack.c.h.b16 %v6707
        %v7638 = vunpack.c.l.b16 %v6708
        %v7639 = vunpack.c.l.b16 %v6709
        %v7640 = vunpack.c.h.b16 %v6709
        %v7641 = vunpack.c.l.b16 %v6710
        %v7642 = vunpack.c.l.b16 %v6711
        %v7643 = vunpack.c.h.b16 %v6711
        %v7644 = vunpack.c.l.b16 %v6712
        %v7645 = vunpack.c.l.b16 %v6713
        %v7646 = vunpack.c.h.b16 %v6713
        %v7647 = vunpack.c.l.b16 %v6714
        %v7648 = vunpack.c.l.b16 %v6715
        %v7649 = vunpack.c.h.b16 %v6715
        %v7650 = vunpack.c.l.b16 %v6716
        %v7651 = vunpack.c.l.b16 %v6717
        %v7652 = vunpack.c.h.b16 %v6717
        %v7653 = vunpack.c.l.b16 %v6718
        %v7654 = vunpack.c.l.b16 %v6719
        %v7655 = vunpack.c.h.b16 %v6719
        %v7656 = vunpack.c.l.b16 %v6720
        %v7657 = vunpack.c.l.b16 %v6721
        %v7658 = vunpack.c.h.b16 %v6721
        %v7659 = vunpack.c.l.b16 %v6722
        %v7660 = vunpack.c.l.b16 %v6723
        %v7661 = vunpack.c.h.b16 %v6723
        %v7662 = vunpack.c.l.b16 %v6724
        %v7663 = vunpack.c.l.b16 %v6725
        %v7664 = vunpack.c.h.b16 %v6725
        %v7665 = vunpack.c.l.b16 %v6726
        %v7666 = vunpack.c.l.b16 %v6727
        %v7667 = vunpack.c.h.b16 %v6727
        %v7668 = vunpack.c.l.b16 %v6728
        %v7669 = vunpack.c.l.b16 %v6729
        %v7670 = vunpack.c.h.b16 %v6729
        %v7671 = vunpack.c.l.b16 %v6730
        %v7672 = vunpack.c.l.b16 %v6731
        %v7673 = vunpack.c.h.b16 %v6731
        %v7674 = vunpack.c.l.b16 %v6732
        %v7675 = vunpack.c.l.b16 %v6733
        %v7676 = vunpack.c.h.b16 %v6733
        %v7677 = vunpack.c.l.b16 %v6734
        %v7678 = vunpack.c.l.b16 %v6735
        %v7679 = vunpack.c.h.b16 %v6735
        %v7680 = vunpack.c.l.b16 %v6736
        %v7681 = vunpack.c.l.b16 %v6737
        %v7682 = vunpack.c.h.b16 %v6737
        %v7683 = vunpack.c.l.b16 %v6738
        %v7684 = vunpack.c.l.b16 %v6739
        %v7685 = vunpack.c.h.b16 %v6739
        %v7686 = vunpack.c.l.b16 %v6740
        %v7687 = vunpack.c.l.b16 %v6741
        %v7688 = vunpack.c.h.b16 %v6741
        %v7689 = vunpack.c.l.b16 %v6742
        %v7690 = vunpack.c.l.b16 %v6743
        %v7691 = vunpack.c.h.b16 %v6743
        %v7692 = vunpack.c.l.b16 %v6744
        %v7693 = vunpack.c.l.b16 %v6745
        %v7694 = vunpack.c.h.b16 %v6745
        %v7695 = vunpack.c.l.b16 %v6746
        %v7696 = vunpack.c.l.b16 %v6747
        %v7697 = vunpack.c.h.b16 %v6747
        %v7698 = vunpack.c.l.b16 %v6748
        %v7699 = vunpack.c.l.b16 %v6749
        %v7700 = vunpack.c.h.b16 %v6749
        %v7701 = vunpack.c.l.b16 %v6750
        %v7702 = vunpack.c.l.b16 %v6751
        %v7703 = vunpack.c.h.b16 %v6751
        %v7704 = vunpack.c.l.b16 %v6752
        %v7705 = vunpack.c.l.b16 %v6753
        %v7706 = vunpack.c.h.b16 %v6753
        %v7707 = vunpack.c.l.b16 %v6754
        %v7708 = vunpack.c.l.b16 %v6755
        %v7709 = vunpack.c.h.b16 %v6755
        %v7710 = vunpack.c.l.b16 %v6756
        %v7711 = vunpack.c.l.b16 %v6757
        %v7712 = vunpack.c.h.b16 %v6757
        %v7713 = vunpack.c.l.b16 %v6758
        %v7714 = vunpack.c.l.b16 %v6759
        %v7715 = vunpack.c.h.b16 %v6759
        %v7716 = vunpack.c.l.b16 %v6760
        %v7717 = vunpack.c.l.b16 %v6761
        %v7718 = vunpack.c.h.b16 %v6761
        %v7719 = vunpack.c.l.b16 %v6762
        %v7720 = vunpack.c.l.b16 %v6763
        %v7721 = vunpack.c.h.b16 %v6763
        %v7722 = vunpack.c.l.b16 %v6764
        %v7723 = vunpack.c.l.b16 %v6765
        %v7724 = vunpack.c.h.b16 %v6765
        %v7725 = vunpack.c.l.b16 %v6766
        %v7726 = vunpack.c.l.b16 %v6767
        %v7727 = vunpack.c.h.b16 %v6767
        %v7728 = vunpack.c.l.b16 %v6768
        %v7729 = vunpack.c.l.b16 %v6769
        %v7730 = vunpack.c.h.b16 %v6769
        %v7731 = vunpack.c.l.b16 %v6770
        %v7732 = vunpack.c.l.b16 %v6771
        %v7733 = vunpack.c.h.b16 %v6771
        %v7734 = vunpack.c.l.b16 %v6772
        %v7735 = vunpack.c.l.b16 %v6773
        %v7736 = vunpack.c.h.b16 %v6773
        %v7737 = vunpack.c.l.b16 %v6774
        %v7738 = vunpack.c.l.b16 %v6775
        %v7739 = vunpack.c.h.b16 %v6775
        %v7740 = vunpack.c.l.b16 %v6776
        %v7741 = vunpack.c.l.b16 %v6777
        %v7742 = vunpack.c.h.b16 %v6777
        %v7743 = vunpack.c.l.b16 %v6778
        %v7744 = vunpack.c.l.b16 %v6779
        %v7745 = vunpack.c.h.b16 %v6779
        %v7746 = vunpack.c.l.b16 %v6780
        %v7747 = vunpack.c.l.b16 %v6781
        %v7748 = vunpack.c.h.b16 %v6781
        %v7749 = vunpack.c.l.b16 %v6782
        %v7750 = vunpack.c.l.b16 %v6783
        %v7751 = vunpack.c.h.b16 %v6783
        %v7752 = vunpack.c.l.b16 %v6784
        %v7753 = vunpack.c.l.b16 %v6785
        %v7754 = vunpack.c.h.b16 %v6785
        %v7755 = vunpack.c.l.b16 %v6786
        %v7756 = vunpack.c.l.b16 %v6787
        %v7757 = vunpack.c.h.b16 %v6787
        %v7758 = vunpack.c.l.b16 %v6788
        %v7759 = vunpack.c.l.b16 %v6789
        %v7760 = vunpack.c.h.b16 %v6789
        %v7761 = vunpack.c.l.b16 %v6790
        %v7762 = vunpack.c.l.b16 %v6791
        %v7763 = vunpack.c.h.b16 %v6791
        %v7764 = vunpack.c.l.b16 %v6792
        %v7765 = vunpack.c.l.b16 %v6793
        %v7766 = vunpack.c.h.b16 %v6793
        %v7767 = vunpack.c.l.b16 %v6794
        %v7768 = vunpack.c.l.b16 %v6795
        %v7769 = vunpack.c.h.b16 %v6795
        %v7770 = vunpack.c.l.b16 %v6796
        %v7771 = vunpack.c.l.b16 %v6797
        %v7772 = vunpack.c.h.b16 %v6797
        %v7773 = vunpack.c.l.b16 %v6798
        %v7774 = vunpack.c.l.b16 %v6799
        %v7775 = vunpack.c.h.b16 %v6799
        %v7776 = vunpack.c.l.b16 %v6800
        %v7777 = vunpack.c.l.b16 %v6801
        %v7778 = vunpack.c.h.b16 %v6801
        %v7779 = vunpack.c.l.b16 %v6802
        %v7780 = vpack.c.b16 %v7207, %v7204
        %v7781 = vpack.c.b16 %v7208, %v7205
        %v7782 = vpack.c.b16 %v7209, %v7206
        %v7783 = vpack.c.b16 %v7213, %v7210
        %v7784 = vpack.c.b16 %v7214, %v7211
        %v7785 = vpack.c.b16 %v7215, %v7212
        %v7786 = vpack.c.b16 %v7219, %v7216
        %v7787 = vpack.c.b16 %v7220, %v7217
        %v7788 = vpack.c.b16 %v7221, %v7218
        %v7789 = vpack.c.b16 %v7225, %v7222
        %v7790 = vpack.c.b16 %v7226, %v7223
        %v7791 = vpack.c.b16 %v7227, %v7224
        %v7792 = vpack.c.b16 %v7231, %v7228
        %v7793 = vpack.c.b16 %v7232, %v7229
        %v7794 = vpack.c.b16 %v7233, %v7230
        %v7795 = vpack.c.b16 %v7237, %v7234
        %v7796 = vpack.c.b16 %v7238, %v7235
        %v7797 = vpack.c.b16 %v7239, %v7236
        %v7798 = vpack.c.b16 %v7243, %v7240
        %v7799 = vpack.c.b16 %v7244, %v7241
        %v7800 = vpack.c.b16 %v7245, %v7242
        %v7801 = vpack.c.b16 %v7249, %v7246
        %v7802 = vpack.c.b16 %v7250, %v7247
        %v7803 = vpack.c.b16 %v7251, %v7248
        %v7804 = vpack.c.b16 %v7255, %v7252
        %v7805 = vpack.c.b16 %v7256, %v7253
        %v7806 = vpack.c.b16 %v7257, %v7254
        %v7807 = vpack.c.b16 %v7261, %v7258
        %v7808 = vpack.c.b16 %v7262, %v7259
        %v7809 = vpack.c.b16 %v7263, %v7260
        %v7810 = vpack.c.b16 %v7267, %v7264
        %v7811 = vpack.c.b16 %v7268, %v7265
        %v7812 = vpack.c.b16 %v7269, %v7266
        %v7813 = vpack.c.b16 %v7273, %v7270
        %v7814 = vpack.c.b16 %v7274, %v7271
        %v7815 = vpack.c.b16 %v7275, %v7272
        %v7816 = vpack.c.b16 %v7279, %v7276
        %v7817 = vpack.c.b16 %v7280, %v7277
        %v7818 = vpack.c.b16 %v7281, %v7278
        %v7819 = vpack.c.b16 %v7285, %v7282
        %v7820 = vpack.c.b16 %v7286, %v7283
        %v7821 = vpack.c.b16 %v7287, %v7284
        %v7822 = vpack.c.b16 %v7291, %v7288
        %v7823 = vpack.c.b16 %v7292, %v7289
        %v7824 = vpack.c.b16 %v7293, %v7290
        %v7825 = vpack.c.b16 %v7297, %v7294
        %v7826 = vpack.c.b16 %v7298, %v7295
        %v7827 = vpack.c.b16 %v7299, %v7296
        %v7828 = vpack.c.b16 %v7303, %v7300
        %v7829 = vpack.c.b16 %v7304, %v7301
        %v7830 = vpack.c.b16 %v7305, %v7302
        %v7831 = vpack.c.b16 %v7309, %v7306
        %v7832 = vpack.c.b16 %v7310, %v7307
        %v7833 = vpack.c.b16 %v7311, %v7308
        %v7834 = vpack.c.b16 %v7315, %v7312
        %v7835 = vpack.c.b16 %v7316, %v7313
        %v7836 = vpack.c.b16 %v7317, %v7314
        %v7837 = vpack.c.b16 %v7321, %v7318
        %v7838 = vpack.c.b16 %v7322, %v7319
        %v7839 = vpack.c.b16 %v7323, %v7320
        %v7840 = vpack.c.b16 %v7327, %v7324
        %v7841 = vpack.c.b16 %v7328, %v7325
        %v7842 = vpack.c.b16 %v7329, %v7326
        %v7843 = vpack.c.b16 %v7333, %v7330
        %v7844 = vpack.c.b16 %v7334, %v7331
        %v7845 = vpack.c.b16 %v7335, %v7332
        %v7846 = vpack.c.b16 %v7339, %v7336
        %v7847 = vpack.c.b16 %v7340, %v7337
        %v7848 = vpack.c.b16 %v7341, %v7338
        %v7849 = vpack.c.b16 %v7345, %v7342
        %v7850 = vpack.c.b16 %v7346, %v7343
        %v7851 = vpack.c.b16 %v7347, %v7344
        %v7852 = vpack.c.b16 %v7351, %v7348
        %v7853 = vpack.c.b16 %v7352, %v7349
        %v7854 = vpack.c.b16 %v7353, %v7350
        %v7855 = vpack.c.b16 %v7357, %v7354
        %v7856 = vpack.c.b16 %v7358, %v7355
        %v7857 = vpack.c.b16 %v7359, %v7356
        %v7858 = vpack.c.b16 %v7363, %v7360
        %v7859 = vpack.c.b16 %v7364, %v7361
        %v7860 = vpack.c.b16 %v7365, %v7362
        %v7861 = vpack.c.b16 %v7369, %v7366
        %v7862 = vpack.c.b16 %v7370, %v7367
        %v7863 = vpack.c.b16 %v7371, %v7368
        %v7864 = vpack.c.b16 %v7375, %v7372
        %v7865 = vpack.c.b16 %v7376, %v7373
        %v7866 = vpack.c.b16 %v7377, %v7374
        %v7867 = vpack.c.b16 %v7381, %v7378
        %v7868 = vpack.c.b16 %v7382, %v7379
        %v7869 = vpack.c.b16 %v7383, %v7380
        %v7870 = vpack.c.b16 %v7387, %v7384
        %v7871 = vpack.c.b16 %v7388, %v7385
        %v7872 = vpack.c.b16 %v7389, %v7386
        %v7873 = vpack.c.b16 %v7393, %v7390
        %v7874 = vpack.c.b16 %v7394, %v7391
        %v7875 = vpack.c.b16 %v7395, %v7392
        %v7876 = vpack.c.b16 %v7399, %v7396
        %v7877 = vpack.c.b16 %v7400, %v7397
        %v7878 = vpack.c.b16 %v7401, %v7398
        %v7879 = vpack.c.b16 %v7405, %v7402
        %v7880 = vpack.c.b16 %v7406, %v7403
        %v7881 = vpack.c.b16 %v7407, %v7404
        %v7882 = vpack.c.b16 %v7411, %v7408
        %v7883 = vpack.c.b16 %v7412, %v7409
        %v7884 = vpack.c.b16 %v7413, %v7410
        %v7885 = vpack.c.b16 %v7417, %v7414
        %v7886 = vpack.c.b16 %v7418, %v7415
        %v7887 = vpack.c.b16 %v7419, %v7416
        %v7888 = vpack.c.b16 %v7423, %v7420
        %v7889 = vpack.c.b16 %v7424, %v7421
        %v7890 = vpack.c.b16 %v7425, %v7422
        %v7891 = vpack.c.b16 %v7429, %v7426
        %v7892 = vpack.c.b16 %v7430, %v7427
        %v7893 = vpack.c.b16 %v7431, %v7428
        %v7894 = vpack.c.b16 %v7435, %v7432
        %v7895 = vpack.c.b16 %v7436, %v7433
        %v7896 = vpack.c.b16 %v7437, %v7434
        %v7897 = vpack.c.b16 %v7441, %v7438
        %v7898 = vpack.c.b16 %v7442, %v7439
        %v7899 = vpack.c.b16 %v7443, %v7440
        %v7900 = vpack.c.b16 %v7447, %v7444
        %v7901 = vpack.c.b16 %v7448, %v7445
        %v7902 = vpack.c.b16 %v7449, %v7446
        %v7903 = vpack.c.b16 %v7453, %v7450
        %v7904 = vpack.c.b16 %v7454, %v7451
        %v7905 = vpack.c.b16 %v7455, %v7452
        %v7906 = vpack.c.b16 %v7459, %v7456
        %v7907 = vpack.c.b16 %v7460, %v7457
        %v7908 = vpack.c.b16 %v7461, %v7458
        %v7909 = vpack.c.b16 %v7465, %v7462
        %v7910 = vpack.c.b16 %v7466, %v7463
        %v7911 = vpack.c.b16 %v7467, %v7464
        %v7912 = vpack.c.b16 %v7471, %v7468
        %v7913 = vpack.c.b16 %v7472, %v7469
        %v7914 = vpack.c.b16 %v7473, %v7470
        %v7915 = vpack.c.b16 %v7477, %v7474
        %v7916 = vpack.c.b16 %v7478, %v7475
        %v7917 = vpack.c.b16 %v7479, %v7476
        %v7918 = vpack.c.b16 %v7483, %v7480
        %v7919 = vpack.c.b16 %v7484, %v7481
        %v7920 = vpack.c.b16 %v7485, %v7482
        %v7921 = vpack.c.b16 %v7489, %v7486
        %v7922 = vpack.c.b16 %v7490, %v7487
        %v7923 = vpack.c.b16 %v7491, %v7488
        %v7924 = vpack.c.b16 %v7495, %v7492
        %v7925 = vpack.c.b16 %v7496, %v7493
        %v7926 = vpack.c.b16 %v7497, %v7494
        %v7927 = vpack.c.b16 %v7501, %v7498
        %v7928 = vpack.c.b16 %v7502, %v7499
        %v7929 = vpack.c.b16 %v7503, %v7500
        %v7930 = vpack.c.b16 %v7507, %v7504
        %v7931 = vpack.c.b16 %v7508, %v7505
        %v7932 = vpack.c.b16 %v7509, %v7506
        %v7933 = vpack.c.b16 %v7513, %v7510
        %v7934 = vpack.c.b16 %v7514, %v7511
        %v7935 = vpack.c.b16 %v7515, %v7512
        %v7936 = vpack.c.b16 %v7519, %v7516
        %v7937 = vpack.c.b16 %v7520, %v7517
        %v7938 = vpack.c.b16 %v7521, %v7518
        %v7939 = vpack.c.b16 %v7525, %v7522
        %v7940 = vpack.c.b16 %v7526, %v7523
        %v7941 = vpack.c.b16 %v7527, %v7524
        %v7942 = vpack.c.b16 %v7531, %v7528
        %v7943 = vpack.c.b16 %v7532, %v7529
        %v7944 = vpack.c.b16 %v7533, %v7530
        %v7945 = vpack.c.b16 %v7537, %v7534
        %v7946 = vpack.c.b16 %v7538, %v7535
        %v7947 = vpack.c.b16 %v7539, %v7536
        %v7948 = vpack.c.b16 %v7543, %v7540
        %v7949 = vpack.c.b16 %v7544, %v7541
        %v7950 = vpack.c.b16 %v7545, %v7542
        %v7951 = vpack.c.b16 %v7549, %v7546
        %v7952 = vpack.c.b16 %v7550, %v7547
        %v7953 = vpack.c.b16 %v7551, %v7548
        %v7954 = vpack.c.b16 %v7555, %v7552
        %v7955 = vpack.c.b16 %v7556, %v7553
        %v7956 = vpack.c.b16 %v7557, %v7554
        %v7957 = vpack.c.b16 %v7561, %v7558
        %v7958 = vpack.c.b16 %v7562, %v7559
        %v7959 = vpack.c.b16 %v7563, %v7560
        %v7960 = vpack.c.b16 %v7567, %v7564
        %v7961 = vpack.c.b16 %v7568, %v7565
        %v7962 = vpack.c.b16 %v7569, %v7566
        %v7963 = vpack.c.b16 %v7573, %v7570
        %v7964 = vpack.c.b16 %v7574, %v7571
        %v7965 = vpack.c.b16 %v7575, %v7572
        %v7966 = vpack.c.b16 %v7579, %v7576
        %v7967 = vpack.c.b16 %v7580, %v7577
        %v7968 = vpack.c.b16 %v7581, %v7578
        %v7969 = vpack.c.b16 %v7585, %v7582
        %v7970 = vpack.c.b16 %v7586, %v7583
        %v7971 = vpack.c.b16 %v7587, %v7584
        %v7972 = vpack.c.b16 %v7591, %v7588
        %v7973 = vpack.c.b16 %v7592, %v7589
        %v7974 = vpack.c.b16 %v7593, %v7590
        %v7975 = vpack.c.b16 %v7597, %v7594
        %v7976 = vpack.c.b16 %v7598, %v7595
        %v7977 = vpack.c.b16 %v7599, %v7596
        %v7978 = vpack.c.b16 %v7603, %v7600
        %v7979 = vpack.c.b16 %v7604, %v7601
        %v7980 = vpack.c.b16 %v7605, %v7602
        %v7981 = vpack.c.b16 %v7609, %v7606
        %v7982 = vpack.c.b16 %v7610, %v7607
        %v7983 = vpack.c.b16 %v7611, %v7608
        %v7984 = vpack.c.b16 %v7615, %v7612
        %v7985 = vpack.c.b16 %v7616, %v7613
        %v7986 = vpack.c.b16 %v7617, %v7614
        %v7987 = vpack.c.b16 %v7621, %v7618
        %v7988 = vpack.c.b16 %v7622, %v7619
        %v7989 = vpack.c.b16 %v7623, %v7620
        %v7990 = vpack.c.b16 %v7627, %v7624
        %v7991 = vpack.c.b16 %v7628, %v7625
        %v7992 = vpack.c.b16 %v7629, %v7626
        %v7993 = vpack.c.b16 %v7633, %v7630
        %v7994 = vpack.c.b16 %v7634, %v7631
        %v7995 = vpack.c.b16 %v7635, %v7632
        %v7996 = vpack.c.b16 %v7639, %v7636
        %v7997 = vpack.c.b16 %v7640, %v7637
        %v7998 = vpack.c.b16 %v7641, %v7638
        %v7999 = vpack.c.b16 %v7645, %v7642
        %v8000 = vpack.c.b16 %v7646, %v7643
        %v8001 = vpack.c.b16 %v7647, %v7644
        %v8002 = vpack.c.b16 %v7651, %v7648
        %v8003 = vpack.c.b16 %v7652, %v7649
        %v8004 = vpack.c.b16 %v7653, %v7650
        %v8005 = vpack.c.b16 %v7657, %v7654
        %v8006 = vpack.c.b16 %v7658, %v7655
        %v8007 = vpack.c.b16 %v7659, %v7656
        %v8008 = vpack.c.b16 %v7663, %v7660
        %v8009 = vpack.c.b16 %v7664, %v7661
        %v8010 = vpack.c.b16 %v7665, %v7662
        %v8011 = vpack.c.b16 %v7669, %v7666
        %v8012 = vpack.c.b16 %v7670, %v7667
        %v8013 = vpack.c.b16 %v7671, %v7668
        %v8014 = vpack.c.b16 %v7675, %v7672
        %v8015 = vpack.c.b16 %v7676, %v7673
        %v8016 = vpack.c.b16 %v7677, %v7674
        %v8017 = vpack.c.b16 %v7681, %v7678
        %v8018 = vpack.c.b16 %v7682, %v7679
        %v8019 = vpack.c.b16 %v7683, %v7680
        %v8020 = vpack.c.b16 %v7687, %v7684
        %v8021 = vpack.c.b16 %v7688, %v7685
        %v8022 = vpack.c.b16 %v7689, %v7686
        %v8023 = vpack.c.b16 %v7693, %v7690
        %v8024 = vpack.c.b16 %v7694, %v7691
        %v8025 = vpack.c.b16 %v7695, %v7692
        %v8026 = vpack.c.b16 %v7699, %v7696
        %v8027 = vpack.c.b16 %v7700, %v7697
        %v8028 = vpack.c.b16 %v7701, %v7698
        %v8029 = vpack.c.b16 %v7705, %v7702
        %v8030 = vpack.c.b16 %v7706, %v7703
        %v8031 = vpack.c.b16 %v7707, %v7704
        %v8032 = vpack.c.b16 %v7711, %v7708
        %v8033 = vpack.c.b16 %v7712, %v7709
        %v8034 = vpack.c.b16 %v7713, %v7710
        %v8035 = vpack.c.b16 %v7717, %v7714
        %v8036 = vpack.c.b16 %v7718, %v7715
        %v8037 = vpack.c.b16 %v7719, %v7716
        %v8038 = vpack.c.b16 %v7723, %v7720
        %v8039 = vpack.c.b16 %v7724, %v7721
        %v8040 = vpack.c.b16 %v7725, %v7722
        %v8041 = vpack.c.b16 %v7729, %v7726
        %v8042 = vpack.c.b16 %v7730, %v7727
        %v8043 = vpack.c.b16 %v7731, %v7728
        %v8044 = vpack.c.b16 %v7735, %v7732
        %v8045 = vpack.c.b16 %v7736, %v7733
        %v8046 = vpack.c.b16 %v7737, %v7734
        %v8047 = vpack.c.b16 %v7741, %v7738
        %v8048 = vpack.c.b16 %v7742, %v7739
        %v8049 = vpack.c.b16 %v7743, %v7740
        %v8050 = vpack.c.b16 %v7747, %v7744
        %v8051 = vpack.c.b16 %v7748, %v7745
        %v8052 = vpack.c.b16 %v7749, %v7746
        %v8053 = vpack.c.b16 %v7753, %v7750
        %v8054 = vpack.c.b16 %v7754, %v7751
        %v8055 = vpack.c.b16 %v7755, %v7752
        %v8056 = vpack.c.b16 %v7759, %v7756
        %v8057 = vpack.c.b16 %v7760, %v7757
        %v8058 = vpack.c.b16 %v7761, %v7758
        %v8059 = vpack.c.b16 %v7765, %v7762
        %v8060 = vpack.c.b16 %v7766, %v7763
        %v8061 = vpack.c.b16 %v7767, %v7764
        %v8062 = vpack.c.b16 %v7771, %v7768
        %v8063 = vpack.c.b16 %v7772, %v7769
        %v8064 = vpack.c.b16 %v7773, %v7770
        %v8065 = vpack.c.b16 %v7777, %v7774
        %v8066 = vpack.c.b16 %v7778, %v7775
        %v8067 = vpack.c.b16 %v7779, %v7776
        %8356 = vmatprep.subr.bf16.mxu0 %v7802
        %8357 = vmatpush1.bf16.msra.mxu0 %v7801
        %8358 = vmatprep.subr.bf16.mxu0 %v7799
        %8359 = vmatpush1.bf16.msra.mxu0 %v7798
        %8360 = vmatprep.subr.bf16.mxu0 %v7796
        %8361 = vmatpush1.bf16.msra.mxu0 %v7795
        %8362 = vmatprep.subr.bf16.mxu0 %v7793
        %8363 = vmatpush1.bf16.msra.mxu0 %v7792
        %8364 = vmatprep.subr.bf16.mxu0 %v7790
        %8365 = vmatpush1.bf16.msra.mxu0 %v7789
        %8366 = vmatprep.subr.bf16.mxu0 %v7787
        %8367 = vmatpush1.bf16.msra.mxu0 %v7786
        %8368 = vmatprep.subr.bf16.mxu0 %v7784
        %8369 = vmatpush1.bf16.msra.mxu0 %v7783
        %8370 = vmatprep.subr.bf16.mxu0 %v7781
        %8371 = vmatpush1.bf16.msra.mxu0 %v7780
        %8372 = vmatprep.subr.bf16.mxu0 %v7826
        %8373 = vmatpush2.bf16.msra.mxu0 %v7825
        %8374 = vmatprep.subr.bf16.mxu0 %v7823
        %8375 = vmatpush2.bf16.msra.mxu0 %v7822
        %8376 = vmatprep.subr.bf16.mxu0 %v7820
        %8377 = vmatpush2.bf16.msra.mxu0 %v7819
        %8378 = vmatprep.subr.bf16.mxu0 %v7817
        %8379 = vmatpush2.bf16.msra.mxu0 %v7816
        %8380 = vmatprep.subr.bf16.mxu0 %v7814
        %8381 = vmatpush2.bf16.msra.mxu0 %v7813
        %8382 = vmatprep.subr.bf16.mxu0 %v7811
        %8383 = vmatpush2.bf16.msra.mxu0 %v7810
        %8384 = vmatprep.subr.bf16.mxu0 %v7808
        %8385 = vmatpush2.bf16.msra.mxu0 %v7807
        %8386 = vmatprep.subr.bf16.mxu0 %v7805
        %8387 = vmatpush2.bf16.msra.mxu0 %v7804
        %8388 = vmatprep.mubr.bf16.mxu0 %v6408
        %8389 = vmatmul.mubr.bf16.gmra.mxu0 %v6407
        %v8390 = vpop.f32.mrf.mxu0
        %v8391 = vadd.f32 %v6808, %v8390
        %v8392 = vpop.f32.mrf.mxu0
        %v8393 = vadd.f32 %v6812, %v8392
        %v8394 = vpop.f32.mrf.mxu0
        %v8395 = vpop.f32.mrf.mxu0
        %8396 = vdwg.mxu0
        %8397 = vmatprep.subr.bf16.mxu0 %v7850
        %8398 = vmatpush1.bf16.msra.mxu0 %v7849
        %8399 = vmatprep.subr.bf16.mxu0 %v7847
        %8400 = vmatpush1.bf16.msra.mxu0 %v7846
        %8401 = vmatprep.subr.bf16.mxu0 %v7844
        %8402 = vmatpush1.bf16.msra.mxu0 %v7843
        %8403 = vmatprep.subr.bf16.mxu0 %v7841
        %8404 = vmatpush1.bf16.msra.mxu0 %v7840
        %8405 = vmatprep.subr.bf16.mxu0 %v7838
        %8406 = vmatpush1.bf16.msra.mxu0 %v7837
        %8407 = vmatprep.subr.bf16.mxu0 %v7835
        %8408 = vmatpush1.bf16.msra.mxu0 %v7834
        %8409 = vmatprep.subr.bf16.mxu0 %v7832
        %8410 = vmatpush1.bf16.msra.mxu0 %v7831
        %8411 = vmatprep.subr.bf16.mxu0 %v7829
        %8412 = vmatpush1.bf16.msra.mxu0 %v7828
        %8413 = vmatprep.subr.bf16.mxu0 %v7874
        %8414 = vmatpush2.bf16.msra.mxu0 %v7873
        %8415 = vmatprep.subr.bf16.mxu0 %v7871
        %8416 = vmatpush2.bf16.msra.mxu0 %v7870
        %8417 = vmatprep.subr.bf16.mxu0 %v7868
        %8418 = vmatpush2.bf16.msra.mxu0 %v7867
        %8419 = vmatprep.subr.bf16.mxu0 %v7865
        %8420 = vmatpush2.bf16.msra.mxu0 %v7864
        %8421 = vmatprep.subr.bf16.mxu0 %v7862
        %8422 = vmatpush2.bf16.msra.mxu0 %v7861
        %8423 = vmatprep.subr.bf16.mxu0 %v7859
        %8424 = vmatpush2.bf16.msra.mxu0 %v7858
        %8425 = vmatprep.subr.bf16.mxu0 %v7856
        %8426 = vmatpush2.bf16.msra.mxu0 %v7855
        %8427 = vmatprep.subr.bf16.mxu0 %v7853
        %8428 = vmatpush2.bf16.msra.mxu0 %v7852
        %8429 = vmatprep.mubr.bf16.mxu0 %v6410
        %8430 = vmatmul.mubr.bf16.gmra.mxu0 %v6409
        %v8431 = vpop.f32.mrf.mxu0
        %v8432 = vadd.f32 %v8391, %v8431
        %v8433 = vpop.f32.mrf.mxu0
        %v8434 = vadd.f32 %v8393, %v8433
        %v8435 = vpop.f32.mrf.mxu0
        %v8436 = vpop.f32.mrf.mxu0
        %8437 = vdwg.mxu0
        %8438 = vmatprep.subr.bf16.mxu0 %v7898
        %8439 = vmatpush1.bf16.msra.mxu0 %v7897
        %8440 = vmatprep.subr.bf16.mxu0 %v7895
        %8441 = vmatpush1.bf16.msra.mxu0 %v7894
        %8442 = vmatprep.subr.bf16.mxu0 %v7892
        %8443 = vmatpush1.bf16.msra.mxu0 %v7891
        %8444 = vmatprep.subr.bf16.mxu0 %v7889
        %8445 = vmatpush1.bf16.msra.mxu0 %v7888
        %8446 = vmatprep.subr.bf16.mxu0 %v7886
        %8447 = vmatpush1.bf16.msra.mxu0 %v7885
        %8448 = vmatprep.subr.bf16.mxu0 %v7883
        %8449 = vmatpush1.bf16.msra.mxu0 %v7882
        %8450 = vmatprep.subr.bf16.mxu0 %v7880
        %8451 = vmatpush1.bf16.msra.mxu0 %v7879
        %8452 = vmatprep.subr.bf16.mxu0 %v7877
        %8453 = vmatpush1.bf16.msra.mxu0 %v7876
        %8454 = vmatprep.subr.bf16.mxu0 %v7922
        %8455 = vmatpush2.bf16.msra.mxu0 %v7921
        %8456 = vmatprep.subr.bf16.mxu0 %v7919
        %8457 = vmatpush2.bf16.msra.mxu0 %v7918
        %8458 = vmatprep.subr.bf16.mxu0 %v7916
        %8459 = vmatpush2.bf16.msra.mxu0 %v7915
        %8460 = vmatprep.subr.bf16.mxu0 %v7913
        %8461 = vmatpush2.bf16.msra.mxu0 %v7912
        %8462 = vmatprep.subr.bf16.mxu0 %v7910
        %8463 = vmatpush2.bf16.msra.mxu0 %v7909
        %8464 = vmatprep.subr.bf16.mxu0 %v7907
        %8465 = vmatpush2.bf16.msra.mxu0 %v7906
        %8466 = vmatprep.subr.bf16.mxu0 %v7904
        %8467 = vmatpush2.bf16.msra.mxu0 %v7903
        %8468 = vmatprep.subr.bf16.mxu0 %v7901
        %8469 = vmatpush2.bf16.msra.mxu0 %v7900
        %8470 = vmatprep.mubr.bf16.mxu0 %v6412
        %8471 = vmatmul.mubr.bf16.gmra.mxu0 %v6411
        %v8472 = vpop.f32.mrf.mxu0
        %v8473 = vadd.f32 %v8432, %v8472
        %v8474 = vpop.f32.mrf.mxu0
        %v8475 = vadd.f32 %v8434, %v8474
        %v8476 = vpop.f32.mrf.mxu0
        %v8477 = vpop.f32.mrf.mxu0
        %8478 = vdwg.mxu0
        %8479 = vmatprep.subr.bf16.mxu0 %v7946
        %8480 = vmatpush1.bf16.msra.mxu0 %v7945
        %8481 = vmatprep.subr.bf16.mxu0 %v7943
        %8482 = vmatpush1.bf16.msra.mxu0 %v7942
        %8483 = vmatprep.subr.bf16.mxu0 %v7940
        %8484 = vmatpush1.bf16.msra.mxu0 %v7939
        %8485 = vmatprep.subr.bf16.mxu0 %v7937
        %8486 = vmatpush1.bf16.msra.mxu0 %v7936
        %8487 = vmatprep.subr.bf16.mxu0 %v7934
        %8488 = vmatpush1.bf16.msra.mxu0 %v7933
        %8489 = vmatprep.subr.bf16.mxu0 %v7931
        %8490 = vmatpush1.bf16.msra.mxu0 %v7930
        %8491 = vmatprep.subr.bf16.mxu0 %v7928
        %8492 = vmatpush1.bf16.msra.mxu0 %v7927
        %8493 = vmatprep.subr.bf16.mxu0 %v7925
        %8494 = vmatpush1.bf16.msra.mxu0 %v7924
        %8495 = vmatprep.subr.bf16.mxu0 %v7970
        %8496 = vmatpush2.bf16.msra.mxu0 %v7969
        %8497 = vmatprep.subr.bf16.mxu0 %v7967
        %8498 = vmatpush2.bf16.msra.mxu0 %v7966
        %8499 = vmatprep.subr.bf16.mxu0 %v7964
        %8500 = vmatpush2.bf16.msra.mxu0 %v7963
        %8501 = vmatprep.subr.bf16.mxu0 %v7961
        %8502 = vmatpush2.bf16.msra.mxu0 %v7960
        %8503 = vmatprep.subr.bf16.mxu0 %v7958
        %8504 = vmatpush2.bf16.msra.mxu0 %v7957
        %8505 = vmatprep.subr.bf16.mxu0 %v7955
        %8506 = vmatpush2.bf16.msra.mxu0 %v7954
        %8507 = vmatprep.subr.bf16.mxu0 %v7952
        %8508 = vmatpush2.bf16.msra.mxu0 %v7951
        %8509 = vmatprep.subr.bf16.mxu0 %v7949
        %8510 = vmatpush2.bf16.msra.mxu0 %v7948
        %8511 = vmatprep.mubr.bf16.mxu0 %v6414
        %8512 = vmatmul.mubr.bf16.gmra.mxu0 %v6413
        %v8513 = vpop.f32.mrf.mxu0
        %v8514 = vadd.f32 %v8473, %v8513
        %v8515 = vpop.f32.mrf.mxu0
        %v8516 = vadd.f32 %v8475, %v8515
        %v8517 = vpop.f32.mrf.mxu0
        %v8518 = vpop.f32.mrf.mxu0
        %8519 = vdwg.mxu0
        %8520 = vmatprep.subr.bf16.mxu0 %v7994
        %8521 = vmatpush1.bf16.msra.mxu0 %v7993
        %8522 = vmatprep.subr.bf16.mxu0 %v7991
        %8523 = vmatpush1.bf16.msra.mxu0 %v7990
        %8524 = vmatprep.subr.bf16.mxu0 %v7988
        %8525 = vmatpush1.bf16.msra.mxu0 %v7987
        %8526 = vmatprep.subr.bf16.mxu0 %v7985
        %8527 = vmatpush1.bf16.msra.mxu0 %v7984
        %8528 = vmatprep.subr.bf16.mxu0 %v7982
        %8529 = vmatpush1.bf16.msra.mxu0 %v7981
        %8530 = vmatprep.subr.bf16.mxu0 %v7979
        %8531 = vmatpush1.bf16.msra.mxu0 %v7978
        %8532 = vmatprep.subr.bf16.mxu0 %v7976
        %8533 = vmatpush1.bf16.msra.mxu0 %v7975
        %8534 = vmatprep.subr.bf16.mxu0 %v7973
        %8535 = vmatpush1.bf16.msra.mxu0 %v7972
        %8536 = vmatprep.subr.bf16.mxu0 %v8018
        %8537 = vmatpush2.bf16.msra.mxu0 %v8017
        %8538 = vmatprep.subr.bf16.mxu0 %v8015
        %8539 = vmatpush2.bf16.msra.mxu0 %v8014
        %8540 = vmatprep.subr.bf16.mxu0 %v8012
        %8541 = vmatpush2.bf16.msra.mxu0 %v8011
        %8542 = vmatprep.subr.bf16.mxu0 %v8009
        %8543 = vmatpush2.bf16.msra.mxu0 %v8008
        %8544 = vmatprep.subr.bf16.mxu0 %v8006
        %8545 = vmatpush2.bf16.msra.mxu0 %v8005
        %8546 = vmatprep.subr.bf16.mxu0 %v8003
        %8547 = vmatpush2.bf16.msra.mxu0 %v8002
        %8548 = vmatprep.subr.bf16.mxu0 %v8000
        %8549 = vmatpush2.bf16.msra.mxu0 %v7999
        %8550 = vmatprep.subr.bf16.mxu0 %v7997
        %8551 = vmatpush2.bf16.msra.mxu0 %v7996
        %8552 = vmatprep.mubr.bf16.mxu0 %v6416
        %8553 = vmatmul.mubr.bf16.gmra.mxu0 %v6415
        %v8554 = vpop.f32.mrf.mxu0
        %v8555 = vadd.f32 %v8514, %v8554
        %v8556 = vpop.f32.mrf.mxu0
        %v8557 = vadd.f32 %v8516, %v8556
        %v8558 = vpop.f32.mrf.mxu0
        %v8559 = vpop.f32.mrf.mxu0
        %8560 = vdwg.mxu0
        %8561 = vmatprep.subr.bf16.mxu0 %v8042
        %8562 = vmatpush1.bf16.msra.mxu0 %v8041
        %8563 = vmatprep.subr.bf16.mxu0 %v8039
        %8564 = vmatpush1.bf16.msra.mxu0 %v8038
        %8565 = vmatprep.subr.bf16.mxu0 %v8036
        %8566 = vmatpush1.bf16.msra.mxu0 %v8035
        %8567 = vmatprep.subr.bf16.mxu0 %v8033
        %8568 = vmatpush1.bf16.msra.mxu0 %v8032
        %8569 = vmatprep.subr.bf16.mxu0 %v8030
        %8570 = vmatpush1.bf16.msra.mxu0 %v8029
        %8571 = vmatprep.subr.bf16.mxu0 %v8027
        %8572 = vmatpush1.bf16.msra.mxu0 %v8026
        %8573 = vmatprep.subr.bf16.mxu0 %v8024
        %8574 = vmatpush1.bf16.msra.mxu0 %v8023
        %8575 = vmatprep.subr.bf16.mxu0 %v8021
        %8576 = vmatpush1.bf16.msra.mxu0 %v8020
        %8577 = vmatprep.subr.bf16.mxu0 %v8066
        %8578 = vmatpush2.bf16.msra.mxu0 %v8065
        %8579 = vmatprep.subr.bf16.mxu0 %v8063
        %8580 = vmatpush2.bf16.msra.mxu0 %v8062
        %8581 = vmatprep.subr.bf16.mxu0 %v8060
        %8582 = vmatpush2.bf16.msra.mxu0 %v8059
        %8583 = vmatprep.subr.bf16.mxu0 %v8057
        %8584 = vmatpush2.bf16.msra.mxu0 %v8056
        %8585 = vmatprep.subr.bf16.mxu0 %v8054
        %8586 = vmatpush2.bf16.msra.mxu0 %v8053
        %8587 = vmatprep.subr.bf16.mxu0 %v8051
        %8588 = vmatpush2.bf16.msra.mxu0 %v8050
        %8589 = vmatprep.subr.bf16.mxu0 %v8048
        %8590 = vmatpush2.bf16.msra.mxu0 %v8047
        %8591 = vmatprep.subr.bf16.mxu0 %v8045
        %8592 = vmatpush2.bf16.msra.mxu0 %v8044
        %8593 = vmatprep.mubr.bf16.mxu0 %v6418
        %8594 = vmatmul.mubr.bf16.gmra.mxu0 %v6417
        %v8595 = vpop.f32.mrf.mxu0
        %v8596 = vadd.f32 %v8555, %v8595
        %v8597 = vpop.f32.mrf.mxu0
        %v8598 = vadd.f32 %v8557, %v8597
        %v8599 = vpop.f32.mrf.mxu0
        %v8600 = vpop.f32.mrf.mxu0
        %8601 = vdwg.mxu0
        %8602 = vmatprep.subr.bf16.mxu0 0
        %8603 = vmatpush1.bf16.msra.mxu0 %v7803
        %8604 = vmatprep.subr.bf16.mxu0 0
        %8605 = vmatpush1.bf16.msra.mxu0 %v7800
        %8606 = vmatprep.subr.bf16.mxu0 0
        %8607 = vmatpush1.bf16.msra.mxu0 %v7797
        %8608 = vmatprep.subr.bf16.mxu0 0
        %8609 = vmatpush1.bf16.msra.mxu0 %v7794
        %8610 = vmatprep.subr.bf16.mxu0 0
        %8611 = vmatpush1.bf16.msra.mxu0 %v7791
        %8612 = vmatprep.subr.bf16.mxu0 0
        %8613 = vmatpush1.bf16.msra.mxu0 %v7788
        %8614 = vmatprep.subr.bf16.mxu0 0
        %8615 = vmatpush1.bf16.msra.mxu0 %v7785
        %8616 = vmatprep.subr.bf16.mxu0 0
        %8617 = vmatpush1.bf16.msra.mxu0 %v7782
        %8618 = vmatprep.subr.bf16.mxu0 0
        %8619 = vmatpush2.bf16.msra.mxu0 %v7827
        %8620 = vmatprep.subr.bf16.mxu0 0
        %8621 = vmatpush2.bf16.msra.mxu0 %v7824
        %8622 = vmatprep.subr.bf16.mxu0 0
        %8623 = vmatpush2.bf16.msra.mxu0 %v7821
        %8624 = vmatprep.subr.bf16.mxu0 0
        %8625 = vmatpush2.bf16.msra.mxu0 %v7818
        %8626 = vmatprep.subr.bf16.mxu0 0
        %8627 = vmatpush2.bf16.msra.mxu0 %v7815
        %8628 = vmatprep.subr.bf16.mxu0 0
        %8629 = vmatpush2.bf16.msra.mxu0 %v7812
        %8630 = vmatprep.subr.bf16.mxu0 0
        %8631 = vmatpush2.bf16.msra.mxu0 %v7809
        %8632 = vmatprep.subr.bf16.mxu0 0
        %8633 = vmatpush2.bf16.msra.mxu0 %v7806
        %8634 = vmatprep.mubr.bf16.mxu0 %v6408
        %8635 = vmatmul.mubr.bf16.gmra.mxu0 %v6407
        %v8636 = vpop.f32.mrf.mxu0
        %v8637 = vadd.f32 %v6816, %v8636
        %v8638 = vpop.f32.mrf.mxu0
        %v8639 = vpop.f32.mrf.mxu0
        %v8640 = vpop.f32.mrf.mxu0
        %8641 = vdwg.mxu0
        %8642 = vmatprep.subr.bf16.mxu0 0
        %8643 = vmatpush1.bf16.msra.mxu0 %v7851
        %8644 = vmatprep.subr.bf16.mxu0 0
        %8645 = vmatpush1.bf16.msra.mxu0 %v7848
        %8646 = vmatprep.subr.bf16.mxu0 0
        %8647 = vmatpush1.bf16.msra.mxu0 %v7845
        %8648 = vmatprep.subr.bf16.mxu0 0
        %8649 = vmatpush1.bf16.msra.mxu0 %v7842
        %8650 = vmatprep.subr.bf16.mxu0 0
        %8651 = vmatpush1.bf16.msra.mxu0 %v7839
        %8652 = vmatprep.subr.bf16.mxu0 0
        %8653 = vmatpush1.bf16.msra.mxu0 %v7836
        %8654 = vmatprep.subr.bf16.mxu0 0
        %8655 = vmatpush1.bf16.msra.mxu0 %v7833
        %8656 = vmatprep.subr.bf16.mxu0 0
        %8657 = vmatpush1.bf16.msra.mxu0 %v7830
        %8658 = vmatprep.subr.bf16.mxu0 0
        %8659 = vmatpush2.bf16.msra.mxu0 %v7875
        %8660 = vmatprep.subr.bf16.mxu0 0
        %8661 = vmatpush2.bf16.msra.mxu0 %v7872
        %8662 = vmatprep.subr.bf16.mxu0 0
        %8663 = vmatpush2.bf16.msra.mxu0 %v7869
        %8664 = vmatprep.subr.bf16.mxu0 0
        %8665 = vmatpush2.bf16.msra.mxu0 %v7866
        %8666 = vmatprep.subr.bf16.mxu0 0
        %8667 = vmatpush2.bf16.msra.mxu0 %v7863
        %8668 = vmatprep.subr.bf16.mxu0 0
        %8669 = vmatpush2.bf16.msra.mxu0 %v7860
        %8670 = vmatprep.subr.bf16.mxu0 0
        %8671 = vmatpush2.bf16.msra.mxu0 %v7857
        %8672 = vmatprep.subr.bf16.mxu0 0
        %8673 = vmatpush2.bf16.msra.mxu0 %v7854
        %8674 = vmatprep.mubr.bf16.mxu0 %v6410
        %8675 = vmatmul.mubr.bf16.gmra.mxu0 %v6409
        %v8676 = vpop.f32.mrf.mxu0
        %v8677 = vadd.f32 %v8637, %v8676
        %v8678 = vpop.f32.mrf.mxu0
        %v8679 = vpop.f32.mrf.mxu0
        %v8680 = vpop.f32.mrf.mxu0
        %8681 = vdwg.mxu0
        %8682 = vmatprep.subr.bf16.mxu0 0
        %8683 = vmatpush1.bf16.msra.mxu0 %v7899
        %8684 = vmatprep.subr.bf16.mxu0 0
        %8685 = vmatpush1.bf16.msra.mxu0 %v7896
        %8686 = vmatprep.subr.bf16.mxu0 0
        %8687 = vmatpush1.bf16.msra.mxu0 %v7893
        %8688 = vmatprep.subr.bf16.mxu0 0
        %8689 = vmatpush1.bf16.msra.mxu0 %v7890
        %8690 = vmatprep.subr.bf16.mxu0 0
        %8691 = vmatpush1.bf16.msra.mxu0 %v7887
        %8692 = vmatprep.subr.bf16.mxu0 0
        %8693 = vmatpush1.bf16.msra.mxu0 %v7884
        %8694 = vmatprep.subr.bf16.mxu0 0
        %8695 = vmatpush1.bf16.msra.mxu0 %v7881
        %8696 = vmatprep.subr.bf16.mxu0 0
        %8697 = vmatpush1.bf16.msra.mxu0 %v7878
        %8698 = vmatprep.subr.bf16.mxu0 0
        %8699 = vmatpush2.bf16.msra.mxu0 %v7923
        %8700 = vmatprep.subr.bf16.mxu0 0
        %8701 = vmatpush2.bf16.msra.mxu0 %v7920
        %8702 = vmatprep.subr.bf16.mxu0 0
        %8703 = vmatpush2.bf16.msra.mxu0 %v7917
        %8704 = vmatprep.subr.bf16.mxu0 0
        %8705 = vmatpush2.bf16.msra.mxu0 %v7914
        %8706 = vmatprep.subr.bf16.mxu0 0
        %8707 = vmatpush2.bf16.msra.mxu0 %v7911
        %8708 = vmatprep.subr.bf16.mxu0 0
        %8709 = vmatpush2.bf16.msra.mxu0 %v7908
        %8710 = vmatprep.subr.bf16.mxu0 0
        %8711 = vmatpush2.bf16.msra.mxu0 %v7905
        %8712 = vmatprep.subr.bf16.mxu0 0
        %8713 = vmatpush2.bf16.msra.mxu0 %v7902
        %8714 = vmatprep.mubr.bf16.mxu0 %v6412
        %8715 = vmatmul.mubr.bf16.gmra.mxu0 %v6411
        %v8716 = vpop.f32.mrf.mxu0
        %v8717 = vadd.f32 %v8677, %v8716
        %v8718 = vpop.f32.mrf.mxu0
        %v8719 = vpop.f32.mrf.mxu0
        %v8720 = vpop.f32.mrf.mxu0
        %8721 = vdwg.mxu0
        %8722 = vmatprep.subr.bf16.mxu0 0
        %8723 = vmatpush1.bf16.msra.mxu0 %v7947
        %8724 = vmatprep.subr.bf16.mxu0 0
        %8725 = vmatpush1.bf16.msra.mxu0 %v7944
        %8726 = vmatprep.subr.bf16.mxu0 0
        %8727 = vmatpush1.bf16.msra.mxu0 %v7941
        %8728 = vmatprep.subr.bf16.mxu0 0
        %8729 = vmatpush1.bf16.msra.mxu0 %v7938
        %8730 = vmatprep.subr.bf16.mxu0 0
        %8731 = vmatpush1.bf16.msra.mxu0 %v7935
        %8732 = vmatprep.subr.bf16.mxu0 0
        %8733 = vmatpush1.bf16.msra.mxu0 %v7932
        %8734 = vmatprep.subr.bf16.mxu0 0
        %8735 = vmatpush1.bf16.msra.mxu0 %v7929
        %8736 = vmatprep.subr.bf16.mxu0 0
        %8737 = vmatpush1.bf16.msra.mxu0 %v7926
        %8738 = vmatprep.subr.bf16.mxu0 0
        %8739 = vmatpush2.bf16.msra.mxu0 %v7971
        %8740 = vmatprep.subr.bf16.mxu0 0
        %8741 = vmatpush2.bf16.msra.mxu0 %v7968
        %8742 = vmatprep.subr.bf16.mxu0 0
        %8743 = vmatpush2.bf16.msra.mxu0 %v7965
        %8744 = vmatprep.subr.bf16.mxu0 0
        %8745 = vmatpush2.bf16.msra.mxu0 %v7962
        %8746 = vmatprep.subr.bf16.mxu0 0
        %8747 = vmatpush2.bf16.msra.mxu0 %v7959
        %8748 = vmatprep.subr.bf16.mxu0 0
        %8749 = vmatpush2.bf16.msra.mxu0 %v7956
        %8750 = vmatprep.subr.bf16.mxu0 0
        %8751 = vmatpush2.bf16.msra.mxu0 %v7953
        %8752 = vmatprep.subr.bf16.mxu0 0
        %8753 = vmatpush2.bf16.msra.mxu0 %v7950
        %8754 = vmatprep.mubr.bf16.mxu0 %v6414
        %8755 = vmatmul.mubr.bf16.gmra.mxu0 %v6413
        %v8756 = vpop.f32.mrf.mxu0
        %v8757 = vadd.f32 %v8717, %v8756
        %v8758 = vpop.f32.mrf.mxu0
        %v8759 = vpop.f32.mrf.mxu0
        %v8760 = vpop.f32.mrf.mxu0
        %8761 = vdwg.mxu0
        %8762 = vmatprep.subr.bf16.mxu0 0
        %8763 = vmatpush1.bf16.msra.mxu0 %v7995
        %8764 = vmatprep.subr.bf16.mxu0 0
        %8765 = vmatpush1.bf16.msra.mxu0 %v7992
        %8766 = vmatprep.subr.bf16.mxu0 0
        %8767 = vmatpush1.bf16.msra.mxu0 %v7989
        %8768 = vmatprep.subr.bf16.mxu0 0
        %8769 = vmatpush1.bf16.msra.mxu0 %v7986
        %8770 = vmatprep.subr.bf16.mxu0 0
        %8771 = vmatpush1.bf16.msra.mxu0 %v7983
        %8772 = vmatprep.subr.bf16.mxu0 0
        %8773 = vmatpush1.bf16.msra.mxu0 %v7980
        %8774 = vmatprep.subr.bf16.mxu0 0
        %8775 = vmatpush1.bf16.msra.mxu0 %v7977
        %8776 = vmatprep.subr.bf16.mxu0 0
        %8777 = vmatpush1.bf16.msra.mxu0 %v7974
        %8778 = vmatprep.subr.bf16.mxu0 0
        %8779 = vmatpush2.bf16.msra.mxu0 %v8019
        %8780 = vmatprep.subr.bf16.mxu0 0
        %8781 = vmatpush2.bf16.msra.mxu0 %v8016
        %8782 = vmatprep.subr.bf16.mxu0 0
        %8783 = vmatpush2.bf16.msra.mxu0 %v8013
        %8784 = vmatprep.subr.bf16.mxu0 0
        %8785 = vmatpush2.bf16.msra.mxu0 %v8010
        %8786 = vmatprep.subr.bf16.mxu0 0
        %8787 = vmatpush2.bf16.msra.mxu0 %v8007
        %8788 = vmatprep.subr.bf16.mxu0 0
        %8789 = vmatpush2.bf16.msra.mxu0 %v8004
        %8790 = vmatprep.subr.bf16.mxu0 0
        %8791 = vmatpush2.bf16.msra.mxu0 %v8001
        %8792 = vmatprep.subr.bf16.mxu0 0
        %8793 = vmatpush2.bf16.msra.mxu0 %v7998
        %8794 = vmatprep.mubr.bf16.mxu0 %v6416
        %8795 = vmatmul.mubr.bf16.gmra.mxu0 %v6415
        %v8796 = vpop.f32.mrf.mxu0
        %v8797 = vadd.f32 %v8757, %v8796
        %v8798 = vpop.f32.mrf.mxu0
        %v8799 = vpop.f32.mrf.mxu0
        %v8800 = vpop.f32.mrf.mxu0
        %8801 = vdwg.mxu0
        %8802 = vmatprep.subr.bf16.mxu0 0
        %8803 = vmatpush1.bf16.msra.mxu0 %v8043
        %8804 = vmatprep.subr.bf16.mxu0 0
        %8805 = vmatpush1.bf16.msra.mxu0 %v8040
        %8806 = vmatprep.subr.bf16.mxu0 0
        %8807 = vmatpush1.bf16.msra.mxu0 %v8037
        %8808 = vmatprep.subr.bf16.mxu0 0
        %8809 = vmatpush1.bf16.msra.mxu0 %v8034
        %8810 = vmatprep.subr.bf16.mxu0 0
        %8811 = vmatpush1.bf16.msra.mxu0 %v8031
        %8812 = vmatprep.subr.bf16.mxu0 0
        %8813 = vmatpush1.bf16.msra.mxu0 %v8028
        %8814 = vmatprep.subr.bf16.mxu0 0
        %8815 = vmatpush1.bf16.msra.mxu0 %v8025
        %8816 = vmatprep.subr.bf16.mxu0 0
        %8817 = vmatpush1.bf16.msra.mxu0 %v8022
        %8818 = vmatprep.subr.bf16.mxu0 0
        %8819 = vmatpush2.bf16.msra.mxu0 %v8067
        %8820 = vmatprep.subr.bf16.mxu0 0
        %8821 = vmatpush2.bf16.msra.mxu0 %v8064
        %8822 = vmatprep.subr.bf16.mxu0 0
        %8823 = vmatpush2.bf16.msra.mxu0 %v8061
        %8824 = vmatprep.subr.bf16.mxu0 0
        %8825 = vmatpush2.bf16.msra.mxu0 %v8058
        %8826 = vmatprep.subr.bf16.mxu0 0
        %8827 = vmatpush2.bf16.msra.mxu0 %v8055
        %8828 = vmatprep.subr.bf16.mxu0 0
        %8829 = vmatpush2.bf16.msra.mxu0 %v8052
        %8830 = vmatprep.subr.bf16.mxu0 0
        %8831 = vmatpush2.bf16.msra.mxu0 %v8049
        %8832 = vmatprep.subr.bf16.mxu0 0
        %8833 = vmatpush2.bf16.msra.mxu0 %v8046
        %8834 = vmatprep.mubr.bf16.mxu0 %v6418
        %8835 = vmatmul.mubr.bf16.gmra.mxu0 %v6417
        %v8836 = vpop.f32.mrf.mxu0
        %v8837 = vadd.f32 %v8797, %v8836
        %v8838 = vpop.f32.mrf.mxu0
        %v8839 = vpop.f32.mrf.mxu0
        %v8840 = vpop.f32.mrf.mxu0
        %8841 = vdwg.mxu0
        %v8842 = vadd.f32 %v4044, %v8596
        %v8843 = vadd.f32 %v4045, %v8598
        %v8844 = vadd.f32 %v4046, %v8837
        %8845 = vst [vmem:[%s697] sm:$0xff] %v8842
        %8846 = vst [vmem:[%s697 + $0x8] sm:$0xff] %v8843
        %8847 = vst [vmem:[%s697 + $0x10] sm:$0xff] %v8844
        %s8848 = sand.u32 %s367, 1
        %s8849 = scalar_lea.sflag [#allocation5], %s8848
        %s8850 = sand.u32 %s367, 1
        %s8851 = smul.addr %s8850, 24
        %s8852 = scalar_lea.vmem [#allocation27], %s8851
        // Predicated region
        $region141: #{tpu_custom_call.1} parent=79 // pred_check
          %p8853 = pneg %p377
        $region142: #{tpu_custom_call.1} parent=79 // pred_check_branch
          %8855 = sbr.rel (%p8853) target = $region144
        $region143: #{tpu_custom_call.1} parent=79 // pred_region
          %s8857 = ssub.s32 384, 384
          %8858 = vsyncadd %s8849, %s8857
          %s8859 = smul.addr %s39, 3
          %s8860 = smul.addr %s8859, 128
          %s8861 = scalar_lea.hbm %s15, %s8860
          %s8863 = sshll.u32 %s8852, 4
          %s8864 = int_to_ptr.vmem [resolvable:$true] %s8863
          %8866 = dma.vmem_to_hbm [thread:$0]  %s8864, 384, %s8861, %s8849
        $region144: #{tpu_custom_call.1} parent=79 // pred_fallthru
          _
      $region80: #{tpu_custom_call.1} parent=5 // pred_fallthru
        _
      %p8867 = scmp.le.s32.totalorder 2, %s34
      // Predicated region
      $region145: #{tpu_custom_call.1} parent=5 // pred_check
        %p8868 = pneg %p8867
      $region146: #{tpu_custom_call.1} parent=5 // pred_check_branch
        %8870 = sbr.rel (%p8868) target = $region148
      $region147: #{tpu_custom_call.1} parent=5 // pred_region
        %s8871 = ssub.s32 %s34, 2
        // Predicated region
        $region149: #{tpu_custom_call.1} parent=147 // pred_check
          %p8872 = pneg %p383
        $region150: #{tpu_custom_call.1} parent=147 // pred_check_branch
          %8874 = sbr.rel (%p8872) target = $region152
        $region151: #{tpu_custom_call.1} parent=147 // pred_region
          %s8875 = sand.u32 %s368, 1
          %s8876 = scalar_lea.sflag [#allocation5], %s8875
          %s8877 = sand.u32 %s368, 1
          %s8878 = smul.addr %s8877, 24
          %s8879 = scalar_lea.vmem [#allocation27], %s8878
          %8880 = dma.done %s8876, 384
        $region152: #{tpu_custom_call.1} parent=147 // pred_fallthru
          _
      $region148: #{tpu_custom_call.1} parent=5 // pred_fallthru
        _
    $region6: #{tpu_custom_call.1} parent=1 // loop_footer
      %s38 = sadd.s32 1, %s34
    $region7: #{tpu_custom_call.1} parent=1 // loop_footer_branch
      %33 = sbr.rel target = $region3
    $region8: #{tpu_custom_call.1} parent=1 // loop_exit
      _
    %8881 = vsyncpa [#allocation4], 1
    %s8882 = scalar_lea.sflag [#allocation4], 1
    %8883 = vsyncpa %s8882, 1
    %8884 = vsyncpa [#allocation7], 1
    %8885 = vsyncpa [#allocation10], 1
    %8886 = vsyncpa [#allocation13], 1
    %8887 = vsyncpa [#allocation16], 1
    %8888 = vsyncpa [#allocation19], 1
    %8889 = vsyncpa [#allocation22], 1
    %8890 = vsyncpa [#allocation25], 1
    %8891 = vsyncpa [#allocation5], 1
    %s8892 = scalar_lea.sflag [#allocation5], 1
    %8893 = vsyncpa %s8892, 1

</llo_original>
